<compile_context>
chip_gen: v7x
topology: tpu7x:2x2x1
jax: 0.10.0
libtpu: 0.0.40
codegen_flags: <defaults>
</compile_context>

<pallas_src>
from functools import partial

import jax
import jax.numpy as jnp
from jax.experimental import pallas as pl
from jax.experimental.pallas import tpu as pltpu


LANE = 128


def _round_up(x, m):
    return (x + m - 1) // m * m


# ---------------------------------------------------------------------------
# Fused Bottleneck kernel (one grid step = one batch element, full H*W)
# ---------------------------------------------------------------------------
def _bottleneck_kernel(x_ref, w1_ref, b1_ref, w2_ref, b2_ref, w3_ref, b3_ref,
                       o_ref, t1_ref, acc_ref, *, H, W, relu_on):
    Pp = w1_ref.shape[1]

    x = x_ref[0]                                   # (H*W, Cin_p) f32 (residual)
    xb = x.astype(jnp.bfloat16)                    # bf16 operand for the MXU

    # ---- stage 1: 1x1 conv (BN1 scale folded into w1) + bias + relu ----
    t1 = jnp.dot(xb, w1_ref[...], preferred_element_type=jnp.float32)
    t1 = jnp.maximum(t1 + b1_ref[...], 0.0).astype(jnp.bfloat16)   # (H*W, Pp)

    # Stage-1 output into a zero-padded (H+2, W+2, Pp) VMEM halo buffer.
    t1_ref[...] = jnp.zeros_like(t1_ref)
    t1_ref[pl.ds(1, H), pl.ds(1, W), :] = t1.reshape(H, W, Pp)

    # ---- stage 2: 3x3 conv (pad=1, stride=1) as 9 shifted matmuls ----
    acc_ref[...] = jnp.zeros_like(acc_ref)
    for kh in range(3):
        for kw in range(3):
            patch = t1_ref[pl.ds(kh, H), pl.ds(kw, W), :].reshape(H * W, Pp)
            acc_ref[...] += jnp.dot(patch, w2_ref[kh * 3 + kw],
                                    preferred_element_type=jnp.float32)
    t2 = jnp.maximum(acc_ref[...] + b2_ref[...], 0.0).astype(jnp.bfloat16)

    # ---- stage 3: 1x1 conv + bias + residual (f32) + optional relu ----
    out = jnp.dot(t2, w3_ref[...], preferred_element_type=jnp.float32)
    out = out + b3_ref[...] + x
    if relu_on:
        out = jnp.maximum(out, 0.0)
    o_ref[0] = out.astype(o_ref.dtype)


# ---------------------------------------------------------------------------
# Host-side glue: BN folding, channel padding to lane multiples, pallas_call
# ---------------------------------------------------------------------------
def fold_bn(gamma, beta, mean, var, eps=1e-5):
    scale = gamma / jnp.sqrt(var + eps)
    bias = beta - mean * scale
    return scale, bias


def bottleneck_forward(x_nchw, params, stride=1, relu_on=True):
    # downsample=None path: the identity residual requires stride==1 and
    # inplanes == planes * expansion.
    assert stride == 1, "identity-residual Bottleneck requires stride == 1"
    N, Cin, H, W = x_nchw.shape
    P = params["w1"].shape[1]
    Cout = params["w3"].shape[1]
    assert Cin == Cout, "identity residual requires inplanes == planes * 4"

    Cin_p = _round_up(Cin, LANE)
    Pp = _round_up(P, LANE)
    Cout_p = _round_up(Cout, LANE)

    # Fold BN scale into the conv weights (output-channel scaling); keep bias.
    s1, b1 = fold_bn(*params["bn1"])
    s2, b2 = fold_bn(*params["bn2"])
    s3, b3 = fold_bn(*params["bn3"])
    w1 = params["w1"] * s1[None, :]                       # (Cin, P)
    w2 = params["w2"] * s2[None, None, None, :]           # (3, 3, P, P) HWIO
    w3 = params["w3"] * s3[None, :]                       # (P, Cout)

    # Pad channels to lane multiples (once, host side); weights go to bf16.
    w1p = jnp.zeros((Cin_p, Pp), jnp.bfloat16).at[:Cin, :P].set(
        w1.astype(jnp.bfloat16))
    w2p = jnp.zeros((9, Pp, Pp), jnp.bfloat16).at[:, :P, :P].set(
        w2.reshape(9, P, P).astype(jnp.bfloat16))
    w3p = jnp.zeros((Pp, Cout_p), jnp.bfloat16).at[:P, :Cout].set(
        w3.astype(jnp.bfloat16))
    b1p = jnp.zeros((1, Pp), jnp.float32).at[0, :P].set(b1)
    b2p = jnp.zeros((1, Pp), jnp.float32).at[0, :P].set(b2)
    b3p = jnp.zeros((1, Cout_p), jnp.float32).at[0, :Cout].set(b3)

    # TODO(synk): accept NHWC end-to-end / fuse these transposes into the
    # kernel to drop one HBM pass on each side of the block.
    x = jnp.transpose(x_nchw, (0, 2, 3, 1)).reshape(N, H * W, Cin)
    xp = jnp.zeros((N, H * W, Cin_p), jnp.float32).at[:, :, :Cin].set(x)

    kernel = partial(_bottleneck_kernel, H=H, W=W, relu_on=relu_on)

    out = pl.pallas_call(
        kernel,
        out_shape=jax.ShapeDtypeStruct((N, H * W, Cout_p), jnp.float32),
        grid=(N,),
        in_specs=[
            pl.BlockSpec((1, H * W, Cin_p), lambda n: (n, 0, 0)),   # x
            pl.BlockSpec((Cin_p, Pp), lambda n: (0, 0)),            # w1
            pl.BlockSpec((1, Pp), lambda n: (0, 0)),                # b1
            pl.BlockSpec((9, Pp, Pp), lambda n: (0, 0, 0)),         # w2
            pl.BlockSpec((1, Pp), lambda n: (0, 0)),                # b2
            pl.BlockSpec((Pp, Cout_p), lambda n: (0, 0)),           # w3
            pl.BlockSpec((1, Cout_p), lambda n: (0, 0)),            # b3
        ],
        out_specs=pl.BlockSpec((1, H * W, Cout_p), lambda n: (n, 0, 0)),
        scratch_shapes=[
            pltpu.VMEM((H + 2, W + 2, Pp), jnp.bfloat16),   # padded stage-1 out
            pltpu.VMEM((H * W, Pp), jnp.float32),           # 3x3 accumulator
        ],
        compiler_params=pltpu.CompilerParams(
            dimension_semantics=("parallel",),
        ),
    )(xp, w1p, b1p, w2p, b2p, w3p, b3p)

    out = out[:, :, :Cout].reshape(N, H, W, Cout)
    return jnp.transpose(out, (0, 3, 1, 2))                 # back to NCHW


# ---------------------------------------------------------------------------
# Pure-JAX (f32, lax.conv) reference for correctness
# ---------------------------------------------------------------------------
def reference_forward(x_nchw, params, stride=1, relu_on=True, eps=1e-5):
    x = jnp.transpose(x_nchw, (0, 2, 3, 1))

    def conv(inp, w_hwio, strides, padding):
        return jax.lax.conv_general_dilated(
            inp, w_hwio, strides, padding,
            dimension_numbers=("NHWC", "HWIO", "NHWC"),
            precision=jax.lax.Precision.HIGHEST)

    def bn(y, p):
        gamma, beta, mean, var = p
        return (y - mean) / jnp.sqrt(var + eps) * gamma + beta

    cin = x.shape[-1]
    planes = params["w1"].shape[1]
    cout = params["w3"].shape[1]

    w1 = params["w1"].reshape(1, 1, cin, planes)
    w2 = params["w2"]                                   # (3, 3, P, P) HWIO
    w3 = params["w3"].reshape(1, 1, planes, cout)

    out = jnp.maximum(bn(conv(x, w1, (1, 1), "VALID"), params["bn1"]), 0.0)
    out = jnp.maximum(bn(conv(out, w2, (stride, stride), [(1, 1), (1, 1)]),
                         params["bn2"]), 0.0)
    out = bn(conv(out, w3, (1, 1), "VALID"), params["bn3"]) + x
    if relu_on:
        out = jnp.maximum(out, 0.0)
    return jnp.transpose(out, (0, 3, 1, 2))


# ---------------------------------------------------------------------------
# Deterministic parameter construction + run
# ---------------------------------------------------------------------------
def make_params(key, inplanes, planes):
    expansion = 4
    ks = jax.random.split(key, 15)

    def bn_params(k0, k1, k2, k3, c):
        gamma = jax.random.uniform(k0, (c,), jnp.float32, 0.5, 1.5)
        beta = 0.1 * jax.random.normal(k1, (c,), jnp.float32)
        mean = 0.1 * jax.random.normal(k2, (c,), jnp.float32)
        var = jax.random.uniform(k3, (c,), jnp.float32, 0.5, 1.5)
        return (gamma, beta, mean, var)

    return {
        "w1": 0.1 * jax.random.normal(ks[0], (inplanes, planes), jnp.float32),
        "w2": 0.1 * jax.random.normal(ks[1], (3, 3, planes, planes),
                                      jnp.float32),
        "w3": 0.1 * jax.random.normal(ks[2], (planes, planes * expansion),
                                      jnp.float32),
        "bn1": bn_params(ks[3], ks[4], ks[5], ks[6], planes),
        "bn2": bn_params(ks[7], ks[8], ks[9], ks[10], planes),
        "bn3": bn_params(ks[11], ks[12], ks[13], ks[14], planes * expansion),
    }


if __name__ == "__main__":
    key = jax.random.PRNGKey(0)
    k_x, k_p = jax.random.split(key)

    # Bottleneck(inplanes=32, planes=8, stride=1, downsample=None, relu=True)
    N, inplanes, H, W = 2, 32, 16, 16
    planes = 8

    x = jax.random.normal(k_x, (N, inplanes, H, W), jnp.float32)   # NCHW
    params = make_params(k_p, inplanes, planes)

    fwd = jax.jit(lambda xx, pp: bottleneck_forward(xx, pp, stride=1,
                                                    relu_on=True))
    out = jax.block_until_ready(fwd(x, params))

    ref = jax.block_until_ready(
        reference_forward(x, params, stride=1, relu_on=True))

    assert out.shape == (N, planes * 4, H, W), out.shape
    err = float(jnp.max(jnp.abs(out - ref)))
    assert jnp.allclose(out, ref, atol=2e-2, rtol=2e-2), err

    print("KERNEL_OK")
</pallas_src>

<mosaic_0001>
module attributes {stable_mosaic.version = 11 : i64} {
  func.func @_bottleneck_kernel(%arg0: i32, %arg1: memref<1x256x128xf32, #tpu.memory_space<vmem>>, %arg2: memref<128x128xbf16, #tpu.memory_space<vmem>>, %arg3: memref<1x128xf32, #tpu.memory_space<vmem>>, %arg4: memref<9x128x128xbf16, #tpu.memory_space<vmem>>, %arg5: memref<1x128xf32, #tpu.memory_space<vmem>>, %arg6: memref<128x128xbf16, #tpu.memory_space<vmem>>, %arg7: memref<1x128xf32, #tpu.memory_space<vmem>>, %arg8: memref<1x256x128xf32, #tpu.memory_space<vmem>>, %arg9: memref<18x18x128xbf16, #tpu.memory_space<vmem>>, %arg10: memref<256x128xf32, #tpu.memory_space<vmem>>) attributes {dimension_semantics = [#tpu.dimension_semantics<parallel>], iteration_bounds = array<i64: 2>, scalar_prefetch = 0 : i64, scratch_operands = 2 : i64, tpu.core_type = #tpu.core_type<tc>, window_params = [{transform_indices = @transform_0, window_bounds = array<i64: 1, 256, 128>}, {pipeline_mode = #tpu.pipeline_mode<synchronous>, transform_indices = @transform_1, window_bounds = array<i64: 128, 128>}, {pipeline_mode = #tpu.pipeline_mode<synchronous>, transform_indices = @transform_2, window_bounds = array<i64: 1, 128>}, {pipeline_mode = #tpu.pipeline_mode<synchronous>, transform_indices = @transform_3, window_bounds = array<i64: 9, 128, 128>}, {pipeline_mode = #tpu.pipeline_mode<synchronous>, transform_indices = @transform_4, window_bounds = array<i64: 1, 128>}, {pipeline_mode = #tpu.pipeline_mode<synchronous>, transform_indices = @transform_5, window_bounds = array<i64: 128, 128>}, {pipeline_mode = #tpu.pipeline_mode<synchronous>, transform_indices = @transform_6, window_bounds = array<i64: 1, 128>}, {transform_indices = @transform_7, window_bounds = array<i64: 1, 256, 128>}]} {
    %c0 = arith.constant 0 : index
    %c0_0 = arith.constant 0 : index
    %c0_1 = arith.constant 0 : index
    %0 = vector.load %arg1[%c0, %c0_0, %c0_1] : memref<1x256x128xf32, #tpu.memory_space<vmem>>, vector<1x256x128xf32>
    %1 = vector.shape_cast %0 : vector<1x256x128xf32> to vector<256x128xf32>
    %2 = arith.truncf %1 : vector<256x128xf32> to vector<256x128xbf16>
    %c0_2 = arith.constant 0 : index
    %c0_3 = arith.constant 0 : index
    %3 = vector.load %arg2[%c0_2, %c0_3] : memref<128x128xbf16, #tpu.memory_space<vmem>>, vector<128x128xbf16>
    %cst = arith.constant dense<0.000000e+00> : vector<256x128xf32>
    %4 = tpu.matmul %2, %3, %cst {dimension_numbers = #tpu.dot_dimension_numbers<[1], [0], [0], [1], [0, 0, 1, 1], [], []>} : vector<256x128xbf16>, vector<128x128xbf16>, vector<256x128xf32> -> vector<256x128xf32>
    %c0_4 = arith.constant 0 : index
    %c0_5 = arith.constant 0 : index
    %5 = vector.load %arg3[%c0_4, %c0_5] : memref<1x128xf32, #tpu.memory_space<vmem>>, vector<1x128xf32>
    %6 = vector.broadcast %5 : vector<1x128xf32> to vector<256x128xf32>
    %7 = arith.addf %4, %6 : vector<256x128xf32>
    %cst_6 = arith.constant 0.000000e+00 : f32
    %8 = vector.broadcast %cst_6 : f32 to vector<256x128xf32>
    %9 = arith.maximumf %7, %8 : vector<256x128xf32>
    %10 = arith.truncf %9 : vector<256x128xf32> to vector<256x128xbf16>
    %cst_7 = arith.constant 0.000000e+00 : bf16
    %11 = vector.broadcast %cst_7 : bf16 to vector<18x18x128xbf16>
    %c0_8 = arith.constant 0 : index
    %c0_9 = arith.constant 0 : index
    %c0_10 = arith.constant 0 : index
    %12 = vector.load %arg9[%c0_8, %c0_9, %c0_10] : memref<18x18x128xbf16, #tpu.memory_space<vmem>>, vector<18x18x128xbf16>
    tpu.vector_store %arg9[%c0_8, %c0_9, %c0_10], %11 {strides = array<i32>} : memref<18x18x128xbf16, #tpu.memory_space<vmem>>, vector<18x18x128xbf16>,
    %13 = vector.shape_cast %10 : vector<256x128xbf16> to vector<16x16x128xbf16>
    %c1 = arith.constant 1 : index
    %c1_11 = arith.constant 1 : index
    %c0_12 = arith.constant 0 : index
    %14 = vector.load %arg9[%c1, %c1_11, %c0_12] : memref<18x18x128xbf16, #tpu.memory_space<vmem>>, vector<16x16x128xbf16>
    tpu.vector_store %arg9[%c1, %c1_11, %c0_12], %13 {strides = array<i32>} : memref<18x18x128xbf16, #tpu.memory_space<vmem>>, vector<16x16x128xbf16>,
    %cst_13 = arith.constant 0.000000e+00 : f32
    %15 = vector.broadcast %cst_13 : f32 to vector<256x128xf32>
    %c0_14 = arith.constant 0 : index
    %c0_15 = arith.constant 0 : index
    %16 = vector.load %arg10[%c0_14, %c0_15] : memref<256x128xf32, #tpu.memory_space<vmem>>, vector<256x128xf32>
    tpu.vector_store %arg10[%c0_14, %c0_15], %15 {strides = array<i32>} : memref<256x128xf32, #tpu.memory_space<vmem>>, vector<256x128xf32>,
    %c0_16 = arith.constant 0 : index
    %c0_17 = arith.constant 0 : index
    %c0_18 = arith.constant 0 : index
    %17 = vector.load %arg9[%c0_16, %c0_17, %c0_18] : memref<18x18x128xbf16, #tpu.memory_space<vmem>>, vector<16x16x128xbf16>
    %18 = vector.shape_cast %17 : vector<16x16x128xbf16> to vector<256x128xbf16>
    %c0_19 = arith.constant 0 : index
    %c0_20 = arith.constant 0 : index
    %19 = vector.load %arg10[%c0_19, %c0_20] : memref<256x128xf32, #tpu.memory_space<vmem>>, vector<256x128xf32>
    %c0_21 = arith.constant 0 : index
    %c0_22 = arith.constant 0 : index
    %c0_23 = arith.constant 0 : index
    %20 = vector.load %arg4[%c0_21, %c0_22, %c0_23] : memref<9x128x128xbf16, #tpu.memory_space<vmem>>, vector<1x128x128xbf16>
    %21 = vector.shape_cast %20 : vector<1x128x128xbf16> to vector<128x128xbf16>
    %cst_24 = arith.constant dense<0.000000e+00> : vector<256x128xf32>
    %22 = tpu.matmul %18, %21, %cst_24 {dimension_numbers = #tpu.dot_dimension_numbers<[1], [0], [0], [1], [0, 0, 1, 1], [], []>} : vector<256x128xbf16>, vector<128x128xbf16>, vector<256x128xf32> -> vector<256x128xf32>
    %23 = arith.addf %19, %22 : vector<256x128xf32>
    %c0_25 = arith.constant 0 : index
    %c0_26 = arith.constant 0 : index
    %24 = vector.load %arg10[%c0_25, %c0_26] : memref<256x128xf32, #tpu.memory_space<vmem>>, vector<256x128xf32>
    tpu.vector_store %arg10[%c0_25, %c0_26], %23 {strides = array<i32>} : memref<256x128xf32, #tpu.memory_space<vmem>>, vector<256x128xf32>,
    %c0_27 = arith.constant 0 : index
    %c1_28 = arith.constant 1 : index
    %c0_29 = arith.constant 0 : index
    %25 = vector.load %arg9[%c0_27, %c1_28, %c0_29] : memref<18x18x128xbf16, #tpu.memory_space<vmem>>, vector<16x16x128xbf16>
    %26 = vector.shape_cast %25 : vector<16x16x128xbf16> to vector<256x128xbf16>
    %c0_30 = arith.constant 0 : index
    %c0_31 = arith.constant 0 : index
    %27 = vector.load %arg10[%c0_30, %c0_31] : memref<256x128xf32, #tpu.memory_space<vmem>>, vector<256x128xf32>
    %c1_32 = arith.constant 1 : index
    %c0_33 = arith.constant 0 : index
    %c0_34 = arith.constant 0 : index
    %28 = vector.load %arg4[%c1_32, %c0_33, %c0_34] : memref<9x128x128xbf16, #tpu.memory_space<vmem>>, vector<1x128x128xbf16>
    %29 = vector.shape_cast %28 : vector<1x128x128xbf16> to vector<128x128xbf16>
    %cst_35 = arith.constant dense<0.000000e+00> : vector<256x128xf32>
    %30 = tpu.matmul %26, %29, %cst_35 {dimension_numbers = #tpu.dot_dimension_numbers<[1], [0], [0], [1], [0, 0, 1, 1], [], []>} : vector<256x128xbf16>, vector<128x128xbf16>, vector<256x128xf32> -> vector<256x128xf32>
    %31 = arith.addf %27, %30 : vector<256x128xf32>
    %c0_36 = arith.constant 0 : index
    %c0_37 = arith.constant 0 : index
    %32 = vector.load %arg10[%c0_36, %c0_37] : memref<256x128xf32, #tpu.memory_space<vmem>>, vector<256x128xf32>
    tpu.vector_store %arg10[%c0_36, %c0_37], %31 {strides = array<i32>} : memref<256x128xf32, #tpu.memory_space<vmem>>, vector<256x128xf32>,
    %c0_38 = arith.constant 0 : index
    %c2 = arith.constant 2 : index
    %c0_39 = arith.constant 0 : index
    %33 = vector.load %arg9[%c0_38, %c2, %c0_39] : memref<18x18x128xbf16, #tpu.memory_space<vmem>>, vector<16x16x128xbf16>
    %34 = vector.shape_cast %33 : vector<16x16x128xbf16> to vector<256x128xbf16>
    %c0_40 = arith.constant 0 : index
    %c0_41 = arith.constant 0 : index
    %35 = vector.load %arg10[%c0_40, %c0_41] : memref<256x128xf32, #tpu.memory_space<vmem>>, vector<256x128xf32>
    %c2_42 = arith.constant 2 : index
    %c0_43 = arith.constant 0 : index
    %c0_44 = arith.constant 0 : index
    %36 = vector.load %arg4[%c2_42, %c0_43, %c0_44] : memref<9x128x128xbf16, #tpu.memory_space<vmem>>, vector<1x128x128xbf16>
    %37 = vector.shape_cast %36 : vector<1x128x128xbf16> to vector<128x128xbf16>
    %cst_45 = arith.constant dense<0.000000e+00> : vector<256x128xf32>
    %38 = tpu.matmul %34, %37, %cst_45 {dimension_numbers = #tpu.dot_dimension_numbers<[1], [0], [0], [1], [0, 0, 1, 1], [], []>} : vector<256x128xbf16>, vector<128x128xbf16>, vector<256x128xf32> -> vector<256x128xf32>
    %39 = arith.addf %35, %38 : vector<256x128xf32>
    %c0_46 = arith.constant 0 : index
    %c0_47 = arith.constant 0 : index
    %40 = vector.load %arg10[%c0_46, %c0_47] : memref<256x128xf32, #tpu.memory_space<vmem>>, vector<256x128xf32>
    tpu.vector_store %arg10[%c0_46, %c0_47], %39 {strides = array<i32>} : memref<256x128xf32, #tpu.memory_space<vmem>>, vector<256x128xf32>,
    %c1_48 = arith.constant 1 : index
    %c0_49 = arith.constant 0 : index
    %c0_50 = arith.constant 0 : index
    %41 = vector.load %arg9[%c1_48, %c0_49, %c0_50] : memref<18x18x128xbf16, #tpu.memory_space<vmem>>, vector<16x16x128xbf16>
    %42 = vector.shape_cast %41 : vector<16x16x128xbf16> to vector<256x128xbf16>
    %c0_51 = arith.constant 0 : index
    %c0_52 = arith.constant 0 : index
    %43 = vector.load %arg10[%c0_51, %c0_52] : memref<256x128xf32, #tpu.memory_space<vmem>>, vector<256x128xf32>
    %c3 = arith.constant 3 : index
    %c0_53 = arith.constant 0 : index
    %c0_54 = arith.constant 0 : index
    %44 = vector.load %arg4[%c3, %c0_53, %c0_54] : memref<9x128x128xbf16, #tpu.memory_space<vmem>>, vector<1x128x128xbf16>
    %45 = vector.shape_cast %44 : vector<1x128x128xbf16> to vector<128x128xbf16>
    %cst_55 = arith.constant dense<0.000000e+00> : vector<256x128xf32>
    %46 = tpu.matmul %42, %45, %cst_55 {dimension_numbers = #tpu.dot_dimension_numbers<[1], [0], [0], [1], [0, 0, 1, 1], [], []>} : vector<256x128xbf16>, vector<128x128xbf16>, vector<256x128xf32> -> vector<256x128xf32>
    %47 = arith.addf %43, %46 : vector<256x128xf32>
    %c0_56 = arith.constant 0 : index
    %c0_57 = arith.constant 0 : index
    %48 = vector.load %arg10[%c0_56, %c0_57] : memref<256x128xf32, #tpu.memory_space<vmem>>, vector<256x128xf32>
    tpu.vector_store %arg10[%c0_56, %c0_57], %47 {strides = array<i32>} : memref<256x128xf32, #tpu.memory_space<vmem>>, vector<256x128xf32>,
    %c1_58 = arith.constant 1 : index
    %c1_59 = arith.constant 1 : index
    %c0_60 = arith.constant 0 : index
    %49 = vector.load %arg9[%c1_58, %c1_59, %c0_60] : memref<18x18x128xbf16, #tpu.memory_space<vmem>>, vector<16x16x128xbf16>
    %50 = vector.shape_cast %49 : vector<16x16x128xbf16> to vector<256x128xbf16>
    %c0_61 = arith.constant 0 : index
    %c0_62 = arith.constant 0 : index
    %51 = vector.load %arg10[%c0_61, %c0_62] : memref<256x128xf32, #tpu.memory_space<vmem>>, vector<256x128xf32>
    %c4 = arith.constant 4 : index
    %c0_63 = arith.constant 0 : index
    %c0_64 = arith.constant 0 : index
    %52 = vector.load %arg4[%c4, %c0_63, %c0_64] : memref<9x128x128xbf16, #tpu.memory_space<vmem>>, vector<1x128x128xbf16>
    %53 = vector.shape_cast %52 : vector<1x128x128xbf16> to vector<128x128xbf16>
    %cst_65 = arith.constant dense<0.000000e+00> : vector<256x128xf32>
    %54 = tpu.matmul %50, %53, %cst_65 {dimension_numbers = #tpu.dot_dimension_numbers<[1], [0], [0], [1], [0, 0, 1, 1], [], []>} : vector<256x128xbf16>, vector<128x128xbf16>, vector<256x128xf32> -> vector<256x128xf32>
    %55 = arith.addf %51, %54 : vector<256x128xf32>
    %c0_66 = arith.constant 0 : index
    %c0_67 = arith.constant 0 : index
    %56 = vector.load %arg10[%c0_66, %c0_67] : memref<256x128xf32, #tpu.memory_space<vmem>>, vector<256x128xf32>
    tpu.vector_store %arg10[%c0_66, %c0_67], %55 {strides = array<i32>} : memref<256x128xf32, #tpu.memory_space<vmem>>, vector<256x128xf32>,
    %c1_68 = arith.constant 1 : index
    %c2_69 = arith.constant 2 : index
    %c0_70 = arith.constant 0 : index
    %57 = vector.load %arg9[%c1_68, %c2_69, %c0_70] : memref<18x18x128xbf16, #tpu.memory_space<vmem>>, vector<16x16x128xbf16>
    %58 = vector.shape_cast %57 : vector<16x16x128xbf16> to vector<256x128xbf16>
    %c0_71 = arith.constant 0 : index
    %c0_72 = arith.constant 0 : index
    %59 = vector.load %arg10[%c0_71, %c0_72] : memref<256x128xf32, #tpu.memory_space<vmem>>, vector<256x128xf32>
    %c5 = arith.constant 5 : index
    %c0_73 = arith.constant 0 : index
    %c0_74 = arith.constant 0 : index
    %60 = vector.load %arg4[%c5, %c0_73, %c0_74] : memref<9x128x128xbf16, #tpu.memory_space<vmem>>, vector<1x128x128xbf16>
    %61 = vector.shape_cast %60 : vector<1x128x128xbf16> to vector<128x128xbf16>
    %cst_75 = arith.constant dense<0.000000e+00> : vector<256x128xf32>
    %62 = tpu.matmul %58, %61, %cst_75 {dimension_numbers = #tpu.dot_dimension_numbers<[1], [0], [0], [1], [0, 0, 1, 1], [], []>} : vector<256x128xbf16>, vector<128x128xbf16>, vector<256x128xf32> -> vector<256x128xf32>
    %63 = arith.addf %59, %62 : vector<256x128xf32>
    %c0_76 = arith.constant 0 : index
    %c0_77 = arith.constant 0 : index
    %64 = vector.load %arg10[%c0_76, %c0_77] : memref<256x128xf32, #tpu.memory_space<vmem>>, vector<256x128xf32>
    tpu.vector_store %arg10[%c0_76, %c0_77], %63 {strides = array<i32>} : memref<256x128xf32, #tpu.memory_space<vmem>>, vector<256x128xf32>,
    %c2_78 = arith.constant 2 : index
    %c0_79 = arith.constant 0 : index
    %c0_80 = arith.constant 0 : index
    %65 = vector.load %arg9[%c2_78, %c0_79, %c0_80] : memref<18x18x128xbf16, #tpu.memory_space<vmem>>, vector<16x16x128xbf16>
    %66 = vector.shape_cast %65 : vector<16x16x128xbf16> to vector<256x128xbf16>
    %c0_81 = arith.constant 0 : index
    %c0_82 = arith.constant 0 : index
    %67 = vector.load %arg10[%c0_81, %c0_82] : memref<256x128xf32, #tpu.memory_space<vmem>>, vector<256x128xf32>
    %c6 = arith.constant 6 : index
    %c0_83 = arith.constant 0 : index
    %c0_84 = arith.constant 0 : index
    %68 = vector.load %arg4[%c6, %c0_83, %c0_84] : memref<9x128x128xbf16, #tpu.memory_space<vmem>>, vector<1x128x128xbf16>
    %69 = vector.shape_cast %68 : vector<1x128x128xbf16> to vector<128x128xbf16>
    %cst_85 = arith.constant dense<0.000000e+00> : vector<256x128xf32>
    %70 = tpu.matmul %66, %69, %cst_85 {dimension_numbers = #tpu.dot_dimension_numbers<[1], [0], [0], [1], [0, 0, 1, 1], [], []>} : vector<256x128xbf16>, vector<128x128xbf16>, vector<256x128xf32> -> vector<256x128xf32>
    %71 = arith.addf %67, %70 : vector<256x128xf32>
    %c0_86 = arith.constant 0 : index
    %c0_87 = arith.constant 0 : index
    %72 = vector.load %arg10[%c0_86, %c0_87] : memref<256x128xf32, #tpu.memory_space<vmem>>, vector<256x128xf32>
    tpu.vector_store %arg10[%c0_86, %c0_87], %71 {strides = array<i32>} : memref<256x128xf32, #tpu.memory_space<vmem>>, vector<256x128xf32>,
    %c2_88 = arith.constant 2 : index
    %c1_89 = arith.constant 1 : index
    %c0_90 = arith.constant 0 : index
    %73 = vector.load %arg9[%c2_88, %c1_89, %c0_90] : memref<18x18x128xbf16, #tpu.memory_space<vmem>>, vector<16x16x128xbf16>
    %74 = vector.shape_cast %73 : vector<16x16x128xbf16> to vector<256x128xbf16>
    %c0_91 = arith.constant 0 : index
    %c0_92 = arith.constant 0 : index
    %75 = vector.load %arg10[%c0_91, %c0_92] : memref<256x128xf32, #tpu.memory_space<vmem>>, vector<256x128xf32>
    %c7 = arith.constant 7 : index
    %c0_93 = arith.constant 0 : index
    %c0_94 = arith.constant 0 : index
    %76 = vector.load %arg4[%c7, %c0_93, %c0_94] : memref<9x128x128xbf16, #tpu.memory_space<vmem>>, vector<1x128x128xbf16>
    %77 = vector.shape_cast %76 : vector<1x128x128xbf16> to vector<128x128xbf16>
    %cst_95 = arith.constant dense<0.000000e+00> : vector<256x128xf32>
    %78 = tpu.matmul %74, %77, %cst_95 {dimension_numbers = #tpu.dot_dimension_numbers<[1], [0], [0], [1], [0, 0, 1, 1], [], []>} : vector<256x128xbf16>, vector<128x128xbf16>, vector<256x128xf32> -> vector<256x128xf32>
    %79 = arith.addf %75, %78 : vector<256x128xf32>
    %c0_96 = arith.constant 0 : index
    %c0_97 = arith.constant 0 : index
    %80 = vector.load %arg10[%c0_96, %c0_97] : memref<256x128xf32, #tpu.memory_space<vmem>>, vector<256x128xf32>
    tpu.vector_store %arg10[%c0_96, %c0_97], %79 {strides = array<i32>} : memref<256x128xf32, #tpu.memory_space<vmem>>, vector<256x128xf32>,
    %c2_98 = arith.constant 2 : index
    %c2_99 = arith.constant 2 : index
    %c0_100 = arith.constant 0 : index
    %81 = vector.load %arg9[%c2_98, %c2_99, %c0_100] : memref<18x18x128xbf16, #tpu.memory_space<vmem>>, vector<16x16x128xbf16>
    %82 = vector.shape_cast %81 : vector<16x16x128xbf16> to vector<256x128xbf16>
    %c0_101 = arith.constant 0 : index
    %c0_102 = arith.constant 0 : index
    %83 = vector.load %arg10[%c0_101, %c0_102] : memref<256x128xf32, #tpu.memory_space<vmem>>, vector<256x128xf32>
    %c8 = arith.constant 8 : index
    %c0_103 = arith.constant 0 : index
    %c0_104 = arith.constant 0 : index
    %84 = vector.load %arg4[%c8, %c0_103, %c0_104] : memref<9x128x128xbf16, #tpu.memory_space<vmem>>, vector<1x128x128xbf16>
    %85 = vector.shape_cast %84 : vector<1x128x128xbf16> to vector<128x128xbf16>
    %cst_105 = arith.constant dense<0.000000e+00> : vector<256x128xf32>
    %86 = tpu.matmul %82, %85, %cst_105 {dimension_numbers = #tpu.dot_dimension_numbers<[1], [0], [0], [1], [0, 0, 1, 1], [], []>} : vector<256x128xbf16>, vector<128x128xbf16>, vector<256x128xf32> -> vector<256x128xf32>
    %87 = arith.addf %83, %86 : vector<256x128xf32>
    %c0_106 = arith.constant 0 : index
    %c0_107 = arith.constant 0 : index
    %88 = vector.load %arg10[%c0_106, %c0_107] : memref<256x128xf32, #tpu.memory_space<vmem>>, vector<256x128xf32>
    tpu.vector_store %arg10[%c0_106, %c0_107], %87 {strides = array<i32>} : memref<256x128xf32, #tpu.memory_space<vmem>>, vector<256x128xf32>,
    %c0_108 = arith.constant 0 : index
    %c0_109 = arith.constant 0 : index
    %89 = vector.load %arg10[%c0_108, %c0_109] : memref<256x128xf32, #tpu.memory_space<vmem>>, vector<256x128xf32>
    %c0_110 = arith.constant 0 : index
    %c0_111 = arith.constant 0 : index
    %90 = vector.load %arg5[%c0_110, %c0_111] : memref<1x128xf32, #tpu.memory_space<vmem>>, vector<1x128xf32>
    %91 = vector.broadcast %90 : vector<1x128xf32> to vector<256x128xf32>
    %92 = arith.addf %89, %91 : vector<256x128xf32>
    %cst_112 = arith.constant 0.000000e+00 : f32
    %93 = vector.broadcast %cst_112 : f32 to vector<256x128xf32>
    %94 = arith.maximumf %92, %93 : vector<256x128xf32>
    %95 = arith.truncf %94 : vector<256x128xf32> to vector<256x128xbf16>
    %c0_113 = arith.constant 0 : index
    %c0_114 = arith.constant 0 : index
    %96 = vector.load %arg6[%c0_113, %c0_114] : memref<128x128xbf16, #tpu.memory_space<vmem>>, vector<128x128xbf16>
    %cst_115 = arith.constant dense<0.000000e+00> : vector<256x128xf32>
    %97 = tpu.matmul %95, %96, %cst_115 {dimension_numbers = #tpu.dot_dimension_numbers<[1], [0], [0], [1], [0, 0, 1, 1], [], []>} : vector<256x128xbf16>, vector<128x128xbf16>, vector<256x128xf32> -> vector<256x128xf32>
    %c0_116 = arith.constant 0 : index
    %c0_117 = arith.constant 0 : index
    %98 = vector.load %arg7[%c0_116, %c0_117] : memref<1x128xf32, #tpu.memory_space<vmem>>, vector<1x128xf32>
    %99 = vector.broadcast %98 : vector<1x128xf32> to vector<256x128xf32>
    %100 = arith.addf %97, %99 : vector<256x128xf32>
    %101 = arith.addf %100, %1 : vector<256x128xf32>
    %cst_118 = arith.constant 0.000000e+00 : f32
    %102 = vector.broadcast %cst_118 : f32 to vector<256x128xf32>
    %103 = arith.maximumf %101, %102 : vector<256x128xf32>
    %c0_119 = arith.constant 0 : index
    %c0_120 = arith.constant 0 : index
    %c0_121 = arith.constant 0 : index
    %104 = vector.load %arg8[%c0_119, %c0_120, %c0_121] : memref<1x256x128xf32, #tpu.memory_space<vmem>>, vector<1x256x128xf32>
    %105 = vector.shape_cast %104 : vector<1x256x128xf32> to vector<256x128xf32>
    %106 = vector.shape_cast %103 : vector<256x128xf32> to vector<1x256x128xf32>
    tpu.vector_store %arg8[%c0_119, %c0_120, %c0_121], %106 {strides = array<i32>} : memref<1x256x128xf32, #tpu.memory_space<vmem>>, vector<1x256x128xf32>,
    return
  }
  func.func @transform_0(%arg0: i32) -> (i32, i32, i32) {
    %c0_i32 = arith.constant 0 : i32
    %c0_i32_0 = arith.constant 0 : i32
    %c0_i32_1 = arith.constant 0 : i32
    return %arg0, %c0_i32, %c0_i32_0 : i32, i32, i32
  }
  func.func @transform_1(%arg0: i32) -> (i32, i32) {
    %c0_i32 = arith.constant 0 : i32
    %c0_i32_0 = arith.constant 0 : i32
    %c0_i32_1 = arith.constant 0 : i32
    return %c0_i32, %c0_i32_0 : i32, i32
  }
  func.func @transform_2(%arg0: i32) -> (i32, i32) {
    %c0_i32 = arith.constant 0 : i32
    %c0_i32_0 = arith.constant 0 : i32
    %c0_i32_1 = arith.constant 0 : i32
    return %c0_i32, %c0_i32_0 : i32, i32
  }
  func.func @transform_3(%arg0: i32) -> (i32, i32, i32) {
    %c0_i32 = arith.constant 0 : i32
    %c0_i32_0 = arith.constant 0 : i32
    %c0_i32_1 = arith.constant 0 : i32
    %c0_i32_2 = arith.constant 0 : i32
    return %c0_i32, %c0_i32_0, %c0_i32_1 : i32, i32, i32
  }
  func.func @transform_4(%arg0: i32) -> (i32, i32) {
    %c0_i32 = arith.constant 0 : i32
    %c0_i32_0 = arith.constant 0 : i32
    %c0_i32_1 = arith.constant 0 : i32
    return %c0_i32, %c0_i32_0 : i32, i32
  }
  func.func @transform_5(%arg0: i32) -> (i32, i32) {
    %c0_i32 = arith.constant 0 : i32
    %c0_i32_0 = arith.constant 0 : i32
    %c0_i32_1 = arith.constant 0 : i32
    return %c0_i32, %c0_i32_0 : i32, i32
  }
  func.func @transform_6(%arg0: i32) -> (i32, i32) {
    %c0_i32 = arith.constant 0 : i32
    %c0_i32_0 = arith.constant 0 : i32
    %c0_i32_1 = arith.constant 0 : i32
    return %c0_i32, %c0_i32_0 : i32, i32
  }
  func.func @transform_7(%arg0: i32) -> (i32, i32, i32) {
    %c0_i32 = arith.constant 0 : i32
    %c0_i32_0 = arith.constant 0 : i32
    %c0_i32_1 = arith.constant 0 : i32
    return %arg0, %c0_i32, %c0_i32_0 : i32, i32, i32
  }
}

</mosaic_0001>

<llo_original>
// kernel: _lambda_.1
$region0: #{_lambda_.1}
  #allocation0 [shape = 'u32[]', space=smem, size = 0x4, offset = 0x4, fixed_abs, tag = 'smem constant byte address 0x4 - core index']
  #allocation1 [shape = 'u32[144,128]{1,0:T(1,128)}', space=vmem, size = 0x12000, scoped, tag = 'internal scratch']
  #allocation2 [shape = 'bf16[18,18,128]{2,1,0:T(8,128)(2,1)}', space=vmem, size = 0x1b000, scoped, tag = 'scratch operand']
  #allocation3 [shape = 'f32[256,128]{1,0:T(8,128)}', space=vmem, size = 0x20000, scoped, tag = 'scratch operand']
  %s0 = inlined_call_operand.vmem [shape: f32[2,256,128], index: 0, kind: input, shape index: {}]
  %s1 = inlined_call_operand.vmem [shape: bf16[128,128], index: 1, kind: input, shape index: {}]
  %s2 = inlined_call_operand.vmem [shape: f32[1,128], index: 2, kind: input, shape index: {}]
  %s3 = inlined_call_operand.vmem [shape: bf16[9,128,128], index: 3, kind: input, shape index: {}]
  %s4 = inlined_call_operand.vmem [shape: f32[1,128], index: 4, kind: input, shape index: {}]
  %s5 = inlined_call_operand.vmem [shape: bf16[128,128], index: 5, kind: input, shape index: {}]
  %s6 = inlined_call_operand.vmem [shape: f32[1,128], index: 6, kind: input, shape index: {}]
  %s7 = inlined_call_operand.hbm [shape: f32[2,256,128], index: 7, kind: output, shape index: {}]
  %s8 = sld [smem:[#allocation0]]
  $region61: #{_lambda_.1} parent=0
    _
  %s10 = ssub.s32 1, %s8
  %s11 = scalar_select 0, %s10, %s8
  $region1: #{_lambda_.1} parent=0
    #allocation4 [shape = 'u8[262144]{0}', space=vmem, size = 0x40000, scoped, tag = 'output window, operand 0']
    #allocation5 [shape = 's32[2]{0}', space=sflag, size = 0x8, scoped, tag = 'scoped memory for _lambda_.1']
    %12 = vsyncpa [#allocation5], 0
    %s13 = scalar_lea.sflag [#allocation5], 1
    %14 = vsyncpa %s13, 0
    loop: start=0, step=1, limit=4
    $region2: #{_lambda_.1} parent=1 // loop_pre_header
      _
    $region3: #{_lambda_.1} parent=1 // loop_header
      %s16 = sphi 0, %s20
      %p17 = scmp.ge.s32.totalorder %s16, 4
      %s26 = sphi 0, %s28
      %s29 = sphi 0, %s26
      %s30 = sphi 0, %s29
      %s46 = sphi 0, %s30
      %s50 = sphi 0, %s50
      %s52 = sphi 0, %s50
      %s53 = sphi 0, %s52
      %s67 = sphi 0, %s53
      %s71 = sphi 0, %s71
      %s73 = sphi 0, %s71
      %s74 = sphi 0, %s73
      %s88 = sphi 0, %s74
      %s92 = sphi 0, %s92
      %s94 = sphi 0, %s92
      %s95 = sphi 0, %s94
      %s109 = sphi 0, %s95
      %s113 = sphi 0, %s113
      %s115 = sphi 0, %s113
      %s116 = sphi 0, %s115
      %s130 = sphi 0, %s116
      %s134 = sphi 0, %s134
      %s136 = sphi 0, %s134
      %s137 = sphi 0, %s136
      %s151 = sphi 0, %s137
      %s155 = sphi 0, %s155
      %s157 = sphi 0, %s155
      %s158 = sphi 0, %s157
      %s172 = sphi 0, %s158
      %s178 = sphi 0, %s180
      %s181 = sphi 0, %s178
      %s182 = sphi 0, %s181
      %s198 = sphi 0, %s182
    $region4: #{_lambda_.1} parent=1 // loop_header_branch
      %19 = sbr.rel (%p17) target = $region8
    $region5: #{_lambda_.1} parent=1 // loop_body
      %s21 = ssub.s32 %s16, 1
      %s22 = ssub.s32 %s16, 2
      %s23 = sadd.s32 %s16, 1
      %s24 = ssub.s32 %s16, %s23
      %p25 = scmp.eq.s32.totalorder %s24, 0
      %s27 = sadd.s32 %s26, 1
      %s28 = scalar_select %p25, %s26, %s27
      %p31 = pneg %p25
      %p32 = scmp.eq.s32.totalorder %s16, 1
      %p33 = por %p31, %p32
      %p34 = scmp.ne.s32.totalorder %s26, %s29
      %p35 = scmp.eq.s32.totalorder %s16, 0
      %p36 = por %p34, %p35
      %p37 = scmp.ne.s32.totalorder %s26, %s29
      %p38 = scmp.eq.s32.totalorder %s21, 1
      %p39 = por %p37, %p38
      %p40 = scmp.ne.s32.totalorder %s29, %s30
      %p41 = scmp.eq.s32.totalorder %s21, 0
      %p42 = por %p40, %p41
      %p43 = scmp.ne.s32.totalorder %s29, %s30
      %p44 = scmp.eq.s32.totalorder %s22, 1
      %p45 = por %p43, %p44
      %p47 = scmp.ne.s32.totalorder %s30, %s46
      %p48 = scmp.eq.s32.totalorder %s22, 0
      %p49 = por %p47, %p48
      %s51 = sadd.s32 %s50, 1
      %p54 = scmp.eq.s32.totalorder %s16, 1
      %p55 = scmp.ne.s32.totalorder %s50, %s52
      %p56 = scmp.eq.s32.totalorder %s16, 0
      %p57 = por %p55, %p56
      %p58 = scmp.ne.s32.totalorder %s50, %s52
      %p59 = scmp.eq.s32.totalorder %s21, 1
      %p60 = por %p58, %p59
      %p61 = scmp.ne.s32.totalorder %s52, %s53
      %p62 = scmp.eq.s32.totalorder %s21, 0
      %p63 = por %p61, %p62
      %p64 = scmp.ne.s32.totalorder %s52, %s53
      %p65 = scmp.eq.s32.totalorder %s22, 1
      %p66 = por %p64, %p65
      %p68 = scmp.ne.s32.totalorder %s53, %s67
      %p69 = scmp.eq.s32.totalorder %s22, 0
      %p70 = por %p68, %p69
      %s72 = sadd.s32 %s71, 1
      %p75 = scmp.eq.s32.totalorder %s16, 1
      %p76 = scmp.ne.s32.totalorder %s71, %s73
      %p77 = scmp.eq.s32.totalorder %s16, 0
      %p78 = por %p76, %p77
      %p79 = scmp.ne.s32.totalorder %s71, %s73
      %p80 = scmp.eq.s32.totalorder %s21, 1
      %p81 = por %p79, %p80
      %p82 = scmp.ne.s32.totalorder %s73, %s74
      %p83 = scmp.eq.s32.totalorder %s21, 0
      %p84 = por %p82, %p83
      %p85 = scmp.ne.s32.totalorder %s73, %s74
      %p86 = scmp.eq.s32.totalorder %s22, 1
      %p87 = por %p85, %p86
      %p89 = scmp.ne.s32.totalorder %s74, %s88
      %p90 = scmp.eq.s32.totalorder %s22, 0
      %p91 = por %p89, %p90
      %s93 = sadd.s32 %s92, 1
      %p96 = scmp.eq.s32.totalorder %s16, 1
      %p97 = scmp.ne.s32.totalorder %s92, %s94
      %p98 = scmp.eq.s32.totalorder %s16, 0
      %p99 = por %p97, %p98
      %p100 = scmp.ne.s32.totalorder %s92, %s94
      %p101 = scmp.eq.s32.totalorder %s21, 1
      %p102 = por %p100, %p101
      %p103 = scmp.ne.s32.totalorder %s94, %s95
      %p104 = scmp.eq.s32.totalorder %s21, 0
      %p105 = por %p103, %p104
      %p106 = scmp.ne.s32.totalorder %s94, %s95
      %p107 = scmp.eq.s32.totalorder %s22, 1
      %p108 = por %p106, %p107
      %p110 = scmp.ne.s32.totalorder %s95, %s109
      %p111 = scmp.eq.s32.totalorder %s22, 0
      %p112 = por %p110, %p111
      %s114 = sadd.s32 %s113, 1
      %p117 = scmp.eq.s32.totalorder %s16, 1
      %p118 = scmp.ne.s32.totalorder %s113, %s115
      %p119 = scmp.eq.s32.totalorder %s16, 0
      %p120 = por %p118, %p119
      %p121 = scmp.ne.s32.totalorder %s113, %s115
      %p122 = scmp.eq.s32.totalorder %s21, 1
      %p123 = por %p121, %p122
      %p124 = scmp.ne.s32.totalorder %s115, %s116
      %p125 = scmp.eq.s32.totalorder %s21, 0
      %p126 = por %p124, %p125
      %p127 = scmp.ne.s32.totalorder %s115, %s116
      %p128 = scmp.eq.s32.totalorder %s22, 1
      %p129 = por %p127, %p128
      %p131 = scmp.ne.s32.totalorder %s116, %s130
      %p132 = scmp.eq.s32.totalorder %s22, 0
      %p133 = por %p131, %p132
      %s135 = sadd.s32 %s134, 1
      %p138 = scmp.eq.s32.totalorder %s16, 1
      %p139 = scmp.ne.s32.totalorder %s134, %s136
      %p140 = scmp.eq.s32.totalorder %s16, 0
      %p141 = por %p139, %p140
      %p142 = scmp.ne.s32.totalorder %s134, %s136
      %p143 = scmp.eq.s32.totalorder %s21, 1
      %p144 = por %p142, %p143
      %p145 = scmp.ne.s32.totalorder %s136, %s137
      %p146 = scmp.eq.s32.totalorder %s21, 0
      %p147 = por %p145, %p146
      %p148 = scmp.ne.s32.totalorder %s136, %s137
      %p149 = scmp.eq.s32.totalorder %s22, 1
      %p150 = por %p148, %p149
      %p152 = scmp.ne.s32.totalorder %s137, %s151
      %p153 = scmp.eq.s32.totalorder %s22, 0
      %p154 = por %p152, %p153
      %s156 = sadd.s32 %s155, 1
      %p159 = scmp.eq.s32.totalorder %s16, 1
      %p160 = scmp.ne.s32.totalorder %s155, %s157
      %p161 = scmp.eq.s32.totalorder %s16, 0
      %p162 = por %p160, %p161
      %p163 = scmp.ne.s32.totalorder %s155, %s157
      %p164 = scmp.eq.s32.totalorder %s21, 1
      %p165 = por %p163, %p164
      %p166 = scmp.ne.s32.totalorder %s157, %s158
      %p167 = scmp.eq.s32.totalorder %s21, 0
      %p168 = por %p166, %p167
      %p169 = scmp.ne.s32.totalorder %s157, %s158
      %p170 = scmp.eq.s32.totalorder %s22, 1
      %p171 = por %p169, %p170
      %p173 = scmp.ne.s32.totalorder %s158, %s172
      %p174 = scmp.eq.s32.totalorder %s22, 0
      %p175 = por %p173, %p174
      %s176 = ssub.s32 %s16, %s23
      %p177 = scmp.eq.s32.totalorder %s176, 0
      %s179 = sadd.s32 %s178, 1
      %s180 = scalar_select %p177, %s178, %s179
      %p183 = pneg %p177
      %p184 = scmp.eq.s32.totalorder %s16, 1
      %p185 = por %p183, %p184
      %p186 = scmp.ne.s32.totalorder %s178, %s181
      %p187 = scmp.eq.s32.totalorder %s16, 0
      %p188 = por %p186, %p187
      %p189 = scmp.ne.s32.totalorder %s178, %s181
      %p190 = scmp.eq.s32.totalorder %s21, 1
      %p191 = por %p189, %p190
      %p192 = scmp.ne.s32.totalorder %s181, %s182
      %p193 = scmp.eq.s32.totalorder %s21, 0
      %p194 = por %p192, %p193
      %p195 = scmp.ne.s32.totalorder %s181, %s182
      %p196 = scmp.eq.s32.totalorder %s22, 1
      %p197 = por %p195, %p196
      %p199 = scmp.ne.s32.totalorder %s182, %s198
      %p200 = scmp.eq.s32.totalorder %s22, 0
      %p201 = por %p199, %p200
      %p202 = scmp.le.s32.totalorder 1, %s16
      %p203 = scmp.lt.s32.totalorder %s16, 3
      %p204 = pnand %p202, %p203
      %p205 = pneg %p204
      // Predicated region
      $region9: #{_lambda_.1} parent=5 // pred_check
        _
      $region10: #{_lambda_.1} parent=5 // pred_check_branch
        %207 = sbr.rel (%p204) target = $region12
      $region11: #{_lambda_.1} parent=5 // pred_region
        %s208 = ssub.s32 %s16, 1
        // Predicated region
        $region13: #{_lambda_.1} parent=11 // pred_check
          %p209 = pneg %p63
        $region14: #{_lambda_.1} parent=11 // pred_check_branch
          %211 = sbr.rel (%p209) target = $region16
        $region15: #{_lambda_.1} parent=11 // pred_region
          _
        $region16: #{_lambda_.1} parent=11 // pred_fallthru
          _
        // Predicated region
        $region17: #{_lambda_.1} parent=11 // pred_check
          %p212 = pneg %p84
        $region18: #{_lambda_.1} parent=11 // pred_check_branch
          %214 = sbr.rel (%p212) target = $region20
        $region19: #{_lambda_.1} parent=11 // pred_region
          _
        $region20: #{_lambda_.1} parent=11 // pred_fallthru
          _
        // Predicated region
        $region21: #{_lambda_.1} parent=11 // pred_check
          %p215 = pneg %p105
        $region22: #{_lambda_.1} parent=11 // pred_check_branch
          %217 = sbr.rel (%p215) target = $region24
        $region23: #{_lambda_.1} parent=11 // pred_region
          _
        $region24: #{_lambda_.1} parent=11 // pred_fallthru
          _
        // Predicated region
        $region25: #{_lambda_.1} parent=11 // pred_check
          %p218 = pneg %p126
        $region26: #{_lambda_.1} parent=11 // pred_check_branch
          %220 = sbr.rel (%p218) target = $region28
        $region27: #{_lambda_.1} parent=11 // pred_region
          _
        $region28: #{_lambda_.1} parent=11 // pred_fallthru
          _
        // Predicated region
        $region29: #{_lambda_.1} parent=11 // pred_check
          %p221 = pneg %p147
        $region30: #{_lambda_.1} parent=11 // pred_check_branch
          %223 = sbr.rel (%p221) target = $region32
        $region31: #{_lambda_.1} parent=11 // pred_region
          _
        $region32: #{_lambda_.1} parent=11 // pred_fallthru
          _
        // Predicated region
        $region33: #{_lambda_.1} parent=11 // pred_check
          %p224 = pneg %p168
        $region34: #{_lambda_.1} parent=11 // pred_check_branch
          %226 = sbr.rel (%p224) target = $region36
        $region35: #{_lambda_.1} parent=11 // pred_region
          _
        $region36: #{_lambda_.1} parent=11 // pred_fallthru
          _
      $region12: #{_lambda_.1} parent=5 // pred_fallthru
        _
      %p227 = scmp.lt.s32.totalorder %s16, 2
      // Predicated region
      $region37: #{_lambda_.1} parent=5 // pred_check
        %p228 = pneg %p227
      $region38: #{_lambda_.1} parent=5 // pred_check_branch
        %230 = sbr.rel (%p228) target = $region40
      $region39: #{_lambda_.1} parent=5 // pred_region
        // Predicated region
        $region41: #{_lambda_.1} parent=39 // pred_check
          %p231 = pneg %p36
        $region42: #{_lambda_.1} parent=39 // pred_check_branch
          %233 = sbr.rel (%p231) target = $region44
        $region43: #{_lambda_.1} parent=39 // pred_region
          %p234 = scmp.lt.s32.totalorder %s16, 1
          %s235 = scalar_select %p234, %s16, 1
          %s236 = smul.addr %s235, 32
          %s237 = smul.addr %s236, 8
          %s238 = scalar_lea.vmem %s0, %s237
        $region44: #{_lambda_.1} parent=39 // pred_fallthru
          _
      $region40: #{_lambda_.1} parent=5 // pred_fallthru
        _
      %p239 = scmp.le.s32.totalorder 1, %s16
      %p240 = scmp.lt.s32.totalorder %s16, 3
      %p241 = pnand %p239, %p240
      %p242 = pneg %p241
      // Predicated region
      $region45: #{_lambda_.1} parent=5 // pred_check
        _
      $region46: #{_lambda_.1} parent=5 // pred_check_branch
        %244 = sbr.rel (%p241) target = $region48
      $region47: #{_lambda_.1} parent=5 // pred_region
        %s245 = ssub.s32 %s16, 1
        %p246 = scmp.lt.s32.totalorder %s21, 1
        %s247 = scalar_select %p246, %s21, 1
        %s248 = smul.addr %s247, 32
        %s249 = smul.addr %s248, 8
        %s250 = scalar_lea.vmem %s0, %s249
        %p251 = pneg %p42
        %p252 = pneg %p39
        %p253 = pneg %p63
        %p254 = pneg %p60
        %p255 = pneg %p84
        %p256 = pneg %p81
        %p257 = pneg %p105
        %p258 = pneg %p102
        %p259 = pneg %p126
        %p260 = pneg %p123
        %p261 = pneg %p147
        %p262 = pneg %p144
        %p263 = pneg %p168
        %p264 = pneg %p165
        %p265 = pneg %p194
        %p266 = pneg %p191
        %s267 = sand.u32 %s181, 1
        %s268 = scalar_lea.sflag [#allocation5], %s267
        %s269 = sand.u32 %s181, 1
        %s270 = smul.addr %s269, 256
        %s271 = scalar_lea.vmem [#allocation4], %s270
        %p272 = scmp.lt.s32.totalorder %s21, 1
        %s273 = scalar_select %p272, %s21, 1
        %s274 = smul.addr %s273, 32
        %s275 = smul.addr %s274, 8
        %s276 = scalar_lea.vmem %s0, %s275
        %v278 = vld [vmem:[%s276] sm:$0xff]
        %v279 = vld [vmem:[%s276 + $0x8] sm:$0xff]
        %v280 = vld [vmem:[%s276 + $0x10] sm:$0xff]
        %v281 = vld [vmem:[%s276 + $0x18] sm:$0xff]
        %v282 = vld [vmem:[%s276 + $0x20] sm:$0xff]
        %v283 = vld [vmem:[%s276 + $0x28] sm:$0xff]
        %v284 = vld [vmem:[%s276 + $0x30] sm:$0xff]
        %v285 = vld [vmem:[%s276 + $0x38] sm:$0xff]
        %v286 = vld [vmem:[%s276 + $0x40] sm:$0xff]
        %v287 = vld [vmem:[%s276 + $0x48] sm:$0xff]
        %v288 = vld [vmem:[%s276 + $0x50] sm:$0xff]
        %v289 = vld [vmem:[%s276 + $0x58] sm:$0xff]
        %v290 = vld [vmem:[%s276 + $0x60] sm:$0xff]
        %v291 = vld [vmem:[%s276 + $0x68] sm:$0xff]
        %v292 = vld [vmem:[%s276 + $0x70] sm:$0xff]
        %v293 = vld [vmem:[%s276 + $0x78] sm:$0xff]
        %v294 = vld [vmem:[%s276 + $0x80] sm:$0xff]
        %v295 = vld [vmem:[%s276 + $0x88] sm:$0xff]
        %v296 = vld [vmem:[%s276 + $0x90] sm:$0xff]
        %v297 = vld [vmem:[%s276 + $0x98] sm:$0xff]
        %v298 = vld [vmem:[%s276 + $0xa0] sm:$0xff]
        %v299 = vld [vmem:[%s276 + $0xa8] sm:$0xff]
        %v300 = vld [vmem:[%s276 + $0xb0] sm:$0xff]
        %v301 = vld [vmem:[%s276 + $0xb8] sm:$0xff]
        %v302 = vld [vmem:[%s276 + $0xc0] sm:$0xff]
        %v303 = vld [vmem:[%s276 + $0xc8] sm:$0xff]
        %v304 = vld [vmem:[%s276 + $0xd0] sm:$0xff]
        %v305 = vld [vmem:[%s276 + $0xd8] sm:$0xff]
        %v306 = vld [vmem:[%s276 + $0xe0] sm:$0xff]
        %v307 = vld [vmem:[%s276 + $0xe8] sm:$0xff]
        %v308 = vld [vmem:[%s276 + $0xf0] sm:$0xff]
        %v309 = vld [vmem:[%s276 + $0xf8] sm:$0xff]
        %v310 = vpack.c.bf16 %v279, %v278
        %v311 = vpack.c.bf16 %v281, %v280
        %v312 = vpack.c.bf16 %v283, %v282
        %v313 = vpack.c.bf16 %v285, %v284
        %v314 = vpack.c.bf16 %v287, %v286
        %v315 = vpack.c.bf16 %v289, %v288
        %v316 = vpack.c.bf16 %v291, %v290
        %v317 = vpack.c.bf16 %v293, %v292
        %v318 = vpack.c.bf16 %v295, %v294
        %v319 = vpack.c.bf16 %v297, %v296
        %v320 = vpack.c.bf16 %v299, %v298
        %v321 = vpack.c.bf16 %v301, %v300
        %v322 = vpack.c.bf16 %v303, %v302
        %v323 = vpack.c.bf16 %v305, %v304
        %v324 = vpack.c.bf16 %v307, %v306
        %v325 = vpack.c.bf16 %v309, %v308
        %v326 = vld [vmem:[%s1] sm:$0xf]
        %v327 = vld [vmem:[%s1 + $0x4] sm:$0xf]
        %v328 = vld [vmem:[%s1 + $0x8] sm:$0xf]
        %v329 = vld [vmem:[%s1 + $0xc] sm:$0xf]
        %v330 = vld [vmem:[%s1 + $0x10] sm:$0xf]
        %v331 = vld [vmem:[%s1 + $0x14] sm:$0xf]
        %v332 = vld [vmem:[%s1 + $0x18] sm:$0xf]
        %v333 = vld [vmem:[%s1 + $0x1c] sm:$0xf]
        %v334 = vld [vmem:[%s1 + $0x20] sm:$0xf]
        %v335 = vld [vmem:[%s1 + $0x24] sm:$0xf]
        %v336 = vld [vmem:[%s1 + $0x28] sm:$0xf]
        %v337 = vld [vmem:[%s1 + $0x2c] sm:$0xf]
        %v338 = vld [vmem:[%s1 + $0x30] sm:$0xf]
        %v339 = vld [vmem:[%s1 + $0x34] sm:$0xf]
        %v340 = vld [vmem:[%s1 + $0x38] sm:$0xf]
        %v341 = vld [vmem:[%s1 + $0x3c] sm:$0xf]
        %v342 = vld [vmem:[%s2] sm:$0x1]
        %v344 = vlaneseq
        %v345 = vshrl.u32 %v344, 7
        %v346 = vsub.s32 0, %v345
        %v347 = vrot.slane %v342, %v346
        %v365 = vunpack.c.l.b16 %v326
        %v366 = vunpack.c.l.b16 %v327
        %v367 = vunpack.c.l.b16 %v328
        %v368 = vunpack.c.l.b16 %v329
        %v369 = vunpack.c.l.b16 %v330
        %v370 = vunpack.c.l.b16 %v331
        %v371 = vunpack.c.l.b16 %v332
        %v372 = vunpack.c.l.b16 %v333
        %v373 = vunpack.c.l.b16 %v334
        %v374 = vunpack.c.l.b16 %v335
        %v375 = vunpack.c.l.b16 %v336
        %v376 = vunpack.c.l.b16 %v337
        %v377 = vunpack.c.l.b16 %v338
        %v378 = vunpack.c.l.b16 %v339
        %v379 = vunpack.c.l.b16 %v340
        %v380 = vunpack.c.l.b16 %v341
        %v381 = vpack.c.b16 %v366, %v365
        %v382 = vpack.c.b16 %v368, %v367
        %v383 = vpack.c.b16 %v370, %v369
        %v384 = vpack.c.b16 %v372, %v371
        %v385 = vpack.c.b16 %v374, %v373
        %v386 = vpack.c.b16 %v376, %v375
        %v387 = vpack.c.b16 %v378, %v377
        %v388 = vpack.c.b16 %v380, %v379
        %397 = vmatprep.subr.bf16.mxu0 0
        %398 = vmatpush1.bf16.msra.mxu0 %v381
        %399 = vmatprep.subr.bf16.mxu0 0
        %400 = vmatpush1.bf16.msra.mxu0 %v382
        %401 = vmatprep.subr.bf16.mxu0 0
        %402 = vmatpush1.bf16.msra.mxu0 %v383
        %403 = vmatprep.subr.bf16.mxu0 0
        %404 = vmatpush1.bf16.msra.mxu0 %v384
        %405 = vmatprep.subr.bf16.mxu0 0
        %406 = vmatpush1.bf16.msra.mxu0 %v385
        %407 = vmatprep.subr.bf16.mxu0 0
        %408 = vmatpush1.bf16.msra.mxu0 %v386
        %409 = vmatprep.subr.bf16.mxu0 0
        %410 = vmatpush1.bf16.msra.mxu0 %v387
        %411 = vmatprep.subr.bf16.mxu0 0
        %412 = vmatpush1.bf16.msra.mxu0 %v388
        %413 = vmatprep.subr.bf16.mxu0 0
        %414 = vmatpush1.bf16.msra.mxu0 0
        %415 = vmatprep.subr.bf16.mxu0 0
        %416 = vmatpush1.bf16.msra.mxu0 0
        %417 = vmatprep.subr.bf16.mxu0 0
        %418 = vmatpush1.bf16.msra.mxu0 0
        %419 = vmatprep.subr.bf16.mxu0 0
        %420 = vmatpush1.bf16.msra.mxu0 0
        %421 = vmatprep.subr.bf16.mxu0 0
        %422 = vmatpush1.bf16.msra.mxu0 0
        %423 = vmatprep.subr.bf16.mxu0 0
        %424 = vmatpush1.bf16.msra.mxu0 0
        %425 = vmatprep.subr.bf16.mxu0 0
        %426 = vmatpush1.bf16.msra.mxu0 0
        %427 = vmatprep.subr.bf16.mxu0 0
        %428 = vmatpush1.bf16.msra.mxu0 0
        %429 = vmatprep.mubr.bf16.mxu0 0
        %430 = vmatmul.mubr.bf16.gmra.mrb[0].mxu0 %v310
        %v431 = vpop.f32.mrb[0].mxu0
        %v432 = vadd.f32 %v347, %v431
        %v433 = vpop.f32.mrb[0].mxu0
        %v434 = vpop.f32.mrb[0].mxu0
        %v435 = vadd.f32 %v347, %v434
        %v436 = vpop.f32.mrb[0].mxu0
        %437 = vmatprep.mubr.bf16.mxu0 0
        %438 = vmatmul.mubr.bf16.gmra.mrb[0].mxu0 %v311
        %v439 = vpop.f32.mrb[0].mxu0
        %v440 = vadd.f32 %v347, %v439
        %v441 = vpop.f32.mrb[0].mxu0
        %v442 = vpop.f32.mrb[0].mxu0
        %v443 = vadd.f32 %v347, %v442
        %v444 = vpop.f32.mrb[0].mxu0
        %445 = vmatprep.mubr.bf16.mxu0 0
        %446 = vmatmul.mubr.bf16.gmra.mrb[0].mxu0 %v312
        %v447 = vpop.f32.mrb[0].mxu0
        %v448 = vadd.f32 %v347, %v447
        %v449 = vpop.f32.mrb[0].mxu0
        %v450 = vpop.f32.mrb[0].mxu0
        %v451 = vadd.f32 %v347, %v450
        %v452 = vpop.f32.mrb[0].mxu0
        %453 = vmatprep.mubr.bf16.mxu0 0
        %454 = vmatmul.mubr.bf16.gmra.mrb[0].mxu0 %v313
        %v455 = vpop.f32.mrb[0].mxu0
        %v456 = vadd.f32 %v347, %v455
        %v457 = vpop.f32.mrb[0].mxu0
        %v458 = vpop.f32.mrb[0].mxu0
        %v459 = vadd.f32 %v347, %v458
        %v460 = vpop.f32.mrb[0].mxu0
        %461 = vmatprep.mubr.bf16.mxu0 0
        %462 = vmatmul.mubr.bf16.gmra.mrb[0].mxu0 %v314
        %v463 = vpop.f32.mrb[0].mxu0
        %v464 = vadd.f32 %v347, %v463
        %v465 = vpop.f32.mrb[0].mxu0
        %v466 = vpop.f32.mrb[0].mxu0
        %v467 = vadd.f32 %v347, %v466
        %v468 = vpop.f32.mrb[0].mxu0
        %469 = vmatprep.mubr.bf16.mxu0 0
        %470 = vmatmul.mubr.bf16.gmra.mrb[0].mxu0 %v315
        %v471 = vpop.f32.mrb[0].mxu0
        %v472 = vadd.f32 %v347, %v471
        %v473 = vpop.f32.mrb[0].mxu0
        %v474 = vpop.f32.mrb[0].mxu0
        %v475 = vadd.f32 %v347, %v474
        %v476 = vpop.f32.mrb[0].mxu0
        %477 = vmatprep.mubr.bf16.mxu0 0
        %478 = vmatmul.mubr.bf16.gmra.mrb[0].mxu0 %v316
        %v479 = vpop.f32.mrb[0].mxu0
        %v480 = vadd.f32 %v347, %v479
        %v481 = vpop.f32.mrb[0].mxu0
        %v482 = vpop.f32.mrb[0].mxu0
        %v483 = vadd.f32 %v347, %v482
        %v484 = vpop.f32.mrb[0].mxu0
        %485 = vmatprep.mubr.bf16.mxu0 0
        %486 = vmatmul.mubr.bf16.gmra.mrb[0].mxu0 %v317
        %v487 = vpop.f32.mrb[0].mxu0
        %v488 = vadd.f32 %v347, %v487
        %v489 = vpop.f32.mrb[0].mxu0
        %v490 = vpop.f32.mrb[0].mxu0
        %v491 = vadd.f32 %v347, %v490
        %v492 = vpop.f32.mrb[0].mxu0
        %493 = vmatprep.mubr.bf16.mxu0 0
        %494 = vmatmul.mubr.bf16.gmra.mrb[0].mxu0 %v318
        %v495 = vpop.f32.mrb[0].mxu0
        %v496 = vadd.f32 %v347, %v495
        %v497 = vpop.f32.mrb[0].mxu0
        %v498 = vpop.f32.mrb[0].mxu0
        %v499 = vadd.f32 %v347, %v498
        %v500 = vpop.f32.mrb[0].mxu0
        %501 = vmatprep.mubr.bf16.mxu0 0
        %502 = vmatmul.mubr.bf16.gmra.mrb[0].mxu0 %v319
        %v503 = vpop.f32.mrb[0].mxu0
        %v504 = vadd.f32 %v347, %v503
        %v505 = vpop.f32.mrb[0].mxu0
        %v506 = vpop.f32.mrb[0].mxu0
        %v507 = vadd.f32 %v347, %v506
        %v508 = vpop.f32.mrb[0].mxu0
        %509 = vmatprep.mubr.bf16.mxu0 0
        %510 = vmatmul.mubr.bf16.gmra.mrb[0].mxu0 %v320
        %v511 = vpop.f32.mrb[0].mxu0
        %v512 = vadd.f32 %v347, %v511
        %v513 = vpop.f32.mrb[0].mxu0
        %v514 = vpop.f32.mrb[0].mxu0
        %v515 = vadd.f32 %v347, %v514
        %v516 = vpop.f32.mrb[0].mxu0
        %517 = vmatprep.mubr.bf16.mxu0 0
        %518 = vmatmul.mubr.bf16.gmra.mrb[0].mxu0 %v321
        %v519 = vpop.f32.mrb[0].mxu0
        %v520 = vadd.f32 %v347, %v519
        %v521 = vpop.f32.mrb[0].mxu0
        %v522 = vpop.f32.mrb[0].mxu0
        %v523 = vadd.f32 %v347, %v522
        %v524 = vpop.f32.mrb[0].mxu0
        %525 = vmatprep.mubr.bf16.mxu0 0
        %526 = vmatmul.mubr.bf16.gmra.mrb[0].mxu0 %v322
        %v527 = vpop.f32.mrb[0].mxu0
        %v528 = vadd.f32 %v347, %v527
        %v529 = vpop.f32.mrb[0].mxu0
        %v530 = vpop.f32.mrb[0].mxu0
        %v531 = vadd.f32 %v347, %v530
        %v532 = vpop.f32.mrb[0].mxu0
        %533 = vmatprep.mubr.bf16.mxu0 0
        %534 = vmatmul.mubr.bf16.gmra.mrb[0].mxu0 %v323
        %v535 = vpop.f32.mrb[0].mxu0
        %v536 = vadd.f32 %v347, %v535
        %v537 = vpop.f32.mrb[0].mxu0
        %v538 = vpop.f32.mrb[0].mxu0
        %v539 = vadd.f32 %v347, %v538
        %v540 = vpop.f32.mrb[0].mxu0
        %541 = vmatprep.mubr.bf16.mxu0 0
        %542 = vmatmul.mubr.bf16.gmra.mrb[0].mxu0 %v324
        %v543 = vpop.f32.mrb[0].mxu0
        %v544 = vadd.f32 %v347, %v543
        %v545 = vpop.f32.mrb[0].mxu0
        %v546 = vpop.f32.mrb[0].mxu0
        %v547 = vadd.f32 %v347, %v546
        %v548 = vpop.f32.mrb[0].mxu0
        %549 = vmatprep.mubr.bf16.mxu0 0
        %550 = vmatmul.mubr.bf16.gmra.mrb[0].mxu0 %v325
        %v551 = vpop.f32.mrb[0].mxu0
        %v552 = vadd.f32 %v347, %v551
        %v553 = vpop.f32.mrb[0].mxu0
        %v554 = vpop.f32.mrb[0].mxu0
        %v555 = vadd.f32 %v347, %v554
        %v556 = vpop.f32.mrb[0].mxu0
        %557 = vdwg.mxu0
        %v558 = vmax.f32 %v432, 0.0
        %v559 = vmax.f32 %v435, 0.0
        %v560 = vmax.f32 %v440, 0.0
        %v561 = vmax.f32 %v443, 0.0
        %v562 = vmax.f32 %v448, 0.0
        %v563 = vmax.f32 %v451, 0.0
        %v564 = vmax.f32 %v456, 0.0
        %v565 = vmax.f32 %v459, 0.0
        %v566 = vmax.f32 %v464, 0.0
        %v567 = vmax.f32 %v467, 0.0
        %v568 = vmax.f32 %v472, 0.0
        %v569 = vmax.f32 %v475, 0.0
        %v570 = vmax.f32 %v480, 0.0
        %v571 = vmax.f32 %v483, 0.0
        %v572 = vmax.f32 %v488, 0.0
        %v573 = vmax.f32 %v491, 0.0
        %v574 = vmax.f32 %v496, 0.0
        %v575 = vmax.f32 %v499, 0.0
        %v576 = vmax.f32 %v504, 0.0
        %v577 = vmax.f32 %v507, 0.0
        %v578 = vmax.f32 %v512, 0.0
        %v579 = vmax.f32 %v515, 0.0
        %v580 = vmax.f32 %v520, 0.0
        %v581 = vmax.f32 %v523, 0.0
        %v582 = vmax.f32 %v528, 0.0
        %v583 = vmax.f32 %v531, 0.0
        %v584 = vmax.f32 %v536, 0.0
        %v585 = vmax.f32 %v539, 0.0
        %v586 = vmax.f32 %v544, 0.0
        %v587 = vmax.f32 %v547, 0.0
        %v588 = vmax.f32 %v552, 0.0
        %v589 = vmax.f32 %v555, 0.0
        %v590 = vpack.c.bf16 %v559, %v558
        %v591 = vpack.c.bf16 %v561, %v560
        %v592 = vpack.c.bf16 %v563, %v562
        %v593 = vpack.c.bf16 %v565, %v564
        %v594 = vpack.c.bf16 %v567, %v566
        %v595 = vpack.c.bf16 %v569, %v568
        %v596 = vpack.c.bf16 %v571, %v570
        %v597 = vpack.c.bf16 %v573, %v572
        %v598 = vpack.c.bf16 %v575, %v574
        %v599 = vpack.c.bf16 %v577, %v576
        %v600 = vpack.c.bf16 %v579, %v578
        %v601 = vpack.c.bf16 %v581, %v580
        %v602 = vpack.c.bf16 %v583, %v582
        %v603 = vpack.c.bf16 %v585, %v584
        %v604 = vpack.c.bf16 %v587, %v586
        %v605 = vpack.c.bf16 %v589, %v588
        %606 = vst [vmem:[#allocation2] sm:$0xf] 0
        %607 = vst [vmem:[#allocation2 + $0x4] sm:$0xf] 0
        %608 = vst [vmem:[#allocation2 + $0x8] sm:$0x1] 0
        %609 = vst [vmem:[#allocation2 + $0xc] sm:$0xf] 0
        %610 = vst [vmem:[#allocation2 + $0x10] sm:$0xf] 0
        %611 = vst [vmem:[#allocation2 + $0x14] sm:$0x1] 0
        %612 = vst [vmem:[#allocation2 + $0x18] sm:$0xf] 0
        %613 = vst [vmem:[#allocation2 + $0x1c] sm:$0xf] 0
        %614 = vst [vmem:[#allocation2 + $0x20] sm:$0x1] 0
        %615 = vst [vmem:[#allocation2 + $0x24] sm:$0xf] 0
        %616 = vst [vmem:[#allocation2 + $0x28] sm:$0xf] 0
        %617 = vst [vmem:[#allocation2 + $0x2c] sm:$0x1] 0
        %618 = vst [vmem:[#allocation2 + $0x30] sm:$0xf] 0
        %619 = vst [vmem:[#allocation2 + $0x34] sm:$0xf] 0
        %620 = vst [vmem:[#allocation2 + $0x38] sm:$0x1] 0
        %621 = vst [vmem:[#allocation2 + $0x3c] sm:$0xf] 0
        %622 = vst [vmem:[#allocation2 + $0x40] sm:$0xf] 0
        %623 = vst [vmem:[#allocation2 + $0x44] sm:$0x1] 0
        %624 = vst [vmem:[#allocation2 + $0x48] sm:$0xf] 0
        %625 = vst [vmem:[#allocation2 + $0x4c] sm:$0xf] 0
        %626 = vst [vmem:[#allocation2 + $0x50] sm:$0x1] 0
        %627 = vst [vmem:[#allocation2 + $0x54] sm:$0xf] 0
        %628 = vst [vmem:[#allocation2 + $0x58] sm:$0xf] 0
        %629 = vst [vmem:[#allocation2 + $0x5c] sm:$0x1] 0
        %630 = vst [vmem:[#allocation2 + $0x60] sm:$0xf] 0
        %631 = vst [vmem:[#allocation2 + $0x64] sm:$0xf] 0
        %632 = vst [vmem:[#allocation2 + $0x68] sm:$0x1] 0
        %633 = vst [vmem:[#allocation2 + $0x6c] sm:$0xf] 0
        %634 = vst [vmem:[#allocation2 + $0x70] sm:$0xf] 0
        %635 = vst [vmem:[#allocation2 + $0x74] sm:$0x1] 0
        %636 = vst [vmem:[#allocation2 + $0x78] sm:$0xf] 0
        %637 = vst [vmem:[#allocation2 + $0x7c] sm:$0xf] 0
        %638 = vst [vmem:[#allocation2 + $0x80] sm:$0x1] 0
        %639 = vst [vmem:[#allocation2 + $0x84] sm:$0xf] 0
        %640 = vst [vmem:[#allocation2 + $0x88] sm:$0xf] 0
        %641 = vst [vmem:[#allocation2 + $0x8c] sm:$0x1] 0
        %642 = vst [vmem:[#allocation2 + $0x90] sm:$0xf] 0
        %643 = vst [vmem:[#allocation2 + $0x94] sm:$0xf] 0
        %644 = vst [vmem:[#allocation2 + $0x98] sm:$0x1] 0
        %645 = vst [vmem:[#allocation2 + $0x9c] sm:$0xf] 0
        %646 = vst [vmem:[#allocation2 + $0xa0] sm:$0xf] 0
        %647 = vst [vmem:[#allocation2 + $0xa4] sm:$0x1] 0
        %648 = vst [vmem:[#allocation2 + $0xa8] sm:$0xf] 0
        %649 = vst [vmem:[#allocation2 + $0xac] sm:$0xf] 0
        %650 = vst [vmem:[#allocation2 + $0xb0] sm:$0x1] 0
        %651 = vst [vmem:[#allocation2 + $0xb4] sm:$0xf] 0
        %652 = vst [vmem:[#allocation2 + $0xb8] sm:$0xf] 0
        %653 = vst [vmem:[#allocation2 + $0xbc] sm:$0x1] 0
        %654 = vst [vmem:[#allocation2 + $0xc0] sm:$0xf] 0
        %655 = vst [vmem:[#allocation2 + $0xc4] sm:$0xf] 0
        %656 = vst [vmem:[#allocation2 + $0xc8] sm:$0x1] 0
        %657 = vst [vmem:[#allocation2 + $0xcc] sm:$0xf] 0
        %658 = vst [vmem:[#allocation2 + $0xd0] sm:$0xf] 0
        %659 = vst [vmem:[#allocation2 + $0xd4] sm:$0x1] 0
        %v676 = vunpack.c.l.b16 %v590
        %v677 = vunpack.c.h.b16 %v590
        %v678 = vunpack.c.l.b16 %v591
        %v679 = vunpack.c.h.b16 %v591
        %v680 = vunpack.c.l.b16 %v592
        %v681 = vunpack.c.h.b16 %v592
        %v682 = vunpack.c.l.b16 %v593
        %v683 = vunpack.c.h.b16 %v593
        %v684 = vunpack.c.l.b16 %v594
        %v685 = vunpack.c.h.b16 %v594
        %v686 = vunpack.c.l.b16 %v595
        %v687 = vunpack.c.h.b16 %v595
        %v688 = vunpack.c.l.b16 %v596
        %v689 = vunpack.c.h.b16 %v596
        %v690 = vunpack.c.l.b16 %v597
        %v691 = vunpack.c.h.b16 %v597
        %v692 = vunpack.c.l.b16 %v598
        %v693 = vunpack.c.h.b16 %v598
        %v694 = vunpack.c.l.b16 %v599
        %v695 = vunpack.c.h.b16 %v599
        %v696 = vunpack.c.l.b16 %v600
        %v697 = vunpack.c.h.b16 %v600
        %v698 = vunpack.c.l.b16 %v601
        %v699 = vunpack.c.h.b16 %v601
        %v700 = vunpack.c.l.b16 %v602
        %v701 = vunpack.c.h.b16 %v602
        %v702 = vunpack.c.l.b16 %v603
        %v703 = vunpack.c.h.b16 %v603
        %v704 = vunpack.c.l.b16 %v604
        %v705 = vunpack.c.h.b16 %v604
        %v706 = vunpack.c.l.b16 %v605
        %v707 = vunpack.c.h.b16 %v605
        %v708 = vpack.c.b16 %v676, %v676
        %v709 = vpack.c.b16 %v677, %v677
        %v710 = vpack.c.b16 %v678, %v678
        %v711 = vpack.c.b16 %v679, %v679
        %v712 = vpack.c.b16 %v680, %v680
        %v713 = vpack.c.b16 %v681, %v681
        %v714 = vpack.c.b16 %v682, %v682
        %v715 = vpack.c.b16 %v683, %v683
        %v716 = vpack.c.b16 %v684, %v684
        %v717 = vpack.c.b16 %v685, %v685
        %v718 = vpack.c.b16 %v686, %v686
        %v719 = vpack.c.b16 %v687, %v687
        %v720 = vpack.c.b16 %v688, %v688
        %v721 = vpack.c.b16 %v689, %v689
        %v722 = vpack.c.b16 %v690, %v690
        %v723 = vpack.c.b16 %v691, %v691
        %v724 = vpack.c.b16 %v692, %v692
        %v725 = vpack.c.b16 %v693, %v693
        %v726 = vpack.c.b16 %v694, %v694
        %v727 = vpack.c.b16 %v695, %v695
        %v728 = vpack.c.b16 %v696, %v696
        %v729 = vpack.c.b16 %v697, %v697
        %v730 = vpack.c.b16 %v698, %v698
        %v731 = vpack.c.b16 %v699, %v699
        %v732 = vpack.c.b16 %v700, %v700
        %v733 = vpack.c.b16 %v701, %v701
        %v734 = vpack.c.b16 %v702, %v702
        %v735 = vpack.c.b16 %v703, %v703
        %v736 = vpack.c.b16 %v704, %v704
        %v737 = vpack.c.b16 %v705, %v705
        %v738 = vpack.c.b16 %v706, %v706
        %v739 = vpack.c.b16 %v707, %v707
        %vm740 = vsmask.f32 256
        %vm741 = vsmask.f32 4368
        %vm742 = vmor %vm740, %vm741
        %v744 = vshrl.u32 %v708, 16
        %v746 = vrot.slane %v744, 7
        %v747 = vshll.u32 %v708, 16
        %v749 = vor.u32 %v746, %v747
        %v750 = vrot.slane %v746, 4
        %v752 = vshrl.u32 %v709, 16
        %v754 = vrot.slane %v752, 7
        %v755 = vshll.u32 %v709, 16
        %v757 = vor.u32 %v754, %v755
        %v758 = vsel %vm742, %v750, %v757
        %v759 = vrot.slane %v754, 4
        %v761 = vshrl.u32 %v710, 16
        %v763 = vrot.slane %v761, 7
        %v764 = vshll.u32 %v710, 16
        %v766 = vor.u32 %v763, %v764
        %v767 = vrot.slane %v763, 4
        %v769 = vshrl.u32 %v711, 16
        %v771 = vrot.slane %v769, 7
        %v772 = vshll.u32 %v711, 16
        %v774 = vor.u32 %v771, %v772
        %v775 = vsel %vm742, %v767, %v774
        %v776 = vrot.slane %v771, 4
        %v778 = vshrl.u32 %v712, 16
        %v780 = vrot.slane %v778, 7
        %v781 = vshll.u32 %v712, 16
        %v783 = vor.u32 %v780, %v781
        %v784 = vrot.slane %v780, 4
        %v786 = vshrl.u32 %v713, 16
        %v788 = vrot.slane %v786, 7
        %v789 = vshll.u32 %v713, 16
        %v791 = vor.u32 %v788, %v789
        %v792 = vsel %vm742, %v784, %v791
        %v793 = vrot.slane %v788, 4
        %v795 = vshrl.u32 %v714, 16
        %v797 = vrot.slane %v795, 7
        %v798 = vshll.u32 %v714, 16
        %v800 = vor.u32 %v797, %v798
        %v801 = vrot.slane %v797, 4
        %v803 = vshrl.u32 %v715, 16
        %v805 = vrot.slane %v803, 7
        %v806 = vshll.u32 %v715, 16
        %v808 = vor.u32 %v805, %v806
        %v809 = vsel %vm742, %v801, %v808
        %v810 = vrot.slane %v805, 4
        %v812 = vshrl.u32 %v716, 16
        %v814 = vrot.slane %v812, 7
        %v815 = vshll.u32 %v716, 16
        %v817 = vor.u32 %v814, %v815
        %v818 = vrot.slane %v814, 4
        %v820 = vshrl.u32 %v717, 16
        %v822 = vrot.slane %v820, 7
        %v823 = vshll.u32 %v717, 16
        %v825 = vor.u32 %v822, %v823
        %v826 = vsel %vm742, %v818, %v825
        %v827 = vrot.slane %v822, 4
        %v829 = vshrl.u32 %v718, 16
        %v831 = vrot.slane %v829, 7
        %v832 = vshll.u32 %v718, 16
        %v834 = vor.u32 %v831, %v832
        %v835 = vrot.slane %v831, 4
        %v837 = vshrl.u32 %v719, 16
        %v839 = vrot.slane %v837, 7
        %v840 = vshll.u32 %v719, 16
        %v842 = vor.u32 %v839, %v840
        %v843 = vsel %vm742, %v835, %v842
        %v844 = vrot.slane %v839, 4
        %v846 = vshrl.u32 %v720, 16
        %v848 = vrot.slane %v846, 7
        %v849 = vshll.u32 %v720, 16
        %v851 = vor.u32 %v848, %v849
        %v852 = vrot.slane %v848, 4
        %v854 = vshrl.u32 %v721, 16
        %v856 = vrot.slane %v854, 7
        %v857 = vshll.u32 %v721, 16
        %v859 = vor.u32 %v856, %v857
        %v860 = vsel %vm742, %v852, %v859
        %v861 = vrot.slane %v856, 4
        %v863 = vshrl.u32 %v722, 16
        %v865 = vrot.slane %v863, 7
        %v866 = vshll.u32 %v722, 16
        %v868 = vor.u32 %v865, %v866
        %v869 = vrot.slane %v865, 4
        %v871 = vshrl.u32 %v723, 16
        %v873 = vrot.slane %v871, 7
        %v874 = vshll.u32 %v723, 16
        %v876 = vor.u32 %v873, %v874
        %v877 = vsel %vm742, %v869, %v876
        %v878 = vrot.slane %v873, 4
        %v880 = vshrl.u32 %v724, 16
        %v882 = vrot.slane %v880, 7
        %v883 = vshll.u32 %v724, 16
        %v885 = vor.u32 %v882, %v883
        %v886 = vrot.slane %v882, 4
        %v888 = vshrl.u32 %v725, 16
        %v890 = vrot.slane %v888, 7
        %v891 = vshll.u32 %v725, 16
        %v893 = vor.u32 %v890, %v891
        %v894 = vsel %vm742, %v886, %v893
        %v895 = vrot.slane %v890, 4
        %v897 = vshrl.u32 %v726, 16
        %v899 = vrot.slane %v897, 7
        %v900 = vshll.u32 %v726, 16
        %v902 = vor.u32 %v899, %v900
        %v903 = vrot.slane %v899, 4
        %v905 = vshrl.u32 %v727, 16
        %v907 = vrot.slane %v905, 7
        %v908 = vshll.u32 %v727, 16
        %v910 = vor.u32 %v907, %v908
        %v911 = vsel %vm742, %v903, %v910
        %v912 = vrot.slane %v907, 4
        %v914 = vshrl.u32 %v728, 16
        %v916 = vrot.slane %v914, 7
        %v917 = vshll.u32 %v728, 16
        %v919 = vor.u32 %v916, %v917
        %v920 = vrot.slane %v916, 4
        %v922 = vshrl.u32 %v729, 16
        %v924 = vrot.slane %v922, 7
        %v925 = vshll.u32 %v729, 16
        %v927 = vor.u32 %v924, %v925
        %v928 = vsel %vm742, %v920, %v927
        %v929 = vrot.slane %v924, 4
        %v931 = vshrl.u32 %v730, 16
        %v933 = vrot.slane %v931, 7
        %v934 = vshll.u32 %v730, 16
        %v936 = vor.u32 %v933, %v934
        %v937 = vrot.slane %v933, 4
        %v939 = vshrl.u32 %v731, 16
        %v941 = vrot.slane %v939, 7
        %v942 = vshll.u32 %v731, 16
        %v944 = vor.u32 %v941, %v942
        %v945 = vsel %vm742, %v937, %v944
        %v946 = vrot.slane %v941, 4
        %v948 = vshrl.u32 %v732, 16
        %v950 = vrot.slane %v948, 7
        %v951 = vshll.u32 %v732, 16
        %v953 = vor.u32 %v950, %v951
        %v954 = vrot.slane %v950, 4
        %v956 = vshrl.u32 %v733, 16
        %v958 = vrot.slane %v956, 7
        %v959 = vshll.u32 %v733, 16
        %v961 = vor.u32 %v958, %v959
        %v962 = vsel %vm742, %v954, %v961
        %v963 = vrot.slane %v958, 4
        %v965 = vshrl.u32 %v734, 16
        %v967 = vrot.slane %v965, 7
        %v968 = vshll.u32 %v734, 16
        %v970 = vor.u32 %v967, %v968
        %v971 = vrot.slane %v967, 4
        %v973 = vshrl.u32 %v735, 16
        %v975 = vrot.slane %v973, 7
        %v976 = vshll.u32 %v735, 16
        %v978 = vor.u32 %v975, %v976
        %v979 = vsel %vm742, %v971, %v978
        %v980 = vrot.slane %v975, 4
        %v982 = vshrl.u32 %v736, 16
        %v984 = vrot.slane %v982, 7
        %v985 = vshll.u32 %v736, 16
        %v987 = vor.u32 %v984, %v985
        %v988 = vrot.slane %v984, 4
        %v990 = vshrl.u32 %v737, 16
        %v992 = vrot.slane %v990, 7
        %v993 = vshll.u32 %v737, 16
        %v995 = vor.u32 %v992, %v993
        %v996 = vsel %vm742, %v988, %v995
        %v997 = vrot.slane %v992, 4
        %v999 = vshrl.u32 %v738, 16
        %v1001 = vrot.slane %v999, 7
        %v1002 = vshll.u32 %v738, 16
        %v1004 = vor.u32 %v1001, %v1002
        %v1005 = vrot.slane %v1001, 4
        %v1007 = vshrl.u32 %v739, 16
        %v1009 = vrot.slane %v1007, 7
        %v1010 = vshll.u32 %v739, 16
        %v1012 = vor.u32 %v1009, %v1010
        %v1013 = vsel %vm742, %v1005, %v1012
        %v1014 = vrot.slane %v1009, 4
        %s1063 = scalar_lea.vmem [#allocation2], 12
        %vm1064 = vcmask 1043456
        %vm1065 = vsmask.f32 7938
        %vm1066 = vmand %vm1064, %vm1065
        %v1067 = vld [vmem:[%s1063] sm:$0xf]
        %v1068 = vsel %vm1066, %v749, %v1067
        %1069 = vst [vmem:[%s1063] sm:$0xf] %v1068
        %1070 = vst [vmem:[%s1063 + $0x4] sm:$0xf] %v758
        %vm1071 = vcmask 1040384
        %vm1072 = vmand %vm1071, %vm740
        %v1073 = vld [vmem:[%s1063 + $0x8] sm:$0x1]
        %v1074 = vsel %vm1072, %v759, %v1073
        %1075 = vst [vmem:[%s1063 + $0x8] sm:$0x1] %v1074
        %v1076 = vld [vmem:[%s1063 + $0xc] sm:$0xf]
        %v1077 = vsel %vm1066, %v766, %v1076
        %1078 = vst [vmem:[%s1063 + $0xc] sm:$0xf] %v1077
        %1079 = vst [vmem:[%s1063 + $0x10] sm:$0xf] %v775
        %v1080 = vld [vmem:[%s1063 + $0x14] sm:$0x1]
        %v1081 = vsel %vm1072, %v776, %v1080
        %1082 = vst [vmem:[%s1063 + $0x14] sm:$0x1] %v1081
        %v1083 = vld [vmem:[%s1063 + $0x18] sm:$0xf]
        %v1084 = vsel %vm1066, %v783, %v1083
        %1085 = vst [vmem:[%s1063 + $0x18] sm:$0xf] %v1084
        %1086 = vst [vmem:[%s1063 + $0x1c] sm:$0xf] %v792
        %v1087 = vld [vmem:[%s1063 + $0x20] sm:$0x1]
        %v1088 = vsel %vm1072, %v793, %v1087
        %1089 = vst [vmem:[%s1063 + $0x20] sm:$0x1] %v1088
        %v1090 = vld [vmem:[%s1063 + $0x24] sm:$0xf]
        %v1091 = vsel %vm1066, %v800, %v1090
        %1092 = vst [vmem:[%s1063 + $0x24] sm:$0xf] %v1091
        %1093 = vst [vmem:[%s1063 + $0x28] sm:$0xf] %v809
        %v1094 = vld [vmem:[%s1063 + $0x2c] sm:$0x1]
        %v1095 = vsel %vm1072, %v810, %v1094
        %1096 = vst [vmem:[%s1063 + $0x2c] sm:$0x1] %v1095
        %v1097 = vld [vmem:[%s1063 + $0x30] sm:$0xf]
        %v1098 = vsel %vm1066, %v817, %v1097
        %1099 = vst [vmem:[%s1063 + $0x30] sm:$0xf] %v1098
        %1100 = vst [vmem:[%s1063 + $0x34] sm:$0xf] %v826
        %v1101 = vld [vmem:[%s1063 + $0x38] sm:$0x1]
        %v1102 = vsel %vm1072, %v827, %v1101
        %1103 = vst [vmem:[%s1063 + $0x38] sm:$0x1] %v1102
        %v1104 = vld [vmem:[%s1063 + $0x3c] sm:$0xf]
        %v1105 = vsel %vm1066, %v834, %v1104
        %1106 = vst [vmem:[%s1063 + $0x3c] sm:$0xf] %v1105
        %1107 = vst [vmem:[%s1063 + $0x40] sm:$0xf] %v843
        %v1108 = vld [vmem:[%s1063 + $0x44] sm:$0x1]
        %v1109 = vsel %vm1072, %v844, %v1108
        %1110 = vst [vmem:[%s1063 + $0x44] sm:$0x1] %v1109
        %v1111 = vld [vmem:[%s1063 + $0x48] sm:$0xf]
        %v1112 = vsel %vm1066, %v851, %v1111
        %1113 = vst [vmem:[%s1063 + $0x48] sm:$0xf] %v1112
        %1114 = vst [vmem:[%s1063 + $0x4c] sm:$0xf] %v860
        %v1115 = vld [vmem:[%s1063 + $0x50] sm:$0x1]
        %v1116 = vsel %vm1072, %v861, %v1115
        %1117 = vst [vmem:[%s1063 + $0x50] sm:$0x1] %v1116
        %v1118 = vld [vmem:[%s1063 + $0x54] sm:$0xf]
        %v1119 = vsel %vm1066, %v868, %v1118
        %1120 = vst [vmem:[%s1063 + $0x54] sm:$0xf] %v1119
        %1121 = vst [vmem:[%s1063 + $0x58] sm:$0xf] %v877
        %v1122 = vld [vmem:[%s1063 + $0x5c] sm:$0x1]
        %v1123 = vsel %vm1072, %v878, %v1122
        %1124 = vst [vmem:[%s1063 + $0x5c] sm:$0x1] %v1123
        %v1125 = vld [vmem:[%s1063 + $0x60] sm:$0xf]
        %v1126 = vsel %vm1066, %v885, %v1125
        %1127 = vst [vmem:[%s1063 + $0x60] sm:$0xf] %v1126
        %1128 = vst [vmem:[%s1063 + $0x64] sm:$0xf] %v894
        %v1129 = vld [vmem:[%s1063 + $0x68] sm:$0x1]
        %v1130 = vsel %vm1072, %v895, %v1129
        %1131 = vst [vmem:[%s1063 + $0x68] sm:$0x1] %v1130
        %v1132 = vld [vmem:[%s1063 + $0x6c] sm:$0xf]
        %v1133 = vsel %vm1066, %v902, %v1132
        %1134 = vst [vmem:[%s1063 + $0x6c] sm:$0xf] %v1133
        %1135 = vst [vmem:[%s1063 + $0x70] sm:$0xf] %v911
        %v1136 = vld [vmem:[%s1063 + $0x74] sm:$0x1]
        %v1137 = vsel %vm1072, %v912, %v1136
        %1138 = vst [vmem:[%s1063 + $0x74] sm:$0x1] %v1137
        %v1139 = vld [vmem:[%s1063 + $0x78] sm:$0xf]
        %v1140 = vsel %vm1066, %v919, %v1139
        %1141 = vst [vmem:[%s1063 + $0x78] sm:$0xf] %v1140
        %1142 = vst [vmem:[%s1063 + $0x7c] sm:$0xf] %v928
        %v1143 = vld [vmem:[%s1063 + $0x80] sm:$0x1]
        %v1144 = vsel %vm1072, %v929, %v1143
        %1145 = vst [vmem:[%s1063 + $0x80] sm:$0x1] %v1144
        %v1146 = vld [vmem:[%s1063 + $0x84] sm:$0xf]
        %v1147 = vsel %vm1066, %v936, %v1146
        %1148 = vst [vmem:[%s1063 + $0x84] sm:$0xf] %v1147
        %1149 = vst [vmem:[%s1063 + $0x88] sm:$0xf] %v945
        %v1150 = vld [vmem:[%s1063 + $0x8c] sm:$0x1]
        %v1151 = vsel %vm1072, %v946, %v1150
        %1152 = vst [vmem:[%s1063 + $0x8c] sm:$0x1] %v1151
        %v1153 = vld [vmem:[%s1063 + $0x90] sm:$0xf]
        %v1154 = vsel %vm1066, %v953, %v1153
        %1155 = vst [vmem:[%s1063 + $0x90] sm:$0xf] %v1154
        %1156 = vst [vmem:[%s1063 + $0x94] sm:$0xf] %v962
        %v1157 = vld [vmem:[%s1063 + $0x98] sm:$0x1]
        %v1158 = vsel %vm1072, %v963, %v1157
        %1159 = vst [vmem:[%s1063 + $0x98] sm:$0x1] %v1158
        %v1160 = vld [vmem:[%s1063 + $0x9c] sm:$0xf]
        %v1161 = vsel %vm1066, %v970, %v1160
        %1162 = vst [vmem:[%s1063 + $0x9c] sm:$0xf] %v1161
        %1163 = vst [vmem:[%s1063 + $0xa0] sm:$0xf] %v979
        %v1164 = vld [vmem:[%s1063 + $0xa4] sm:$0x1]
        %v1165 = vsel %vm1072, %v980, %v1164
        %1166 = vst [vmem:[%s1063 + $0xa4] sm:$0x1] %v1165
        %v1167 = vld [vmem:[%s1063 + $0xa8] sm:$0xf]
        %v1168 = vsel %vm1066, %v987, %v1167
        %1169 = vst [vmem:[%s1063 + $0xa8] sm:$0xf] %v1168
        %1170 = vst [vmem:[%s1063 + $0xac] sm:$0xf] %v996
        %v1171 = vld [vmem:[%s1063 + $0xb0] sm:$0x1]
        %v1172 = vsel %vm1072, %v997, %v1171
        %1173 = vst [vmem:[%s1063 + $0xb0] sm:$0x1] %v1172
        %v1174 = vld [vmem:[%s1063 + $0xb4] sm:$0xf]
        %v1175 = vsel %vm1066, %v1004, %v1174
        %1176 = vst [vmem:[%s1063 + $0xb4] sm:$0xf] %v1175
        %1177 = vst [vmem:[%s1063 + $0xb8] sm:$0xf] %v1013
        %v1178 = vld [vmem:[%s1063 + $0xbc] sm:$0x1]
        %v1179 = vsel %vm1072, %v1014, %v1178
        %1180 = vst [vmem:[%s1063 + $0xbc] sm:$0x1] %v1179
        %1181 = vst [vmem:[#allocation3] sm:$0xff] 0.0
        %1182 = vst [vmem:[#allocation3 + $0x8] sm:$0xff] 0.0
        %1183 = vst [vmem:[#allocation3 + $0x10] sm:$0xff] 0.0
        %1184 = vst [vmem:[#allocation3 + $0x18] sm:$0xff] 0.0
        %1185 = vst [vmem:[#allocation3 + $0x20] sm:$0xff] 0.0
        %1186 = vst [vmem:[#allocation3 + $0x28] sm:$0xff] 0.0
        %1187 = vst [vmem:[#allocation3 + $0x30] sm:$0xff] 0.0
        %1188 = vst [vmem:[#allocation3 + $0x38] sm:$0xff] 0.0
        %1189 = vst [vmem:[#allocation3 + $0x40] sm:$0xff] 0.0
        %1190 = vst [vmem:[#allocation3 + $0x48] sm:$0xff] 0.0
        %1191 = vst [vmem:[#allocation3 + $0x50] sm:$0xff] 0.0
        %1192 = vst [vmem:[#allocation3 + $0x58] sm:$0xff] 0.0
        %1193 = vst [vmem:[#allocation3 + $0x60] sm:$0xff] 0.0
        %1194 = vst [vmem:[#allocation3 + $0x68] sm:$0xff] 0.0
        %1195 = vst [vmem:[#allocation3 + $0x70] sm:$0xff] 0.0
        %1196 = vst [vmem:[#allocation3 + $0x78] sm:$0xff] 0.0
        %1197 = vst [vmem:[#allocation3 + $0x80] sm:$0xff] 0.0
        %1198 = vst [vmem:[#allocation3 + $0x88] sm:$0xff] 0.0
        %1199 = vst [vmem:[#allocation3 + $0x90] sm:$0xff] 0.0
        %1200 = vst [vmem:[#allocation3 + $0x98] sm:$0xff] 0.0
        %1201 = vst [vmem:[#allocation3 + $0xa0] sm:$0xff] 0.0
        %1202 = vst [vmem:[#allocation3 + $0xa8] sm:$0xff] 0.0
        %1203 = vst [vmem:[#allocation3 + $0xb0] sm:$0xff] 0.0
        %1204 = vst [vmem:[#allocation3 + $0xb8] sm:$0xff] 0.0
        %1205 = vst [vmem:[#allocation3 + $0xc0] sm:$0xff] 0.0
        %1206 = vst [vmem:[#allocation3 + $0xc8] sm:$0xff] 0.0
        %1207 = vst [vmem:[#allocation3 + $0xd0] sm:$0xff] 0.0
        %1208 = vst [vmem:[#allocation3 + $0xd8] sm:$0xff] 0.0
        %1209 = vst [vmem:[#allocation3 + $0xe0] sm:$0xff] 0.0
        %1210 = vst [vmem:[#allocation3 + $0xe8] sm:$0xff] 0.0
        %1211 = vst [vmem:[#allocation3 + $0xf0] sm:$0xff] 0.0
        %1212 = vst [vmem:[#allocation3 + $0xf8] sm:$0xff] 0.0
        %v1213 = vld [vmem:[#allocation2] sm:$0xf]
        %v1214 = vld [vmem:[#allocation2 + $0x4] sm:$0xf]
        %v1215 = vld [vmem:[#allocation2 + $0xc] sm:$0xf]
        %v1216 = vld [vmem:[#allocation2 + $0x10] sm:$0xf]
        %v1217 = vld [vmem:[#allocation2 + $0x18] sm:$0xf]
        %v1218 = vld [vmem:[#allocation2 + $0x1c] sm:$0xf]
        %v1219 = vld [vmem:[#allocation2 + $0x24] sm:$0xf]
        %v1220 = vld [vmem:[#allocation2 + $0x28] sm:$0xf]
        %v1221 = vld [vmem:[#allocation2 + $0x30] sm:$0xf]
        %v1222 = vld [vmem:[#allocation2 + $0x34] sm:$0xf]
        %v1223 = vld [vmem:[#allocation2 + $0x3c] sm:$0xf]
        %v1224 = vld [vmem:[#allocation2 + $0x40] sm:$0xf]
        %v1225 = vld [vmem:[#allocation2 + $0x48] sm:$0xf]
        %v1226 = vld [vmem:[#allocation2 + $0x4c] sm:$0xf]
        %v1227 = vld [vmem:[#allocation2 + $0x54] sm:$0xf]
        %v1228 = vld [vmem:[#allocation2 + $0x58] sm:$0xf]
        %v1229 = vld [vmem:[#allocation2 + $0x60] sm:$0xf]
        %v1230 = vld [vmem:[#allocation2 + $0x64] sm:$0xf]
        %v1231 = vld [vmem:[#allocation2 + $0x6c] sm:$0xf]
        %v1232 = vld [vmem:[#allocation2 + $0x70] sm:$0xf]
        %v1233 = vld [vmem:[#allocation2 + $0x78] sm:$0xf]
        %v1234 = vld [vmem:[#allocation2 + $0x7c] sm:$0xf]
        %v1235 = vld [vmem:[#allocation2 + $0x84] sm:$0xf]
        %v1236 = vld [vmem:[#allocation2 + $0x88] sm:$0xf]
        %v1237 = vld [vmem:[#allocation2 + $0x90] sm:$0xf]
        %v1238 = vld [vmem:[#allocation2 + $0x94] sm:$0xf]
        %v1239 = vld [vmem:[#allocation2 + $0x9c] sm:$0xf]
        %v1240 = vld [vmem:[#allocation2 + $0xa0] sm:$0xf]
        %v1241 = vld [vmem:[#allocation2 + $0xa8] sm:$0xf]
        %v1242 = vld [vmem:[#allocation2 + $0xac] sm:$0xf]
        %v1243 = vld [vmem:[#allocation2 + $0xb4] sm:$0xf]
        %v1244 = vld [vmem:[#allocation2 + $0xb8] sm:$0xf]
        %v1245 = vld [vmem:[#allocation3] sm:$0xff]
        %v1246 = vld [vmem:[#allocation3 + $0x8] sm:$0xff]
        %v1247 = vld [vmem:[#allocation3 + $0x10] sm:$0xff]
        %v1248 = vld [vmem:[#allocation3 + $0x18] sm:$0xff]
        %v1249 = vld [vmem:[#allocation3 + $0x20] sm:$0xff]
        %v1250 = vld [vmem:[#allocation3 + $0x28] sm:$0xff]
        %v1251 = vld [vmem:[#allocation3 + $0x30] sm:$0xff]
        %v1252 = vld [vmem:[#allocation3 + $0x38] sm:$0xff]
        %v1253 = vld [vmem:[#allocation3 + $0x40] sm:$0xff]
        %v1254 = vld [vmem:[#allocation3 + $0x48] sm:$0xff]
        %v1255 = vld [vmem:[#allocation3 + $0x50] sm:$0xff]
        %v1256 = vld [vmem:[#allocation3 + $0x58] sm:$0xff]
        %v1257 = vld [vmem:[#allocation3 + $0x60] sm:$0xff]
        %v1258 = vld [vmem:[#allocation3 + $0x68] sm:$0xff]
        %v1259 = vld [vmem:[#allocation3 + $0x70] sm:$0xff]
        %v1260 = vld [vmem:[#allocation3 + $0x78] sm:$0xff]
        %v1261 = vld [vmem:[#allocation3 + $0x80] sm:$0xff]
        %v1262 = vld [vmem:[#allocation3 + $0x88] sm:$0xff]
        %v1263 = vld [vmem:[#allocation3 + $0x90] sm:$0xff]
        %v1264 = vld [vmem:[#allocation3 + $0x98] sm:$0xff]
        %v1265 = vld [vmem:[#allocation3 + $0xa0] sm:$0xff]
        %v1266 = vld [vmem:[#allocation3 + $0xa8] sm:$0xff]
        %v1267 = vld [vmem:[#allocation3 + $0xb0] sm:$0xff]
        %v1268 = vld [vmem:[#allocation3 + $0xb8] sm:$0xff]
        %v1269 = vld [vmem:[#allocation3 + $0xc0] sm:$0xff]
        %v1270 = vld [vmem:[#allocation3 + $0xc8] sm:$0xff]
        %v1271 = vld [vmem:[#allocation3 + $0xd0] sm:$0xff]
        %v1272 = vld [vmem:[#allocation3 + $0xd8] sm:$0xff]
        %v1273 = vld [vmem:[#allocation3 + $0xe0] sm:$0xff]
        %v1274 = vld [vmem:[#allocation3 + $0xe8] sm:$0xff]
        %v1275 = vld [vmem:[#allocation3 + $0xf0] sm:$0xff]
        %v1276 = vld [vmem:[#allocation3 + $0xf8] sm:$0xff]
        %v1277 = vld [vmem:[%s3] sm:$0xf]
        %v1278 = vld [vmem:[%s3 + $0x4] sm:$0xf]
        %v1279 = vld [vmem:[%s3 + $0x8] sm:$0xf]
        %v1280 = vld [vmem:[%s3 + $0xc] sm:$0xf]
        %v1281 = vld [vmem:[%s3 + $0x10] sm:$0xf]
        %v1282 = vld [vmem:[%s3 + $0x14] sm:$0xf]
        %v1283 = vld [vmem:[%s3 + $0x18] sm:$0xf]
        %v1284 = vld [vmem:[%s3 + $0x1c] sm:$0xf]
        %v1285 = vld [vmem:[%s3 + $0x20] sm:$0xf]
        %v1286 = vld [vmem:[%s3 + $0x24] sm:$0xf]
        %v1287 = vld [vmem:[%s3 + $0x28] sm:$0xf]
        %v1288 = vld [vmem:[%s3 + $0x2c] sm:$0xf]
        %v1289 = vld [vmem:[%s3 + $0x30] sm:$0xf]
        %v1290 = vld [vmem:[%s3 + $0x34] sm:$0xf]
        %v1291 = vld [vmem:[%s3 + $0x38] sm:$0xf]
        %v1292 = vld [vmem:[%s3 + $0x3c] sm:$0xf]
        %v1325 = vunpack.c.l.b16 %v1213
        %v1326 = vunpack.c.l.b16 %v1214
        %v1327 = vunpack.c.l.b16 %v1215
        %v1328 = vunpack.c.l.b16 %v1216
        %v1329 = vunpack.c.l.b16 %v1217
        %v1330 = vunpack.c.l.b16 %v1218
        %v1331 = vunpack.c.l.b16 %v1219
        %v1332 = vunpack.c.l.b16 %v1220
        %v1333 = vunpack.c.l.b16 %v1221
        %v1334 = vunpack.c.l.b16 %v1222
        %v1335 = vunpack.c.l.b16 %v1223
        %v1336 = vunpack.c.l.b16 %v1224
        %v1337 = vunpack.c.l.b16 %v1225
        %v1338 = vunpack.c.l.b16 %v1226
        %v1339 = vunpack.c.l.b16 %v1227
        %v1340 = vunpack.c.l.b16 %v1228
        %v1341 = vunpack.c.l.b16 %v1229
        %v1342 = vunpack.c.l.b16 %v1230
        %v1343 = vunpack.c.l.b16 %v1231
        %v1344 = vunpack.c.l.b16 %v1232
        %v1345 = vunpack.c.l.b16 %v1233
        %v1346 = vunpack.c.l.b16 %v1234
        %v1347 = vunpack.c.l.b16 %v1235
        %v1348 = vunpack.c.l.b16 %v1236
        %v1349 = vunpack.c.l.b16 %v1237
        %v1350 = vunpack.c.l.b16 %v1238
        %v1351 = vunpack.c.l.b16 %v1239
        %v1352 = vunpack.c.l.b16 %v1240
        %v1353 = vunpack.c.l.b16 %v1241
        %v1354 = vunpack.c.l.b16 %v1242
        %v1355 = vunpack.c.l.b16 %v1243
        %v1356 = vunpack.c.l.b16 %v1244
        %v1357 = vpack.c.b16 %v1326, %v1325
        %v1358 = vpack.c.b16 %v1328, %v1327
        %v1359 = vpack.c.b16 %v1330, %v1329
        %v1360 = vpack.c.b16 %v1332, %v1331
        %v1361 = vpack.c.b16 %v1334, %v1333
        %v1362 = vpack.c.b16 %v1336, %v1335
        %v1363 = vpack.c.b16 %v1338, %v1337
        %v1364 = vpack.c.b16 %v1340, %v1339
        %v1365 = vpack.c.b16 %v1342, %v1341
        %v1366 = vpack.c.b16 %v1344, %v1343
        %v1367 = vpack.c.b16 %v1346, %v1345
        %v1368 = vpack.c.b16 %v1348, %v1347
        %v1369 = vpack.c.b16 %v1350, %v1349
        %v1370 = vpack.c.b16 %v1352, %v1351
        %v1371 = vpack.c.b16 %v1354, %v1353
        %v1372 = vpack.c.b16 %v1356, %v1355
        %v1405 = vunpack.c.l.b16 %v1277
        %v1406 = vunpack.c.l.b16 %v1278
        %v1407 = vunpack.c.l.b16 %v1279
        %v1408 = vunpack.c.l.b16 %v1280
        %v1409 = vunpack.c.l.b16 %v1281
        %v1410 = vunpack.c.l.b16 %v1282
        %v1411 = vunpack.c.l.b16 %v1283
        %v1412 = vunpack.c.l.b16 %v1284
        %v1413 = vunpack.c.l.b16 %v1285
        %v1414 = vunpack.c.l.b16 %v1286
        %v1415 = vunpack.c.l.b16 %v1287
        %v1416 = vunpack.c.l.b16 %v1288
        %v1417 = vunpack.c.l.b16 %v1289
        %v1418 = vunpack.c.l.b16 %v1290
        %v1419 = vunpack.c.l.b16 %v1291
        %v1420 = vunpack.c.l.b16 %v1292
        %v1421 = vpack.c.b16 %v1406, %v1405
        %v1422 = vpack.c.b16 %v1408, %v1407
        %v1423 = vpack.c.b16 %v1410, %v1409
        %v1424 = vpack.c.b16 %v1412, %v1411
        %v1425 = vpack.c.b16 %v1414, %v1413
        %v1426 = vpack.c.b16 %v1416, %v1415
        %v1427 = vpack.c.b16 %v1418, %v1417
        %v1428 = vpack.c.b16 %v1420, %v1419
        %1437 = vmatprep.subr.bf16.mxu0 0
        %1438 = vmatpush1.bf16.msra.mxu0 %v1421
        %1439 = vmatprep.subr.bf16.mxu0 0
        %1440 = vmatpush1.bf16.msra.mxu0 %v1422
        %1441 = vmatprep.subr.bf16.mxu0 0
        %1442 = vmatpush1.bf16.msra.mxu0 %v1423
        %1443 = vmatprep.subr.bf16.mxu0 0
        %1444 = vmatpush1.bf16.msra.mxu0 %v1424
        %1445 = vmatprep.subr.bf16.mxu0 0
        %1446 = vmatpush1.bf16.msra.mxu0 %v1425
        %1447 = vmatprep.subr.bf16.mxu0 0
        %1448 = vmatpush1.bf16.msra.mxu0 %v1426
        %1449 = vmatprep.subr.bf16.mxu0 0
        %1450 = vmatpush1.bf16.msra.mxu0 %v1427
        %1451 = vmatprep.subr.bf16.mxu0 0
        %1452 = vmatpush1.bf16.msra.mxu0 %v1428
        %1453 = vmatprep.subr.bf16.mxu0 0
        %1454 = vmatpush1.bf16.msra.mxu0 0
        %1455 = vmatprep.subr.bf16.mxu0 0
        %1456 = vmatpush1.bf16.msra.mxu0 0
        %1457 = vmatprep.subr.bf16.mxu0 0
        %1458 = vmatpush1.bf16.msra.mxu0 0
        %1459 = vmatprep.subr.bf16.mxu0 0
        %1460 = vmatpush1.bf16.msra.mxu0 0
        %1461 = vmatprep.subr.bf16.mxu0 0
        %1462 = vmatpush1.bf16.msra.mxu0 0
        %1463 = vmatprep.subr.bf16.mxu0 0
        %1464 = vmatpush1.bf16.msra.mxu0 0
        %1465 = vmatprep.subr.bf16.mxu0 0
        %1466 = vmatpush1.bf16.msra.mxu0 0
        %1467 = vmatprep.subr.bf16.mxu0 0
        %1468 = vmatpush1.bf16.msra.mxu0 0
        %1469 = vmatprep.mubr.bf16.mxu0 0
        %1470 = vmatmul.mubr.bf16.gmra.mrb[0].mxu0 %v1357
        %v1471 = vpop.f32.mrb[0].mxu0
        %v1472 = vadd.f32 0.0, %v1471
        %v1473 = vpop.f32.mrb[0].mxu0
        %v1474 = vpop.f32.mrb[0].mxu0
        %v1475 = vadd.f32 0.0, %v1474
        %v1476 = vpop.f32.mrb[0].mxu0
        %1477 = vmatprep.mubr.bf16.mxu0 0
        %1478 = vmatmul.mubr.bf16.gmra.mrb[0].mxu0 %v1358
        %v1479 = vpop.f32.mrb[0].mxu0
        %v1480 = vadd.f32 0.0, %v1479
        %v1481 = vpop.f32.mrb[0].mxu0
        %v1482 = vpop.f32.mrb[0].mxu0
        %v1483 = vadd.f32 0.0, %v1482
        %v1484 = vpop.f32.mrb[0].mxu0
        %1485 = vmatprep.mubr.bf16.mxu0 0
        %1486 = vmatmul.mubr.bf16.gmra.mrb[0].mxu0 %v1359
        %v1487 = vpop.f32.mrb[0].mxu0
        %v1488 = vadd.f32 0.0, %v1487
        %v1489 = vpop.f32.mrb[0].mxu0
        %v1490 = vpop.f32.mrb[0].mxu0
        %v1491 = vadd.f32 0.0, %v1490
        %v1492 = vpop.f32.mrb[0].mxu0
        %1493 = vmatprep.mubr.bf16.mxu0 0
        %1494 = vmatmul.mubr.bf16.gmra.mrb[0].mxu0 %v1360
        %v1495 = vpop.f32.mrb[0].mxu0
        %v1496 = vadd.f32 0.0, %v1495
        %v1497 = vpop.f32.mrb[0].mxu0
        %v1498 = vpop.f32.mrb[0].mxu0
        %v1499 = vadd.f32 0.0, %v1498
        %v1500 = vpop.f32.mrb[0].mxu0
        %1501 = vmatprep.mubr.bf16.mxu0 0
        %1502 = vmatmul.mubr.bf16.gmra.mrb[0].mxu0 %v1361
        %v1503 = vpop.f32.mrb[0].mxu0
        %v1504 = vadd.f32 0.0, %v1503
        %v1505 = vpop.f32.mrb[0].mxu0
        %v1506 = vpop.f32.mrb[0].mxu0
        %v1507 = vadd.f32 0.0, %v1506
        %v1508 = vpop.f32.mrb[0].mxu0
        %1509 = vmatprep.mubr.bf16.mxu0 0
        %1510 = vmatmul.mubr.bf16.gmra.mrb[0].mxu0 %v1362
        %v1511 = vpop.f32.mrb[0].mxu0
        %v1512 = vadd.f32 0.0, %v1511
        %v1513 = vpop.f32.mrb[0].mxu0
        %v1514 = vpop.f32.mrb[0].mxu0
        %v1515 = vadd.f32 0.0, %v1514
        %v1516 = vpop.f32.mrb[0].mxu0
        %1517 = vmatprep.mubr.bf16.mxu0 0
        %1518 = vmatmul.mubr.bf16.gmra.mrb[0].mxu0 %v1363
        %v1519 = vpop.f32.mrb[0].mxu0
        %v1520 = vadd.f32 0.0, %v1519
        %v1521 = vpop.f32.mrb[0].mxu0
        %v1522 = vpop.f32.mrb[0].mxu0
        %v1523 = vadd.f32 0.0, %v1522
        %v1524 = vpop.f32.mrb[0].mxu0
        %1525 = vmatprep.mubr.bf16.mxu0 0
        %1526 = vmatmul.mubr.bf16.gmra.mrb[0].mxu0 %v1364
        %v1527 = vpop.f32.mrb[0].mxu0
        %v1528 = vadd.f32 0.0, %v1527
        %v1529 = vpop.f32.mrb[0].mxu0
        %v1530 = vpop.f32.mrb[0].mxu0
        %v1531 = vadd.f32 0.0, %v1530
        %v1532 = vpop.f32.mrb[0].mxu0
        %1533 = vmatprep.mubr.bf16.mxu0 0
        %1534 = vmatmul.mubr.bf16.gmra.mrb[0].mxu0 %v1365
        %v1535 = vpop.f32.mrb[0].mxu0
        %v1536 = vadd.f32 0.0, %v1535
        %v1537 = vpop.f32.mrb[0].mxu0
        %v1538 = vpop.f32.mrb[0].mxu0
        %v1539 = vadd.f32 0.0, %v1538
        %v1540 = vpop.f32.mrb[0].mxu0
        %1541 = vmatprep.mubr.bf16.mxu0 0
        %1542 = vmatmul.mubr.bf16.gmra.mrb[0].mxu0 %v1366
        %v1543 = vpop.f32.mrb[0].mxu0
        %v1544 = vadd.f32 0.0, %v1543
        %v1545 = vpop.f32.mrb[0].mxu0
        %v1546 = vpop.f32.mrb[0].mxu0
        %v1547 = vadd.f32 0.0, %v1546
        %v1548 = vpop.f32.mrb[0].mxu0
        %1549 = vmatprep.mubr.bf16.mxu0 0
        %1550 = vmatmul.mubr.bf16.gmra.mrb[0].mxu0 %v1367
        %v1551 = vpop.f32.mrb[0].mxu0
        %v1552 = vadd.f32 0.0, %v1551
        %v1553 = vpop.f32.mrb[0].mxu0
        %v1554 = vpop.f32.mrb[0].mxu0
        %v1555 = vadd.f32 0.0, %v1554
        %v1556 = vpop.f32.mrb[0].mxu0
        %1557 = vmatprep.mubr.bf16.mxu0 0
        %1558 = vmatmul.mubr.bf16.gmra.mrb[0].mxu0 %v1368
        %v1559 = vpop.f32.mrb[0].mxu0
        %v1560 = vadd.f32 0.0, %v1559
        %v1561 = vpop.f32.mrb[0].mxu0
        %v1562 = vpop.f32.mrb[0].mxu0
        %v1563 = vadd.f32 0.0, %v1562
        %v1564 = vpop.f32.mrb[0].mxu0
        %1565 = vmatprep.mubr.bf16.mxu0 0
        %1566 = vmatmul.mubr.bf16.gmra.mrb[0].mxu0 %v1369
        %v1567 = vpop.f32.mrb[0].mxu0
        %v1568 = vadd.f32 0.0, %v1567
        %v1569 = vpop.f32.mrb[0].mxu0
        %v1570 = vpop.f32.mrb[0].mxu0
        %v1571 = vadd.f32 0.0, %v1570
        %v1572 = vpop.f32.mrb[0].mxu0
        %1573 = vmatprep.mubr.bf16.mxu0 0
        %1574 = vmatmul.mubr.bf16.gmra.mrb[0].mxu0 %v1370
        %v1575 = vpop.f32.mrb[0].mxu0
        %v1576 = vadd.f32 0.0, %v1575
        %v1577 = vpop.f32.mrb[0].mxu0
        %v1578 = vpop.f32.mrb[0].mxu0
        %v1579 = vadd.f32 0.0, %v1578
        %v1580 = vpop.f32.mrb[0].mxu0
        %1581 = vmatprep.mubr.bf16.mxu0 0
        %1582 = vmatmul.mubr.bf16.gmra.mrb[0].mxu0 %v1371
        %v1583 = vpop.f32.mrb[0].mxu0
        %v1584 = vadd.f32 0.0, %v1583
        %v1585 = vpop.f32.mrb[0].mxu0
        %v1586 = vpop.f32.mrb[0].mxu0
        %v1587 = vadd.f32 0.0, %v1586
        %v1588 = vpop.f32.mrb[0].mxu0
        %1589 = vmatprep.mubr.bf16.mxu0 0
        %1590 = vmatmul.mubr.bf16.gmra.mrb[0].mxu0 %v1372
        %v1591 = vpop.f32.mrb[0].mxu0
        %v1592 = vadd.f32 0.0, %v1591
        %v1593 = vpop.f32.mrb[0].mxu0
        %v1594 = vpop.f32.mrb[0].mxu0
        %v1595 = vadd.f32 0.0, %v1594
        %v1596 = vpop.f32.mrb[0].mxu0
        %1597 = vdwg.mxu0
        %v1598 = vadd.f32 %v1245, %v1472
        %v1599 = vadd.f32 %v1246, %v1475
        %v1600 = vadd.f32 %v1247, %v1480
        %v1601 = vadd.f32 %v1248, %v1483
        %v1602 = vadd.f32 %v1249, %v1488
        %v1603 = vadd.f32 %v1250, %v1491
        %v1604 = vadd.f32 %v1251, %v1496
        %v1605 = vadd.f32 %v1252, %v1499
        %v1606 = vadd.f32 %v1253, %v1504
        %v1607 = vadd.f32 %v1254, %v1507
        %v1608 = vadd.f32 %v1255, %v1512
        %v1609 = vadd.f32 %v1256, %v1515
        %v1610 = vadd.f32 %v1257, %v1520
        %v1611 = vadd.f32 %v1258, %v1523
        %v1612 = vadd.f32 %v1259, %v1528
        %v1613 = vadd.f32 %v1260, %v1531
        %v1614 = vadd.f32 %v1261, %v1536
        %v1615 = vadd.f32 %v1262, %v1539
        %v1616 = vadd.f32 %v1263, %v1544
        %v1617 = vadd.f32 %v1264, %v1547
        %v1618 = vadd.f32 %v1265, %v1552
        %v1619 = vadd.f32 %v1266, %v1555
        %v1620 = vadd.f32 %v1267, %v1560
        %v1621 = vadd.f32 %v1268, %v1563
        %v1622 = vadd.f32 %v1269, %v1568
        %v1623 = vadd.f32 %v1270, %v1571
        %v1624 = vadd.f32 %v1271, %v1576
        %v1625 = vadd.f32 %v1272, %v1579
        %v1626 = vadd.f32 %v1273, %v1584
        %v1627 = vadd.f32 %v1274, %v1587
        %v1628 = vadd.f32 %v1275, %v1592
        %v1629 = vadd.f32 %v1276, %v1595
        %1630 = vst [vmem:[#allocation3] sm:$0xff] %v1598
        %1631 = vst [vmem:[#allocation3 + $0x8] sm:$0xff] %v1599
        %1632 = vst [vmem:[#allocation3 + $0x10] sm:$0xff] %v1600
        %1633 = vst [vmem:[#allocation3 + $0x18] sm:$0xff] %v1601
        %1634 = vst [vmem:[#allocation3 + $0x20] sm:$0xff] %v1602
        %1635 = vst [vmem:[#allocation3 + $0x28] sm:$0xff] %v1603
        %1636 = vst [vmem:[#allocation3 + $0x30] sm:$0xff] %v1604
        %1637 = vst [vmem:[#allocation3 + $0x38] sm:$0xff] %v1605
        %1638 = vst [vmem:[#allocation3 + $0x40] sm:$0xff] %v1606
        %1639 = vst [vmem:[#allocation3 + $0x48] sm:$0xff] %v1607
        %1640 = vst [vmem:[#allocation3 + $0x50] sm:$0xff] %v1608
        %1641 = vst [vmem:[#allocation3 + $0x58] sm:$0xff] %v1609
        %1642 = vst [vmem:[#allocation3 + $0x60] sm:$0xff] %v1610
        %1643 = vst [vmem:[#allocation3 + $0x68] sm:$0xff] %v1611
        %1644 = vst [vmem:[#allocation3 + $0x70] sm:$0xff] %v1612
        %1645 = vst [vmem:[#allocation3 + $0x78] sm:$0xff] %v1613
        %1646 = vst [vmem:[#allocation3 + $0x80] sm:$0xff] %v1614
        %1647 = vst [vmem:[#allocation3 + $0x88] sm:$0xff] %v1615
        %1648 = vst [vmem:[#allocation3 + $0x90] sm:$0xff] %v1616
        %1649 = vst [vmem:[#allocation3 + $0x98] sm:$0xff] %v1617
        %1650 = vst [vmem:[#allocation3 + $0xa0] sm:$0xff] %v1618
        %1651 = vst [vmem:[#allocation3 + $0xa8] sm:$0xff] %v1619
        %1652 = vst [vmem:[#allocation3 + $0xb0] sm:$0xff] %v1620
        %1653 = vst [vmem:[#allocation3 + $0xb8] sm:$0xff] %v1621
        %1654 = vst [vmem:[#allocation3 + $0xc0] sm:$0xff] %v1622
        %1655 = vst [vmem:[#allocation3 + $0xc8] sm:$0xff] %v1623
        %1656 = vst [vmem:[#allocation3 + $0xd0] sm:$0xff] %v1624
        %1657 = vst [vmem:[#allocation3 + $0xd8] sm:$0xff] %v1625
        %1658 = vst [vmem:[#allocation3 + $0xe0] sm:$0xff] %v1626
        %1659 = vst [vmem:[#allocation3 + $0xe8] sm:$0xff] %v1627
        %1660 = vst [vmem:[#allocation3 + $0xf0] sm:$0xff] %v1628
        %1661 = vst [vmem:[#allocation3 + $0xf8] sm:$0xff] %v1629
        %v1662 = vld [vmem:[#allocation2] sm:$0xf]
        %v1663 = vld [vmem:[#allocation2 + $0x4] sm:$0xf]
        %v1664 = vld [vmem:[#allocation2 + $0x8] sm:$0x1]
        %v1665 = vld [vmem:[#allocation2 + $0xc] sm:$0xf]
        %v1666 = vld [vmem:[#allocation2 + $0x10] sm:$0xf]
        %v1667 = vld [vmem:[#allocation2 + $0x14] sm:$0x1]
        %v1668 = vld [vmem:[#allocation2 + $0x18] sm:$0xf]
        %v1669 = vld [vmem:[#allocation2 + $0x1c] sm:$0xf]
        %v1670 = vld [vmem:[#allocation2 + $0x20] sm:$0x1]
        %v1671 = vld [vmem:[#allocation2 + $0x24] sm:$0xf]
        %v1672 = vld [vmem:[#allocation2 + $0x28] sm:$0xf]
        %v1673 = vld [vmem:[#allocation2 + $0x2c] sm:$0x1]
        %v1674 = vld [vmem:[#allocation2 + $0x30] sm:$0xf]
        %v1675 = vld [vmem:[#allocation2 + $0x34] sm:$0xf]
        %v1676 = vld [vmem:[#allocation2 + $0x38] sm:$0x1]
        %v1677 = vld [vmem:[#allocation2 + $0x3c] sm:$0xf]
        %v1678 = vld [vmem:[#allocation2 + $0x40] sm:$0xf]
        %v1679 = vld [vmem:[#allocation2 + $0x44] sm:$0x1]
        %v1680 = vld [vmem:[#allocation2 + $0x48] sm:$0xf]
        %v1681 = vld [vmem:[#allocation2 + $0x4c] sm:$0xf]
        %v1682 = vld [vmem:[#allocation2 + $0x50] sm:$0x1]
        %v1683 = vld [vmem:[#allocation2 + $0x54] sm:$0xf]
        %v1684 = vld [vmem:[#allocation2 + $0x58] sm:$0xf]
        %v1685 = vld [vmem:[#allocation2 + $0x5c] sm:$0x1]
        %v1686 = vld [vmem:[#allocation2 + $0x60] sm:$0xf]
        %v1687 = vld [vmem:[#allocation2 + $0x64] sm:$0xf]
        %v1688 = vld [vmem:[#allocation2 + $0x68] sm:$0x1]
        %v1689 = vld [vmem:[#allocation2 + $0x6c] sm:$0xf]
        %v1690 = vld [vmem:[#allocation2 + $0x70] sm:$0xf]
        %v1691 = vld [vmem:[#allocation2 + $0x74] sm:$0x1]
        %v1692 = vld [vmem:[#allocation2 + $0x78] sm:$0xf]
        %v1693 = vld [vmem:[#allocation2 + $0x7c] sm:$0xf]
        %v1694 = vld [vmem:[#allocation2 + $0x80] sm:$0x1]
        %v1695 = vld [vmem:[#allocation2 + $0x84] sm:$0xf]
        %v1696 = vld [vmem:[#allocation2 + $0x88] sm:$0xf]
        %v1697 = vld [vmem:[#allocation2 + $0x8c] sm:$0x1]
        %v1698 = vld [vmem:[#allocation2 + $0x90] sm:$0xf]
        %v1699 = vld [vmem:[#allocation2 + $0x94] sm:$0xf]
        %v1700 = vld [vmem:[#allocation2 + $0x98] sm:$0x1]
        %v1701 = vld [vmem:[#allocation2 + $0x9c] sm:$0xf]
        %v1702 = vld [vmem:[#allocation2 + $0xa0] sm:$0xf]
        %v1703 = vld [vmem:[#allocation2 + $0xa4] sm:$0x1]
        %v1704 = vld [vmem:[#allocation2 + $0xa8] sm:$0xf]
        %v1705 = vld [vmem:[#allocation2 + $0xac] sm:$0xf]
        %v1706 = vld [vmem:[#allocation2 + $0xb0] sm:$0x1]
        %v1707 = vld [vmem:[#allocation2 + $0xb4] sm:$0xf]
        %v1708 = vld [vmem:[#allocation2 + $0xb8] sm:$0xf]
        %v1709 = vld [vmem:[#allocation2 + $0xbc] sm:$0x1]
        %vm1710 = vsmask.f32 3328
        %vm1711 = vsmask.f32 7440
        %vm1712 = vmor %vm1710, %vm1711
        %v1714 = vshrl.u32 %v1662, 16
        %v1716 = vrot.slane %v1714, 4
        %v1717 = vshll.u32 %v1662, 16
        %v1719 = vrot.slane %v1717, 5
        %v1720 = vor.u32 %v1716, %v1719
        %v1721 = vrot.slane %v1720, 4
        %v1723 = vshll.u32 %v1663, 16
        %v1725 = vrot.slane %v1723, 5
        %v1726 = vsel %vm1712, %v1721, %v1725
        %v1727 = vshrl.u32 %v1663, 16
        %v1729 = vrot.slane %v1727, 4
        %v1730 = vor.u32 %v1729, %v1725
        %v1731 = vrot.slane %v1730, 4
        %v1733 = vshll.u32 %v1664, 16
        %v1735 = vrot.slane %v1733, 5
        %v1736 = vsel %vm1712, %v1731, %v1735
        %v1738 = vshrl.u32 %v1665, 16
        %v1740 = vrot.slane %v1738, 4
        %v1741 = vshll.u32 %v1665, 16
        %v1743 = vrot.slane %v1741, 5
        %v1744 = vor.u32 %v1740, %v1743
        %v1745 = vrot.slane %v1744, 4
        %v1747 = vshll.u32 %v1666, 16
        %v1749 = vrot.slane %v1747, 5
        %v1750 = vsel %vm1712, %v1745, %v1749
        %v1751 = vshrl.u32 %v1666, 16
        %v1753 = vrot.slane %v1751, 4
        %v1754 = vor.u32 %v1753, %v1749
        %v1755 = vrot.slane %v1754, 4
        %v1757 = vshll.u32 %v1667, 16
        %v1759 = vrot.slane %v1757, 5
        %v1760 = vsel %vm1712, %v1755, %v1759
        %v1762 = vshrl.u32 %v1668, 16
        %v1764 = vrot.slane %v1762, 4
        %v1765 = vshll.u32 %v1668, 16
        %v1767 = vrot.slane %v1765, 5
        %v1768 = vor.u32 %v1764, %v1767
        %v1769 = vrot.slane %v1768, 4
        %v1771 = vshll.u32 %v1669, 16
        %v1773 = vrot.slane %v1771, 5
        %v1774 = vsel %vm1712, %v1769, %v1773
        %v1775 = vshrl.u32 %v1669, 16
        %v1777 = vrot.slane %v1775, 4
        %v1778 = vor.u32 %v1777, %v1773
        %v1779 = vrot.slane %v1778, 4
        %v1781 = vshll.u32 %v1670, 16
        %v1783 = vrot.slane %v1781, 5
        %v1784 = vsel %vm1712, %v1779, %v1783
        %v1786 = vshrl.u32 %v1671, 16
        %v1788 = vrot.slane %v1786, 4
        %v1789 = vshll.u32 %v1671, 16
        %v1791 = vrot.slane %v1789, 5
        %v1792 = vor.u32 %v1788, %v1791
        %v1793 = vrot.slane %v1792, 4
        %v1795 = vshll.u32 %v1672, 16
        %v1797 = vrot.slane %v1795, 5
        %v1798 = vsel %vm1712, %v1793, %v1797
        %v1799 = vshrl.u32 %v1672, 16
        %v1801 = vrot.slane %v1799, 4
        %v1802 = vor.u32 %v1801, %v1797
        %v1803 = vrot.slane %v1802, 4
        %v1805 = vshll.u32 %v1673, 16
        %v1807 = vrot.slane %v1805, 5
        %v1808 = vsel %vm1712, %v1803, %v1807
        %v1810 = vshrl.u32 %v1674, 16
        %v1812 = vrot.slane %v1810, 4
        %v1813 = vshll.u32 %v1674, 16
        %v1815 = vrot.slane %v1813, 5
        %v1816 = vor.u32 %v1812, %v1815
        %v1817 = vrot.slane %v1816, 4
        %v1819 = vshll.u32 %v1675, 16
        %v1821 = vrot.slane %v1819, 5
        %v1822 = vsel %vm1712, %v1817, %v1821
        %v1823 = vshrl.u32 %v1675, 16
        %v1825 = vrot.slane %v1823, 4
        %v1826 = vor.u32 %v1825, %v1821
        %v1827 = vrot.slane %v1826, 4
        %v1829 = vshll.u32 %v1676, 16
        %v1831 = vrot.slane %v1829, 5
        %v1832 = vsel %vm1712, %v1827, %v1831
        %v1834 = vshrl.u32 %v1677, 16
        %v1836 = vrot.slane %v1834, 4
        %v1837 = vshll.u32 %v1677, 16
        %v1839 = vrot.slane %v1837, 5
        %v1840 = vor.u32 %v1836, %v1839
        %v1841 = vrot.slane %v1840, 4
        %v1843 = vshll.u32 %v1678, 16
        %v1845 = vrot.slane %v1843, 5
        %v1846 = vsel %vm1712, %v1841, %v1845
        %v1847 = vshrl.u32 %v1678, 16
        %v1849 = vrot.slane %v1847, 4
        %v1850 = vor.u32 %v1849, %v1845
        %v1851 = vrot.slane %v1850, 4
        %v1853 = vshll.u32 %v1679, 16
        %v1855 = vrot.slane %v1853, 5
        %v1856 = vsel %vm1712, %v1851, %v1855
        %v1858 = vshrl.u32 %v1680, 16
        %v1860 = vrot.slane %v1858, 4
        %v1861 = vshll.u32 %v1680, 16
        %v1863 = vrot.slane %v1861, 5
        %v1864 = vor.u32 %v1860, %v1863
        %v1865 = vrot.slane %v1864, 4
        %v1867 = vshll.u32 %v1681, 16
        %v1869 = vrot.slane %v1867, 5
        %v1870 = vsel %vm1712, %v1865, %v1869
        %v1871 = vshrl.u32 %v1681, 16
        %v1873 = vrot.slane %v1871, 4
        %v1874 = vor.u32 %v1873, %v1869
        %v1875 = vrot.slane %v1874, 4
        %v1877 = vshll.u32 %v1682, 16
        %v1879 = vrot.slane %v1877, 5
        %v1880 = vsel %vm1712, %v1875, %v1879
        %v1882 = vshrl.u32 %v1683, 16
        %v1884 = vrot.slane %v1882, 4
        %v1885 = vshll.u32 %v1683, 16
        %v1887 = vrot.slane %v1885, 5
        %v1888 = vor.u32 %v1884, %v1887
        %v1889 = vrot.slane %v1888, 4
        %v1891 = vshll.u32 %v1684, 16
        %v1893 = vrot.slane %v1891, 5
        %v1894 = vsel %vm1712, %v1889, %v1893
        %v1895 = vshrl.u32 %v1684, 16
        %v1897 = vrot.slane %v1895, 4
        %v1898 = vor.u32 %v1897, %v1893
        %v1899 = vrot.slane %v1898, 4
        %v1901 = vshll.u32 %v1685, 16
        %v1903 = vrot.slane %v1901, 5
        %v1904 = vsel %vm1712, %v1899, %v1903
        %v1906 = vshrl.u32 %v1686, 16
        %v1908 = vrot.slane %v1906, 4
        %v1909 = vshll.u32 %v1686, 16
        %v1911 = vrot.slane %v1909, 5
        %v1912 = vor.u32 %v1908, %v1911
        %v1913 = vrot.slane %v1912, 4
        %v1915 = vshll.u32 %v1687, 16
        %v1917 = vrot.slane %v1915, 5
        %v1918 = vsel %vm1712, %v1913, %v1917
        %v1919 = vshrl.u32 %v1687, 16
        %v1921 = vrot.slane %v1919, 4
        %v1922 = vor.u32 %v1921, %v1917
        %v1923 = vrot.slane %v1922, 4
        %v1925 = vshll.u32 %v1688, 16
        %v1927 = vrot.slane %v1925, 5
        %v1928 = vsel %vm1712, %v1923, %v1927
        %v1930 = vshrl.u32 %v1689, 16
        %v1932 = vrot.slane %v1930, 4
        %v1933 = vshll.u32 %v1689, 16
        %v1935 = vrot.slane %v1933, 5
        %v1936 = vor.u32 %v1932, %v1935
        %v1937 = vrot.slane %v1936, 4
        %v1939 = vshll.u32 %v1690, 16
        %v1941 = vrot.slane %v1939, 5
        %v1942 = vsel %vm1712, %v1937, %v1941
        %v1943 = vshrl.u32 %v1690, 16
        %v1945 = vrot.slane %v1943, 4
        %v1946 = vor.u32 %v1945, %v1941
        %v1947 = vrot.slane %v1946, 4
        %v1949 = vshll.u32 %v1691, 16
        %v1951 = vrot.slane %v1949, 5
        %v1952 = vsel %vm1712, %v1947, %v1951
        %v1954 = vshrl.u32 %v1692, 16
        %v1956 = vrot.slane %v1954, 4
        %v1957 = vshll.u32 %v1692, 16
        %v1959 = vrot.slane %v1957, 5
        %v1960 = vor.u32 %v1956, %v1959
        %v1961 = vrot.slane %v1960, 4
        %v1963 = vshll.u32 %v1693, 16
        %v1965 = vrot.slane %v1963, 5
        %v1966 = vsel %vm1712, %v1961, %v1965
        %v1967 = vshrl.u32 %v1693, 16
        %v1969 = vrot.slane %v1967, 4
        %v1970 = vor.u32 %v1969, %v1965
        %v1971 = vrot.slane %v1970, 4
        %v1973 = vshll.u32 %v1694, 16
        %v1975 = vrot.slane %v1973, 5
        %v1976 = vsel %vm1712, %v1971, %v1975
        %v1978 = vshrl.u32 %v1695, 16
        %v1980 = vrot.slane %v1978, 4
        %v1981 = vshll.u32 %v1695, 16
        %v1983 = vrot.slane %v1981, 5
        %v1984 = vor.u32 %v1980, %v1983
        %v1985 = vrot.slane %v1984, 4
        %v1987 = vshll.u32 %v1696, 16
        %v1989 = vrot.slane %v1987, 5
        %v1990 = vsel %vm1712, %v1985, %v1989
        %v1991 = vshrl.u32 %v1696, 16
        %v1993 = vrot.slane %v1991, 4
        %v1994 = vor.u32 %v1993, %v1989
        %v1995 = vrot.slane %v1994, 4
        %v1997 = vshll.u32 %v1697, 16
        %v1999 = vrot.slane %v1997, 5
        %v2000 = vsel %vm1712, %v1995, %v1999
        %v2002 = vshrl.u32 %v1698, 16
        %v2004 = vrot.slane %v2002, 4
        %v2005 = vshll.u32 %v1698, 16
        %v2007 = vrot.slane %v2005, 5
        %v2008 = vor.u32 %v2004, %v2007
        %v2009 = vrot.slane %v2008, 4
        %v2011 = vshll.u32 %v1699, 16
        %v2013 = vrot.slane %v2011, 5
        %v2014 = vsel %vm1712, %v2009, %v2013
        %v2015 = vshrl.u32 %v1699, 16
        %v2017 = vrot.slane %v2015, 4
        %v2018 = vor.u32 %v2017, %v2013
        %v2019 = vrot.slane %v2018, 4
        %v2021 = vshll.u32 %v1700, 16
        %v2023 = vrot.slane %v2021, 5
        %v2024 = vsel %vm1712, %v2019, %v2023
        %v2026 = vshrl.u32 %v1701, 16
        %v2028 = vrot.slane %v2026, 4
        %v2029 = vshll.u32 %v1701, 16
        %v2031 = vrot.slane %v2029, 5
        %v2032 = vor.u32 %v2028, %v2031
        %v2033 = vrot.slane %v2032, 4
        %v2035 = vshll.u32 %v1702, 16
        %v2037 = vrot.slane %v2035, 5
        %v2038 = vsel %vm1712, %v2033, %v2037
        %v2039 = vshrl.u32 %v1702, 16
        %v2041 = vrot.slane %v2039, 4
        %v2042 = vor.u32 %v2041, %v2037
        %v2043 = vrot.slane %v2042, 4
        %v2045 = vshll.u32 %v1703, 16
        %v2047 = vrot.slane %v2045, 5
        %v2048 = vsel %vm1712, %v2043, %v2047
        %v2050 = vshrl.u32 %v1704, 16
        %v2052 = vrot.slane %v2050, 4
        %v2053 = vshll.u32 %v1704, 16
        %v2055 = vrot.slane %v2053, 5
        %v2056 = vor.u32 %v2052, %v2055
        %v2057 = vrot.slane %v2056, 4
        %v2059 = vshll.u32 %v1705, 16
        %v2061 = vrot.slane %v2059, 5
        %v2062 = vsel %vm1712, %v2057, %v2061
        %v2063 = vshrl.u32 %v1705, 16
        %v2065 = vrot.slane %v2063, 4
        %v2066 = vor.u32 %v2065, %v2061
        %v2067 = vrot.slane %v2066, 4
        %v2069 = vshll.u32 %v1706, 16
        %v2071 = vrot.slane %v2069, 5
        %v2072 = vsel %vm1712, %v2067, %v2071
        %v2074 = vshrl.u32 %v1707, 16
        %v2076 = vrot.slane %v2074, 4
        %v2077 = vshll.u32 %v1707, 16
        %v2079 = vrot.slane %v2077, 5
        %v2080 = vor.u32 %v2076, %v2079
        %v2081 = vrot.slane %v2080, 4
        %v2083 = vshll.u32 %v1708, 16
        %v2085 = vrot.slane %v2083, 5
        %v2086 = vsel %vm1712, %v2081, %v2085
        %v2087 = vshrl.u32 %v1708, 16
        %v2089 = vrot.slane %v2087, 4
        %v2090 = vor.u32 %v2089, %v2085
        %v2091 = vrot.slane %v2090, 4
        %v2093 = vshll.u32 %v1709, 16
        %v2095 = vrot.slane %v2093, 5
        %v2096 = vsel %vm1712, %v2091, %v2095
        %v2097 = vld [vmem:[#allocation3] sm:$0xff]
        %v2098 = vld [vmem:[#allocation3 + $0x8] sm:$0xff]
        %v2099 = vld [vmem:[#allocation3 + $0x10] sm:$0xff]
        %v2100 = vld [vmem:[#allocation3 + $0x18] sm:$0xff]
        %v2101 = vld [vmem:[#allocation3 + $0x20] sm:$0xff]
        %v2102 = vld [vmem:[#allocation3 + $0x28] sm:$0xff]
        %v2103 = vld [vmem:[#allocation3 + $0x30] sm:$0xff]
        %v2104 = vld [vmem:[#allocation3 + $0x38] sm:$0xff]
        %v2105 = vld [vmem:[#allocation3 + $0x40] sm:$0xff]
        %v2106 = vld [vmem:[#allocation3 + $0x48] sm:$0xff]
        %v2107 = vld [vmem:[#allocation3 + $0x50] sm:$0xff]
        %v2108 = vld [vmem:[#allocation3 + $0x58] sm:$0xff]
        %v2109 = vld [vmem:[#allocation3 + $0x60] sm:$0xff]
        %v2110 = vld [vmem:[#allocation3 + $0x68] sm:$0xff]
        %v2111 = vld [vmem:[#allocation3 + $0x70] sm:$0xff]
        %v2112 = vld [vmem:[#allocation3 + $0x78] sm:$0xff]
        %v2113 = vld [vmem:[#allocation3 + $0x80] sm:$0xff]
        %v2114 = vld [vmem:[#allocation3 + $0x88] sm:$0xff]
        %v2115 = vld [vmem:[#allocation3 + $0x90] sm:$0xff]
        %v2116 = vld [vmem:[#allocation3 + $0x98] sm:$0xff]
        %v2117 = vld [vmem:[#allocation3 + $0xa0] sm:$0xff]
        %v2118 = vld [vmem:[#allocation3 + $0xa8] sm:$0xff]
        %v2119 = vld [vmem:[#allocation3 + $0xb0] sm:$0xff]
        %v2120 = vld [vmem:[#allocation3 + $0xb8] sm:$0xff]
        %v2121 = vld [vmem:[#allocation3 + $0xc0] sm:$0xff]
        %v2122 = vld [vmem:[#allocation3 + $0xc8] sm:$0xff]
        %v2123 = vld [vmem:[#allocation3 + $0xd0] sm:$0xff]
        %v2124 = vld [vmem:[#allocation3 + $0xd8] sm:$0xff]
        %v2125 = vld [vmem:[#allocation3 + $0xe0] sm:$0xff]
        %v2126 = vld [vmem:[#allocation3 + $0xe8] sm:$0xff]
        %v2127 = vld [vmem:[#allocation3 + $0xf0] sm:$0xff]
        %v2128 = vld [vmem:[#allocation3 + $0xf8] sm:$0xff]
        %s2129 = scalar_lea.vmem %s3, 64
        %v2130 = vld [vmem:[%s2129] sm:$0xf]
        %v2131 = vld [vmem:[%s2129 + $0x4] sm:$0xf]
        %v2132 = vld [vmem:[%s2129 + $0x8] sm:$0xf]
        %v2133 = vld [vmem:[%s2129 + $0xc] sm:$0xf]
        %v2134 = vld [vmem:[%s2129 + $0x10] sm:$0xf]
        %v2135 = vld [vmem:[%s2129 + $0x14] sm:$0xf]
        %v2136 = vld [vmem:[%s2129 + $0x18] sm:$0xf]
        %v2137 = vld [vmem:[%s2129 + $0x1c] sm:$0xf]
        %v2138 = vld [vmem:[%s2129 + $0x20] sm:$0xf]
        %v2139 = vld [vmem:[%s2129 + $0x24] sm:$0xf]
        %v2140 = vld [vmem:[%s2129 + $0x28] sm:$0xf]
        %v2141 = vld [vmem:[%s2129 + $0x2c] sm:$0xf]
        %v2142 = vld [vmem:[%s2129 + $0x30] sm:$0xf]
        %v2143 = vld [vmem:[%s2129 + $0x34] sm:$0xf]
        %v2144 = vld [vmem:[%s2129 + $0x38] sm:$0xf]
        %v2145 = vld [vmem:[%s2129 + $0x3c] sm:$0xf]
        %v2146 = vunpack.c.l.b16 %v1726
        %v2147 = vunpack.c.l.b16 %v1736
        %v2148 = vunpack.c.l.b16 %v1750
        %v2149 = vunpack.c.l.b16 %v1760
        %v2150 = vunpack.c.l.b16 %v1774
        %v2151 = vunpack.c.l.b16 %v1784
        %v2152 = vunpack.c.l.b16 %v1798
        %v2153 = vunpack.c.l.b16 %v1808
        %v2154 = vunpack.c.l.b16 %v1822
        %v2155 = vunpack.c.l.b16 %v1832
        %v2156 = vunpack.c.l.b16 %v1846
        %v2157 = vunpack.c.l.b16 %v1856
        %v2158 = vunpack.c.l.b16 %v1870
        %v2159 = vunpack.c.l.b16 %v1880
        %v2160 = vunpack.c.l.b16 %v1894
        %v2161 = vunpack.c.l.b16 %v1904
        %v2162 = vunpack.c.l.b16 %v1918
        %v2163 = vunpack.c.l.b16 %v1928
        %v2164 = vunpack.c.l.b16 %v1942
        %v2165 = vunpack.c.l.b16 %v1952
        %v2166 = vunpack.c.l.b16 %v1966
        %v2167 = vunpack.c.l.b16 %v1976
        %v2168 = vunpack.c.l.b16 %v1990
        %v2169 = vunpack.c.l.b16 %v2000
        %v2170 = vunpack.c.l.b16 %v2014
        %v2171 = vunpack.c.l.b16 %v2024
        %v2172 = vunpack.c.l.b16 %v2038
        %v2173 = vunpack.c.l.b16 %v2048
        %v2174 = vunpack.c.l.b16 %v2062
        %v2175 = vunpack.c.l.b16 %v2072
        %v2176 = vunpack.c.l.b16 %v2086
        %v2177 = vunpack.c.l.b16 %v2096
        %v2178 = vpack.c.b16 %v2147, %v2146
        %v2179 = vpack.c.b16 %v2149, %v2148
        %v2180 = vpack.c.b16 %v2151, %v2150
        %v2181 = vpack.c.b16 %v2153, %v2152
        %v2182 = vpack.c.b16 %v2155, %v2154
        %v2183 = vpack.c.b16 %v2157, %v2156
        %v2184 = vpack.c.b16 %v2159, %v2158
        %v2185 = vpack.c.b16 %v2161, %v2160
        %v2186 = vpack.c.b16 %v2163, %v2162
        %v2187 = vpack.c.b16 %v2165, %v2164
        %v2188 = vpack.c.b16 %v2167, %v2166
        %v2189 = vpack.c.b16 %v2169, %v2168
        %v2190 = vpack.c.b16 %v2171, %v2170
        %v2191 = vpack.c.b16 %v2173, %v2172
        %v2192 = vpack.c.b16 %v2175, %v2174
        %v2193 = vpack.c.b16 %v2177, %v2176
        %v2226 = vunpack.c.l.b16 %v2130
        %v2227 = vunpack.c.l.b16 %v2131
        %v2228 = vunpack.c.l.b16 %v2132
        %v2229 = vunpack.c.l.b16 %v2133
        %v2230 = vunpack.c.l.b16 %v2134
        %v2231 = vunpack.c.l.b16 %v2135
        %v2232 = vunpack.c.l.b16 %v2136
        %v2233 = vunpack.c.l.b16 %v2137
        %v2234 = vunpack.c.l.b16 %v2138
        %v2235 = vunpack.c.l.b16 %v2139
        %v2236 = vunpack.c.l.b16 %v2140
        %v2237 = vunpack.c.l.b16 %v2141
        %v2238 = vunpack.c.l.b16 %v2142
        %v2239 = vunpack.c.l.b16 %v2143
        %v2240 = vunpack.c.l.b16 %v2144
        %v2241 = vunpack.c.l.b16 %v2145
        %v2242 = vpack.c.b16 %v2227, %v2226
        %v2243 = vpack.c.b16 %v2229, %v2228
        %v2244 = vpack.c.b16 %v2231, %v2230
        %v2245 = vpack.c.b16 %v2233, %v2232
        %v2246 = vpack.c.b16 %v2235, %v2234
        %v2247 = vpack.c.b16 %v2237, %v2236
        %v2248 = vpack.c.b16 %v2239, %v2238
        %v2249 = vpack.c.b16 %v2241, %v2240
        %2258 = vmatprep.subr.bf16.mxu0 0
        %2259 = vmatpush1.bf16.msra.mxu0 %v2242
        %2260 = vmatprep.subr.bf16.mxu0 0
        %2261 = vmatpush1.bf16.msra.mxu0 %v2243
        %2262 = vmatprep.subr.bf16.mxu0 0
        %2263 = vmatpush1.bf16.msra.mxu0 %v2244
        %2264 = vmatprep.subr.bf16.mxu0 0
        %2265 = vmatpush1.bf16.msra.mxu0 %v2245
        %2266 = vmatprep.subr.bf16.mxu0 0
        %2267 = vmatpush1.bf16.msra.mxu0 %v2246
        %2268 = vmatprep.subr.bf16.mxu0 0
        %2269 = vmatpush1.bf16.msra.mxu0 %v2247
        %2270 = vmatprep.subr.bf16.mxu0 0
        %2271 = vmatpush1.bf16.msra.mxu0 %v2248
        %2272 = vmatprep.subr.bf16.mxu0 0
        %2273 = vmatpush1.bf16.msra.mxu0 %v2249
        %2274 = vmatprep.subr.bf16.mxu0 0
        %2275 = vmatpush1.bf16.msra.mxu0 0
        %2276 = vmatprep.subr.bf16.mxu0 0
        %2277 = vmatpush1.bf16.msra.mxu0 0
        %2278 = vmatprep.subr.bf16.mxu0 0
        %2279 = vmatpush1.bf16.msra.mxu0 0
        %2280 = vmatprep.subr.bf16.mxu0 0
        %2281 = vmatpush1.bf16.msra.mxu0 0
        %2282 = vmatprep.subr.bf16.mxu0 0
        %2283 = vmatpush1.bf16.msra.mxu0 0
        %2284 = vmatprep.subr.bf16.mxu0 0
        %2285 = vmatpush1.bf16.msra.mxu0 0
        %2286 = vmatprep.subr.bf16.mxu0 0
        %2287 = vmatpush1.bf16.msra.mxu0 0
        %2288 = vmatprep.subr.bf16.mxu0 0
        %2289 = vmatpush1.bf16.msra.mxu0 0
        %2290 = vmatprep.mubr.bf16.mxu0 0
        %2291 = vmatmul.mubr.bf16.gmra.mrb[0].mxu0 %v2178
        %v2292 = vpop.f32.mrb[0].mxu0
        %v2293 = vadd.f32 0.0, %v2292
        %v2294 = vpop.f32.mrb[0].mxu0
        %v2295 = vpop.f32.mrb[0].mxu0
        %v2296 = vadd.f32 0.0, %v2295
        %v2297 = vpop.f32.mrb[0].mxu0
        %2298 = vmatprep.mubr.bf16.mxu0 0
        %2299 = vmatmul.mubr.bf16.gmra.mrb[0].mxu0 %v2179
        %v2300 = vpop.f32.mrb[0].mxu0
        %v2301 = vadd.f32 0.0, %v2300
        %v2302 = vpop.f32.mrb[0].mxu0
        %v2303 = vpop.f32.mrb[0].mxu0
        %v2304 = vadd.f32 0.0, %v2303
        %v2305 = vpop.f32.mrb[0].mxu0
        %2306 = vmatprep.mubr.bf16.mxu0 0
        %2307 = vmatmul.mubr.bf16.gmra.mrb[0].mxu0 %v2180
        %v2308 = vpop.f32.mrb[0].mxu0
        %v2309 = vadd.f32 0.0, %v2308
        %v2310 = vpop.f32.mrb[0].mxu0
        %v2311 = vpop.f32.mrb[0].mxu0
        %v2312 = vadd.f32 0.0, %v2311
        %v2313 = vpop.f32.mrb[0].mxu0
        %2314 = vmatprep.mubr.bf16.mxu0 0
        %2315 = vmatmul.mubr.bf16.gmra.mrb[0].mxu0 %v2181
        %v2316 = vpop.f32.mrb[0].mxu0
        %v2317 = vadd.f32 0.0, %v2316
        %v2318 = vpop.f32.mrb[0].mxu0
        %v2319 = vpop.f32.mrb[0].mxu0
        %v2320 = vadd.f32 0.0, %v2319
        %v2321 = vpop.f32.mrb[0].mxu0
        %2322 = vmatprep.mubr.bf16.mxu0 0
        %2323 = vmatmul.mubr.bf16.gmra.mrb[0].mxu0 %v2182
        %v2324 = vpop.f32.mrb[0].mxu0
        %v2325 = vadd.f32 0.0, %v2324
        %v2326 = vpop.f32.mrb[0].mxu0
        %v2327 = vpop.f32.mrb[0].mxu0
        %v2328 = vadd.f32 0.0, %v2327
        %v2329 = vpop.f32.mrb[0].mxu0
        %2330 = vmatprep.mubr.bf16.mxu0 0
        %2331 = vmatmul.mubr.bf16.gmra.mrb[0].mxu0 %v2183
        %v2332 = vpop.f32.mrb[0].mxu0
        %v2333 = vadd.f32 0.0, %v2332
        %v2334 = vpop.f32.mrb[0].mxu0
        %v2335 = vpop.f32.mrb[0].mxu0
        %v2336 = vadd.f32 0.0, %v2335
        %v2337 = vpop.f32.mrb[0].mxu0
        %2338 = vmatprep.mubr.bf16.mxu0 0
        %2339 = vmatmul.mubr.bf16.gmra.mrb[0].mxu0 %v2184
        %v2340 = vpop.f32.mrb[0].mxu0
        %v2341 = vadd.f32 0.0, %v2340
        %v2342 = vpop.f32.mrb[0].mxu0
        %v2343 = vpop.f32.mrb[0].mxu0
        %v2344 = vadd.f32 0.0, %v2343
        %v2345 = vpop.f32.mrb[0].mxu0
        %2346 = vmatprep.mubr.bf16.mxu0 0
        %2347 = vmatmul.mubr.bf16.gmra.mrb[0].mxu0 %v2185
        %v2348 = vpop.f32.mrb[0].mxu0
        %v2349 = vadd.f32 0.0, %v2348
        %v2350 = vpop.f32.mrb[0].mxu0
        %v2351 = vpop.f32.mrb[0].mxu0
        %v2352 = vadd.f32 0.0, %v2351
        %v2353 = vpop.f32.mrb[0].mxu0
        %2354 = vmatprep.mubr.bf16.mxu0 0
        %2355 = vmatmul.mubr.bf16.gmra.mrb[0].mxu0 %v2186
        %v2356 = vpop.f32.mrb[0].mxu0
        %v2357 = vadd.f32 0.0, %v2356
        %v2358 = vpop.f32.mrb[0].mxu0
        %v2359 = vpop.f32.mrb[0].mxu0
        %v2360 = vadd.f32 0.0, %v2359
        %v2361 = vpop.f32.mrb[0].mxu0
        %2362 = vmatprep.mubr.bf16.mxu0 0
        %2363 = vmatmul.mubr.bf16.gmra.mrb[0].mxu0 %v2187
        %v2364 = vpop.f32.mrb[0].mxu0
        %v2365 = vadd.f32 0.0, %v2364
        %v2366 = vpop.f32.mrb[0].mxu0
        %v2367 = vpop.f32.mrb[0].mxu0
        %v2368 = vadd.f32 0.0, %v2367
        %v2369 = vpop.f32.mrb[0].mxu0
        %2370 = vmatprep.mubr.bf16.mxu0 0
        %2371 = vmatmul.mubr.bf16.gmra.mrb[0].mxu0 %v2188
        %v2372 = vpop.f32.mrb[0].mxu0
        %v2373 = vadd.f32 0.0, %v2372
        %v2374 = vpop.f32.mrb[0].mxu0
        %v2375 = vpop.f32.mrb[0].mxu0
        %v2376 = vadd.f32 0.0, %v2375
        %v2377 = vpop.f32.mrb[0].mxu0
        %2378 = vmatprep.mubr.bf16.mxu0 0
        %2379 = vmatmul.mubr.bf16.gmra.mrb[0].mxu0 %v2189
        %v2380 = vpop.f32.mrb[0].mxu0
        %v2381 = vadd.f32 0.0, %v2380
        %v2382 = vpop.f32.mrb[0].mxu0
        %v2383 = vpop.f32.mrb[0].mxu0
        %v2384 = vadd.f32 0.0, %v2383
        %v2385 = vpop.f32.mrb[0].mxu0
        %2386 = vmatprep.mubr.bf16.mxu0 0
        %2387 = vmatmul.mubr.bf16.gmra.mrb[0].mxu0 %v2190
        %v2388 = vpop.f32.mrb[0].mxu0
        %v2389 = vadd.f32 0.0, %v2388
        %v2390 = vpop.f32.mrb[0].mxu0
        %v2391 = vpop.f32.mrb[0].mxu0
        %v2392 = vadd.f32 0.0, %v2391
        %v2393 = vpop.f32.mrb[0].mxu0
        %2394 = vmatprep.mubr.bf16.mxu0 0
        %2395 = vmatmul.mubr.bf16.gmra.mrb[0].mxu0 %v2191
        %v2396 = vpop.f32.mrb[0].mxu0
        %v2397 = vadd.f32 0.0, %v2396
        %v2398 = vpop.f32.mrb[0].mxu0
        %v2399 = vpop.f32.mrb[0].mxu0
        %v2400 = vadd.f32 0.0, %v2399
        %v2401 = vpop.f32.mrb[0].mxu0
        %2402 = vmatprep.mubr.bf16.mxu0 0
        %2403 = vmatmul.mubr.bf16.gmra.mrb[0].mxu0 %v2192
        %v2404 = vpop.f32.mrb[0].mxu0
        %v2405 = vadd.f32 0.0, %v2404
        %v2406 = vpop.f32.mrb[0].mxu0
        %v2407 = vpop.f32.mrb[0].mxu0
        %v2408 = vadd.f32 0.0, %v2407
        %v2409 = vpop.f32.mrb[0].mxu0
        %2410 = vmatprep.mubr.bf16.mxu0 0
        %2411 = vmatmul.mubr.bf16.gmra.mrb[0].mxu0 %v2193
        %v2412 = vpop.f32.mrb[0].mxu0
        %v2413 = vadd.f32 0.0, %v2412
        %v2414 = vpop.f32.mrb[0].mxu0
        %v2415 = vpop.f32.mrb[0].mxu0
        %v2416 = vadd.f32 0.0, %v2415
        %v2417 = vpop.f32.mrb[0].mxu0
        %2418 = vdwg.mxu0
        %v2419 = vadd.f32 %v2097, %v2293
        %v2420 = vadd.f32 %v2098, %v2296
        %v2421 = vadd.f32 %v2099, %v2301
        %v2422 = vadd.f32 %v2100, %v2304
        %v2423 = vadd.f32 %v2101, %v2309
        %v2424 = vadd.f32 %v2102, %v2312
        %v2425 = vadd.f32 %v2103, %v2317
        %v2426 = vadd.f32 %v2104, %v2320
        %v2427 = vadd.f32 %v2105, %v2325
        %v2428 = vadd.f32 %v2106, %v2328
        %v2429 = vadd.f32 %v2107, %v2333
        %v2430 = vadd.f32 %v2108, %v2336
        %v2431 = vadd.f32 %v2109, %v2341
        %v2432 = vadd.f32 %v2110, %v2344
        %v2433 = vadd.f32 %v2111, %v2349
        %v2434 = vadd.f32 %v2112, %v2352
        %v2435 = vadd.f32 %v2113, %v2357
        %v2436 = vadd.f32 %v2114, %v2360
        %v2437 = vadd.f32 %v2115, %v2365
        %v2438 = vadd.f32 %v2116, %v2368
        %v2439 = vadd.f32 %v2117, %v2373
        %v2440 = vadd.f32 %v2118, %v2376
        %v2441 = vadd.f32 %v2119, %v2381
        %v2442 = vadd.f32 %v2120, %v2384
        %v2443 = vadd.f32 %v2121, %v2389
        %v2444 = vadd.f32 %v2122, %v2392
        %v2445 = vadd.f32 %v2123, %v2397
        %v2446 = vadd.f32 %v2124, %v2400
        %v2447 = vadd.f32 %v2125, %v2405
        %v2448 = vadd.f32 %v2126, %v2408
        %v2449 = vadd.f32 %v2127, %v2413
        %v2450 = vadd.f32 %v2128, %v2416
        %2451 = vst [vmem:[#allocation3] sm:$0xff] %v2419
        %2452 = vst [vmem:[#allocation3 + $0x8] sm:$0xff] %v2420
        %2453 = vst [vmem:[#allocation3 + $0x10] sm:$0xff] %v2421
        %2454 = vst [vmem:[#allocation3 + $0x18] sm:$0xff] %v2422
        %2455 = vst [vmem:[#allocation3 + $0x20] sm:$0xff] %v2423
        %2456 = vst [vmem:[#allocation3 + $0x28] sm:$0xff] %v2424
        %2457 = vst [vmem:[#allocation3 + $0x30] sm:$0xff] %v2425
        %2458 = vst [vmem:[#allocation3 + $0x38] sm:$0xff] %v2426
        %2459 = vst [vmem:[#allocation3 + $0x40] sm:$0xff] %v2427
        %2460 = vst [vmem:[#allocation3 + $0x48] sm:$0xff] %v2428
        %2461 = vst [vmem:[#allocation3 + $0x50] sm:$0xff] %v2429
        %2462 = vst [vmem:[#allocation3 + $0x58] sm:$0xff] %v2430
        %2463 = vst [vmem:[#allocation3 + $0x60] sm:$0xff] %v2431
        %2464 = vst [vmem:[#allocation3 + $0x68] sm:$0xff] %v2432
        %2465 = vst [vmem:[#allocation3 + $0x70] sm:$0xff] %v2433
        %2466 = vst [vmem:[#allocation3 + $0x78] sm:$0xff] %v2434
        %2467 = vst [vmem:[#allocation3 + $0x80] sm:$0xff] %v2435
        %2468 = vst [vmem:[#allocation3 + $0x88] sm:$0xff] %v2436
        %2469 = vst [vmem:[#allocation3 + $0x90] sm:$0xff] %v2437
        %2470 = vst [vmem:[#allocation3 + $0x98] sm:$0xff] %v2438
        %2471 = vst [vmem:[#allocation3 + $0xa0] sm:$0xff] %v2439
        %2472 = vst [vmem:[#allocation3 + $0xa8] sm:$0xff] %v2440
        %2473 = vst [vmem:[#allocation3 + $0xb0] sm:$0xff] %v2441
        %2474 = vst [vmem:[#allocation3 + $0xb8] sm:$0xff] %v2442
        %2475 = vst [vmem:[#allocation3 + $0xc0] sm:$0xff] %v2443
        %2476 = vst [vmem:[#allocation3 + $0xc8] sm:$0xff] %v2444
        %2477 = vst [vmem:[#allocation3 + $0xd0] sm:$0xff] %v2445
        %2478 = vst [vmem:[#allocation3 + $0xd8] sm:$0xff] %v2446
        %2479 = vst [vmem:[#allocation3 + $0xe0] sm:$0xff] %v2447
        %2480 = vst [vmem:[#allocation3 + $0xe8] sm:$0xff] %v2448
        %2481 = vst [vmem:[#allocation3 + $0xf0] sm:$0xff] %v2449
        %2482 = vst [vmem:[#allocation3 + $0xf8] sm:$0xff] %v2450
        %v2483 = vld [vmem:[#allocation2] sm:$0xe]
        %v2484 = vld [vmem:[#allocation2 + $0x4] sm:$0xf]
        %v2485 = vld [vmem:[#allocation2 + $0x8] sm:$0x1]
        %v2486 = vld [vmem:[#allocation2 + $0xc] sm:$0xe]
        %v2487 = vld [vmem:[#allocation2 + $0x10] sm:$0xf]
        %v2488 = vld [vmem:[#allocation2 + $0x14] sm:$0x1]
        %v2489 = vld [vmem:[#allocation2 + $0x18] sm:$0xe]
        %v2490 = vld [vmem:[#allocation2 + $0x1c] sm:$0xf]
        %v2491 = vld [vmem:[#allocation2 + $0x20] sm:$0x1]
        %v2492 = vld [vmem:[#allocation2 + $0x24] sm:$0xe]
        %v2493 = vld [vmem:[#allocation2 + $0x28] sm:$0xf]
        %v2494 = vld [vmem:[#allocation2 + $0x2c] sm:$0x1]
        %v2495 = vld [vmem:[#allocation2 + $0x30] sm:$0xe]
        %v2496 = vld [vmem:[#allocation2 + $0x34] sm:$0xf]
        %v2497 = vld [vmem:[#allocation2 + $0x38] sm:$0x1]
        %v2498 = vld [vmem:[#allocation2 + $0x3c] sm:$0xe]
        %v2499 = vld [vmem:[#allocation2 + $0x40] sm:$0xf]
        %v2500 = vld [vmem:[#allocation2 + $0x44] sm:$0x1]
        %v2501 = vld [vmem:[#allocation2 + $0x48] sm:$0xe]
        %v2502 = vld [vmem:[#allocation2 + $0x4c] sm:$0xf]
        %v2503 = vld [vmem:[#allocation2 + $0x50] sm:$0x1]
        %v2504 = vld [vmem:[#allocation2 + $0x54] sm:$0xe]
        %v2505 = vld [vmem:[#allocation2 + $0x58] sm:$0xf]
        %v2506 = vld [vmem:[#allocation2 + $0x5c] sm:$0x1]
        %v2507 = vld [vmem:[#allocation2 + $0x60] sm:$0xe]
        %v2508 = vld [vmem:[#allocation2 + $0x64] sm:$0xf]
        %v2509 = vld [vmem:[#allocation2 + $0x68] sm:$0x1]
        %v2510 = vld [vmem:[#allocation2 + $0x6c] sm:$0xe]
        %v2511 = vld [vmem:[#allocation2 + $0x70] sm:$0xf]
        %v2512 = vld [vmem:[#allocation2 + $0x74] sm:$0x1]
        %v2513 = vld [vmem:[#allocation2 + $0x78] sm:$0xe]
        %v2514 = vld [vmem:[#allocation2 + $0x7c] sm:$0xf]
        %v2515 = vld [vmem:[#allocation2 + $0x80] sm:$0x1]
        %v2516 = vld [vmem:[#allocation2 + $0x84] sm:$0xe]
        %v2517 = vld [vmem:[#allocation2 + $0x88] sm:$0xf]
        %v2518 = vld [vmem:[#allocation2 + $0x8c] sm:$0x1]
        %v2519 = vld [vmem:[#allocation2 + $0x90] sm:$0xe]
        %v2520 = vld [vmem:[#allocation2 + $0x94] sm:$0xf]
        %v2521 = vld [vmem:[#allocation2 + $0x98] sm:$0x1]
        %v2522 = vld [vmem:[#allocation2 + $0x9c] sm:$0xe]
        %v2523 = vld [vmem:[#allocation2 + $0xa0] sm:$0xf]
        %v2524 = vld [vmem:[#allocation2 + $0xa4] sm:$0x1]
        %v2525 = vld [vmem:[#allocation2 + $0xa8] sm:$0xe]
        %v2526 = vld [vmem:[#allocation2 + $0xac] sm:$0xf]
        %v2527 = vld [vmem:[#allocation2 + $0xb0] sm:$0x1]
        %v2528 = vld [vmem:[#allocation2 + $0xb4] sm:$0xe]
        %v2529 = vld [vmem:[#allocation2 + $0xb8] sm:$0xf]
        %v2530 = vld [vmem:[#allocation2 + $0xbc] sm:$0x1]
        %vm2579 = vcmask 1042432
        %vm2580 = vcmask 1046532
        %vm2581 = vmor %vm2579, %vm2580
        %v2582 = vrot.slane %v2483, 5
        %v2583 = vrot.slane %v2582, 4
        %v2584 = vrot.slane %v2484, 5
        %v2585 = vsel %vm2581, %v2583, %v2584
        %v2586 = vrot.slane %v2584, 4
        %v2587 = vrot.slane %v2485, 5
        %v2588 = vsel %vm2581, %v2586, %v2587
        %v2589 = vrot.slane %v2486, 5
        %v2590 = vrot.slane %v2589, 4
        %v2591 = vrot.slane %v2487, 5
        %v2592 = vsel %vm2581, %v2590, %v2591
        %v2593 = vrot.slane %v2591, 4
        %v2594 = vrot.slane %v2488, 5
        %v2595 = vsel %vm2581, %v2593, %v2594
        %v2596 = vrot.slane %v2489, 5
        %v2597 = vrot.slane %v2596, 4
        %v2598 = vrot.slane %v2490, 5
        %v2599 = vsel %vm2581, %v2597, %v2598
        %v2600 = vrot.slane %v2598, 4
        %v2601 = vrot.slane %v2491, 5
        %v2602 = vsel %vm2581, %v2600, %v2601
        %v2603 = vrot.slane %v2492, 5
        %v2604 = vrot.slane %v2603, 4
        %v2605 = vrot.slane %v2493, 5
        %v2606 = vsel %vm2581, %v2604, %v2605
        %v2607 = vrot.slane %v2605, 4
        %v2608 = vrot.slane %v2494, 5
        %v2609 = vsel %vm2581, %v2607, %v2608
        %v2610 = vrot.slane %v2495, 5
        %v2611 = vrot.slane %v2610, 4
        %v2612 = vrot.slane %v2496, 5
        %v2613 = vsel %vm2581, %v2611, %v2612
        %v2614 = vrot.slane %v2612, 4
        %v2615 = vrot.slane %v2497, 5
        %v2616 = vsel %vm2581, %v2614, %v2615
        %v2617 = vrot.slane %v2498, 5
        %v2618 = vrot.slane %v2617, 4
        %v2619 = vrot.slane %v2499, 5
        %v2620 = vsel %vm2581, %v2618, %v2619
        %v2621 = vrot.slane %v2619, 4
        %v2622 = vrot.slane %v2500, 5
        %v2623 = vsel %vm2581, %v2621, %v2622
        %v2624 = vrot.slane %v2501, 5
        %v2625 = vrot.slane %v2624, 4
        %v2626 = vrot.slane %v2502, 5
        %v2627 = vsel %vm2581, %v2625, %v2626
        %v2628 = vrot.slane %v2626, 4
        %v2629 = vrot.slane %v2503, 5
        %v2630 = vsel %vm2581, %v2628, %v2629
        %v2631 = vrot.slane %v2504, 5
        %v2632 = vrot.slane %v2631, 4
        %v2633 = vrot.slane %v2505, 5
        %v2634 = vsel %vm2581, %v2632, %v2633
        %v2635 = vrot.slane %v2633, 4
        %v2636 = vrot.slane %v2506, 5
        %v2637 = vsel %vm2581, %v2635, %v2636
        %v2638 = vrot.slane %v2507, 5
        %v2639 = vrot.slane %v2638, 4
        %v2640 = vrot.slane %v2508, 5
        %v2641 = vsel %vm2581, %v2639, %v2640
        %v2642 = vrot.slane %v2640, 4
        %v2643 = vrot.slane %v2509, 5
        %v2644 = vsel %vm2581, %v2642, %v2643
        %v2645 = vrot.slane %v2510, 5
        %v2646 = vrot.slane %v2645, 4
        %v2647 = vrot.slane %v2511, 5
        %v2648 = vsel %vm2581, %v2646, %v2647
        %v2649 = vrot.slane %v2647, 4
        %v2650 = vrot.slane %v2512, 5
        %v2651 = vsel %vm2581, %v2649, %v2650
        %v2652 = vrot.slane %v2513, 5
        %v2653 = vrot.slane %v2652, 4
        %v2654 = vrot.slane %v2514, 5
        %v2655 = vsel %vm2581, %v2653, %v2654
        %v2656 = vrot.slane %v2654, 4
        %v2657 = vrot.slane %v2515, 5
        %v2658 = vsel %vm2581, %v2656, %v2657
        %v2659 = vrot.slane %v2516, 5
        %v2660 = vrot.slane %v2659, 4
        %v2661 = vrot.slane %v2517, 5
        %v2662 = vsel %vm2581, %v2660, %v2661
        %v2663 = vrot.slane %v2661, 4
        %v2664 = vrot.slane %v2518, 5
        %v2665 = vsel %vm2581, %v2663, %v2664
        %v2666 = vrot.slane %v2519, 5
        %v2667 = vrot.slane %v2666, 4
        %v2668 = vrot.slane %v2520, 5
        %v2669 = vsel %vm2581, %v2667, %v2668
        %v2670 = vrot.slane %v2668, 4
        %v2671 = vrot.slane %v2521, 5
        %v2672 = vsel %vm2581, %v2670, %v2671
        %v2673 = vrot.slane %v2522, 5
        %v2674 = vrot.slane %v2673, 4
        %v2675 = vrot.slane %v2523, 5
        %v2676 = vsel %vm2581, %v2674, %v2675
        %v2677 = vrot.slane %v2675, 4
        %v2678 = vrot.slane %v2524, 5
        %v2679 = vsel %vm2581, %v2677, %v2678
        %v2680 = vrot.slane %v2525, 5
        %v2681 = vrot.slane %v2680, 4
        %v2682 = vrot.slane %v2526, 5
        %v2683 = vsel %vm2581, %v2681, %v2682
        %v2684 = vrot.slane %v2682, 4
        %v2685 = vrot.slane %v2527, 5
        %v2686 = vsel %vm2581, %v2684, %v2685
        %v2687 = vrot.slane %v2528, 5
        %v2688 = vrot.slane %v2687, 4
        %v2689 = vrot.slane %v2529, 5
        %v2690 = vsel %vm2581, %v2688, %v2689
        %v2691 = vrot.slane %v2689, 4
        %v2692 = vrot.slane %v2530, 5
        %v2693 = vsel %vm2581, %v2691, %v2692
        %v2694 = vld [vmem:[#allocation3] sm:$0xff]
        %v2695 = vld [vmem:[#allocation3 + $0x8] sm:$0xff]
        %v2696 = vld [vmem:[#allocation3 + $0x10] sm:$0xff]
        %v2697 = vld [vmem:[#allocation3 + $0x18] sm:$0xff]
        %v2698 = vld [vmem:[#allocation3 + $0x20] sm:$0xff]
        %v2699 = vld [vmem:[#allocation3 + $0x28] sm:$0xff]
        %v2700 = vld [vmem:[#allocation3 + $0x30] sm:$0xff]
        %v2701 = vld [vmem:[#allocation3 + $0x38] sm:$0xff]
        %v2702 = vld [vmem:[#allocation3 + $0x40] sm:$0xff]
        %v2703 = vld [vmem:[#allocation3 + $0x48] sm:$0xff]
        %v2704 = vld [vmem:[#allocation3 + $0x50] sm:$0xff]
        %v2705 = vld [vmem:[#allocation3 + $0x58] sm:$0xff]
        %v2706 = vld [vmem:[#allocation3 + $0x60] sm:$0xff]
        %v2707 = vld [vmem:[#allocation3 + $0x68] sm:$0xff]
        %v2708 = vld [vmem:[#allocation3 + $0x70] sm:$0xff]
        %v2709 = vld [vmem:[#allocation3 + $0x78] sm:$0xff]
        %v2710 = vld [vmem:[#allocation3 + $0x80] sm:$0xff]
        %v2711 = vld [vmem:[#allocation3 + $0x88] sm:$0xff]
        %v2712 = vld [vmem:[#allocation3 + $0x90] sm:$0xff]
        %v2713 = vld [vmem:[#allocation3 + $0x98] sm:$0xff]
        %v2714 = vld [vmem:[#allocation3 + $0xa0] sm:$0xff]
        %v2715 = vld [vmem:[#allocation3 + $0xa8] sm:$0xff]
        %v2716 = vld [vmem:[#allocation3 + $0xb0] sm:$0xff]
        %v2717 = vld [vmem:[#allocation3 + $0xb8] sm:$0xff]
        %v2718 = vld [vmem:[#allocation3 + $0xc0] sm:$0xff]
        %v2719 = vld [vmem:[#allocation3 + $0xc8] sm:$0xff]
        %v2720 = vld [vmem:[#allocation3 + $0xd0] sm:$0xff]
        %v2721 = vld [vmem:[#allocation3 + $0xd8] sm:$0xff]
        %v2722 = vld [vmem:[#allocation3 + $0xe0] sm:$0xff]
        %v2723 = vld [vmem:[#allocation3 + $0xe8] sm:$0xff]
        %v2724 = vld [vmem:[#allocation3 + $0xf0] sm:$0xff]
        %v2725 = vld [vmem:[#allocation3 + $0xf8] sm:$0xff]
        %s2726 = scalar_lea.vmem %s3, 128
        %v2727 = vld [vmem:[%s2726] sm:$0xf]
        %v2728 = vld [vmem:[%s2726 + $0x4] sm:$0xf]
        %v2729 = vld [vmem:[%s2726 + $0x8] sm:$0xf]
        %v2730 = vld [vmem:[%s2726 + $0xc] sm:$0xf]
        %v2731 = vld [vmem:[%s2726 + $0x10] sm:$0xf]
        %v2732 = vld [vmem:[%s2726 + $0x14] sm:$0xf]
        %v2733 = vld [vmem:[%s2726 + $0x18] sm:$0xf]
        %v2734 = vld [vmem:[%s2726 + $0x1c] sm:$0xf]
        %v2735 = vld [vmem:[%s2726 + $0x20] sm:$0xf]
        %v2736 = vld [vmem:[%s2726 + $0x24] sm:$0xf]
        %v2737 = vld [vmem:[%s2726 + $0x28] sm:$0xf]
        %v2738 = vld [vmem:[%s2726 + $0x2c] sm:$0xf]
        %v2739 = vld [vmem:[%s2726 + $0x30] sm:$0xf]
        %v2740 = vld [vmem:[%s2726 + $0x34] sm:$0xf]
        %v2741 = vld [vmem:[%s2726 + $0x38] sm:$0xf]
        %v2742 = vld [vmem:[%s2726 + $0x3c] sm:$0xf]
        %v2743 = vunpack.c.l.b16 %v2585
        %v2744 = vunpack.c.l.b16 %v2588
        %v2745 = vunpack.c.l.b16 %v2592
        %v2746 = vunpack.c.l.b16 %v2595
        %v2747 = vunpack.c.l.b16 %v2599
        %v2748 = vunpack.c.l.b16 %v2602
        %v2749 = vunpack.c.l.b16 %v2606
        %v2750 = vunpack.c.l.b16 %v2609
        %v2751 = vunpack.c.l.b16 %v2613
        %v2752 = vunpack.c.l.b16 %v2616
        %v2753 = vunpack.c.l.b16 %v2620
        %v2754 = vunpack.c.l.b16 %v2623
        %v2755 = vunpack.c.l.b16 %v2627
        %v2756 = vunpack.c.l.b16 %v2630
        %v2757 = vunpack.c.l.b16 %v2634
        %v2758 = vunpack.c.l.b16 %v2637
        %v2759 = vunpack.c.l.b16 %v2641
        %v2760 = vunpack.c.l.b16 %v2644
        %v2761 = vunpack.c.l.b16 %v2648
        %v2762 = vunpack.c.l.b16 %v2651
        %v2763 = vunpack.c.l.b16 %v2655
        %v2764 = vunpack.c.l.b16 %v2658
        %v2765 = vunpack.c.l.b16 %v2662
        %v2766 = vunpack.c.l.b16 %v2665
        %v2767 = vunpack.c.l.b16 %v2669
        %v2768 = vunpack.c.l.b16 %v2672
        %v2769 = vunpack.c.l.b16 %v2676
        %v2770 = vunpack.c.l.b16 %v2679
        %v2771 = vunpack.c.l.b16 %v2683
        %v2772 = vunpack.c.l.b16 %v2686
        %v2773 = vunpack.c.l.b16 %v2690
        %v2774 = vunpack.c.l.b16 %v2693
        %v2775 = vpack.c.b16 %v2744, %v2743
        %v2776 = vpack.c.b16 %v2746, %v2745
        %v2777 = vpack.c.b16 %v2748, %v2747
        %v2778 = vpack.c.b16 %v2750, %v2749
        %v2779 = vpack.c.b16 %v2752, %v2751
        %v2780 = vpack.c.b16 %v2754, %v2753
        %v2781 = vpack.c.b16 %v2756, %v2755
        %v2782 = vpack.c.b16 %v2758, %v2757
        %v2783 = vpack.c.b16 %v2760, %v2759
        %v2784 = vpack.c.b16 %v2762, %v2761
        %v2785 = vpack.c.b16 %v2764, %v2763
        %v2786 = vpack.c.b16 %v2766, %v2765
        %v2787 = vpack.c.b16 %v2768, %v2767
        %v2788 = vpack.c.b16 %v2770, %v2769
        %v2789 = vpack.c.b16 %v2772, %v2771
        %v2790 = vpack.c.b16 %v2774, %v2773
        %v2823 = vunpack.c.l.b16 %v2727
        %v2824 = vunpack.c.l.b16 %v2728
        %v2825 = vunpack.c.l.b16 %v2729
        %v2826 = vunpack.c.l.b16 %v2730
        %v2827 = vunpack.c.l.b16 %v2731
        %v2828 = vunpack.c.l.b16 %v2732
        %v2829 = vunpack.c.l.b16 %v2733
        %v2830 = vunpack.c.l.b16 %v2734
        %v2831 = vunpack.c.l.b16 %v2735
        %v2832 = vunpack.c.l.b16 %v2736
        %v2833 = vunpack.c.l.b16 %v2737
        %v2834 = vunpack.c.l.b16 %v2738
        %v2835 = vunpack.c.l.b16 %v2739
        %v2836 = vunpack.c.l.b16 %v2740
        %v2837 = vunpack.c.l.b16 %v2741
        %v2838 = vunpack.c.l.b16 %v2742
        %v2839 = vpack.c.b16 %v2824, %v2823
        %v2840 = vpack.c.b16 %v2826, %v2825
        %v2841 = vpack.c.b16 %v2828, %v2827
        %v2842 = vpack.c.b16 %v2830, %v2829
        %v2843 = vpack.c.b16 %v2832, %v2831
        %v2844 = vpack.c.b16 %v2834, %v2833
        %v2845 = vpack.c.b16 %v2836, %v2835
        %v2846 = vpack.c.b16 %v2838, %v2837
        %2855 = vmatprep.subr.bf16.mxu0 0
        %2856 = vmatpush1.bf16.msra.mxu0 %v2839
        %2857 = vmatprep.subr.bf16.mxu0 0
        %2858 = vmatpush1.bf16.msra.mxu0 %v2840
        %2859 = vmatprep.subr.bf16.mxu0 0
        %2860 = vmatpush1.bf16.msra.mxu0 %v2841
        %2861 = vmatprep.subr.bf16.mxu0 0
        %2862 = vmatpush1.bf16.msra.mxu0 %v2842
        %2863 = vmatprep.subr.bf16.mxu0 0
        %2864 = vmatpush1.bf16.msra.mxu0 %v2843
        %2865 = vmatprep.subr.bf16.mxu0 0
        %2866 = vmatpush1.bf16.msra.mxu0 %v2844
        %2867 = vmatprep.subr.bf16.mxu0 0
        %2868 = vmatpush1.bf16.msra.mxu0 %v2845
        %2869 = vmatprep.subr.bf16.mxu0 0
        %2870 = vmatpush1.bf16.msra.mxu0 %v2846
        %2871 = vmatprep.subr.bf16.mxu0 0
        %2872 = vmatpush1.bf16.msra.mxu0 0
        %2873 = vmatprep.subr.bf16.mxu0 0
        %2874 = vmatpush1.bf16.msra.mxu0 0
        %2875 = vmatprep.subr.bf16.mxu0 0
        %2876 = vmatpush1.bf16.msra.mxu0 0
        %2877 = vmatprep.subr.bf16.mxu0 0
        %2878 = vmatpush1.bf16.msra.mxu0 0
        %2879 = vmatprep.subr.bf16.mxu0 0
        %2880 = vmatpush1.bf16.msra.mxu0 0
        %2881 = vmatprep.subr.bf16.mxu0 0
        %2882 = vmatpush1.bf16.msra.mxu0 0
        %2883 = vmatprep.subr.bf16.mxu0 0
        %2884 = vmatpush1.bf16.msra.mxu0 0
        %2885 = vmatprep.subr.bf16.mxu0 0
        %2886 = vmatpush1.bf16.msra.mxu0 0
        %2887 = vmatprep.mubr.bf16.mxu0 0
        %2888 = vmatmul.mubr.bf16.gmra.mrb[0].mxu0 %v2775
        %v2889 = vpop.f32.mrb[0].mxu0
        %v2890 = vadd.f32 0.0, %v2889
        %v2891 = vpop.f32.mrb[0].mxu0
        %v2892 = vpop.f32.mrb[0].mxu0
        %v2893 = vadd.f32 0.0, %v2892
        %v2894 = vpop.f32.mrb[0].mxu0
        %2895 = vmatprep.mubr.bf16.mxu0 0
        %2896 = vmatmul.mubr.bf16.gmra.mrb[0].mxu0 %v2776
        %v2897 = vpop.f32.mrb[0].mxu0
        %v2898 = vadd.f32 0.0, %v2897
        %v2899 = vpop.f32.mrb[0].mxu0
        %v2900 = vpop.f32.mrb[0].mxu0
        %v2901 = vadd.f32 0.0, %v2900
        %v2902 = vpop.f32.mrb[0].mxu0
        %2903 = vmatprep.mubr.bf16.mxu0 0
        %2904 = vmatmul.mubr.bf16.gmra.mrb[0].mxu0 %v2777
        %v2905 = vpop.f32.mrb[0].mxu0
        %v2906 = vadd.f32 0.0, %v2905
        %v2907 = vpop.f32.mrb[0].mxu0
        %v2908 = vpop.f32.mrb[0].mxu0
        %v2909 = vadd.f32 0.0, %v2908
        %v2910 = vpop.f32.mrb[0].mxu0
        %2911 = vmatprep.mubr.bf16.mxu0 0
        %2912 = vmatmul.mubr.bf16.gmra.mrb[0].mxu0 %v2778
        %v2913 = vpop.f32.mrb[0].mxu0
        %v2914 = vadd.f32 0.0, %v2913
        %v2915 = vpop.f32.mrb[0].mxu0
        %v2916 = vpop.f32.mrb[0].mxu0
        %v2917 = vadd.f32 0.0, %v2916
        %v2918 = vpop.f32.mrb[0].mxu0
        %2919 = vmatprep.mubr.bf16.mxu0 0
        %2920 = vmatmul.mubr.bf16.gmra.mrb[0].mxu0 %v2779
        %v2921 = vpop.f32.mrb[0].mxu0
        %v2922 = vadd.f32 0.0, %v2921
        %v2923 = vpop.f32.mrb[0].mxu0
        %v2924 = vpop.f32.mrb[0].mxu0
        %v2925 = vadd.f32 0.0, %v2924
        %v2926 = vpop.f32.mrb[0].mxu0
        %2927 = vmatprep.mubr.bf16.mxu0 0
        %2928 = vmatmul.mubr.bf16.gmra.mrb[0].mxu0 %v2780
        %v2929 = vpop.f32.mrb[0].mxu0
        %v2930 = vadd.f32 0.0, %v2929
        %v2931 = vpop.f32.mrb[0].mxu0
        %v2932 = vpop.f32.mrb[0].mxu0
        %v2933 = vadd.f32 0.0, %v2932
        %v2934 = vpop.f32.mrb[0].mxu0
        %2935 = vmatprep.mubr.bf16.mxu0 0
        %2936 = vmatmul.mubr.bf16.gmra.mrb[0].mxu0 %v2781
        %v2937 = vpop.f32.mrb[0].mxu0
        %v2938 = vadd.f32 0.0, %v2937
        %v2939 = vpop.f32.mrb[0].mxu0
        %v2940 = vpop.f32.mrb[0].mxu0
        %v2941 = vadd.f32 0.0, %v2940
        %v2942 = vpop.f32.mrb[0].mxu0
        %2943 = vmatprep.mubr.bf16.mxu0 0
        %2944 = vmatmul.mubr.bf16.gmra.mrb[0].mxu0 %v2782
        %v2945 = vpop.f32.mrb[0].mxu0
        %v2946 = vadd.f32 0.0, %v2945
        %v2947 = vpop.f32.mrb[0].mxu0
        %v2948 = vpop.f32.mrb[0].mxu0
        %v2949 = vadd.f32 0.0, %v2948
        %v2950 = vpop.f32.mrb[0].mxu0
        %2951 = vmatprep.mubr.bf16.mxu0 0
        %2952 = vmatmul.mubr.bf16.gmra.mrb[0].mxu0 %v2783
        %v2953 = vpop.f32.mrb[0].mxu0
        %v2954 = vadd.f32 0.0, %v2953
        %v2955 = vpop.f32.mrb[0].mxu0
        %v2956 = vpop.f32.mrb[0].mxu0
        %v2957 = vadd.f32 0.0, %v2956
        %v2958 = vpop.f32.mrb[0].mxu0
        %2959 = vmatprep.mubr.bf16.mxu0 0
        %2960 = vmatmul.mubr.bf16.gmra.mrb[0].mxu0 %v2784
        %v2961 = vpop.f32.mrb[0].mxu0
        %v2962 = vadd.f32 0.0, %v2961
        %v2963 = vpop.f32.mrb[0].mxu0
        %v2964 = vpop.f32.mrb[0].mxu0
        %v2965 = vadd.f32 0.0, %v2964
        %v2966 = vpop.f32.mrb[0].mxu0
        %2967 = vmatprep.mubr.bf16.mxu0 0
        %2968 = vmatmul.mubr.bf16.gmra.mrb[0].mxu0 %v2785
        %v2969 = vpop.f32.mrb[0].mxu0
        %v2970 = vadd.f32 0.0, %v2969
        %v2971 = vpop.f32.mrb[0].mxu0
        %v2972 = vpop.f32.mrb[0].mxu0
        %v2973 = vadd.f32 0.0, %v2972
        %v2974 = vpop.f32.mrb[0].mxu0
        %2975 = vmatprep.mubr.bf16.mxu0 0
        %2976 = vmatmul.mubr.bf16.gmra.mrb[0].mxu0 %v2786
        %v2977 = vpop.f32.mrb[0].mxu0
        %v2978 = vadd.f32 0.0, %v2977
        %v2979 = vpop.f32.mrb[0].mxu0
        %v2980 = vpop.f32.mrb[0].mxu0
        %v2981 = vadd.f32 0.0, %v2980
        %v2982 = vpop.f32.mrb[0].mxu0
        %2983 = vmatprep.mubr.bf16.mxu0 0
        %2984 = vmatmul.mubr.bf16.gmra.mrb[0].mxu0 %v2787
        %v2985 = vpop.f32.mrb[0].mxu0
        %v2986 = vadd.f32 0.0, %v2985
        %v2987 = vpop.f32.mrb[0].mxu0
        %v2988 = vpop.f32.mrb[0].mxu0
        %v2989 = vadd.f32 0.0, %v2988
        %v2990 = vpop.f32.mrb[0].mxu0
        %2991 = vmatprep.mubr.bf16.mxu0 0
        %2992 = vmatmul.mubr.bf16.gmra.mrb[0].mxu0 %v2788
        %v2993 = vpop.f32.mrb[0].mxu0
        %v2994 = vadd.f32 0.0, %v2993
        %v2995 = vpop.f32.mrb[0].mxu0
        %v2996 = vpop.f32.mrb[0].mxu0
        %v2997 = vadd.f32 0.0, %v2996
        %v2998 = vpop.f32.mrb[0].mxu0
        %2999 = vmatprep.mubr.bf16.mxu0 0
        %3000 = vmatmul.mubr.bf16.gmra.mrb[0].mxu0 %v2789
        %v3001 = vpop.f32.mrb[0].mxu0
        %v3002 = vadd.f32 0.0, %v3001
        %v3003 = vpop.f32.mrb[0].mxu0
        %v3004 = vpop.f32.mrb[0].mxu0
        %v3005 = vadd.f32 0.0, %v3004
        %v3006 = vpop.f32.mrb[0].mxu0
        %3007 = vmatprep.mubr.bf16.mxu0 0
        %3008 = vmatmul.mubr.bf16.gmra.mrb[0].mxu0 %v2790
        %v3009 = vpop.f32.mrb[0].mxu0
        %v3010 = vadd.f32 0.0, %v3009
        %v3011 = vpop.f32.mrb[0].mxu0
        %v3012 = vpop.f32.mrb[0].mxu0
        %v3013 = vadd.f32 0.0, %v3012
        %v3014 = vpop.f32.mrb[0].mxu0
        %3015 = vdwg.mxu0
        %v3016 = vadd.f32 %v2694, %v2890
        %v3017 = vadd.f32 %v2695, %v2893
        %v3018 = vadd.f32 %v2696, %v2898
        %v3019 = vadd.f32 %v2697, %v2901
        %v3020 = vadd.f32 %v2698, %v2906
        %v3021 = vadd.f32 %v2699, %v2909
        %v3022 = vadd.f32 %v2700, %v2914
        %v3023 = vadd.f32 %v2701, %v2917
        %v3024 = vadd.f32 %v2702, %v2922
        %v3025 = vadd.f32 %v2703, %v2925
        %v3026 = vadd.f32 %v2704, %v2930
        %v3027 = vadd.f32 %v2705, %v2933
        %v3028 = vadd.f32 %v2706, %v2938
        %v3029 = vadd.f32 %v2707, %v2941
        %v3030 = vadd.f32 %v2708, %v2946
        %v3031 = vadd.f32 %v2709, %v2949
        %v3032 = vadd.f32 %v2710, %v2954
        %v3033 = vadd.f32 %v2711, %v2957
        %v3034 = vadd.f32 %v2712, %v2962
        %v3035 = vadd.f32 %v2713, %v2965
        %v3036 = vadd.f32 %v2714, %v2970
        %v3037 = vadd.f32 %v2715, %v2973
        %v3038 = vadd.f32 %v2716, %v2978
        %v3039 = vadd.f32 %v2717, %v2981
        %v3040 = vadd.f32 %v2718, %v2986
        %v3041 = vadd.f32 %v2719, %v2989
        %v3042 = vadd.f32 %v2720, %v2994
        %v3043 = vadd.f32 %v2721, %v2997
        %v3044 = vadd.f32 %v2722, %v3002
        %v3045 = vadd.f32 %v2723, %v3005
        %v3046 = vadd.f32 %v2724, %v3010
        %v3047 = vadd.f32 %v2725, %v3013
        %3048 = vst [vmem:[#allocation3] sm:$0xff] %v3016
        %3049 = vst [vmem:[#allocation3 + $0x8] sm:$0xff] %v3017
        %3050 = vst [vmem:[#allocation3 + $0x10] sm:$0xff] %v3018
        %3051 = vst [vmem:[#allocation3 + $0x18] sm:$0xff] %v3019
        %3052 = vst [vmem:[#allocation3 + $0x20] sm:$0xff] %v3020
        %3053 = vst [vmem:[#allocation3 + $0x28] sm:$0xff] %v3021
        %3054 = vst [vmem:[#allocation3 + $0x30] sm:$0xff] %v3022
        %3055 = vst [vmem:[#allocation3 + $0x38] sm:$0xff] %v3023
        %3056 = vst [vmem:[#allocation3 + $0x40] sm:$0xff] %v3024
        %3057 = vst [vmem:[#allocation3 + $0x48] sm:$0xff] %v3025
        %3058 = vst [vmem:[#allocation3 + $0x50] sm:$0xff] %v3026
        %3059 = vst [vmem:[#allocation3 + $0x58] sm:$0xff] %v3027
        %3060 = vst [vmem:[#allocation3 + $0x60] sm:$0xff] %v3028
        %3061 = vst [vmem:[#allocation3 + $0x68] sm:$0xff] %v3029
        %3062 = vst [vmem:[#allocation3 + $0x70] sm:$0xff] %v3030
        %3063 = vst [vmem:[#allocation3 + $0x78] sm:$0xff] %v3031
        %3064 = vst [vmem:[#allocation3 + $0x80] sm:$0xff] %v3032
        %3065 = vst [vmem:[#allocation3 + $0x88] sm:$0xff] %v3033
        %3066 = vst [vmem:[#allocation3 + $0x90] sm:$0xff] %v3034
        %3067 = vst [vmem:[#allocation3 + $0x98] sm:$0xff] %v3035
        %3068 = vst [vmem:[#allocation3 + $0xa0] sm:$0xff] %v3036
        %3069 = vst [vmem:[#allocation3 + $0xa8] sm:$0xff] %v3037
        %3070 = vst [vmem:[#allocation3 + $0xb0] sm:$0xff] %v3038
        %3071 = vst [vmem:[#allocation3 + $0xb8] sm:$0xff] %v3039
        %3072 = vst [vmem:[#allocation3 + $0xc0] sm:$0xff] %v3040
        %3073 = vst [vmem:[#allocation3 + $0xc8] sm:$0xff] %v3041
        %3074 = vst [vmem:[#allocation3 + $0xd0] sm:$0xff] %v3042
        %3075 = vst [vmem:[#allocation3 + $0xd8] sm:$0xff] %v3043
        %3076 = vst [vmem:[#allocation3 + $0xe0] sm:$0xff] %v3044
        %3077 = vst [vmem:[#allocation3 + $0xe8] sm:$0xff] %v3045
        %3078 = vst [vmem:[#allocation3 + $0xf0] sm:$0xff] %v3046
        %3079 = vst [vmem:[#allocation3 + $0xf8] sm:$0xff] %v3047
        %v3080 = vld [vmem:[%s1063] sm:$0xf]
        %v3081 = vld [vmem:[%s1063 + $0x4] sm:$0xf]
        %v3082 = vld [vmem:[%s1063 + $0xc] sm:$0xf]
        %v3083 = vld [vmem:[%s1063 + $0x10] sm:$0xf]
        %v3084 = vld [vmem:[%s1063 + $0x18] sm:$0xf]
        %v3085 = vld [vmem:[%s1063 + $0x1c] sm:$0xf]
        %v3086 = vld [vmem:[%s1063 + $0x24] sm:$0xf]
        %v3087 = vld [vmem:[%s1063 + $0x28] sm:$0xf]
        %v3088 = vld [vmem:[%s1063 + $0x30] sm:$0xf]
        %v3089 = vld [vmem:[%s1063 + $0x34] sm:$0xf]
        %v3090 = vld [vmem:[%s1063 + $0x3c] sm:$0xf]
        %v3091 = vld [vmem:[%s1063 + $0x40] sm:$0xf]
        %v3092 = vld [vmem:[%s1063 + $0x48] sm:$0xf]
        %v3093 = vld [vmem:[%s1063 + $0x4c] sm:$0xf]
        %v3094 = vld [vmem:[%s1063 + $0x54] sm:$0xf]
        %v3095 = vld [vmem:[%s1063 + $0x58] sm:$0xf]
        %v3096 = vld [vmem:[%s1063 + $0x60] sm:$0xf]
        %v3097 = vld [vmem:[%s1063 + $0x64] sm:$0xf]
        %v3098 = vld [vmem:[%s1063 + $0x6c] sm:$0xf]
        %v3099 = vld [vmem:[%s1063 + $0x70] sm:$0xf]
        %v3100 = vld [vmem:[%s1063 + $0x78] sm:$0xf]
        %v3101 = vld [vmem:[%s1063 + $0x7c] sm:$0xf]
        %v3102 = vld [vmem:[%s1063 + $0x84] sm:$0xf]
        %v3103 = vld [vmem:[%s1063 + $0x88] sm:$0xf]
        %v3104 = vld [vmem:[%s1063 + $0x90] sm:$0xf]
        %v3105 = vld [vmem:[%s1063 + $0x94] sm:$0xf]
        %v3106 = vld [vmem:[%s1063 + $0x9c] sm:$0xf]
        %v3107 = vld [vmem:[%s1063 + $0xa0] sm:$0xf]
        %v3108 = vld [vmem:[%s1063 + $0xa8] sm:$0xf]
        %v3109 = vld [vmem:[%s1063 + $0xac] sm:$0xf]
        %v3110 = vld [vmem:[%s1063 + $0xb4] sm:$0xf]
        %v3111 = vld [vmem:[%s1063 + $0xb8] sm:$0xf]
        %v3112 = vld [vmem:[#allocation3] sm:$0xff]
        %v3113 = vld [vmem:[#allocation3 + $0x8] sm:$0xff]
        %v3114 = vld [vmem:[#allocation3 + $0x10] sm:$0xff]
        %v3115 = vld [vmem:[#allocation3 + $0x18] sm:$0xff]
        %v3116 = vld [vmem:[#allocation3 + $0x20] sm:$0xff]
        %v3117 = vld [vmem:[#allocation3 + $0x28] sm:$0xff]
        %v3118 = vld [vmem:[#allocation3 + $0x30] sm:$0xff]
        %v3119 = vld [vmem:[#allocation3 + $0x38] sm:$0xff]
        %v3120 = vld [vmem:[#allocation3 + $0x40] sm:$0xff]
        %v3121 = vld [vmem:[#allocation3 + $0x48] sm:$0xff]
        %v3122 = vld [vmem:[#allocation3 + $0x50] sm:$0xff]
        %v3123 = vld [vmem:[#allocation3 + $0x58] sm:$0xff]
        %v3124 = vld [vmem:[#allocation3 + $0x60] sm:$0xff]
        %v3125 = vld [vmem:[#allocation3 + $0x68] sm:$0xff]
        %v3126 = vld [vmem:[#allocation3 + $0x70] sm:$0xff]
        %v3127 = vld [vmem:[#allocation3 + $0x78] sm:$0xff]
        %v3128 = vld [vmem:[#allocation3 + $0x80] sm:$0xff]
        %v3129 = vld [vmem:[#allocation3 + $0x88] sm:$0xff]
        %v3130 = vld [vmem:[#allocation3 + $0x90] sm:$0xff]
        %v3131 = vld [vmem:[#allocation3 + $0x98] sm:$0xff]
        %v3132 = vld [vmem:[#allocation3 + $0xa0] sm:$0xff]
        %v3133 = vld [vmem:[#allocation3 + $0xa8] sm:$0xff]
        %v3134 = vld [vmem:[#allocation3 + $0xb0] sm:$0xff]
        %v3135 = vld [vmem:[#allocation3 + $0xb8] sm:$0xff]
        %v3136 = vld [vmem:[#allocation3 + $0xc0] sm:$0xff]
        %v3137 = vld [vmem:[#allocation3 + $0xc8] sm:$0xff]
        %v3138 = vld [vmem:[#allocation3 + $0xd0] sm:$0xff]
        %v3139 = vld [vmem:[#allocation3 + $0xd8] sm:$0xff]
        %v3140 = vld [vmem:[#allocation3 + $0xe0] sm:$0xff]
        %v3141 = vld [vmem:[#allocation3 + $0xe8] sm:$0xff]
        %v3142 = vld [vmem:[#allocation3 + $0xf0] sm:$0xff]
        %v3143 = vld [vmem:[#allocation3 + $0xf8] sm:$0xff]
        %s3144 = scalar_lea.vmem %s3, 192
        %v3145 = vld [vmem:[%s3144] sm:$0xf]
        %v3146 = vld [vmem:[%s3144 + $0x4] sm:$0xf]
        %v3147 = vld [vmem:[%s3144 + $0x8] sm:$0xf]
        %v3148 = vld [vmem:[%s3144 + $0xc] sm:$0xf]
        %v3149 = vld [vmem:[%s3144 + $0x10] sm:$0xf]
        %v3150 = vld [vmem:[%s3144 + $0x14] sm:$0xf]
        %v3151 = vld [vmem:[%s3144 + $0x18] sm:$0xf]
        %v3152 = vld [vmem:[%s3144 + $0x1c] sm:$0xf]
        %v3153 = vld [vmem:[%s3144 + $0x20] sm:$0xf]
        %v3154 = vld [vmem:[%s3144 + $0x24] sm:$0xf]
        %v3155 = vld [vmem:[%s3144 + $0x28] sm:$0xf]
        %v3156 = vld [vmem:[%s3144 + $0x2c] sm:$0xf]
        %v3157 = vld [vmem:[%s3144 + $0x30] sm:$0xf]
        %v3158 = vld [vmem:[%s3144 + $0x34] sm:$0xf]
        %v3159 = vld [vmem:[%s3144 + $0x38] sm:$0xf]
        %v3160 = vld [vmem:[%s3144 + $0x3c] sm:$0xf]
        %v3193 = vunpack.c.l.b16 %v3080
        %v3194 = vunpack.c.l.b16 %v3081
        %v3195 = vunpack.c.l.b16 %v3082
        %v3196 = vunpack.c.l.b16 %v3083
        %v3197 = vunpack.c.l.b16 %v3084
        %v3198 = vunpack.c.l.b16 %v3085
        %v3199 = vunpack.c.l.b16 %v3086
        %v3200 = vunpack.c.l.b16 %v3087
        %v3201 = vunpack.c.l.b16 %v3088
        %v3202 = vunpack.c.l.b16 %v3089
        %v3203 = vunpack.c.l.b16 %v3090
        %v3204 = vunpack.c.l.b16 %v3091
        %v3205 = vunpack.c.l.b16 %v3092
        %v3206 = vunpack.c.l.b16 %v3093
        %v3207 = vunpack.c.l.b16 %v3094
        %v3208 = vunpack.c.l.b16 %v3095
        %v3209 = vunpack.c.l.b16 %v3096
        %v3210 = vunpack.c.l.b16 %v3097
        %v3211 = vunpack.c.l.b16 %v3098
        %v3212 = vunpack.c.l.b16 %v3099
        %v3213 = vunpack.c.l.b16 %v3100
        %v3214 = vunpack.c.l.b16 %v3101
        %v3215 = vunpack.c.l.b16 %v3102
        %v3216 = vunpack.c.l.b16 %v3103
        %v3217 = vunpack.c.l.b16 %v3104
        %v3218 = vunpack.c.l.b16 %v3105
        %v3219 = vunpack.c.l.b16 %v3106
        %v3220 = vunpack.c.l.b16 %v3107
        %v3221 = vunpack.c.l.b16 %v3108
        %v3222 = vunpack.c.l.b16 %v3109
        %v3223 = vunpack.c.l.b16 %v3110
        %v3224 = vunpack.c.l.b16 %v3111
        %v3225 = vpack.c.b16 %v3194, %v3193
        %v3226 = vpack.c.b16 %v3196, %v3195
        %v3227 = vpack.c.b16 %v3198, %v3197
        %v3228 = vpack.c.b16 %v3200, %v3199
        %v3229 = vpack.c.b16 %v3202, %v3201
        %v3230 = vpack.c.b16 %v3204, %v3203
        %v3231 = vpack.c.b16 %v3206, %v3205
        %v3232 = vpack.c.b16 %v3208, %v3207
        %v3233 = vpack.c.b16 %v3210, %v3209
        %v3234 = vpack.c.b16 %v3212, %v3211
        %v3235 = vpack.c.b16 %v3214, %v3213
        %v3236 = vpack.c.b16 %v3216, %v3215
        %v3237 = vpack.c.b16 %v3218, %v3217
        %v3238 = vpack.c.b16 %v3220, %v3219
        %v3239 = vpack.c.b16 %v3222, %v3221
        %v3240 = vpack.c.b16 %v3224, %v3223
        %v3273 = vunpack.c.l.b16 %v3145
        %v3274 = vunpack.c.l.b16 %v3146
        %v3275 = vunpack.c.l.b16 %v3147
        %v3276 = vunpack.c.l.b16 %v3148
        %v3277 = vunpack.c.l.b16 %v3149
        %v3278 = vunpack.c.l.b16 %v3150
        %v3279 = vunpack.c.l.b16 %v3151
        %v3280 = vunpack.c.l.b16 %v3152
        %v3281 = vunpack.c.l.b16 %v3153
        %v3282 = vunpack.c.l.b16 %v3154
        %v3283 = vunpack.c.l.b16 %v3155
        %v3284 = vunpack.c.l.b16 %v3156
        %v3285 = vunpack.c.l.b16 %v3157
        %v3286 = vunpack.c.l.b16 %v3158
        %v3287 = vunpack.c.l.b16 %v3159
        %v3288 = vunpack.c.l.b16 %v3160
        %v3289 = vpack.c.b16 %v3274, %v3273
        %v3290 = vpack.c.b16 %v3276, %v3275
        %v3291 = vpack.c.b16 %v3278, %v3277
        %v3292 = vpack.c.b16 %v3280, %v3279
        %v3293 = vpack.c.b16 %v3282, %v3281
        %v3294 = vpack.c.b16 %v3284, %v3283
        %v3295 = vpack.c.b16 %v3286, %v3285
        %v3296 = vpack.c.b16 %v3288, %v3287
        %3305 = vmatprep.subr.bf16.mxu0 0
        %3306 = vmatpush1.bf16.msra.mxu0 %v3289
        %3307 = vmatprep.subr.bf16.mxu0 0
        %3308 = vmatpush1.bf16.msra.mxu0 %v3290
        %3309 = vmatprep.subr.bf16.mxu0 0
        %3310 = vmatpush1.bf16.msra.mxu0 %v3291
        %3311 = vmatprep.subr.bf16.mxu0 0
        %3312 = vmatpush1.bf16.msra.mxu0 %v3292
        %3313 = vmatprep.subr.bf16.mxu0 0
        %3314 = vmatpush1.bf16.msra.mxu0 %v3293
        %3315 = vmatprep.subr.bf16.mxu0 0
        %3316 = vmatpush1.bf16.msra.mxu0 %v3294
        %3317 = vmatprep.subr.bf16.mxu0 0
        %3318 = vmatpush1.bf16.msra.mxu0 %v3295
        %3319 = vmatprep.subr.bf16.mxu0 0
        %3320 = vmatpush1.bf16.msra.mxu0 %v3296
        %3321 = vmatprep.subr.bf16.mxu0 0
        %3322 = vmatpush1.bf16.msra.mxu0 0
        %3323 = vmatprep.subr.bf16.mxu0 0
        %3324 = vmatpush1.bf16.msra.mxu0 0
        %3325 = vmatprep.subr.bf16.mxu0 0
        %3326 = vmatpush1.bf16.msra.mxu0 0
        %3327 = vmatprep.subr.bf16.mxu0 0
        %3328 = vmatpush1.bf16.msra.mxu0 0
        %3329 = vmatprep.subr.bf16.mxu0 0
        %3330 = vmatpush1.bf16.msra.mxu0 0
        %3331 = vmatprep.subr.bf16.mxu0 0
        %3332 = vmatpush1.bf16.msra.mxu0 0
        %3333 = vmatprep.subr.bf16.mxu0 0
        %3334 = vmatpush1.bf16.msra.mxu0 0
        %3335 = vmatprep.subr.bf16.mxu0 0
        %3336 = vmatpush1.bf16.msra.mxu0 0
        %3337 = vmatprep.mubr.bf16.mxu0 0
        %3338 = vmatmul.mubr.bf16.gmra.mrb[0].mxu0 %v3225
        %v3339 = vpop.f32.mrb[0].mxu0
        %v3340 = vadd.f32 0.0, %v3339
        %v3341 = vpop.f32.mrb[0].mxu0
        %v3342 = vpop.f32.mrb[0].mxu0
        %v3343 = vadd.f32 0.0, %v3342
        %v3344 = vpop.f32.mrb[0].mxu0
        %3345 = vmatprep.mubr.bf16.mxu0 0
        %3346 = vmatmul.mubr.bf16.gmra.mrb[0].mxu0 %v3226
        %v3347 = vpop.f32.mrb[0].mxu0
        %v3348 = vadd.f32 0.0, %v3347
        %v3349 = vpop.f32.mrb[0].mxu0
        %v3350 = vpop.f32.mrb[0].mxu0
        %v3351 = vadd.f32 0.0, %v3350
        %v3352 = vpop.f32.mrb[0].mxu0
        %3353 = vmatprep.mubr.bf16.mxu0 0
        %3354 = vmatmul.mubr.bf16.gmra.mrb[0].mxu0 %v3227
        %v3355 = vpop.f32.mrb[0].mxu0
        %v3356 = vadd.f32 0.0, %v3355
        %v3357 = vpop.f32.mrb[0].mxu0
        %v3358 = vpop.f32.mrb[0].mxu0
        %v3359 = vadd.f32 0.0, %v3358
        %v3360 = vpop.f32.mrb[0].mxu0
        %3361 = vmatprep.mubr.bf16.mxu0 0
        %3362 = vmatmul.mubr.bf16.gmra.mrb[0].mxu0 %v3228
        %v3363 = vpop.f32.mrb[0].mxu0
        %v3364 = vadd.f32 0.0, %v3363
        %v3365 = vpop.f32.mrb[0].mxu0
        %v3366 = vpop.f32.mrb[0].mxu0
        %v3367 = vadd.f32 0.0, %v3366
        %v3368 = vpop.f32.mrb[0].mxu0
        %3369 = vmatprep.mubr.bf16.mxu0 0
        %3370 = vmatmul.mubr.bf16.gmra.mrb[0].mxu0 %v3229
        %v3371 = vpop.f32.mrb[0].mxu0
        %v3372 = vadd.f32 0.0, %v3371
        %v3373 = vpop.f32.mrb[0].mxu0
        %v3374 = vpop.f32.mrb[0].mxu0
        %v3375 = vadd.f32 0.0, %v3374
        %v3376 = vpop.f32.mrb[0].mxu0
        %3377 = vmatprep.mubr.bf16.mxu0 0
        %3378 = vmatmul.mubr.bf16.gmra.mrb[0].mxu0 %v3230
        %v3379 = vpop.f32.mrb[0].mxu0
        %v3380 = vadd.f32 0.0, %v3379
        %v3381 = vpop.f32.mrb[0].mxu0
        %v3382 = vpop.f32.mrb[0].mxu0
        %v3383 = vadd.f32 0.0, %v3382
        %v3384 = vpop.f32.mrb[0].mxu0
        %3385 = vmatprep.mubr.bf16.mxu0 0
        %3386 = vmatmul.mubr.bf16.gmra.mrb[0].mxu0 %v3231
        %v3387 = vpop.f32.mrb[0].mxu0
        %v3388 = vadd.f32 0.0, %v3387
        %v3389 = vpop.f32.mrb[0].mxu0
        %v3390 = vpop.f32.mrb[0].mxu0
        %v3391 = vadd.f32 0.0, %v3390
        %v3392 = vpop.f32.mrb[0].mxu0
        %3393 = vmatprep.mubr.bf16.mxu0 0
        %3394 = vmatmul.mubr.bf16.gmra.mrb[0].mxu0 %v3232
        %v3395 = vpop.f32.mrb[0].mxu0
        %v3396 = vadd.f32 0.0, %v3395
        %v3397 = vpop.f32.mrb[0].mxu0
        %v3398 = vpop.f32.mrb[0].mxu0
        %v3399 = vadd.f32 0.0, %v3398
        %v3400 = vpop.f32.mrb[0].mxu0
        %3401 = vmatprep.mubr.bf16.mxu0 0
        %3402 = vmatmul.mubr.bf16.gmra.mrb[0].mxu0 %v3233
        %v3403 = vpop.f32.mrb[0].mxu0
        %v3404 = vadd.f32 0.0, %v3403
        %v3405 = vpop.f32.mrb[0].mxu0
        %v3406 = vpop.f32.mrb[0].mxu0
        %v3407 = vadd.f32 0.0, %v3406
        %v3408 = vpop.f32.mrb[0].mxu0
        %3409 = vmatprep.mubr.bf16.mxu0 0
        %3410 = vmatmul.mubr.bf16.gmra.mrb[0].mxu0 %v3234
        %v3411 = vpop.f32.mrb[0].mxu0
        %v3412 = vadd.f32 0.0, %v3411
        %v3413 = vpop.f32.mrb[0].mxu0
        %v3414 = vpop.f32.mrb[0].mxu0
        %v3415 = vadd.f32 0.0, %v3414
        %v3416 = vpop.f32.mrb[0].mxu0
        %3417 = vmatprep.mubr.bf16.mxu0 0
        %3418 = vmatmul.mubr.bf16.gmra.mrb[0].mxu0 %v3235
        %v3419 = vpop.f32.mrb[0].mxu0
        %v3420 = vadd.f32 0.0, %v3419
        %v3421 = vpop.f32.mrb[0].mxu0
        %v3422 = vpop.f32.mrb[0].mxu0
        %v3423 = vadd.f32 0.0, %v3422
        %v3424 = vpop.f32.mrb[0].mxu0
        %3425 = vmatprep.mubr.bf16.mxu0 0
        %3426 = vmatmul.mubr.bf16.gmra.mrb[0].mxu0 %v3236
        %v3427 = vpop.f32.mrb[0].mxu0
        %v3428 = vadd.f32 0.0, %v3427
        %v3429 = vpop.f32.mrb[0].mxu0
        %v3430 = vpop.f32.mrb[0].mxu0
        %v3431 = vadd.f32 0.0, %v3430
        %v3432 = vpop.f32.mrb[0].mxu0
        %3433 = vmatprep.mubr.bf16.mxu0 0
        %3434 = vmatmul.mubr.bf16.gmra.mrb[0].mxu0 %v3237
        %v3435 = vpop.f32.mrb[0].mxu0
        %v3436 = vadd.f32 0.0, %v3435
        %v3437 = vpop.f32.mrb[0].mxu0
        %v3438 = vpop.f32.mrb[0].mxu0
        %v3439 = vadd.f32 0.0, %v3438
        %v3440 = vpop.f32.mrb[0].mxu0
        %3441 = vmatprep.mubr.bf16.mxu0 0
        %3442 = vmatmul.mubr.bf16.gmra.mrb[0].mxu0 %v3238
        %v3443 = vpop.f32.mrb[0].mxu0
        %v3444 = vadd.f32 0.0, %v3443
        %v3445 = vpop.f32.mrb[0].mxu0
        %v3446 = vpop.f32.mrb[0].mxu0
        %v3447 = vadd.f32 0.0, %v3446
        %v3448 = vpop.f32.mrb[0].mxu0
        %3449 = vmatprep.mubr.bf16.mxu0 0
        %3450 = vmatmul.mubr.bf16.gmra.mrb[0].mxu0 %v3239
        %v3451 = vpop.f32.mrb[0].mxu0
        %v3452 = vadd.f32 0.0, %v3451
        %v3453 = vpop.f32.mrb[0].mxu0
        %v3454 = vpop.f32.mrb[0].mxu0
        %v3455 = vadd.f32 0.0, %v3454
        %v3456 = vpop.f32.mrb[0].mxu0
        %3457 = vmatprep.mubr.bf16.mxu0 0
        %3458 = vmatmul.mubr.bf16.gmra.mrb[0].mxu0 %v3240
        %v3459 = vpop.f32.mrb[0].mxu0
        %v3460 = vadd.f32 0.0, %v3459
        %v3461 = vpop.f32.mrb[0].mxu0
        %v3462 = vpop.f32.mrb[0].mxu0
        %v3463 = vadd.f32 0.0, %v3462
        %v3464 = vpop.f32.mrb[0].mxu0
        %3465 = vdwg.mxu0
        %v3466 = vadd.f32 %v3112, %v3340
        %v3467 = vadd.f32 %v3113, %v3343
        %v3468 = vadd.f32 %v3114, %v3348
        %v3469 = vadd.f32 %v3115, %v3351
        %v3470 = vadd.f32 %v3116, %v3356
        %v3471 = vadd.f32 %v3117, %v3359
        %v3472 = vadd.f32 %v3118, %v3364
        %v3473 = vadd.f32 %v3119, %v3367
        %v3474 = vadd.f32 %v3120, %v3372
        %v3475 = vadd.f32 %v3121, %v3375
        %v3476 = vadd.f32 %v3122, %v3380
        %v3477 = vadd.f32 %v3123, %v3383
        %v3478 = vadd.f32 %v3124, %v3388
        %v3479 = vadd.f32 %v3125, %v3391
        %v3480 = vadd.f32 %v3126, %v3396
        %v3481 = vadd.f32 %v3127, %v3399
        %v3482 = vadd.f32 %v3128, %v3404
        %v3483 = vadd.f32 %v3129, %v3407
        %v3484 = vadd.f32 %v3130, %v3412
        %v3485 = vadd.f32 %v3131, %v3415
        %v3486 = vadd.f32 %v3132, %v3420
        %v3487 = vadd.f32 %v3133, %v3423
        %v3488 = vadd.f32 %v3134, %v3428
        %v3489 = vadd.f32 %v3135, %v3431
        %v3490 = vadd.f32 %v3136, %v3436
        %v3491 = vadd.f32 %v3137, %v3439
        %v3492 = vadd.f32 %v3138, %v3444
        %v3493 = vadd.f32 %v3139, %v3447
        %v3494 = vadd.f32 %v3140, %v3452
        %v3495 = vadd.f32 %v3141, %v3455
        %v3496 = vadd.f32 %v3142, %v3460
        %v3497 = vadd.f32 %v3143, %v3463
        %3498 = vst [vmem:[#allocation3] sm:$0xff] %v3466
        %3499 = vst [vmem:[#allocation3 + $0x8] sm:$0xff] %v3467
        %3500 = vst [vmem:[#allocation3 + $0x10] sm:$0xff] %v3468
        %3501 = vst [vmem:[#allocation3 + $0x18] sm:$0xff] %v3469
        %3502 = vst [vmem:[#allocation3 + $0x20] sm:$0xff] %v3470
        %3503 = vst [vmem:[#allocation3 + $0x28] sm:$0xff] %v3471
        %3504 = vst [vmem:[#allocation3 + $0x30] sm:$0xff] %v3472
        %3505 = vst [vmem:[#allocation3 + $0x38] sm:$0xff] %v3473
        %3506 = vst [vmem:[#allocation3 + $0x40] sm:$0xff] %v3474
        %3507 = vst [vmem:[#allocation3 + $0x48] sm:$0xff] %v3475
        %3508 = vst [vmem:[#allocation3 + $0x50] sm:$0xff] %v3476
        %3509 = vst [vmem:[#allocation3 + $0x58] sm:$0xff] %v3477
        %3510 = vst [vmem:[#allocation3 + $0x60] sm:$0xff] %v3478
        %3511 = vst [vmem:[#allocation3 + $0x68] sm:$0xff] %v3479
        %3512 = vst [vmem:[#allocation3 + $0x70] sm:$0xff] %v3480
        %3513 = vst [vmem:[#allocation3 + $0x78] sm:$0xff] %v3481
        %3514 = vst [vmem:[#allocation3 + $0x80] sm:$0xff] %v3482
        %3515 = vst [vmem:[#allocation3 + $0x88] sm:$0xff] %v3483
        %3516 = vst [vmem:[#allocation3 + $0x90] sm:$0xff] %v3484
        %3517 = vst [vmem:[#allocation3 + $0x98] sm:$0xff] %v3485
        %3518 = vst [vmem:[#allocation3 + $0xa0] sm:$0xff] %v3486
        %3519 = vst [vmem:[#allocation3 + $0xa8] sm:$0xff] %v3487
        %3520 = vst [vmem:[#allocation3 + $0xb0] sm:$0xff] %v3488
        %3521 = vst [vmem:[#allocation3 + $0xb8] sm:$0xff] %v3489
        %3522 = vst [vmem:[#allocation3 + $0xc0] sm:$0xff] %v3490
        %3523 = vst [vmem:[#allocation3 + $0xc8] sm:$0xff] %v3491
        %3524 = vst [vmem:[#allocation3 + $0xd0] sm:$0xff] %v3492
        %3525 = vst [vmem:[#allocation3 + $0xd8] sm:$0xff] %v3493
        %3526 = vst [vmem:[#allocation3 + $0xe0] sm:$0xff] %v3494
        %3527 = vst [vmem:[#allocation3 + $0xe8] sm:$0xff] %v3495
        %3528 = vst [vmem:[#allocation3 + $0xf0] sm:$0xff] %v3496
        %3529 = vst [vmem:[#allocation3 + $0xf8] sm:$0xff] %v3497
        %v3530 = vld [vmem:[%s1063] sm:$0xf]
        %v3531 = vld [vmem:[%s1063 + $0x4] sm:$0xf]
        %v3532 = vld [vmem:[%s1063 + $0x8] sm:$0x1]
        %v3533 = vld [vmem:[%s1063 + $0xc] sm:$0xf]
        %v3534 = vld [vmem:[%s1063 + $0x10] sm:$0xf]
        %v3535 = vld [vmem:[%s1063 + $0x14] sm:$0x1]
        %v3536 = vld [vmem:[%s1063 + $0x18] sm:$0xf]
        %v3537 = vld [vmem:[%s1063 + $0x1c] sm:$0xf]
        %v3538 = vld [vmem:[%s1063 + $0x20] sm:$0x1]
        %v3539 = vld [vmem:[%s1063 + $0x24] sm:$0xf]
        %v3540 = vld [vmem:[%s1063 + $0x28] sm:$0xf]
        %v3541 = vld [vmem:[%s1063 + $0x2c] sm:$0x1]
        %v3542 = vld [vmem:[%s1063 + $0x30] sm:$0xf]
        %v3543 = vld [vmem:[%s1063 + $0x34] sm:$0xf]
        %v3544 = vld [vmem:[%s1063 + $0x38] sm:$0x1]
        %v3545 = vld [vmem:[%s1063 + $0x3c] sm:$0xf]
        %v3546 = vld [vmem:[%s1063 + $0x40] sm:$0xf]
        %v3547 = vld [vmem:[%s1063 + $0x44] sm:$0x1]
        %v3548 = vld [vmem:[%s1063 + $0x48] sm:$0xf]
        %v3549 = vld [vmem:[%s1063 + $0x4c] sm:$0xf]
        %v3550 = vld [vmem:[%s1063 + $0x50] sm:$0x1]
        %v3551 = vld [vmem:[%s1063 + $0x54] sm:$0xf]
        %v3552 = vld [vmem:[%s1063 + $0x58] sm:$0xf]
        %v3553 = vld [vmem:[%s1063 + $0x5c] sm:$0x1]
        %v3554 = vld [vmem:[%s1063 + $0x60] sm:$0xf]
        %v3555 = vld [vmem:[%s1063 + $0x64] sm:$0xf]
        %v3556 = vld [vmem:[%s1063 + $0x68] sm:$0x1]
        %v3557 = vld [vmem:[%s1063 + $0x6c] sm:$0xf]
        %v3558 = vld [vmem:[%s1063 + $0x70] sm:$0xf]
        %v3559 = vld [vmem:[%s1063 + $0x74] sm:$0x1]
        %v3560 = vld [vmem:[%s1063 + $0x78] sm:$0xf]
        %v3561 = vld [vmem:[%s1063 + $0x7c] sm:$0xf]
        %v3562 = vld [vmem:[%s1063 + $0x80] sm:$0x1]
        %v3563 = vld [vmem:[%s1063 + $0x84] sm:$0xf]
        %v3564 = vld [vmem:[%s1063 + $0x88] sm:$0xf]
        %v3565 = vld [vmem:[%s1063 + $0x8c] sm:$0x1]
        %v3566 = vld [vmem:[%s1063 + $0x90] sm:$0xf]
        %v3567 = vld [vmem:[%s1063 + $0x94] sm:$0xf]
        %v3568 = vld [vmem:[%s1063 + $0x98] sm:$0x1]
        %v3569 = vld [vmem:[%s1063 + $0x9c] sm:$0xf]
        %v3570 = vld [vmem:[%s1063 + $0xa0] sm:$0xf]
        %v3571 = vld [vmem:[%s1063 + $0xa4] sm:$0x1]
        %v3572 = vld [vmem:[%s1063 + $0xa8] sm:$0xf]
        %v3573 = vld [vmem:[%s1063 + $0xac] sm:$0xf]
        %v3574 = vld [vmem:[%s1063 + $0xb0] sm:$0x1]
        %v3575 = vld [vmem:[%s1063 + $0xb4] sm:$0xf]
        %v3576 = vld [vmem:[%s1063 + $0xb8] sm:$0xf]
        %v3577 = vld [vmem:[%s1063 + $0xbc] sm:$0x1]
        %v3579 = vshrl.u32 %v3530, 16
        %v3581 = vrot.slane %v3579, 4
        %v3582 = vshll.u32 %v3530, 16
        %v3584 = vrot.slane %v3582, 5
        %v3585 = vor.u32 %v3581, %v3584
        %v3586 = vrot.slane %v3585, 4
        %v3588 = vshll.u32 %v3531, 16
        %v3590 = vrot.slane %v3588, 5
        %v3591 = vsel %vm1712, %v3586, %v3590
        %v3592 = vshrl.u32 %v3531, 16
        %v3594 = vrot.slane %v3592, 4
        %v3595 = vor.u32 %v3594, %v3590
        %v3596 = vrot.slane %v3595, 4
        %v3598 = vshll.u32 %v3532, 16
        %v3600 = vrot.slane %v3598, 5
        %v3601 = vsel %vm1712, %v3596, %v3600
        %v3603 = vshrl.u32 %v3533, 16
        %v3605 = vrot.slane %v3603, 4
        %v3606 = vshll.u32 %v3533, 16
        %v3608 = vrot.slane %v3606, 5
        %v3609 = vor.u32 %v3605, %v3608
        %v3610 = vrot.slane %v3609, 4
        %v3612 = vshll.u32 %v3534, 16
        %v3614 = vrot.slane %v3612, 5
        %v3615 = vsel %vm1712, %v3610, %v3614
        %v3616 = vshrl.u32 %v3534, 16
        %v3618 = vrot.slane %v3616, 4
        %v3619 = vor.u32 %v3618, %v3614
        %v3620 = vrot.slane %v3619, 4
        %v3622 = vshll.u32 %v3535, 16
        %v3624 = vrot.slane %v3622, 5
        %v3625 = vsel %vm1712, %v3620, %v3624
        %v3627 = vshrl.u32 %v3536, 16
        %v3629 = vrot.slane %v3627, 4
        %v3630 = vshll.u32 %v3536, 16
        %v3632 = vrot.slane %v3630, 5
        %v3633 = vor.u32 %v3629, %v3632
        %v3634 = vrot.slane %v3633, 4
        %v3636 = vshll.u32 %v3537, 16
        %v3638 = vrot.slane %v3636, 5
        %v3639 = vsel %vm1712, %v3634, %v3638
        %v3640 = vshrl.u32 %v3537, 16
        %v3642 = vrot.slane %v3640, 4
        %v3643 = vor.u32 %v3642, %v3638
        %v3644 = vrot.slane %v3643, 4
        %v3646 = vshll.u32 %v3538, 16
        %v3648 = vrot.slane %v3646, 5
        %v3649 = vsel %vm1712, %v3644, %v3648
        %v3651 = vshrl.u32 %v3539, 16
        %v3653 = vrot.slane %v3651, 4
        %v3654 = vshll.u32 %v3539, 16
        %v3656 = vrot.slane %v3654, 5
        %v3657 = vor.u32 %v3653, %v3656
        %v3658 = vrot.slane %v3657, 4
        %v3660 = vshll.u32 %v3540, 16
        %v3662 = vrot.slane %v3660, 5
        %v3663 = vsel %vm1712, %v3658, %v3662
        %v3664 = vshrl.u32 %v3540, 16
        %v3666 = vrot.slane %v3664, 4
        %v3667 = vor.u32 %v3666, %v3662
        %v3668 = vrot.slane %v3667, 4
        %v3670 = vshll.u32 %v3541, 16
        %v3672 = vrot.slane %v3670, 5
        %v3673 = vsel %vm1712, %v3668, %v3672
        %v3675 = vshrl.u32 %v3542, 16
        %v3677 = vrot.slane %v3675, 4
        %v3678 = vshll.u32 %v3542, 16
        %v3680 = vrot.slane %v3678, 5
        %v3681 = vor.u32 %v3677, %v3680
        %v3682 = vrot.slane %v3681, 4
        %v3684 = vshll.u32 %v3543, 16
        %v3686 = vrot.slane %v3684, 5
        %v3687 = vsel %vm1712, %v3682, %v3686
        %v3688 = vshrl.u32 %v3543, 16
        %v3690 = vrot.slane %v3688, 4
        %v3691 = vor.u32 %v3690, %v3686
        %v3692 = vrot.slane %v3691, 4
        %v3694 = vshll.u32 %v3544, 16
        %v3696 = vrot.slane %v3694, 5
        %v3697 = vsel %vm1712, %v3692, %v3696
        %v3699 = vshrl.u32 %v3545, 16
        %v3701 = vrot.slane %v3699, 4
        %v3702 = vshll.u32 %v3545, 16
        %v3704 = vrot.slane %v3702, 5
        %v3705 = vor.u32 %v3701, %v3704
        %v3706 = vrot.slane %v3705, 4
        %v3708 = vshll.u32 %v3546, 16
        %v3710 = vrot.slane %v3708, 5
        %v3711 = vsel %vm1712, %v3706, %v3710
        %v3712 = vshrl.u32 %v3546, 16
        %v3714 = vrot.slane %v3712, 4
        %v3715 = vor.u32 %v3714, %v3710
        %v3716 = vrot.slane %v3715, 4
        %v3718 = vshll.u32 %v3547, 16
        %v3720 = vrot.slane %v3718, 5
        %v3721 = vsel %vm1712, %v3716, %v3720
        %v3723 = vshrl.u32 %v3548, 16
        %v3725 = vrot.slane %v3723, 4
        %v3726 = vshll.u32 %v3548, 16
        %v3728 = vrot.slane %v3726, 5
        %v3729 = vor.u32 %v3725, %v3728
        %v3730 = vrot.slane %v3729, 4
        %v3732 = vshll.u32 %v3549, 16
        %v3734 = vrot.slane %v3732, 5
        %v3735 = vsel %vm1712, %v3730, %v3734
        %v3736 = vshrl.u32 %v3549, 16
        %v3738 = vrot.slane %v3736, 4
        %v3739 = vor.u32 %v3738, %v3734
        %v3740 = vrot.slane %v3739, 4
        %v3742 = vshll.u32 %v3550, 16
        %v3744 = vrot.slane %v3742, 5
        %v3745 = vsel %vm1712, %v3740, %v3744
        %v3747 = vshrl.u32 %v3551, 16
        %v3749 = vrot.slane %v3747, 4
        %v3750 = vshll.u32 %v3551, 16
        %v3752 = vrot.slane %v3750, 5
        %v3753 = vor.u32 %v3749, %v3752
        %v3754 = vrot.slane %v3753, 4
        %v3756 = vshll.u32 %v3552, 16
        %v3758 = vrot.slane %v3756, 5
        %v3759 = vsel %vm1712, %v3754, %v3758
        %v3760 = vshrl.u32 %v3552, 16
        %v3762 = vrot.slane %v3760, 4
        %v3763 = vor.u32 %v3762, %v3758
        %v3764 = vrot.slane %v3763, 4
        %v3766 = vshll.u32 %v3553, 16
        %v3768 = vrot.slane %v3766, 5
        %v3769 = vsel %vm1712, %v3764, %v3768
        %v3771 = vshrl.u32 %v3554, 16
        %v3773 = vrot.slane %v3771, 4
        %v3774 = vshll.u32 %v3554, 16
        %v3776 = vrot.slane %v3774, 5
        %v3777 = vor.u32 %v3773, %v3776
        %v3778 = vrot.slane %v3777, 4
        %v3780 = vshll.u32 %v3555, 16
        %v3782 = vrot.slane %v3780, 5
        %v3783 = vsel %vm1712, %v3778, %v3782
        %v3784 = vshrl.u32 %v3555, 16
        %v3786 = vrot.slane %v3784, 4
        %v3787 = vor.u32 %v3786, %v3782
        %v3788 = vrot.slane %v3787, 4
        %v3790 = vshll.u32 %v3556, 16
        %v3792 = vrot.slane %v3790, 5
        %v3793 = vsel %vm1712, %v3788, %v3792
        %v3795 = vshrl.u32 %v3557, 16
        %v3797 = vrot.slane %v3795, 4
        %v3798 = vshll.u32 %v3557, 16
        %v3800 = vrot.slane %v3798, 5
        %v3801 = vor.u32 %v3797, %v3800
        %v3802 = vrot.slane %v3801, 4
        %v3804 = vshll.u32 %v3558, 16
        %v3806 = vrot.slane %v3804, 5
        %v3807 = vsel %vm1712, %v3802, %v3806
        %v3808 = vshrl.u32 %v3558, 16
        %v3810 = vrot.slane %v3808, 4
        %v3811 = vor.u32 %v3810, %v3806
        %v3812 = vrot.slane %v3811, 4
        %v3814 = vshll.u32 %v3559, 16
        %v3816 = vrot.slane %v3814, 5
        %v3817 = vsel %vm1712, %v3812, %v3816
        %v3819 = vshrl.u32 %v3560, 16
        %v3821 = vrot.slane %v3819, 4
        %v3822 = vshll.u32 %v3560, 16
        %v3824 = vrot.slane %v3822, 5
        %v3825 = vor.u32 %v3821, %v3824
        %v3826 = vrot.slane %v3825, 4
        %v3828 = vshll.u32 %v3561, 16
        %v3830 = vrot.slane %v3828, 5
        %v3831 = vsel %vm1712, %v3826, %v3830
        %v3832 = vshrl.u32 %v3561, 16
        %v3834 = vrot.slane %v3832, 4
        %v3835 = vor.u32 %v3834, %v3830
        %v3836 = vrot.slane %v3835, 4
        %v3838 = vshll.u32 %v3562, 16
        %v3840 = vrot.slane %v3838, 5
        %v3841 = vsel %vm1712, %v3836, %v3840
        %v3843 = vshrl.u32 %v3563, 16
        %v3845 = vrot.slane %v3843, 4
        %v3846 = vshll.u32 %v3563, 16
        %v3848 = vrot.slane %v3846, 5
        %v3849 = vor.u32 %v3845, %v3848
        %v3850 = vrot.slane %v3849, 4
        %v3852 = vshll.u32 %v3564, 16
        %v3854 = vrot.slane %v3852, 5
        %v3855 = vsel %vm1712, %v3850, %v3854
        %v3856 = vshrl.u32 %v3564, 16
        %v3858 = vrot.slane %v3856, 4
        %v3859 = vor.u32 %v3858, %v3854
        %v3860 = vrot.slane %v3859, 4
        %v3862 = vshll.u32 %v3565, 16
        %v3864 = vrot.slane %v3862, 5
        %v3865 = vsel %vm1712, %v3860, %v3864
        %v3867 = vshrl.u32 %v3566, 16
        %v3869 = vrot.slane %v3867, 4
        %v3870 = vshll.u32 %v3566, 16
        %v3872 = vrot.slane %v3870, 5
        %v3873 = vor.u32 %v3869, %v3872
        %v3874 = vrot.slane %v3873, 4
        %v3876 = vshll.u32 %v3567, 16
        %v3878 = vrot.slane %v3876, 5
        %v3879 = vsel %vm1712, %v3874, %v3878
        %v3880 = vshrl.u32 %v3567, 16
        %v3882 = vrot.slane %v3880, 4
        %v3883 = vor.u32 %v3882, %v3878
        %v3884 = vrot.slane %v3883, 4
        %v3886 = vshll.u32 %v3568, 16
        %v3888 = vrot.slane %v3886, 5
        %v3889 = vsel %vm1712, %v3884, %v3888
        %v3891 = vshrl.u32 %v3569, 16
        %v3893 = vrot.slane %v3891, 4
        %v3894 = vshll.u32 %v3569, 16
        %v3896 = vrot.slane %v3894, 5
        %v3897 = vor.u32 %v3893, %v3896
        %v3898 = vrot.slane %v3897, 4
        %v3900 = vshll.u32 %v3570, 16
        %v3902 = vrot.slane %v3900, 5
        %v3903 = vsel %vm1712, %v3898, %v3902
        %v3904 = vshrl.u32 %v3570, 16
        %v3906 = vrot.slane %v3904, 4
        %v3907 = vor.u32 %v3906, %v3902
        %v3908 = vrot.slane %v3907, 4
        %v3910 = vshll.u32 %v3571, 16
        %v3912 = vrot.slane %v3910, 5
        %v3913 = vsel %vm1712, %v3908, %v3912
        %v3915 = vshrl.u32 %v3572, 16
        %v3917 = vrot.slane %v3915, 4
        %v3918 = vshll.u32 %v3572, 16
        %v3920 = vrot.slane %v3918, 5
        %v3921 = vor.u32 %v3917, %v3920
        %v3922 = vrot.slane %v3921, 4
        %v3924 = vshll.u32 %v3573, 16
        %v3926 = vrot.slane %v3924, 5
        %v3927 = vsel %vm1712, %v3922, %v3926
        %v3928 = vshrl.u32 %v3573, 16
        %v3930 = vrot.slane %v3928, 4
        %v3931 = vor.u32 %v3930, %v3926
        %v3932 = vrot.slane %v3931, 4
        %v3934 = vshll.u32 %v3574, 16
        %v3936 = vrot.slane %v3934, 5
        %v3937 = vsel %vm1712, %v3932, %v3936
        %v3939 = vshrl.u32 %v3575, 16
        %v3941 = vrot.slane %v3939, 4
        %v3942 = vshll.u32 %v3575, 16
        %v3944 = vrot.slane %v3942, 5
        %v3945 = vor.u32 %v3941, %v3944
        %v3946 = vrot.slane %v3945, 4
        %v3948 = vshll.u32 %v3576, 16
        %v3950 = vrot.slane %v3948, 5
        %v3951 = vsel %vm1712, %v3946, %v3950
        %v3952 = vshrl.u32 %v3576, 16
        %v3954 = vrot.slane %v3952, 4
        %v3955 = vor.u32 %v3954, %v3950
        %v3956 = vrot.slane %v3955, 4
        %v3958 = vshll.u32 %v3577, 16
        %v3960 = vrot.slane %v3958, 5
        %v3961 = vsel %vm1712, %v3956, %v3960
        %v3962 = vld [vmem:[#allocation3] sm:$0xff]
        %v3963 = vld [vmem:[#allocation3 + $0x8] sm:$0xff]
        %v3964 = vld [vmem:[#allocation3 + $0x10] sm:$0xff]
        %v3965 = vld [vmem:[#allocation3 + $0x18] sm:$0xff]
        %v3966 = vld [vmem:[#allocation3 + $0x20] sm:$0xff]
        %v3967 = vld [vmem:[#allocation3 + $0x28] sm:$0xff]
        %v3968 = vld [vmem:[#allocation3 + $0x30] sm:$0xff]
        %v3969 = vld [vmem:[#allocation3 + $0x38] sm:$0xff]
        %v3970 = vld [vmem:[#allocation3 + $0x40] sm:$0xff]
        %v3971 = vld [vmem:[#allocation3 + $0x48] sm:$0xff]
        %v3972 = vld [vmem:[#allocation3 + $0x50] sm:$0xff]
        %v3973 = vld [vmem:[#allocation3 + $0x58] sm:$0xff]
        %v3974 = vld [vmem:[#allocation3 + $0x60] sm:$0xff]
        %v3975 = vld [vmem:[#allocation3 + $0x68] sm:$0xff]
        %v3976 = vld [vmem:[#allocation3 + $0x70] sm:$0xff]
        %v3977 = vld [vmem:[#allocation3 + $0x78] sm:$0xff]
        %v3978 = vld [vmem:[#allocation3 + $0x80] sm:$0xff]
        %v3979 = vld [vmem:[#allocation3 + $0x88] sm:$0xff]
        %v3980 = vld [vmem:[#allocation3 + $0x90] sm:$0xff]
        %v3981 = vld [vmem:[#allocation3 + $0x98] sm:$0xff]
        %v3982 = vld [vmem:[#allocation3 + $0xa0] sm:$0xff]
        %v3983 = vld [vmem:[#allocation3 + $0xa8] sm:$0xff]
        %v3984 = vld [vmem:[#allocation3 + $0xb0] sm:$0xff]
        %v3985 = vld [vmem:[#allocation3 + $0xb8] sm:$0xff]
        %v3986 = vld [vmem:[#allocation3 + $0xc0] sm:$0xff]
        %v3987 = vld [vmem:[#allocation3 + $0xc8] sm:$0xff]
        %v3988 = vld [vmem:[#allocation3 + $0xd0] sm:$0xff]
        %v3989 = vld [vmem:[#allocation3 + $0xd8] sm:$0xff]
        %v3990 = vld [vmem:[#allocation3 + $0xe0] sm:$0xff]
        %v3991 = vld [vmem:[#allocation3 + $0xe8] sm:$0xff]
        %v3992 = vld [vmem:[#allocation3 + $0xf0] sm:$0xff]
        %v3993 = vld [vmem:[#allocation3 + $0xf8] sm:$0xff]
        %s3994 = scalar_lea.vmem %s3, 256
        %v3995 = vld [vmem:[%s3994] sm:$0xf]
        %v3996 = vld [vmem:[%s3994 + $0x4] sm:$0xf]
        %v3997 = vld [vmem:[%s3994 + $0x8] sm:$0xf]
        %v3998 = vld [vmem:[%s3994 + $0xc] sm:$0xf]
        %v3999 = vld [vmem:[%s3994 + $0x10] sm:$0xf]
        %v4000 = vld [vmem:[%s3994 + $0x14] sm:$0xf]
        %v4001 = vld [vmem:[%s3994 + $0x18] sm:$0xf]
        %v4002 = vld [vmem:[%s3994 + $0x1c] sm:$0xf]
        %v4003 = vld [vmem:[%s3994 + $0x20] sm:$0xf]
        %v4004 = vld [vmem:[%s3994 + $0x24] sm:$0xf]
        %v4005 = vld [vmem:[%s3994 + $0x28] sm:$0xf]
        %v4006 = vld [vmem:[%s3994 + $0x2c] sm:$0xf]
        %v4007 = vld [vmem:[%s3994 + $0x30] sm:$0xf]
        %v4008 = vld [vmem:[%s3994 + $0x34] sm:$0xf]
        %v4009 = vld [vmem:[%s3994 + $0x38] sm:$0xf]
        %v4010 = vld [vmem:[%s3994 + $0x3c] sm:$0xf]
        %v4011 = vunpack.c.l.b16 %v3591
        %v4012 = vunpack.c.l.b16 %v3601
        %v4013 = vunpack.c.l.b16 %v3615
        %v4014 = vunpack.c.l.b16 %v3625
        %v4015 = vunpack.c.l.b16 %v3639
        %v4016 = vunpack.c.l.b16 %v3649
        %v4017 = vunpack.c.l.b16 %v3663
        %v4018 = vunpack.c.l.b16 %v3673
        %v4019 = vunpack.c.l.b16 %v3687
        %v4020 = vunpack.c.l.b16 %v3697
        %v4021 = vunpack.c.l.b16 %v3711
        %v4022 = vunpack.c.l.b16 %v3721
        %v4023 = vunpack.c.l.b16 %v3735
        %v4024 = vunpack.c.l.b16 %v3745
        %v4025 = vunpack.c.l.b16 %v3759
        %v4026 = vunpack.c.l.b16 %v3769
        %v4027 = vunpack.c.l.b16 %v3783
        %v4028 = vunpack.c.l.b16 %v3793
        %v4029 = vunpack.c.l.b16 %v3807
        %v4030 = vunpack.c.l.b16 %v3817
        %v4031 = vunpack.c.l.b16 %v3831
        %v4032 = vunpack.c.l.b16 %v3841
        %v4033 = vunpack.c.l.b16 %v3855
        %v4034 = vunpack.c.l.b16 %v3865
        %v4035 = vunpack.c.l.b16 %v3879
        %v4036 = vunpack.c.l.b16 %v3889
        %v4037 = vunpack.c.l.b16 %v3903
        %v4038 = vunpack.c.l.b16 %v3913
        %v4039 = vunpack.c.l.b16 %v3927
        %v4040 = vunpack.c.l.b16 %v3937
        %v4041 = vunpack.c.l.b16 %v3951
        %v4042 = vunpack.c.l.b16 %v3961
        %v4043 = vpack.c.b16 %v4012, %v4011
        %v4044 = vpack.c.b16 %v4014, %v4013
        %v4045 = vpack.c.b16 %v4016, %v4015
        %v4046 = vpack.c.b16 %v4018, %v4017
        %v4047 = vpack.c.b16 %v4020, %v4019
        %v4048 = vpack.c.b16 %v4022, %v4021
        %v4049 = vpack.c.b16 %v4024, %v4023
        %v4050 = vpack.c.b16 %v4026, %v4025
        %v4051 = vpack.c.b16 %v4028, %v4027
        %v4052 = vpack.c.b16 %v4030, %v4029
        %v4053 = vpack.c.b16 %v4032, %v4031
        %v4054 = vpack.c.b16 %v4034, %v4033
        %v4055 = vpack.c.b16 %v4036, %v4035
        %v4056 = vpack.c.b16 %v4038, %v4037
        %v4057 = vpack.c.b16 %v4040, %v4039
        %v4058 = vpack.c.b16 %v4042, %v4041
        %v4091 = vunpack.c.l.b16 %v3995
        %v4092 = vunpack.c.l.b16 %v3996
        %v4093 = vunpack.c.l.b16 %v3997
        %v4094 = vunpack.c.l.b16 %v3998
        %v4095 = vunpack.c.l.b16 %v3999
        %v4096 = vunpack.c.l.b16 %v4000
        %v4097 = vunpack.c.l.b16 %v4001
        %v4098 = vunpack.c.l.b16 %v4002
        %v4099 = vunpack.c.l.b16 %v4003
        %v4100 = vunpack.c.l.b16 %v4004
        %v4101 = vunpack.c.l.b16 %v4005
        %v4102 = vunpack.c.l.b16 %v4006
        %v4103 = vunpack.c.l.b16 %v4007
        %v4104 = vunpack.c.l.b16 %v4008
        %v4105 = vunpack.c.l.b16 %v4009
        %v4106 = vunpack.c.l.b16 %v4010
        %v4107 = vpack.c.b16 %v4092, %v4091
        %v4108 = vpack.c.b16 %v4094, %v4093
        %v4109 = vpack.c.b16 %v4096, %v4095
        %v4110 = vpack.c.b16 %v4098, %v4097
        %v4111 = vpack.c.b16 %v4100, %v4099
        %v4112 = vpack.c.b16 %v4102, %v4101
        %v4113 = vpack.c.b16 %v4104, %v4103
        %v4114 = vpack.c.b16 %v4106, %v4105
        %4123 = vmatprep.subr.bf16.mxu0 0
        %4124 = vmatpush1.bf16.msra.mxu0 %v4107
        %4125 = vmatprep.subr.bf16.mxu0 0
        %4126 = vmatpush1.bf16.msra.mxu0 %v4108
        %4127 = vmatprep.subr.bf16.mxu0 0
        %4128 = vmatpush1.bf16.msra.mxu0 %v4109
        %4129 = vmatprep.subr.bf16.mxu0 0
        %4130 = vmatpush1.bf16.msra.mxu0 %v4110
        %4131 = vmatprep.subr.bf16.mxu0 0
        %4132 = vmatpush1.bf16.msra.mxu0 %v4111
        %4133 = vmatprep.subr.bf16.mxu0 0
        %4134 = vmatpush1.bf16.msra.mxu0 %v4112
        %4135 = vmatprep.subr.bf16.mxu0 0
        %4136 = vmatpush1.bf16.msra.mxu0 %v4113
        %4137 = vmatprep.subr.bf16.mxu0 0
        %4138 = vmatpush1.bf16.msra.mxu0 %v4114
        %4139 = vmatprep.subr.bf16.mxu0 0
        %4140 = vmatpush1.bf16.msra.mxu0 0
        %4141 = vmatprep.subr.bf16.mxu0 0
        %4142 = vmatpush1.bf16.msra.mxu0 0
        %4143 = vmatprep.subr.bf16.mxu0 0
        %4144 = vmatpush1.bf16.msra.mxu0 0
        %4145 = vmatprep.subr.bf16.mxu0 0
        %4146 = vmatpush1.bf16.msra.mxu0 0
        %4147 = vmatprep.subr.bf16.mxu0 0
        %4148 = vmatpush1.bf16.msra.mxu0 0
        %4149 = vmatprep.subr.bf16.mxu0 0
        %4150 = vmatpush1.bf16.msra.mxu0 0
        %4151 = vmatprep.subr.bf16.mxu0 0
        %4152 = vmatpush1.bf16.msra.mxu0 0
        %4153 = vmatprep.subr.bf16.mxu0 0
        %4154 = vmatpush1.bf16.msra.mxu0 0
        %4155 = vmatprep.mubr.bf16.mxu0 0
        %4156 = vmatmul.mubr.bf16.gmra.mrb[0].mxu0 %v4043
        %v4157 = vpop.f32.mrb[0].mxu0
        %v4158 = vadd.f32 0.0, %v4157
        %v4159 = vpop.f32.mrb[0].mxu0
        %v4160 = vpop.f32.mrb[0].mxu0
        %v4161 = vadd.f32 0.0, %v4160
        %v4162 = vpop.f32.mrb[0].mxu0
        %4163 = vmatprep.mubr.bf16.mxu0 0
        %4164 = vmatmul.mubr.bf16.gmra.mrb[0].mxu0 %v4044
        %v4165 = vpop.f32.mrb[0].mxu0
        %v4166 = vadd.f32 0.0, %v4165
        %v4167 = vpop.f32.mrb[0].mxu0
        %v4168 = vpop.f32.mrb[0].mxu0
        %v4169 = vadd.f32 0.0, %v4168
        %v4170 = vpop.f32.mrb[0].mxu0
        %4171 = vmatprep.mubr.bf16.mxu0 0
        %4172 = vmatmul.mubr.bf16.gmra.mrb[0].mxu0 %v4045
        %v4173 = vpop.f32.mrb[0].mxu0
        %v4174 = vadd.f32 0.0, %v4173
        %v4175 = vpop.f32.mrb[0].mxu0
        %v4176 = vpop.f32.mrb[0].mxu0
        %v4177 = vadd.f32 0.0, %v4176
        %v4178 = vpop.f32.mrb[0].mxu0
        %4179 = vmatprep.mubr.bf16.mxu0 0
        %4180 = vmatmul.mubr.bf16.gmra.mrb[0].mxu0 %v4046
        %v4181 = vpop.f32.mrb[0].mxu0
        %v4182 = vadd.f32 0.0, %v4181
        %v4183 = vpop.f32.mrb[0].mxu0
        %v4184 = vpop.f32.mrb[0].mxu0
        %v4185 = vadd.f32 0.0, %v4184
        %v4186 = vpop.f32.mrb[0].mxu0
        %4187 = vmatprep.mubr.bf16.mxu0 0
        %4188 = vmatmul.mubr.bf16.gmra.mrb[0].mxu0 %v4047
        %v4189 = vpop.f32.mrb[0].mxu0
        %v4190 = vadd.f32 0.0, %v4189
        %v4191 = vpop.f32.mrb[0].mxu0
        %v4192 = vpop.f32.mrb[0].mxu0
        %v4193 = vadd.f32 0.0, %v4192
        %v4194 = vpop.f32.mrb[0].mxu0
        %4195 = vmatprep.mubr.bf16.mxu0 0
        %4196 = vmatmul.mubr.bf16.gmra.mrb[0].mxu0 %v4048
        %v4197 = vpop.f32.mrb[0].mxu0
        %v4198 = vadd.f32 0.0, %v4197
        %v4199 = vpop.f32.mrb[0].mxu0
        %v4200 = vpop.f32.mrb[0].mxu0
        %v4201 = vadd.f32 0.0, %v4200
        %v4202 = vpop.f32.mrb[0].mxu0
        %4203 = vmatprep.mubr.bf16.mxu0 0
        %4204 = vmatmul.mubr.bf16.gmra.mrb[0].mxu0 %v4049
        %v4205 = vpop.f32.mrb[0].mxu0
        %v4206 = vadd.f32 0.0, %v4205
        %v4207 = vpop.f32.mrb[0].mxu0
        %v4208 = vpop.f32.mrb[0].mxu0
        %v4209 = vadd.f32 0.0, %v4208
        %v4210 = vpop.f32.mrb[0].mxu0
        %4211 = vmatprep.mubr.bf16.mxu0 0
        %4212 = vmatmul.mubr.bf16.gmra.mrb[0].mxu0 %v4050
        %v4213 = vpop.f32.mrb[0].mxu0
        %v4214 = vadd.f32 0.0, %v4213
        %v4215 = vpop.f32.mrb[0].mxu0
        %v4216 = vpop.f32.mrb[0].mxu0
        %v4217 = vadd.f32 0.0, %v4216
        %v4218 = vpop.f32.mrb[0].mxu0
        %4219 = vmatprep.mubr.bf16.mxu0 0
        %4220 = vmatmul.mubr.bf16.gmra.mrb[0].mxu0 %v4051
        %v4221 = vpop.f32.mrb[0].mxu0
        %v4222 = vadd.f32 0.0, %v4221
        %v4223 = vpop.f32.mrb[0].mxu0
        %v4224 = vpop.f32.mrb[0].mxu0
        %v4225 = vadd.f32 0.0, %v4224
        %v4226 = vpop.f32.mrb[0].mxu0
        %4227 = vmatprep.mubr.bf16.mxu0 0
        %4228 = vmatmul.mubr.bf16.gmra.mrb[0].mxu0 %v4052
        %v4229 = vpop.f32.mrb[0].mxu0
        %v4230 = vadd.f32 0.0, %v4229
        %v4231 = vpop.f32.mrb[0].mxu0
        %v4232 = vpop.f32.mrb[0].mxu0
        %v4233 = vadd.f32 0.0, %v4232
        %v4234 = vpop.f32.mrb[0].mxu0
        %4235 = vmatprep.mubr.bf16.mxu0 0
        %4236 = vmatmul.mubr.bf16.gmra.mrb[0].mxu0 %v4053
        %v4237 = vpop.f32.mrb[0].mxu0
        %v4238 = vadd.f32 0.0, %v4237
        %v4239 = vpop.f32.mrb[0].mxu0
        %v4240 = vpop.f32.mrb[0].mxu0
        %v4241 = vadd.f32 0.0, %v4240
        %v4242 = vpop.f32.mrb[0].mxu0
        %4243 = vmatprep.mubr.bf16.mxu0 0
        %4244 = vmatmul.mubr.bf16.gmra.mrb[0].mxu0 %v4054
        %v4245 = vpop.f32.mrb[0].mxu0
        %v4246 = vadd.f32 0.0, %v4245
        %v4247 = vpop.f32.mrb[0].mxu0
        %v4248 = vpop.f32.mrb[0].mxu0
        %v4249 = vadd.f32 0.0, %v4248
        %v4250 = vpop.f32.mrb[0].mxu0
        %4251 = vmatprep.mubr.bf16.mxu0 0
        %4252 = vmatmul.mubr.bf16.gmra.mrb[0].mxu0 %v4055
        %v4253 = vpop.f32.mrb[0].mxu0
        %v4254 = vadd.f32 0.0, %v4253
        %v4255 = vpop.f32.mrb[0].mxu0
        %v4256 = vpop.f32.mrb[0].mxu0
        %v4257 = vadd.f32 0.0, %v4256
        %v4258 = vpop.f32.mrb[0].mxu0
        %4259 = vmatprep.mubr.bf16.mxu0 0
        %4260 = vmatmul.mubr.bf16.gmra.mrb[0].mxu0 %v4056
        %v4261 = vpop.f32.mrb[0].mxu0
        %v4262 = vadd.f32 0.0, %v4261
        %v4263 = vpop.f32.mrb[0].mxu0
        %v4264 = vpop.f32.mrb[0].mxu0
        %v4265 = vadd.f32 0.0, %v4264
        %v4266 = vpop.f32.mrb[0].mxu0
        %4267 = vmatprep.mubr.bf16.mxu0 0
        %4268 = vmatmul.mubr.bf16.gmra.mrb[0].mxu0 %v4057
        %v4269 = vpop.f32.mrb[0].mxu0
        %v4270 = vadd.f32 0.0, %v4269
        %v4271 = vpop.f32.mrb[0].mxu0
        %v4272 = vpop.f32.mrb[0].mxu0
        %v4273 = vadd.f32 0.0, %v4272
        %v4274 = vpop.f32.mrb[0].mxu0
        %4275 = vmatprep.mubr.bf16.mxu0 0
        %4276 = vmatmul.mubr.bf16.gmra.mrb[0].mxu0 %v4058
        %v4277 = vpop.f32.mrb[0].mxu0
        %v4278 = vadd.f32 0.0, %v4277
        %v4279 = vpop.f32.mrb[0].mxu0
        %v4280 = vpop.f32.mrb[0].mxu0
        %v4281 = vadd.f32 0.0, %v4280
        %v4282 = vpop.f32.mrb[0].mxu0
        %4283 = vdwg.mxu0
        %v4284 = vadd.f32 %v3962, %v4158
        %v4285 = vadd.f32 %v3963, %v4161
        %v4286 = vadd.f32 %v3964, %v4166
        %v4287 = vadd.f32 %v3965, %v4169
        %v4288 = vadd.f32 %v3966, %v4174
        %v4289 = vadd.f32 %v3967, %v4177
        %v4290 = vadd.f32 %v3968, %v4182
        %v4291 = vadd.f32 %v3969, %v4185
        %v4292 = vadd.f32 %v3970, %v4190
        %v4293 = vadd.f32 %v3971, %v4193
        %v4294 = vadd.f32 %v3972, %v4198
        %v4295 = vadd.f32 %v3973, %v4201
        %v4296 = vadd.f32 %v3974, %v4206
        %v4297 = vadd.f32 %v3975, %v4209
        %v4298 = vadd.f32 %v3976, %v4214
        %v4299 = vadd.f32 %v3977, %v4217
        %v4300 = vadd.f32 %v3978, %v4222
        %v4301 = vadd.f32 %v3979, %v4225
        %v4302 = vadd.f32 %v3980, %v4230
        %v4303 = vadd.f32 %v3981, %v4233
        %v4304 = vadd.f32 %v3982, %v4238
        %v4305 = vadd.f32 %v3983, %v4241
        %v4306 = vadd.f32 %v3984, %v4246
        %v4307 = vadd.f32 %v3985, %v4249
        %v4308 = vadd.f32 %v3986, %v4254
        %v4309 = vadd.f32 %v3987, %v4257
        %v4310 = vadd.f32 %v3988, %v4262
        %v4311 = vadd.f32 %v3989, %v4265
        %v4312 = vadd.f32 %v3990, %v4270
        %v4313 = vadd.f32 %v3991, %v4273
        %v4314 = vadd.f32 %v3992, %v4278
        %v4315 = vadd.f32 %v3993, %v4281
        %4316 = vst [vmem:[#allocation3] sm:$0xff] %v4284
        %4317 = vst [vmem:[#allocation3 + $0x8] sm:$0xff] %v4285
        %4318 = vst [vmem:[#allocation3 + $0x10] sm:$0xff] %v4286
        %4319 = vst [vmem:[#allocation3 + $0x18] sm:$0xff] %v4287
        %4320 = vst [vmem:[#allocation3 + $0x20] sm:$0xff] %v4288
        %4321 = vst [vmem:[#allocation3 + $0x28] sm:$0xff] %v4289
        %4322 = vst [vmem:[#allocation3 + $0x30] sm:$0xff] %v4290
        %4323 = vst [vmem:[#allocation3 + $0x38] sm:$0xff] %v4291
        %4324 = vst [vmem:[#allocation3 + $0x40] sm:$0xff] %v4292
        %4325 = vst [vmem:[#allocation3 + $0x48] sm:$0xff] %v4293
        %4326 = vst [vmem:[#allocation3 + $0x50] sm:$0xff] %v4294
        %4327 = vst [vmem:[#allocation3 + $0x58] sm:$0xff] %v4295
        %4328 = vst [vmem:[#allocation3 + $0x60] sm:$0xff] %v4296
        %4329 = vst [vmem:[#allocation3 + $0x68] sm:$0xff] %v4297
        %4330 = vst [vmem:[#allocation3 + $0x70] sm:$0xff] %v4298
        %4331 = vst [vmem:[#allocation3 + $0x78] sm:$0xff] %v4299
        %4332 = vst [vmem:[#allocation3 + $0x80] sm:$0xff] %v4300
        %4333 = vst [vmem:[#allocation3 + $0x88] sm:$0xff] %v4301
        %4334 = vst [vmem:[#allocation3 + $0x90] sm:$0xff] %v4302
        %4335 = vst [vmem:[#allocation3 + $0x98] sm:$0xff] %v4303
        %4336 = vst [vmem:[#allocation3 + $0xa0] sm:$0xff] %v4304
        %4337 = vst [vmem:[#allocation3 + $0xa8] sm:$0xff] %v4305
        %4338 = vst [vmem:[#allocation3 + $0xb0] sm:$0xff] %v4306
        %4339 = vst [vmem:[#allocation3 + $0xb8] sm:$0xff] %v4307
        %4340 = vst [vmem:[#allocation3 + $0xc0] sm:$0xff] %v4308
        %4341 = vst [vmem:[#allocation3 + $0xc8] sm:$0xff] %v4309
        %4342 = vst [vmem:[#allocation3 + $0xd0] sm:$0xff] %v4310
        %4343 = vst [vmem:[#allocation3 + $0xd8] sm:$0xff] %v4311
        %4344 = vst [vmem:[#allocation3 + $0xe0] sm:$0xff] %v4312
        %4345 = vst [vmem:[#allocation3 + $0xe8] sm:$0xff] %v4313
        %4346 = vst [vmem:[#allocation3 + $0xf0] sm:$0xff] %v4314
        %4347 = vst [vmem:[#allocation3 + $0xf8] sm:$0xff] %v4315
        %v4348 = vld [vmem:[%s1063] sm:$0xe]
        %v4349 = vld [vmem:[%s1063 + $0x4] sm:$0xf]
        %v4350 = vld [vmem:[%s1063 + $0x8] sm:$0x1]
        %v4351 = vld [vmem:[%s1063 + $0xc] sm:$0xe]
        %v4352 = vld [vmem:[%s1063 + $0x10] sm:$0xf]
        %v4353 = vld [vmem:[%s1063 + $0x14] sm:$0x1]
        %v4354 = vld [vmem:[%s1063 + $0x18] sm:$0xe]
        %v4355 = vld [vmem:[%s1063 + $0x1c] sm:$0xf]
        %v4356 = vld [vmem:[%s1063 + $0x20] sm:$0x1]
        %v4357 = vld [vmem:[%s1063 + $0x24] sm:$0xe]
        %v4358 = vld [vmem:[%s1063 + $0x28] sm:$0xf]
        %v4359 = vld [vmem:[%s1063 + $0x2c] sm:$0x1]
        %v4360 = vld [vmem:[%s1063 + $0x30] sm:$0xe]
        %v4361 = vld [vmem:[%s1063 + $0x34] sm:$0xf]
        %v4362 = vld [vmem:[%s1063 + $0x38] sm:$0x1]
        %v4363 = vld [vmem:[%s1063 + $0x3c] sm:$0xe]
        %v4364 = vld [vmem:[%s1063 + $0x40] sm:$0xf]
        %v4365 = vld [vmem:[%s1063 + $0x44] sm:$0x1]
        %v4366 = vld [vmem:[%s1063 + $0x48] sm:$0xe]
        %v4367 = vld [vmem:[%s1063 + $0x4c] sm:$0xf]
        %v4368 = vld [vmem:[%s1063 + $0x50] sm:$0x1]
        %v4369 = vld [vmem:[%s1063 + $0x54] sm:$0xe]
        %v4370 = vld [vmem:[%s1063 + $0x58] sm:$0xf]
        %v4371 = vld [vmem:[%s1063 + $0x5c] sm:$0x1]
        %v4372 = vld [vmem:[%s1063 + $0x60] sm:$0xe]
        %v4373 = vld [vmem:[%s1063 + $0x64] sm:$0xf]
        %v4374 = vld [vmem:[%s1063 + $0x68] sm:$0x1]
        %v4375 = vld [vmem:[%s1063 + $0x6c] sm:$0xe]
        %v4376 = vld [vmem:[%s1063 + $0x70] sm:$0xf]
        %v4377 = vld [vmem:[%s1063 + $0x74] sm:$0x1]
        %v4378 = vld [vmem:[%s1063 + $0x78] sm:$0xe]
        %v4379 = vld [vmem:[%s1063 + $0x7c] sm:$0xf]
        %v4380 = vld [vmem:[%s1063 + $0x80] sm:$0x1]
        %v4381 = vld [vmem:[%s1063 + $0x84] sm:$0xe]
        %v4382 = vld [vmem:[%s1063 + $0x88] sm:$0xf]
        %v4383 = vld [vmem:[%s1063 + $0x8c] sm:$0x1]
        %v4384 = vld [vmem:[%s1063 + $0x90] sm:$0xe]
        %v4385 = vld [vmem:[%s1063 + $0x94] sm:$0xf]
        %v4386 = vld [vmem:[%s1063 + $0x98] sm:$0x1]
        %v4387 = vld [vmem:[%s1063 + $0x9c] sm:$0xe]
        %v4388 = vld [vmem:[%s1063 + $0xa0] sm:$0xf]
        %v4389 = vld [vmem:[%s1063 + $0xa4] sm:$0x1]
        %v4390 = vld [vmem:[%s1063 + $0xa8] sm:$0xe]
        %v4391 = vld [vmem:[%s1063 + $0xac] sm:$0xf]
        %v4392 = vld [vmem:[%s1063 + $0xb0] sm:$0x1]
        %v4393 = vld [vmem:[%s1063 + $0xb4] sm:$0xe]
        %v4394 = vld [vmem:[%s1063 + $0xb8] sm:$0xf]
        %v4395 = vld [vmem:[%s1063 + $0xbc] sm:$0x1]
        %v4444 = vrot.slane %v4348, 5
        %v4445 = vrot.slane %v4444, 4
        %v4446 = vrot.slane %v4349, 5
        %v4447 = vsel %vm2581, %v4445, %v4446
        %v4448 = vrot.slane %v4446, 4
        %v4449 = vrot.slane %v4350, 5
        %v4450 = vsel %vm2581, %v4448, %v4449
        %v4451 = vrot.slane %v4351, 5
        %v4452 = vrot.slane %v4451, 4
        %v4453 = vrot.slane %v4352, 5
        %v4454 = vsel %vm2581, %v4452, %v4453
        %v4455 = vrot.slane %v4453, 4
        %v4456 = vrot.slane %v4353, 5
        %v4457 = vsel %vm2581, %v4455, %v4456
        %v4458 = vrot.slane %v4354, 5
        %v4459 = vrot.slane %v4458, 4
        %v4460 = vrot.slane %v4355, 5
        %v4461 = vsel %vm2581, %v4459, %v4460
        %v4462 = vrot.slane %v4460, 4
        %v4463 = vrot.slane %v4356, 5
        %v4464 = vsel %vm2581, %v4462, %v4463
        %v4465 = vrot.slane %v4357, 5
        %v4466 = vrot.slane %v4465, 4
        %v4467 = vrot.slane %v4358, 5
        %v4468 = vsel %vm2581, %v4466, %v4467
        %v4469 = vrot.slane %v4467, 4
        %v4470 = vrot.slane %v4359, 5
        %v4471 = vsel %vm2581, %v4469, %v4470
        %v4472 = vrot.slane %v4360, 5
        %v4473 = vrot.slane %v4472, 4
        %v4474 = vrot.slane %v4361, 5
        %v4475 = vsel %vm2581, %v4473, %v4474
        %v4476 = vrot.slane %v4474, 4
        %v4477 = vrot.slane %v4362, 5
        %v4478 = vsel %vm2581, %v4476, %v4477
        %v4479 = vrot.slane %v4363, 5
        %v4480 = vrot.slane %v4479, 4
        %v4481 = vrot.slane %v4364, 5
        %v4482 = vsel %vm2581, %v4480, %v4481
        %v4483 = vrot.slane %v4481, 4
        %v4484 = vrot.slane %v4365, 5
        %v4485 = vsel %vm2581, %v4483, %v4484
        %v4486 = vrot.slane %v4366, 5
        %v4487 = vrot.slane %v4486, 4
        %v4488 = vrot.slane %v4367, 5
        %v4489 = vsel %vm2581, %v4487, %v4488
        %v4490 = vrot.slane %v4488, 4
        %v4491 = vrot.slane %v4368, 5
        %v4492 = vsel %vm2581, %v4490, %v4491
        %v4493 = vrot.slane %v4369, 5
        %v4494 = vrot.slane %v4493, 4
        %v4495 = vrot.slane %v4370, 5
        %v4496 = vsel %vm2581, %v4494, %v4495
        %v4497 = vrot.slane %v4495, 4
        %v4498 = vrot.slane %v4371, 5
        %v4499 = vsel %vm2581, %v4497, %v4498
        %v4500 = vrot.slane %v4372, 5
        %v4501 = vrot.slane %v4500, 4
        %v4502 = vrot.slane %v4373, 5
        %v4503 = vsel %vm2581, %v4501, %v4502
        %v4504 = vrot.slane %v4502, 4
        %v4505 = vrot.slane %v4374, 5
        %v4506 = vsel %vm2581, %v4504, %v4505
        %v4507 = vrot.slane %v4375, 5
        %v4508 = vrot.slane %v4507, 4
        %v4509 = vrot.slane %v4376, 5
        %v4510 = vsel %vm2581, %v4508, %v4509
        %v4511 = vrot.slane %v4509, 4
        %v4512 = vrot.slane %v4377, 5
        %v4513 = vsel %vm2581, %v4511, %v4512
        %v4514 = vrot.slane %v4378, 5
        %v4515 = vrot.slane %v4514, 4
        %v4516 = vrot.slane %v4379, 5
        %v4517 = vsel %vm2581, %v4515, %v4516
        %v4518 = vrot.slane %v4516, 4
        %v4519 = vrot.slane %v4380, 5
        %v4520 = vsel %vm2581, %v4518, %v4519
        %v4521 = vrot.slane %v4381, 5
        %v4522 = vrot.slane %v4521, 4
        %v4523 = vrot.slane %v4382, 5
        %v4524 = vsel %vm2581, %v4522, %v4523
        %v4525 = vrot.slane %v4523, 4
        %v4526 = vrot.slane %v4383, 5
        %v4527 = vsel %vm2581, %v4525, %v4526
        %v4528 = vrot.slane %v4384, 5
        %v4529 = vrot.slane %v4528, 4
        %v4530 = vrot.slane %v4385, 5
        %v4531 = vsel %vm2581, %v4529, %v4530
        %v4532 = vrot.slane %v4530, 4
        %v4533 = vrot.slane %v4386, 5
        %v4534 = vsel %vm2581, %v4532, %v4533
        %v4535 = vrot.slane %v4387, 5
        %v4536 = vrot.slane %v4535, 4
        %v4537 = vrot.slane %v4388, 5
        %v4538 = vsel %vm2581, %v4536, %v4537
        %v4539 = vrot.slane %v4537, 4
        %v4540 = vrot.slane %v4389, 5
        %v4541 = vsel %vm2581, %v4539, %v4540
        %v4542 = vrot.slane %v4390, 5
        %v4543 = vrot.slane %v4542, 4
        %v4544 = vrot.slane %v4391, 5
        %v4545 = vsel %vm2581, %v4543, %v4544
        %v4546 = vrot.slane %v4544, 4
        %v4547 = vrot.slane %v4392, 5
        %v4548 = vsel %vm2581, %v4546, %v4547
        %v4549 = vrot.slane %v4393, 5
        %v4550 = vrot.slane %v4549, 4
        %v4551 = vrot.slane %v4394, 5
        %v4552 = vsel %vm2581, %v4550, %v4551
        %v4553 = vrot.slane %v4551, 4
        %v4554 = vrot.slane %v4395, 5
        %v4555 = vsel %vm2581, %v4553, %v4554
        %v4556 = vld [vmem:[#allocation3] sm:$0xff]
        %v4557 = vld [vmem:[#allocation3 + $0x8] sm:$0xff]
        %v4558 = vld [vmem:[#allocation3 + $0x10] sm:$0xff]
        %v4559 = vld [vmem:[#allocation3 + $0x18] sm:$0xff]
        %v4560 = vld [vmem:[#allocation3 + $0x20] sm:$0xff]
        %v4561 = vld [vmem:[#allocation3 + $0x28] sm:$0xff]
        %v4562 = vld [vmem:[#allocation3 + $0x30] sm:$0xff]
        %v4563 = vld [vmem:[#allocation3 + $0x38] sm:$0xff]
        %v4564 = vld [vmem:[#allocation3 + $0x40] sm:$0xff]
        %v4565 = vld [vmem:[#allocation3 + $0x48] sm:$0xff]
        %v4566 = vld [vmem:[#allocation3 + $0x50] sm:$0xff]
        %v4567 = vld [vmem:[#allocation3 + $0x58] sm:$0xff]
        %v4568 = vld [vmem:[#allocation3 + $0x60] sm:$0xff]
        %v4569 = vld [vmem:[#allocation3 + $0x68] sm:$0xff]
        %v4570 = vld [vmem:[#allocation3 + $0x70] sm:$0xff]
        %v4571 = vld [vmem:[#allocation3 + $0x78] sm:$0xff]
        %v4572 = vld [vmem:[#allocation3 + $0x80] sm:$0xff]
        %v4573 = vld [vmem:[#allocation3 + $0x88] sm:$0xff]
        %v4574 = vld [vmem:[#allocation3 + $0x90] sm:$0xff]
        %v4575 = vld [vmem:[#allocation3 + $0x98] sm:$0xff]
        %v4576 = vld [vmem:[#allocation3 + $0xa0] sm:$0xff]
        %v4577 = vld [vmem:[#allocation3 + $0xa8] sm:$0xff]
        %v4578 = vld [vmem:[#allocation3 + $0xb0] sm:$0xff]
        %v4579 = vld [vmem:[#allocation3 + $0xb8] sm:$0xff]
        %v4580 = vld [vmem:[#allocation3 + $0xc0] sm:$0xff]
        %v4581 = vld [vmem:[#allocation3 + $0xc8] sm:$0xff]
        %v4582 = vld [vmem:[#allocation3 + $0xd0] sm:$0xff]
        %v4583 = vld [vmem:[#allocation3 + $0xd8] sm:$0xff]
        %v4584 = vld [vmem:[#allocation3 + $0xe0] sm:$0xff]
        %v4585 = vld [vmem:[#allocation3 + $0xe8] sm:$0xff]
        %v4586 = vld [vmem:[#allocation3 + $0xf0] sm:$0xff]
        %v4587 = vld [vmem:[#allocation3 + $0xf8] sm:$0xff]
        %s4588 = scalar_lea.vmem %s3, 320
        %v4589 = vld [vmem:[%s4588] sm:$0xf]
        %v4590 = vld [vmem:[%s4588 + $0x4] sm:$0xf]
        %v4591 = vld [vmem:[%s4588 + $0x8] sm:$0xf]
        %v4592 = vld [vmem:[%s4588 + $0xc] sm:$0xf]
        %v4593 = vld [vmem:[%s4588 + $0x10] sm:$0xf]
        %v4594 = vld [vmem:[%s4588 + $0x14] sm:$0xf]
        %v4595 = vld [vmem:[%s4588 + $0x18] sm:$0xf]
        %v4596 = vld [vmem:[%s4588 + $0x1c] sm:$0xf]
        %v4597 = vld [vmem:[%s4588 + $0x20] sm:$0xf]
        %v4598 = vld [vmem:[%s4588 + $0x24] sm:$0xf]
        %v4599 = vld [vmem:[%s4588 + $0x28] sm:$0xf]
        %v4600 = vld [vmem:[%s4588 + $0x2c] sm:$0xf]
        %v4601 = vld [vmem:[%s4588 + $0x30] sm:$0xf]
        %v4602 = vld [vmem:[%s4588 + $0x34] sm:$0xf]
        %v4603 = vld [vmem:[%s4588 + $0x38] sm:$0xf]
        %v4604 = vld [vmem:[%s4588 + $0x3c] sm:$0xf]
        %v4605 = vunpack.c.l.b16 %v4447
        %v4606 = vunpack.c.l.b16 %v4450
        %v4607 = vunpack.c.l.b16 %v4454
        %v4608 = vunpack.c.l.b16 %v4457
        %v4609 = vunpack.c.l.b16 %v4461
        %v4610 = vunpack.c.l.b16 %v4464
        %v4611 = vunpack.c.l.b16 %v4468
        %v4612 = vunpack.c.l.b16 %v4471
        %v4613 = vunpack.c.l.b16 %v4475
        %v4614 = vunpack.c.l.b16 %v4478
        %v4615 = vunpack.c.l.b16 %v4482
        %v4616 = vunpack.c.l.b16 %v4485
        %v4617 = vunpack.c.l.b16 %v4489
        %v4618 = vunpack.c.l.b16 %v4492
        %v4619 = vunpack.c.l.b16 %v4496
        %v4620 = vunpack.c.l.b16 %v4499
        %v4621 = vunpack.c.l.b16 %v4503
        %v4622 = vunpack.c.l.b16 %v4506
        %v4623 = vunpack.c.l.b16 %v4510
        %v4624 = vunpack.c.l.b16 %v4513
        %v4625 = vunpack.c.l.b16 %v4517
        %v4626 = vunpack.c.l.b16 %v4520
        %v4627 = vunpack.c.l.b16 %v4524
        %v4628 = vunpack.c.l.b16 %v4527
        %v4629 = vunpack.c.l.b16 %v4531
        %v4630 = vunpack.c.l.b16 %v4534
        %v4631 = vunpack.c.l.b16 %v4538
        %v4632 = vunpack.c.l.b16 %v4541
        %v4633 = vunpack.c.l.b16 %v4545
        %v4634 = vunpack.c.l.b16 %v4548
        %v4635 = vunpack.c.l.b16 %v4552
        %v4636 = vunpack.c.l.b16 %v4555
        %v4637 = vpack.c.b16 %v4606, %v4605
        %v4638 = vpack.c.b16 %v4608, %v4607
        %v4639 = vpack.c.b16 %v4610, %v4609
        %v4640 = vpack.c.b16 %v4612, %v4611
        %v4641 = vpack.c.b16 %v4614, %v4613
        %v4642 = vpack.c.b16 %v4616, %v4615
        %v4643 = vpack.c.b16 %v4618, %v4617
        %v4644 = vpack.c.b16 %v4620, %v4619
        %v4645 = vpack.c.b16 %v4622, %v4621
        %v4646 = vpack.c.b16 %v4624, %v4623
        %v4647 = vpack.c.b16 %v4626, %v4625
        %v4648 = vpack.c.b16 %v4628, %v4627
        %v4649 = vpack.c.b16 %v4630, %v4629
        %v4650 = vpack.c.b16 %v4632, %v4631
        %v4651 = vpack.c.b16 %v4634, %v4633
        %v4652 = vpack.c.b16 %v4636, %v4635
        %v4685 = vunpack.c.l.b16 %v4589
        %v4686 = vunpack.c.l.b16 %v4590
        %v4687 = vunpack.c.l.b16 %v4591
        %v4688 = vunpack.c.l.b16 %v4592
        %v4689 = vunpack.c.l.b16 %v4593
        %v4690 = vunpack.c.l.b16 %v4594
        %v4691 = vunpack.c.l.b16 %v4595
        %v4692 = vunpack.c.l.b16 %v4596
        %v4693 = vunpack.c.l.b16 %v4597
        %v4694 = vunpack.c.l.b16 %v4598
        %v4695 = vunpack.c.l.b16 %v4599
        %v4696 = vunpack.c.l.b16 %v4600
        %v4697 = vunpack.c.l.b16 %v4601
        %v4698 = vunpack.c.l.b16 %v4602
        %v4699 = vunpack.c.l.b16 %v4603
        %v4700 = vunpack.c.l.b16 %v4604
        %v4701 = vpack.c.b16 %v4686, %v4685
        %v4702 = vpack.c.b16 %v4688, %v4687
        %v4703 = vpack.c.b16 %v4690, %v4689
        %v4704 = vpack.c.b16 %v4692, %v4691
        %v4705 = vpack.c.b16 %v4694, %v4693
        %v4706 = vpack.c.b16 %v4696, %v4695
        %v4707 = vpack.c.b16 %v4698, %v4697
        %v4708 = vpack.c.b16 %v4700, %v4699
        %4717 = vmatprep.subr.bf16.mxu0 0
        %4718 = vmatpush1.bf16.msra.mxu0 %v4701
        %4719 = vmatprep.subr.bf16.mxu0 0
        %4720 = vmatpush1.bf16.msra.mxu0 %v4702
        %4721 = vmatprep.subr.bf16.mxu0 0
        %4722 = vmatpush1.bf16.msra.mxu0 %v4703
        %4723 = vmatprep.subr.bf16.mxu0 0
        %4724 = vmatpush1.bf16.msra.mxu0 %v4704
        %4725 = vmatprep.subr.bf16.mxu0 0
        %4726 = vmatpush1.bf16.msra.mxu0 %v4705
        %4727 = vmatprep.subr.bf16.mxu0 0
        %4728 = vmatpush1.bf16.msra.mxu0 %v4706
        %4729 = vmatprep.subr.bf16.mxu0 0
        %4730 = vmatpush1.bf16.msra.mxu0 %v4707
        %4731 = vmatprep.subr.bf16.mxu0 0
        %4732 = vmatpush1.bf16.msra.mxu0 %v4708
        %4733 = vmatprep.subr.bf16.mxu0 0
        %4734 = vmatpush1.bf16.msra.mxu0 0
        %4735 = vmatprep.subr.bf16.mxu0 0
        %4736 = vmatpush1.bf16.msra.mxu0 0
        %4737 = vmatprep.subr.bf16.mxu0 0
        %4738 = vmatpush1.bf16.msra.mxu0 0
        %4739 = vmatprep.subr.bf16.mxu0 0
        %4740 = vmatpush1.bf16.msra.mxu0 0
        %4741 = vmatprep.subr.bf16.mxu0 0
        %4742 = vmatpush1.bf16.msra.mxu0 0
        %4743 = vmatprep.subr.bf16.mxu0 0
        %4744 = vmatpush1.bf16.msra.mxu0 0
        %4745 = vmatprep.subr.bf16.mxu0 0
        %4746 = vmatpush1.bf16.msra.mxu0 0
        %4747 = vmatprep.subr.bf16.mxu0 0
        %4748 = vmatpush1.bf16.msra.mxu0 0
        %4749 = vmatprep.mubr.bf16.mxu0 0
        %4750 = vmatmul.mubr.bf16.gmra.mrb[0].mxu0 %v4637
        %v4751 = vpop.f32.mrb[0].mxu0
        %v4752 = vadd.f32 0.0, %v4751
        %v4753 = vpop.f32.mrb[0].mxu0
        %v4754 = vpop.f32.mrb[0].mxu0
        %v4755 = vadd.f32 0.0, %v4754
        %v4756 = vpop.f32.mrb[0].mxu0
        %4757 = vmatprep.mubr.bf16.mxu0 0
        %4758 = vmatmul.mubr.bf16.gmra.mrb[0].mxu0 %v4638
        %v4759 = vpop.f32.mrb[0].mxu0
        %v4760 = vadd.f32 0.0, %v4759
        %v4761 = vpop.f32.mrb[0].mxu0
        %v4762 = vpop.f32.mrb[0].mxu0
        %v4763 = vadd.f32 0.0, %v4762
        %v4764 = vpop.f32.mrb[0].mxu0
        %4765 = vmatprep.mubr.bf16.mxu0 0
        %4766 = vmatmul.mubr.bf16.gmra.mrb[0].mxu0 %v4639
        %v4767 = vpop.f32.mrb[0].mxu0
        %v4768 = vadd.f32 0.0, %v4767
        %v4769 = vpop.f32.mrb[0].mxu0
        %v4770 = vpop.f32.mrb[0].mxu0
        %v4771 = vadd.f32 0.0, %v4770
        %v4772 = vpop.f32.mrb[0].mxu0
        %4773 = vmatprep.mubr.bf16.mxu0 0
        %4774 = vmatmul.mubr.bf16.gmra.mrb[0].mxu0 %v4640
        %v4775 = vpop.f32.mrb[0].mxu0
        %v4776 = vadd.f32 0.0, %v4775
        %v4777 = vpop.f32.mrb[0].mxu0
        %v4778 = vpop.f32.mrb[0].mxu0
        %v4779 = vadd.f32 0.0, %v4778
        %v4780 = vpop.f32.mrb[0].mxu0
        %4781 = vmatprep.mubr.bf16.mxu0 0
        %4782 = vmatmul.mubr.bf16.gmra.mrb[0].mxu0 %v4641
        %v4783 = vpop.f32.mrb[0].mxu0
        %v4784 = vadd.f32 0.0, %v4783
        %v4785 = vpop.f32.mrb[0].mxu0
        %v4786 = vpop.f32.mrb[0].mxu0
        %v4787 = vadd.f32 0.0, %v4786
        %v4788 = vpop.f32.mrb[0].mxu0
        %4789 = vmatprep.mubr.bf16.mxu0 0
        %4790 = vmatmul.mubr.bf16.gmra.mrb[0].mxu0 %v4642
        %v4791 = vpop.f32.mrb[0].mxu0
        %v4792 = vadd.f32 0.0, %v4791
        %v4793 = vpop.f32.mrb[0].mxu0
        %v4794 = vpop.f32.mrb[0].mxu0
        %v4795 = vadd.f32 0.0, %v4794
        %v4796 = vpop.f32.mrb[0].mxu0
        %4797 = vmatprep.mubr.bf16.mxu0 0
        %4798 = vmatmul.mubr.bf16.gmra.mrb[0].mxu0 %v4643
        %v4799 = vpop.f32.mrb[0].mxu0
        %v4800 = vadd.f32 0.0, %v4799
        %v4801 = vpop.f32.mrb[0].mxu0
        %v4802 = vpop.f32.mrb[0].mxu0
        %v4803 = vadd.f32 0.0, %v4802
        %v4804 = vpop.f32.mrb[0].mxu0
        %4805 = vmatprep.mubr.bf16.mxu0 0
        %4806 = vmatmul.mubr.bf16.gmra.mrb[0].mxu0 %v4644
        %v4807 = vpop.f32.mrb[0].mxu0
        %v4808 = vadd.f32 0.0, %v4807
        %v4809 = vpop.f32.mrb[0].mxu0
        %v4810 = vpop.f32.mrb[0].mxu0
        %v4811 = vadd.f32 0.0, %v4810
        %v4812 = vpop.f32.mrb[0].mxu0
        %4813 = vmatprep.mubr.bf16.mxu0 0
        %4814 = vmatmul.mubr.bf16.gmra.mrb[0].mxu0 %v4645
        %v4815 = vpop.f32.mrb[0].mxu0
        %v4816 = vadd.f32 0.0, %v4815
        %v4817 = vpop.f32.mrb[0].mxu0
        %v4818 = vpop.f32.mrb[0].mxu0
        %v4819 = vadd.f32 0.0, %v4818
        %v4820 = vpop.f32.mrb[0].mxu0
        %4821 = vmatprep.mubr.bf16.mxu0 0
        %4822 = vmatmul.mubr.bf16.gmra.mrb[0].mxu0 %v4646
        %v4823 = vpop.f32.mrb[0].mxu0
        %v4824 = vadd.f32 0.0, %v4823
        %v4825 = vpop.f32.mrb[0].mxu0
        %v4826 = vpop.f32.mrb[0].mxu0
        %v4827 = vadd.f32 0.0, %v4826
        %v4828 = vpop.f32.mrb[0].mxu0
        %4829 = vmatprep.mubr.bf16.mxu0 0
        %4830 = vmatmul.mubr.bf16.gmra.mrb[0].mxu0 %v4647
        %v4831 = vpop.f32.mrb[0].mxu0
        %v4832 = vadd.f32 0.0, %v4831
        %v4833 = vpop.f32.mrb[0].mxu0
        %v4834 = vpop.f32.mrb[0].mxu0
        %v4835 = vadd.f32 0.0, %v4834
        %v4836 = vpop.f32.mrb[0].mxu0
        %4837 = vmatprep.mubr.bf16.mxu0 0
        %4838 = vmatmul.mubr.bf16.gmra.mrb[0].mxu0 %v4648
        %v4839 = vpop.f32.mrb[0].mxu0
        %v4840 = vadd.f32 0.0, %v4839
        %v4841 = vpop.f32.mrb[0].mxu0
        %v4842 = vpop.f32.mrb[0].mxu0
        %v4843 = vadd.f32 0.0, %v4842
        %v4844 = vpop.f32.mrb[0].mxu0
        %4845 = vmatprep.mubr.bf16.mxu0 0
        %4846 = vmatmul.mubr.bf16.gmra.mrb[0].mxu0 %v4649
        %v4847 = vpop.f32.mrb[0].mxu0
        %v4848 = vadd.f32 0.0, %v4847
        %v4849 = vpop.f32.mrb[0].mxu0
        %v4850 = vpop.f32.mrb[0].mxu0
        %v4851 = vadd.f32 0.0, %v4850
        %v4852 = vpop.f32.mrb[0].mxu0
        %4853 = vmatprep.mubr.bf16.mxu0 0
        %4854 = vmatmul.mubr.bf16.gmra.mrb[0].mxu0 %v4650
        %v4855 = vpop.f32.mrb[0].mxu0
        %v4856 = vadd.f32 0.0, %v4855
        %v4857 = vpop.f32.mrb[0].mxu0
        %v4858 = vpop.f32.mrb[0].mxu0
        %v4859 = vadd.f32 0.0, %v4858
        %v4860 = vpop.f32.mrb[0].mxu0
        %4861 = vmatprep.mubr.bf16.mxu0 0
        %4862 = vmatmul.mubr.bf16.gmra.mrb[0].mxu0 %v4651
        %v4863 = vpop.f32.mrb[0].mxu0
        %v4864 = vadd.f32 0.0, %v4863
        %v4865 = vpop.f32.mrb[0].mxu0
        %v4866 = vpop.f32.mrb[0].mxu0
        %v4867 = vadd.f32 0.0, %v4866
        %v4868 = vpop.f32.mrb[0].mxu0
        %4869 = vmatprep.mubr.bf16.mxu0 0
        %4870 = vmatmul.mubr.bf16.gmra.mrb[0].mxu0 %v4652
        %v4871 = vpop.f32.mrb[0].mxu0
        %v4872 = vadd.f32 0.0, %v4871
        %v4873 = vpop.f32.mrb[0].mxu0
        %v4874 = vpop.f32.mrb[0].mxu0
        %v4875 = vadd.f32 0.0, %v4874
        %v4876 = vpop.f32.mrb[0].mxu0
        %4877 = vdwg.mxu0
        %v4878 = vadd.f32 %v4556, %v4752
        %v4879 = vadd.f32 %v4557, %v4755
        %v4880 = vadd.f32 %v4558, %v4760
        %v4881 = vadd.f32 %v4559, %v4763
        %v4882 = vadd.f32 %v4560, %v4768
        %v4883 = vadd.f32 %v4561, %v4771
        %v4884 = vadd.f32 %v4562, %v4776
        %v4885 = vadd.f32 %v4563, %v4779
        %v4886 = vadd.f32 %v4564, %v4784
        %v4887 = vadd.f32 %v4565, %v4787
        %v4888 = vadd.f32 %v4566, %v4792
        %v4889 = vadd.f32 %v4567, %v4795
        %v4890 = vadd.f32 %v4568, %v4800
        %v4891 = vadd.f32 %v4569, %v4803
        %v4892 = vadd.f32 %v4570, %v4808
        %v4893 = vadd.f32 %v4571, %v4811
        %v4894 = vadd.f32 %v4572, %v4816
        %v4895 = vadd.f32 %v4573, %v4819
        %v4896 = vadd.f32 %v4574, %v4824
        %v4897 = vadd.f32 %v4575, %v4827
        %v4898 = vadd.f32 %v4576, %v4832
        %v4899 = vadd.f32 %v4577, %v4835
        %v4900 = vadd.f32 %v4578, %v4840
        %v4901 = vadd.f32 %v4579, %v4843
        %v4902 = vadd.f32 %v4580, %v4848
        %v4903 = vadd.f32 %v4581, %v4851
        %v4904 = vadd.f32 %v4582, %v4856
        %v4905 = vadd.f32 %v4583, %v4859
        %v4906 = vadd.f32 %v4584, %v4864
        %v4907 = vadd.f32 %v4585, %v4867
        %v4908 = vadd.f32 %v4586, %v4872
        %v4909 = vadd.f32 %v4587, %v4875
        %4910 = vst [vmem:[#allocation3] sm:$0xff] %v4878
        %4911 = vst [vmem:[#allocation3 + $0x8] sm:$0xff] %v4879
        %4912 = vst [vmem:[#allocation3 + $0x10] sm:$0xff] %v4880
        %4913 = vst [vmem:[#allocation3 + $0x18] sm:$0xff] %v4881
        %4914 = vst [vmem:[#allocation3 + $0x20] sm:$0xff] %v4882
        %4915 = vst [vmem:[#allocation3 + $0x28] sm:$0xff] %v4883
        %4916 = vst [vmem:[#allocation3 + $0x30] sm:$0xff] %v4884
        %4917 = vst [vmem:[#allocation3 + $0x38] sm:$0xff] %v4885
        %4918 = vst [vmem:[#allocation3 + $0x40] sm:$0xff] %v4886
        %4919 = vst [vmem:[#allocation3 + $0x48] sm:$0xff] %v4887
        %4920 = vst [vmem:[#allocation3 + $0x50] sm:$0xff] %v4888
        %4921 = vst [vmem:[#allocation3 + $0x58] sm:$0xff] %v4889
        %4922 = vst [vmem:[#allocation3 + $0x60] sm:$0xff] %v4890
        %4923 = vst [vmem:[#allocation3 + $0x68] sm:$0xff] %v4891
        %4924 = vst [vmem:[#allocation3 + $0x70] sm:$0xff] %v4892
        %4925 = vst [vmem:[#allocation3 + $0x78] sm:$0xff] %v4893
        %4926 = vst [vmem:[#allocation3 + $0x80] sm:$0xff] %v4894
        %4927 = vst [vmem:[#allocation3 + $0x88] sm:$0xff] %v4895
        %4928 = vst [vmem:[#allocation3 + $0x90] sm:$0xff] %v4896
        %4929 = vst [vmem:[#allocation3 + $0x98] sm:$0xff] %v4897
        %4930 = vst [vmem:[#allocation3 + $0xa0] sm:$0xff] %v4898
        %4931 = vst [vmem:[#allocation3 + $0xa8] sm:$0xff] %v4899
        %4932 = vst [vmem:[#allocation3 + $0xb0] sm:$0xff] %v4900
        %4933 = vst [vmem:[#allocation3 + $0xb8] sm:$0xff] %v4901
        %4934 = vst [vmem:[#allocation3 + $0xc0] sm:$0xff] %v4902
        %4935 = vst [vmem:[#allocation3 + $0xc8] sm:$0xff] %v4903
        %4936 = vst [vmem:[#allocation3 + $0xd0] sm:$0xff] %v4904
        %4937 = vst [vmem:[#allocation3 + $0xd8] sm:$0xff] %v4905
        %4938 = vst [vmem:[#allocation3 + $0xe0] sm:$0xff] %v4906
        %4939 = vst [vmem:[#allocation3 + $0xe8] sm:$0xff] %v4907
        %4940 = vst [vmem:[#allocation3 + $0xf0] sm:$0xff] %v4908
        %4941 = vst [vmem:[#allocation3 + $0xf8] sm:$0xff] %v4909
        %s4942 = scalar_lea.vmem [#allocation2], 24
        %v4943 = vld [vmem:[%s4942] sm:$0xf]
        %v4944 = vld [vmem:[%s4942 + $0x4] sm:$0xf]
        %v4945 = vld [vmem:[%s4942 + $0xc] sm:$0xf]
        %v4946 = vld [vmem:[%s4942 + $0x10] sm:$0xf]
        %v4947 = vld [vmem:[%s4942 + $0x18] sm:$0xf]
        %v4948 = vld [vmem:[%s4942 + $0x1c] sm:$0xf]
        %v4949 = vld [vmem:[%s4942 + $0x24] sm:$0xf]
        %v4950 = vld [vmem:[%s4942 + $0x28] sm:$0xf]
        %v4951 = vld [vmem:[%s4942 + $0x30] sm:$0xf]
        %v4952 = vld [vmem:[%s4942 + $0x34] sm:$0xf]
        %v4953 = vld [vmem:[%s4942 + $0x3c] sm:$0xf]
        %v4954 = vld [vmem:[%s4942 + $0x40] sm:$0xf]
        %v4955 = vld [vmem:[%s4942 + $0x48] sm:$0xf]
        %v4956 = vld [vmem:[%s4942 + $0x4c] sm:$0xf]
        %v4957 = vld [vmem:[%s4942 + $0x54] sm:$0xf]
        %v4958 = vld [vmem:[%s4942 + $0x58] sm:$0xf]
        %v4959 = vld [vmem:[%s4942 + $0x60] sm:$0xf]
        %v4960 = vld [vmem:[%s4942 + $0x64] sm:$0xf]
        %v4961 = vld [vmem:[%s4942 + $0x6c] sm:$0xf]
        %v4962 = vld [vmem:[%s4942 + $0x70] sm:$0xf]
        %v4963 = vld [vmem:[%s4942 + $0x78] sm:$0xf]
        %v4964 = vld [vmem:[%s4942 + $0x7c] sm:$0xf]
        %v4965 = vld [vmem:[%s4942 + $0x84] sm:$0xf]
        %v4966 = vld [vmem:[%s4942 + $0x88] sm:$0xf]
        %v4967 = vld [vmem:[%s4942 + $0x90] sm:$0xf]
        %v4968 = vld [vmem:[%s4942 + $0x94] sm:$0xf]
        %v4969 = vld [vmem:[%s4942 + $0x9c] sm:$0xf]
        %v4970 = vld [vmem:[%s4942 + $0xa0] sm:$0xf]
        %v4971 = vld [vmem:[%s4942 + $0xa8] sm:$0xf]
        %v4972 = vld [vmem:[%s4942 + $0xac] sm:$0xf]
        %v4973 = vld [vmem:[%s4942 + $0xb4] sm:$0xf]
        %v4974 = vld [vmem:[%s4942 + $0xb8] sm:$0xf]
        %v4975 = vld [vmem:[#allocation3] sm:$0xff]
        %v4976 = vld [vmem:[#allocation3 + $0x8] sm:$0xff]
        %v4977 = vld [vmem:[#allocation3 + $0x10] sm:$0xff]
        %v4978 = vld [vmem:[#allocation3 + $0x18] sm:$0xff]
        %v4979 = vld [vmem:[#allocation3 + $0x20] sm:$0xff]
        %v4980 = vld [vmem:[#allocation3 + $0x28] sm:$0xff]
        %v4981 = vld [vmem:[#allocation3 + $0x30] sm:$0xff]
        %v4982 = vld [vmem:[#allocation3 + $0x38] sm:$0xff]
        %v4983 = vld [vmem:[#allocation3 + $0x40] sm:$0xff]
        %v4984 = vld [vmem:[#allocation3 + $0x48] sm:$0xff]
        %v4985 = vld [vmem:[#allocation3 + $0x50] sm:$0xff]
        %v4986 = vld [vmem:[#allocation3 + $0x58] sm:$0xff]
        %v4987 = vld [vmem:[#allocation3 + $0x60] sm:$0xff]
        %v4988 = vld [vmem:[#allocation3 + $0x68] sm:$0xff]
        %v4989 = vld [vmem:[#allocation3 + $0x70] sm:$0xff]
        %v4990 = vld [vmem:[#allocation3 + $0x78] sm:$0xff]
        %v4991 = vld [vmem:[#allocation3 + $0x80] sm:$0xff]
        %v4992 = vld [vmem:[#allocation3 + $0x88] sm:$0xff]
        %v4993 = vld [vmem:[#allocation3 + $0x90] sm:$0xff]
        %v4994 = vld [vmem:[#allocation3 + $0x98] sm:$0xff]
        %v4995 = vld [vmem:[#allocation3 + $0xa0] sm:$0xff]
        %v4996 = vld [vmem:[#allocation3 + $0xa8] sm:$0xff]
        %v4997 = vld [vmem:[#allocation3 + $0xb0] sm:$0xff]
        %v4998 = vld [vmem:[#allocation3 + $0xb8] sm:$0xff]
        %v4999 = vld [vmem:[#allocation3 + $0xc0] sm:$0xff]
        %v5000 = vld [vmem:[#allocation3 + $0xc8] sm:$0xff]
        %v5001 = vld [vmem:[#allocation3 + $0xd0] sm:$0xff]
        %v5002 = vld [vmem:[#allocation3 + $0xd8] sm:$0xff]
        %v5003 = vld [vmem:[#allocation3 + $0xe0] sm:$0xff]
        %v5004 = vld [vmem:[#allocation3 + $0xe8] sm:$0xff]
        %v5005 = vld [vmem:[#allocation3 + $0xf0] sm:$0xff]
        %v5006 = vld [vmem:[#allocation3 + $0xf8] sm:$0xff]
        %s5007 = scalar_lea.vmem %s3, 384
        %v5008 = vld [vmem:[%s5007] sm:$0xf]
        %v5009 = vld [vmem:[%s5007 + $0x4] sm:$0xf]
        %v5010 = vld [vmem:[%s5007 + $0x8] sm:$0xf]
        %v5011 = vld [vmem:[%s5007 + $0xc] sm:$0xf]
        %v5012 = vld [vmem:[%s5007 + $0x10] sm:$0xf]
        %v5013 = vld [vmem:[%s5007 + $0x14] sm:$0xf]
        %v5014 = vld [vmem:[%s5007 + $0x18] sm:$0xf]
        %v5015 = vld [vmem:[%s5007 + $0x1c] sm:$0xf]
        %v5016 = vld [vmem:[%s5007 + $0x20] sm:$0xf]
        %v5017 = vld [vmem:[%s5007 + $0x24] sm:$0xf]
        %v5018 = vld [vmem:[%s5007 + $0x28] sm:$0xf]
        %v5019 = vld [vmem:[%s5007 + $0x2c] sm:$0xf]
        %v5020 = vld [vmem:[%s5007 + $0x30] sm:$0xf]
        %v5021 = vld [vmem:[%s5007 + $0x34] sm:$0xf]
        %v5022 = vld [vmem:[%s5007 + $0x38] sm:$0xf]
        %v5023 = vld [vmem:[%s5007 + $0x3c] sm:$0xf]
        %v5056 = vunpack.c.l.b16 %v4943
        %v5057 = vunpack.c.l.b16 %v4944
        %v5058 = vunpack.c.l.b16 %v4945
        %v5059 = vunpack.c.l.b16 %v4946
        %v5060 = vunpack.c.l.b16 %v4947
        %v5061 = vunpack.c.l.b16 %v4948
        %v5062 = vunpack.c.l.b16 %v4949
        %v5063 = vunpack.c.l.b16 %v4950
        %v5064 = vunpack.c.l.b16 %v4951
        %v5065 = vunpack.c.l.b16 %v4952
        %v5066 = vunpack.c.l.b16 %v4953
        %v5067 = vunpack.c.l.b16 %v4954
        %v5068 = vunpack.c.l.b16 %v4955
        %v5069 = vunpack.c.l.b16 %v4956
        %v5070 = vunpack.c.l.b16 %v4957
        %v5071 = vunpack.c.l.b16 %v4958
        %v5072 = vunpack.c.l.b16 %v4959
        %v5073 = vunpack.c.l.b16 %v4960
        %v5074 = vunpack.c.l.b16 %v4961
        %v5075 = vunpack.c.l.b16 %v4962
        %v5076 = vunpack.c.l.b16 %v4963
        %v5077 = vunpack.c.l.b16 %v4964
        %v5078 = vunpack.c.l.b16 %v4965
        %v5079 = vunpack.c.l.b16 %v4966
        %v5080 = vunpack.c.l.b16 %v4967
        %v5081 = vunpack.c.l.b16 %v4968
        %v5082 = vunpack.c.l.b16 %v4969
        %v5083 = vunpack.c.l.b16 %v4970
        %v5084 = vunpack.c.l.b16 %v4971
        %v5085 = vunpack.c.l.b16 %v4972
        %v5086 = vunpack.c.l.b16 %v4973
        %v5087 = vunpack.c.l.b16 %v4974
        %v5088 = vpack.c.b16 %v5057, %v5056
        %v5089 = vpack.c.b16 %v5059, %v5058
        %v5090 = vpack.c.b16 %v5061, %v5060
        %v5091 = vpack.c.b16 %v5063, %v5062
        %v5092 = vpack.c.b16 %v5065, %v5064
        %v5093 = vpack.c.b16 %v5067, %v5066
        %v5094 = vpack.c.b16 %v5069, %v5068
        %v5095 = vpack.c.b16 %v5071, %v5070
        %v5096 = vpack.c.b16 %v5073, %v5072
        %v5097 = vpack.c.b16 %v5075, %v5074
        %v5098 = vpack.c.b16 %v5077, %v5076
        %v5099 = vpack.c.b16 %v5079, %v5078
        %v5100 = vpack.c.b16 %v5081, %v5080
        %v5101 = vpack.c.b16 %v5083, %v5082
        %v5102 = vpack.c.b16 %v5085, %v5084
        %v5103 = vpack.c.b16 %v5087, %v5086
        %v5136 = vunpack.c.l.b16 %v5008
        %v5137 = vunpack.c.l.b16 %v5009
        %v5138 = vunpack.c.l.b16 %v5010
        %v5139 = vunpack.c.l.b16 %v5011
        %v5140 = vunpack.c.l.b16 %v5012
        %v5141 = vunpack.c.l.b16 %v5013
        %v5142 = vunpack.c.l.b16 %v5014
        %v5143 = vunpack.c.l.b16 %v5015
        %v5144 = vunpack.c.l.b16 %v5016
        %v5145 = vunpack.c.l.b16 %v5017
        %v5146 = vunpack.c.l.b16 %v5018
        %v5147 = vunpack.c.l.b16 %v5019
        %v5148 = vunpack.c.l.b16 %v5020
        %v5149 = vunpack.c.l.b16 %v5021
        %v5150 = vunpack.c.l.b16 %v5022
        %v5151 = vunpack.c.l.b16 %v5023
        %v5152 = vpack.c.b16 %v5137, %v5136
        %v5153 = vpack.c.b16 %v5139, %v5138
        %v5154 = vpack.c.b16 %v5141, %v5140
        %v5155 = vpack.c.b16 %v5143, %v5142
        %v5156 = vpack.c.b16 %v5145, %v5144
        %v5157 = vpack.c.b16 %v5147, %v5146
        %v5158 = vpack.c.b16 %v5149, %v5148
        %v5159 = vpack.c.b16 %v5151, %v5150
        %5168 = vmatprep.subr.bf16.mxu0 0
        %5169 = vmatpush1.bf16.msra.mxu0 %v5152
        %5170 = vmatprep.subr.bf16.mxu0 0
        %5171 = vmatpush1.bf16.msra.mxu0 %v5153
        %5172 = vmatprep.subr.bf16.mxu0 0
        %5173 = vmatpush1.bf16.msra.mxu0 %v5154
        %5174 = vmatprep.subr.bf16.mxu0 0
        %5175 = vmatpush1.bf16.msra.mxu0 %v5155
        %5176 = vmatprep.subr.bf16.mxu0 0
        %5177 = vmatpush1.bf16.msra.mxu0 %v5156
        %5178 = vmatprep.subr.bf16.mxu0 0
        %5179 = vmatpush1.bf16.msra.mxu0 %v5157
        %5180 = vmatprep.subr.bf16.mxu0 0
        %5181 = vmatpush1.bf16.msra.mxu0 %v5158
        %5182 = vmatprep.subr.bf16.mxu0 0
        %5183 = vmatpush1.bf16.msra.mxu0 %v5159
        %5184 = vmatprep.subr.bf16.mxu0 0
        %5185 = vmatpush1.bf16.msra.mxu0 0
        %5186 = vmatprep.subr.bf16.mxu0 0
        %5187 = vmatpush1.bf16.msra.mxu0 0
        %5188 = vmatprep.subr.bf16.mxu0 0
        %5189 = vmatpush1.bf16.msra.mxu0 0
        %5190 = vmatprep.subr.bf16.mxu0 0
        %5191 = vmatpush1.bf16.msra.mxu0 0
        %5192 = vmatprep.subr.bf16.mxu0 0
        %5193 = vmatpush1.bf16.msra.mxu0 0
        %5194 = vmatprep.subr.bf16.mxu0 0
        %5195 = vmatpush1.bf16.msra.mxu0 0
        %5196 = vmatprep.subr.bf16.mxu0 0
        %5197 = vmatpush1.bf16.msra.mxu0 0
        %5198 = vmatprep.subr.bf16.mxu0 0
        %5199 = vmatpush1.bf16.msra.mxu0 0
        %5200 = vmatprep.mubr.bf16.mxu0 0
        %5201 = vmatmul.mubr.bf16.gmra.mrb[0].mxu0 %v5088
        %v5202 = vpop.f32.mrb[0].mxu0
        %v5203 = vadd.f32 0.0, %v5202
        %v5204 = vpop.f32.mrb[0].mxu0
        %v5205 = vpop.f32.mrb[0].mxu0
        %v5206 = vadd.f32 0.0, %v5205
        %v5207 = vpop.f32.mrb[0].mxu0
        %5208 = vmatprep.mubr.bf16.mxu0 0
        %5209 = vmatmul.mubr.bf16.gmra.mrb[0].mxu0 %v5089
        %v5210 = vpop.f32.mrb[0].mxu0
        %v5211 = vadd.f32 0.0, %v5210
        %v5212 = vpop.f32.mrb[0].mxu0
        %v5213 = vpop.f32.mrb[0].mxu0
        %v5214 = vadd.f32 0.0, %v5213
        %v5215 = vpop.f32.mrb[0].mxu0
        %5216 = vmatprep.mubr.bf16.mxu0 0
        %5217 = vmatmul.mubr.bf16.gmra.mrb[0].mxu0 %v5090
        %v5218 = vpop.f32.mrb[0].mxu0
        %v5219 = vadd.f32 0.0, %v5218
        %v5220 = vpop.f32.mrb[0].mxu0
        %v5221 = vpop.f32.mrb[0].mxu0
        %v5222 = vadd.f32 0.0, %v5221
        %v5223 = vpop.f32.mrb[0].mxu0
        %5224 = vmatprep.mubr.bf16.mxu0 0
        %5225 = vmatmul.mubr.bf16.gmra.mrb[0].mxu0 %v5091
        %v5226 = vpop.f32.mrb[0].mxu0
        %v5227 = vadd.f32 0.0, %v5226
        %v5228 = vpop.f32.mrb[0].mxu0
        %v5229 = vpop.f32.mrb[0].mxu0
        %v5230 = vadd.f32 0.0, %v5229
        %v5231 = vpop.f32.mrb[0].mxu0
        %5232 = vmatprep.mubr.bf16.mxu0 0
        %5233 = vmatmul.mubr.bf16.gmra.mrb[0].mxu0 %v5092
        %v5234 = vpop.f32.mrb[0].mxu0
        %v5235 = vadd.f32 0.0, %v5234
        %v5236 = vpop.f32.mrb[0].mxu0
        %v5237 = vpop.f32.mrb[0].mxu0
        %v5238 = vadd.f32 0.0, %v5237
        %v5239 = vpop.f32.mrb[0].mxu0
        %5240 = vmatprep.mubr.bf16.mxu0 0
        %5241 = vmatmul.mubr.bf16.gmra.mrb[0].mxu0 %v5093
        %v5242 = vpop.f32.mrb[0].mxu0
        %v5243 = vadd.f32 0.0, %v5242
        %v5244 = vpop.f32.mrb[0].mxu0
        %v5245 = vpop.f32.mrb[0].mxu0
        %v5246 = vadd.f32 0.0, %v5245
        %v5247 = vpop.f32.mrb[0].mxu0
        %5248 = vmatprep.mubr.bf16.mxu0 0
        %5249 = vmatmul.mubr.bf16.gmra.mrb[0].mxu0 %v5094
        %v5250 = vpop.f32.mrb[0].mxu0
        %v5251 = vadd.f32 0.0, %v5250
        %v5252 = vpop.f32.mrb[0].mxu0
        %v5253 = vpop.f32.mrb[0].mxu0
        %v5254 = vadd.f32 0.0, %v5253
        %v5255 = vpop.f32.mrb[0].mxu0
        %5256 = vmatprep.mubr.bf16.mxu0 0
        %5257 = vmatmul.mubr.bf16.gmra.mrb[0].mxu0 %v5095
        %v5258 = vpop.f32.mrb[0].mxu0
        %v5259 = vadd.f32 0.0, %v5258
        %v5260 = vpop.f32.mrb[0].mxu0
        %v5261 = vpop.f32.mrb[0].mxu0
        %v5262 = vadd.f32 0.0, %v5261
        %v5263 = vpop.f32.mrb[0].mxu0
        %5264 = vmatprep.mubr.bf16.mxu0 0
        %5265 = vmatmul.mubr.bf16.gmra.mrb[0].mxu0 %v5096
        %v5266 = vpop.f32.mrb[0].mxu0
        %v5267 = vadd.f32 0.0, %v5266
        %v5268 = vpop.f32.mrb[0].mxu0
        %v5269 = vpop.f32.mrb[0].mxu0
        %v5270 = vadd.f32 0.0, %v5269
        %v5271 = vpop.f32.mrb[0].mxu0
        %5272 = vmatprep.mubr.bf16.mxu0 0
        %5273 = vmatmul.mubr.bf16.gmra.mrb[0].mxu0 %v5097
        %v5274 = vpop.f32.mrb[0].mxu0
        %v5275 = vadd.f32 0.0, %v5274
        %v5276 = vpop.f32.mrb[0].mxu0
        %v5277 = vpop.f32.mrb[0].mxu0
        %v5278 = vadd.f32 0.0, %v5277
        %v5279 = vpop.f32.mrb[0].mxu0
        %5280 = vmatprep.mubr.bf16.mxu0 0
        %5281 = vmatmul.mubr.bf16.gmra.mrb[0].mxu0 %v5098
        %v5282 = vpop.f32.mrb[0].mxu0
        %v5283 = vadd.f32 0.0, %v5282
        %v5284 = vpop.f32.mrb[0].mxu0
        %v5285 = vpop.f32.mrb[0].mxu0
        %v5286 = vadd.f32 0.0, %v5285
        %v5287 = vpop.f32.mrb[0].mxu0
        %5288 = vmatprep.mubr.bf16.mxu0 0
        %5289 = vmatmul.mubr.bf16.gmra.mrb[0].mxu0 %v5099
        %v5290 = vpop.f32.mrb[0].mxu0
        %v5291 = vadd.f32 0.0, %v5290
        %v5292 = vpop.f32.mrb[0].mxu0
        %v5293 = vpop.f32.mrb[0].mxu0
        %v5294 = vadd.f32 0.0, %v5293
        %v5295 = vpop.f32.mrb[0].mxu0
        %5296 = vmatprep.mubr.bf16.mxu0 0
        %5297 = vmatmul.mubr.bf16.gmra.mrb[0].mxu0 %v5100
        %v5298 = vpop.f32.mrb[0].mxu0
        %v5299 = vadd.f32 0.0, %v5298
        %v5300 = vpop.f32.mrb[0].mxu0
        %v5301 = vpop.f32.mrb[0].mxu0
        %v5302 = vadd.f32 0.0, %v5301
        %v5303 = vpop.f32.mrb[0].mxu0
        %5304 = vmatprep.mubr.bf16.mxu0 0
        %5305 = vmatmul.mubr.bf16.gmra.mrb[0].mxu0 %v5101
        %v5306 = vpop.f32.mrb[0].mxu0
        %v5307 = vadd.f32 0.0, %v5306
        %v5308 = vpop.f32.mrb[0].mxu0
        %v5309 = vpop.f32.mrb[0].mxu0
        %v5310 = vadd.f32 0.0, %v5309
        %v5311 = vpop.f32.mrb[0].mxu0
        %5312 = vmatprep.mubr.bf16.mxu0 0
        %5313 = vmatmul.mubr.bf16.gmra.mrb[0].mxu0 %v5102
        %v5314 = vpop.f32.mrb[0].mxu0
        %v5315 = vadd.f32 0.0, %v5314
        %v5316 = vpop.f32.mrb[0].mxu0
        %v5317 = vpop.f32.mrb[0].mxu0
        %v5318 = vadd.f32 0.0, %v5317
        %v5319 = vpop.f32.mrb[0].mxu0
        %5320 = vmatprep.mubr.bf16.mxu0 0
        %5321 = vmatmul.mubr.bf16.gmra.mrb[0].mxu0 %v5103
        %v5322 = vpop.f32.mrb[0].mxu0
        %v5323 = vadd.f32 0.0, %v5322
        %v5324 = vpop.f32.mrb[0].mxu0
        %v5325 = vpop.f32.mrb[0].mxu0
        %v5326 = vadd.f32 0.0, %v5325
        %v5327 = vpop.f32.mrb[0].mxu0
        %5328 = vdwg.mxu0
        %v5329 = vadd.f32 %v4975, %v5203
        %v5330 = vadd.f32 %v4976, %v5206
        %v5331 = vadd.f32 %v4977, %v5211
        %v5332 = vadd.f32 %v4978, %v5214
        %v5333 = vadd.f32 %v4979, %v5219
        %v5334 = vadd.f32 %v4980, %v5222
        %v5335 = vadd.f32 %v4981, %v5227
        %v5336 = vadd.f32 %v4982, %v5230
        %v5337 = vadd.f32 %v4983, %v5235
        %v5338 = vadd.f32 %v4984, %v5238
        %v5339 = vadd.f32 %v4985, %v5243
        %v5340 = vadd.f32 %v4986, %v5246
        %v5341 = vadd.f32 %v4987, %v5251
        %v5342 = vadd.f32 %v4988, %v5254
        %v5343 = vadd.f32 %v4989, %v5259
        %v5344 = vadd.f32 %v4990, %v5262
        %v5345 = vadd.f32 %v4991, %v5267
        %v5346 = vadd.f32 %v4992, %v5270
        %v5347 = vadd.f32 %v4993, %v5275
        %v5348 = vadd.f32 %v4994, %v5278
        %v5349 = vadd.f32 %v4995, %v5283
        %v5350 = vadd.f32 %v4996, %v5286
        %v5351 = vadd.f32 %v4997, %v5291
        %v5352 = vadd.f32 %v4998, %v5294
        %v5353 = vadd.f32 %v4999, %v5299
        %v5354 = vadd.f32 %v5000, %v5302
        %v5355 = vadd.f32 %v5001, %v5307
        %v5356 = vadd.f32 %v5002, %v5310
        %v5357 = vadd.f32 %v5003, %v5315
        %v5358 = vadd.f32 %v5004, %v5318
        %v5359 = vadd.f32 %v5005, %v5323
        %v5360 = vadd.f32 %v5006, %v5326
        %5361 = vst [vmem:[#allocation3] sm:$0xff] %v5329
        %5362 = vst [vmem:[#allocation3 + $0x8] sm:$0xff] %v5330
        %5363 = vst [vmem:[#allocation3 + $0x10] sm:$0xff] %v5331
        %5364 = vst [vmem:[#allocation3 + $0x18] sm:$0xff] %v5332
        %5365 = vst [vmem:[#allocation3 + $0x20] sm:$0xff] %v5333
        %5366 = vst [vmem:[#allocation3 + $0x28] sm:$0xff] %v5334
        %5367 = vst [vmem:[#allocation3 + $0x30] sm:$0xff] %v5335
        %5368 = vst [vmem:[#allocation3 + $0x38] sm:$0xff] %v5336
        %5369 = vst [vmem:[#allocation3 + $0x40] sm:$0xff] %v5337
        %5370 = vst [vmem:[#allocation3 + $0x48] sm:$0xff] %v5338
        %5371 = vst [vmem:[#allocation3 + $0x50] sm:$0xff] %v5339
        %5372 = vst [vmem:[#allocation3 + $0x58] sm:$0xff] %v5340
        %5373 = vst [vmem:[#allocation3 + $0x60] sm:$0xff] %v5341
        %5374 = vst [vmem:[#allocation3 + $0x68] sm:$0xff] %v5342
        %5375 = vst [vmem:[#allocation3 + $0x70] sm:$0xff] %v5343
        %5376 = vst [vmem:[#allocation3 + $0x78] sm:$0xff] %v5344
        %5377 = vst [vmem:[#allocation3 + $0x80] sm:$0xff] %v5345
        %5378 = vst [vmem:[#allocation3 + $0x88] sm:$0xff] %v5346
        %5379 = vst [vmem:[#allocation3 + $0x90] sm:$0xff] %v5347
        %5380 = vst [vmem:[#allocation3 + $0x98] sm:$0xff] %v5348
        %5381 = vst [vmem:[#allocation3 + $0xa0] sm:$0xff] %v5349
        %5382 = vst [vmem:[#allocation3 + $0xa8] sm:$0xff] %v5350
        %5383 = vst [vmem:[#allocation3 + $0xb0] sm:$0xff] %v5351
        %5384 = vst [vmem:[#allocation3 + $0xb8] sm:$0xff] %v5352
        %5385 = vst [vmem:[#allocation3 + $0xc0] sm:$0xff] %v5353
        %5386 = vst [vmem:[#allocation3 + $0xc8] sm:$0xff] %v5354
        %5387 = vst [vmem:[#allocation3 + $0xd0] sm:$0xff] %v5355
        %5388 = vst [vmem:[#allocation3 + $0xd8] sm:$0xff] %v5356
        %5389 = vst [vmem:[#allocation3 + $0xe0] sm:$0xff] %v5357
        %5390 = vst [vmem:[#allocation3 + $0xe8] sm:$0xff] %v5358
        %5391 = vst [vmem:[#allocation3 + $0xf0] sm:$0xff] %v5359
        %5392 = vst [vmem:[#allocation3 + $0xf8] sm:$0xff] %v5360
        %v5393 = vld [vmem:[%s4942] sm:$0xf]
        %v5394 = vld [vmem:[%s4942 + $0x4] sm:$0xf]
        %v5395 = vld [vmem:[%s4942 + $0x8] sm:$0x1]
        %v5396 = vld [vmem:[%s4942 + $0xc] sm:$0xf]
        %v5397 = vld [vmem:[%s4942 + $0x10] sm:$0xf]
        %v5398 = vld [vmem:[%s4942 + $0x14] sm:$0x1]
        %v5399 = vld [vmem:[%s4942 + $0x18] sm:$0xf]
        %v5400 = vld [vmem:[%s4942 + $0x1c] sm:$0xf]
        %v5401 = vld [vmem:[%s4942 + $0x20] sm:$0x1]
        %v5402 = vld [vmem:[%s4942 + $0x24] sm:$0xf]
        %v5403 = vld [vmem:[%s4942 + $0x28] sm:$0xf]
        %v5404 = vld [vmem:[%s4942 + $0x2c] sm:$0x1]
        %v5405 = vld [vmem:[%s4942 + $0x30] sm:$0xf]
        %v5406 = vld [vmem:[%s4942 + $0x34] sm:$0xf]
        %v5407 = vld [vmem:[%s4942 + $0x38] sm:$0x1]
        %v5408 = vld [vmem:[%s4942 + $0x3c] sm:$0xf]
        %v5409 = vld [vmem:[%s4942 + $0x40] sm:$0xf]
        %v5410 = vld [vmem:[%s4942 + $0x44] sm:$0x1]
        %v5411 = vld [vmem:[%s4942 + $0x48] sm:$0xf]
        %v5412 = vld [vmem:[%s4942 + $0x4c] sm:$0xf]
        %v5413 = vld [vmem:[%s4942 + $0x50] sm:$0x1]
        %v5414 = vld [vmem:[%s4942 + $0x54] sm:$0xf]
        %v5415 = vld [vmem:[%s4942 + $0x58] sm:$0xf]
        %v5416 = vld [vmem:[%s4942 + $0x5c] sm:$0x1]
        %v5417 = vld [vmem:[%s4942 + $0x60] sm:$0xf]
        %v5418 = vld [vmem:[%s4942 + $0x64] sm:$0xf]
        %v5419 = vld [vmem:[%s4942 + $0x68] sm:$0x1]
        %v5420 = vld [vmem:[%s4942 + $0x6c] sm:$0xf]
        %v5421 = vld [vmem:[%s4942 + $0x70] sm:$0xf]
        %v5422 = vld [vmem:[%s4942 + $0x74] sm:$0x1]
        %v5423 = vld [vmem:[%s4942 + $0x78] sm:$0xf]
        %v5424 = vld [vmem:[%s4942 + $0x7c] sm:$0xf]
        %v5425 = vld [vmem:[%s4942 + $0x80] sm:$0x1]
        %v5426 = vld [vmem:[%s4942 + $0x84] sm:$0xf]
        %v5427 = vld [vmem:[%s4942 + $0x88] sm:$0xf]
        %v5428 = vld [vmem:[%s4942 + $0x8c] sm:$0x1]
        %v5429 = vld [vmem:[%s4942 + $0x90] sm:$0xf]
        %v5430 = vld [vmem:[%s4942 + $0x94] sm:$0xf]
        %v5431 = vld [vmem:[%s4942 + $0x98] sm:$0x1]
        %v5432 = vld [vmem:[%s4942 + $0x9c] sm:$0xf]
        %v5433 = vld [vmem:[%s4942 + $0xa0] sm:$0xf]
        %v5434 = vld [vmem:[%s4942 + $0xa4] sm:$0x1]
        %v5435 = vld [vmem:[%s4942 + $0xa8] sm:$0xf]
        %v5436 = vld [vmem:[%s4942 + $0xac] sm:$0xf]
        %v5437 = vld [vmem:[%s4942 + $0xb0] sm:$0x1]
        %v5438 = vld [vmem:[%s4942 + $0xb4] sm:$0xf]
        %v5439 = vld [vmem:[%s4942 + $0xb8] sm:$0xf]
        %v5440 = vld [vmem:[%s4942 + $0xbc] sm:$0x1]
        %v5442 = vshrl.u32 %v5393, 16
        %v5444 = vrot.slane %v5442, 4
        %v5445 = vshll.u32 %v5393, 16
        %v5447 = vrot.slane %v5445, 5
        %v5448 = vor.u32 %v5444, %v5447
        %v5449 = vrot.slane %v5448, 4
        %v5451 = vshll.u32 %v5394, 16
        %v5453 = vrot.slane %v5451, 5
        %v5454 = vsel %vm1712, %v5449, %v5453
        %v5455 = vshrl.u32 %v5394, 16
        %v5457 = vrot.slane %v5455, 4
        %v5458 = vor.u32 %v5457, %v5453
        %v5459 = vrot.slane %v5458, 4
        %v5461 = vshll.u32 %v5395, 16
        %v5463 = vrot.slane %v5461, 5
        %v5464 = vsel %vm1712, %v5459, %v5463
        %v5466 = vshrl.u32 %v5396, 16
        %v5468 = vrot.slane %v5466, 4
        %v5469 = vshll.u32 %v5396, 16
        %v5471 = vrot.slane %v5469, 5
        %v5472 = vor.u32 %v5468, %v5471
        %v5473 = vrot.slane %v5472, 4
        %v5475 = vshll.u32 %v5397, 16
        %v5477 = vrot.slane %v5475, 5
        %v5478 = vsel %vm1712, %v5473, %v5477
        %v5479 = vshrl.u32 %v5397, 16
        %v5481 = vrot.slane %v5479, 4
        %v5482 = vor.u32 %v5481, %v5477
        %v5483 = vrot.slane %v5482, 4
        %v5485 = vshll.u32 %v5398, 16
        %v5487 = vrot.slane %v5485, 5
        %v5488 = vsel %vm1712, %v5483, %v5487
        %v5490 = vshrl.u32 %v5399, 16
        %v5492 = vrot.slane %v5490, 4
        %v5493 = vshll.u32 %v5399, 16
        %v5495 = vrot.slane %v5493, 5
        %v5496 = vor.u32 %v5492, %v5495
        %v5497 = vrot.slane %v5496, 4
        %v5499 = vshll.u32 %v5400, 16
        %v5501 = vrot.slane %v5499, 5
        %v5502 = vsel %vm1712, %v5497, %v5501
        %v5503 = vshrl.u32 %v5400, 16
        %v5505 = vrot.slane %v5503, 4
        %v5506 = vor.u32 %v5505, %v5501
        %v5507 = vrot.slane %v5506, 4
        %v5509 = vshll.u32 %v5401, 16
        %v5511 = vrot.slane %v5509, 5
        %v5512 = vsel %vm1712, %v5507, %v5511
        %v5514 = vshrl.u32 %v5402, 16
        %v5516 = vrot.slane %v5514, 4
        %v5517 = vshll.u32 %v5402, 16
        %v5519 = vrot.slane %v5517, 5
        %v5520 = vor.u32 %v5516, %v5519
        %v5521 = vrot.slane %v5520, 4
        %v5523 = vshll.u32 %v5403, 16
        %v5525 = vrot.slane %v5523, 5
        %v5526 = vsel %vm1712, %v5521, %v5525
        %v5527 = vshrl.u32 %v5403, 16
        %v5529 = vrot.slane %v5527, 4
        %v5530 = vor.u32 %v5529, %v5525
        %v5531 = vrot.slane %v5530, 4
        %v5533 = vshll.u32 %v5404, 16
        %v5535 = vrot.slane %v5533, 5
        %v5536 = vsel %vm1712, %v5531, %v5535
        %v5538 = vshrl.u32 %v5405, 16
        %v5540 = vrot.slane %v5538, 4
        %v5541 = vshll.u32 %v5405, 16
        %v5543 = vrot.slane %v5541, 5
        %v5544 = vor.u32 %v5540, %v5543
        %v5545 = vrot.slane %v5544, 4
        %v5547 = vshll.u32 %v5406, 16
        %v5549 = vrot.slane %v5547, 5
        %v5550 = vsel %vm1712, %v5545, %v5549
        %v5551 = vshrl.u32 %v5406, 16
        %v5553 = vrot.slane %v5551, 4
        %v5554 = vor.u32 %v5553, %v5549
        %v5555 = vrot.slane %v5554, 4
        %v5557 = vshll.u32 %v5407, 16
        %v5559 = vrot.slane %v5557, 5
        %v5560 = vsel %vm1712, %v5555, %v5559
        %v5562 = vshrl.u32 %v5408, 16
        %v5564 = vrot.slane %v5562, 4
        %v5565 = vshll.u32 %v5408, 16
        %v5567 = vrot.slane %v5565, 5
        %v5568 = vor.u32 %v5564, %v5567
        %v5569 = vrot.slane %v5568, 4
        %v5571 = vshll.u32 %v5409, 16
        %v5573 = vrot.slane %v5571, 5
        %v5574 = vsel %vm1712, %v5569, %v5573
        %v5575 = vshrl.u32 %v5409, 16
        %v5577 = vrot.slane %v5575, 4
        %v5578 = vor.u32 %v5577, %v5573
        %v5579 = vrot.slane %v5578, 4
        %v5581 = vshll.u32 %v5410, 16
        %v5583 = vrot.slane %v5581, 5
        %v5584 = vsel %vm1712, %v5579, %v5583
        %v5586 = vshrl.u32 %v5411, 16
        %v5588 = vrot.slane %v5586, 4
        %v5589 = vshll.u32 %v5411, 16
        %v5591 = vrot.slane %v5589, 5
        %v5592 = vor.u32 %v5588, %v5591
        %v5593 = vrot.slane %v5592, 4
        %v5595 = vshll.u32 %v5412, 16
        %v5597 = vrot.slane %v5595, 5
        %v5598 = vsel %vm1712, %v5593, %v5597
        %v5599 = vshrl.u32 %v5412, 16
        %v5601 = vrot.slane %v5599, 4
        %v5602 = vor.u32 %v5601, %v5597
        %v5603 = vrot.slane %v5602, 4
        %v5605 = vshll.u32 %v5413, 16
        %v5607 = vrot.slane %v5605, 5
        %v5608 = vsel %vm1712, %v5603, %v5607
        %v5610 = vshrl.u32 %v5414, 16
        %v5612 = vrot.slane %v5610, 4
        %v5613 = vshll.u32 %v5414, 16
        %v5615 = vrot.slane %v5613, 5
        %v5616 = vor.u32 %v5612, %v5615
        %v5617 = vrot.slane %v5616, 4
        %v5619 = vshll.u32 %v5415, 16
        %v5621 = vrot.slane %v5619, 5
        %v5622 = vsel %vm1712, %v5617, %v5621
        %v5623 = vshrl.u32 %v5415, 16
        %v5625 = vrot.slane %v5623, 4
        %v5626 = vor.u32 %v5625, %v5621
        %v5627 = vrot.slane %v5626, 4
        %v5629 = vshll.u32 %v5416, 16
        %v5631 = vrot.slane %v5629, 5
        %v5632 = vsel %vm1712, %v5627, %v5631
        %v5634 = vshrl.u32 %v5417, 16
        %v5636 = vrot.slane %v5634, 4
        %v5637 = vshll.u32 %v5417, 16
        %v5639 = vrot.slane %v5637, 5
        %v5640 = vor.u32 %v5636, %v5639
        %v5641 = vrot.slane %v5640, 4
        %v5643 = vshll.u32 %v5418, 16
        %v5645 = vrot.slane %v5643, 5
        %v5646 = vsel %vm1712, %v5641, %v5645
        %v5647 = vshrl.u32 %v5418, 16
        %v5649 = vrot.slane %v5647, 4
        %v5650 = vor.u32 %v5649, %v5645
        %v5651 = vrot.slane %v5650, 4
        %v5653 = vshll.u32 %v5419, 16
        %v5655 = vrot.slane %v5653, 5
        %v5656 = vsel %vm1712, %v5651, %v5655
        %v5658 = vshrl.u32 %v5420, 16
        %v5660 = vrot.slane %v5658, 4
        %v5661 = vshll.u32 %v5420, 16
        %v5663 = vrot.slane %v5661, 5
        %v5664 = vor.u32 %v5660, %v5663
        %v5665 = vrot.slane %v5664, 4
        %v5667 = vshll.u32 %v5421, 16
        %v5669 = vrot.slane %v5667, 5
        %v5670 = vsel %vm1712, %v5665, %v5669
        %v5671 = vshrl.u32 %v5421, 16
        %v5673 = vrot.slane %v5671, 4
        %v5674 = vor.u32 %v5673, %v5669
        %v5675 = vrot.slane %v5674, 4
        %v5677 = vshll.u32 %v5422, 16
        %v5679 = vrot.slane %v5677, 5
        %v5680 = vsel %vm1712, %v5675, %v5679
        %v5682 = vshrl.u32 %v5423, 16
        %v5684 = vrot.slane %v5682, 4
        %v5685 = vshll.u32 %v5423, 16
        %v5687 = vrot.slane %v5685, 5
        %v5688 = vor.u32 %v5684, %v5687
        %v5689 = vrot.slane %v5688, 4
        %v5691 = vshll.u32 %v5424, 16
        %v5693 = vrot.slane %v5691, 5
        %v5694 = vsel %vm1712, %v5689, %v5693
        %v5695 = vshrl.u32 %v5424, 16
        %v5697 = vrot.slane %v5695, 4
        %v5698 = vor.u32 %v5697, %v5693
        %v5699 = vrot.slane %v5698, 4
        %v5701 = vshll.u32 %v5425, 16
        %v5703 = vrot.slane %v5701, 5
        %v5704 = vsel %vm1712, %v5699, %v5703
        %v5706 = vshrl.u32 %v5426, 16
        %v5708 = vrot.slane %v5706, 4
        %v5709 = vshll.u32 %v5426, 16
        %v5711 = vrot.slane %v5709, 5
        %v5712 = vor.u32 %v5708, %v5711
        %v5713 = vrot.slane %v5712, 4
        %v5715 = vshll.u32 %v5427, 16
        %v5717 = vrot.slane %v5715, 5
        %v5718 = vsel %vm1712, %v5713, %v5717
        %v5719 = vshrl.u32 %v5427, 16
        %v5721 = vrot.slane %v5719, 4
        %v5722 = vor.u32 %v5721, %v5717
        %v5723 = vrot.slane %v5722, 4
        %v5725 = vshll.u32 %v5428, 16
        %v5727 = vrot.slane %v5725, 5
        %v5728 = vsel %vm1712, %v5723, %v5727
        %v5730 = vshrl.u32 %v5429, 16
        %v5732 = vrot.slane %v5730, 4
        %v5733 = vshll.u32 %v5429, 16
        %v5735 = vrot.slane %v5733, 5
        %v5736 = vor.u32 %v5732, %v5735
        %v5737 = vrot.slane %v5736, 4
        %v5739 = vshll.u32 %v5430, 16
        %v5741 = vrot.slane %v5739, 5
        %v5742 = vsel %vm1712, %v5737, %v5741
        %v5743 = vshrl.u32 %v5430, 16
        %v5745 = vrot.slane %v5743, 4
        %v5746 = vor.u32 %v5745, %v5741
        %v5747 = vrot.slane %v5746, 4
        %v5749 = vshll.u32 %v5431, 16
        %v5751 = vrot.slane %v5749, 5
        %v5752 = vsel %vm1712, %v5747, %v5751
        %v5754 = vshrl.u32 %v5432, 16
        %v5756 = vrot.slane %v5754, 4
        %v5757 = vshll.u32 %v5432, 16
        %v5759 = vrot.slane %v5757, 5
        %v5760 = vor.u32 %v5756, %v5759
        %v5761 = vrot.slane %v5760, 4
        %v5763 = vshll.u32 %v5433, 16
        %v5765 = vrot.slane %v5763, 5
        %v5766 = vsel %vm1712, %v5761, %v5765
        %v5767 = vshrl.u32 %v5433, 16
        %v5769 = vrot.slane %v5767, 4
        %v5770 = vor.u32 %v5769, %v5765
        %v5771 = vrot.slane %v5770, 4
        %v5773 = vshll.u32 %v5434, 16
        %v5775 = vrot.slane %v5773, 5
        %v5776 = vsel %vm1712, %v5771, %v5775
        %v5778 = vshrl.u32 %v5435, 16
        %v5780 = vrot.slane %v5778, 4
        %v5781 = vshll.u32 %v5435, 16
        %v5783 = vrot.slane %v5781, 5
        %v5784 = vor.u32 %v5780, %v5783
        %v5785 = vrot.slane %v5784, 4
        %v5787 = vshll.u32 %v5436, 16
        %v5789 = vrot.slane %v5787, 5
        %v5790 = vsel %vm1712, %v5785, %v5789
        %v5791 = vshrl.u32 %v5436, 16
        %v5793 = vrot.slane %v5791, 4
        %v5794 = vor.u32 %v5793, %v5789
        %v5795 = vrot.slane %v5794, 4
        %v5797 = vshll.u32 %v5437, 16
        %v5799 = vrot.slane %v5797, 5
        %v5800 = vsel %vm1712, %v5795, %v5799
        %v5802 = vshrl.u32 %v5438, 16
        %v5804 = vrot.slane %v5802, 4
        %v5805 = vshll.u32 %v5438, 16
        %v5807 = vrot.slane %v5805, 5
        %v5808 = vor.u32 %v5804, %v5807
        %v5809 = vrot.slane %v5808, 4
        %v5811 = vshll.u32 %v5439, 16
        %v5813 = vrot.slane %v5811, 5
        %v5814 = vsel %vm1712, %v5809, %v5813
        %v5815 = vshrl.u32 %v5439, 16
        %v5817 = vrot.slane %v5815, 4
        %v5818 = vor.u32 %v5817, %v5813
        %v5819 = vrot.slane %v5818, 4
        %v5821 = vshll.u32 %v5440, 16
        %v5823 = vrot.slane %v5821, 5
        %v5824 = vsel %vm1712, %v5819, %v5823
        %v5825 = vld [vmem:[#allocation3] sm:$0xff]
        %v5826 = vld [vmem:[#allocation3 + $0x8] sm:$0xff]
        %v5827 = vld [vmem:[#allocation3 + $0x10] sm:$0xff]
        %v5828 = vld [vmem:[#allocation3 + $0x18] sm:$0xff]
        %v5829 = vld [vmem:[#allocation3 + $0x20] sm:$0xff]
        %v5830 = vld [vmem:[#allocation3 + $0x28] sm:$0xff]
        %v5831 = vld [vmem:[#allocation3 + $0x30] sm:$0xff]
        %v5832 = vld [vmem:[#allocation3 + $0x38] sm:$0xff]
        %v5833 = vld [vmem:[#allocation3 + $0x40] sm:$0xff]
        %v5834 = vld [vmem:[#allocation3 + $0x48] sm:$0xff]
        %v5835 = vld [vmem:[#allocation3 + $0x50] sm:$0xff]
        %v5836 = vld [vmem:[#allocation3 + $0x58] sm:$0xff]
        %v5837 = vld [vmem:[#allocation3 + $0x60] sm:$0xff]
        %v5838 = vld [vmem:[#allocation3 + $0x68] sm:$0xff]
        %v5839 = vld [vmem:[#allocation3 + $0x70] sm:$0xff]
        %v5840 = vld [vmem:[#allocation3 + $0x78] sm:$0xff]
        %v5841 = vld [vmem:[#allocation3 + $0x80] sm:$0xff]
        %v5842 = vld [vmem:[#allocation3 + $0x88] sm:$0xff]
        %v5843 = vld [vmem:[#allocation3 + $0x90] sm:$0xff]
        %v5844 = vld [vmem:[#allocation3 + $0x98] sm:$0xff]
        %v5845 = vld [vmem:[#allocation3 + $0xa0] sm:$0xff]
        %v5846 = vld [vmem:[#allocation3 + $0xa8] sm:$0xff]
        %v5847 = vld [vmem:[#allocation3 + $0xb0] sm:$0xff]
        %v5848 = vld [vmem:[#allocation3 + $0xb8] sm:$0xff]
        %v5849 = vld [vmem:[#allocation3 + $0xc0] sm:$0xff]
        %v5850 = vld [vmem:[#allocation3 + $0xc8] sm:$0xff]
        %v5851 = vld [vmem:[#allocation3 + $0xd0] sm:$0xff]
        %v5852 = vld [vmem:[#allocation3 + $0xd8] sm:$0xff]
        %v5853 = vld [vmem:[#allocation3 + $0xe0] sm:$0xff]
        %v5854 = vld [vmem:[#allocation3 + $0xe8] sm:$0xff]
        %v5855 = vld [vmem:[#allocation3 + $0xf0] sm:$0xff]
        %v5856 = vld [vmem:[#allocation3 + $0xf8] sm:$0xff]
        %s5857 = scalar_lea.vmem %s3, 448
        %v5858 = vld [vmem:[%s5857] sm:$0xf]
        %v5859 = vld [vmem:[%s5857 + $0x4] sm:$0xf]
        %v5860 = vld [vmem:[%s5857 + $0x8] sm:$0xf]
        %v5861 = vld [vmem:[%s5857 + $0xc] sm:$0xf]
        %v5862 = vld [vmem:[%s5857 + $0x10] sm:$0xf]
        %v5863 = vld [vmem:[%s5857 + $0x14] sm:$0xf]
        %v5864 = vld [vmem:[%s5857 + $0x18] sm:$0xf]
        %v5865 = vld [vmem:[%s5857 + $0x1c] sm:$0xf]
        %v5866 = vld [vmem:[%s5857 + $0x20] sm:$0xf]
        %v5867 = vld [vmem:[%s5857 + $0x24] sm:$0xf]
        %v5868 = vld [vmem:[%s5857 + $0x28] sm:$0xf]
        %v5869 = vld [vmem:[%s5857 + $0x2c] sm:$0xf]
        %v5870 = vld [vmem:[%s5857 + $0x30] sm:$0xf]
        %v5871 = vld [vmem:[%s5857 + $0x34] sm:$0xf]
        %v5872 = vld [vmem:[%s5857 + $0x38] sm:$0xf]
        %v5873 = vld [vmem:[%s5857 + $0x3c] sm:$0xf]
        %v5874 = vunpack.c.l.b16 %v5454
        %v5875 = vunpack.c.l.b16 %v5464
        %v5876 = vunpack.c.l.b16 %v5478
        %v5877 = vunpack.c.l.b16 %v5488
        %v5878 = vunpack.c.l.b16 %v5502
        %v5879 = vunpack.c.l.b16 %v5512
        %v5880 = vunpack.c.l.b16 %v5526
        %v5881 = vunpack.c.l.b16 %v5536
        %v5882 = vunpack.c.l.b16 %v5550
        %v5883 = vunpack.c.l.b16 %v5560
        %v5884 = vunpack.c.l.b16 %v5574
        %v5885 = vunpack.c.l.b16 %v5584
        %v5886 = vunpack.c.l.b16 %v5598
        %v5887 = vunpack.c.l.b16 %v5608
        %v5888 = vunpack.c.l.b16 %v5622
        %v5889 = vunpack.c.l.b16 %v5632
        %v5890 = vunpack.c.l.b16 %v5646
        %v5891 = vunpack.c.l.b16 %v5656
        %v5892 = vunpack.c.l.b16 %v5670
        %v5893 = vunpack.c.l.b16 %v5680
        %v5894 = vunpack.c.l.b16 %v5694
        %v5895 = vunpack.c.l.b16 %v5704
        %v5896 = vunpack.c.l.b16 %v5718
        %v5897 = vunpack.c.l.b16 %v5728
        %v5898 = vunpack.c.l.b16 %v5742
        %v5899 = vunpack.c.l.b16 %v5752
        %v5900 = vunpack.c.l.b16 %v5766
        %v5901 = vunpack.c.l.b16 %v5776
        %v5902 = vunpack.c.l.b16 %v5790
        %v5903 = vunpack.c.l.b16 %v5800
        %v5904 = vunpack.c.l.b16 %v5814
        %v5905 = vunpack.c.l.b16 %v5824
        %v5906 = vpack.c.b16 %v5875, %v5874
        %v5907 = vpack.c.b16 %v5877, %v5876
        %v5908 = vpack.c.b16 %v5879, %v5878
        %v5909 = vpack.c.b16 %v5881, %v5880
        %v5910 = vpack.c.b16 %v5883, %v5882
        %v5911 = vpack.c.b16 %v5885, %v5884
        %v5912 = vpack.c.b16 %v5887, %v5886
        %v5913 = vpack.c.b16 %v5889, %v5888
        %v5914 = vpack.c.b16 %v5891, %v5890
        %v5915 = vpack.c.b16 %v5893, %v5892
        %v5916 = vpack.c.b16 %v5895, %v5894
        %v5917 = vpack.c.b16 %v5897, %v5896
        %v5918 = vpack.c.b16 %v5899, %v5898
        %v5919 = vpack.c.b16 %v5901, %v5900
        %v5920 = vpack.c.b16 %v5903, %v5902
        %v5921 = vpack.c.b16 %v5905, %v5904
        %v5954 = vunpack.c.l.b16 %v5858
        %v5955 = vunpack.c.l.b16 %v5859
        %v5956 = vunpack.c.l.b16 %v5860
        %v5957 = vunpack.c.l.b16 %v5861
        %v5958 = vunpack.c.l.b16 %v5862
        %v5959 = vunpack.c.l.b16 %v5863
        %v5960 = vunpack.c.l.b16 %v5864
        %v5961 = vunpack.c.l.b16 %v5865
        %v5962 = vunpack.c.l.b16 %v5866
        %v5963 = vunpack.c.l.b16 %v5867
        %v5964 = vunpack.c.l.b16 %v5868
        %v5965 = vunpack.c.l.b16 %v5869
        %v5966 = vunpack.c.l.b16 %v5870
        %v5967 = vunpack.c.l.b16 %v5871
        %v5968 = vunpack.c.l.b16 %v5872
        %v5969 = vunpack.c.l.b16 %v5873
        %v5970 = vpack.c.b16 %v5955, %v5954
        %v5971 = vpack.c.b16 %v5957, %v5956
        %v5972 = vpack.c.b16 %v5959, %v5958
        %v5973 = vpack.c.b16 %v5961, %v5960
        %v5974 = vpack.c.b16 %v5963, %v5962
        %v5975 = vpack.c.b16 %v5965, %v5964
        %v5976 = vpack.c.b16 %v5967, %v5966
        %v5977 = vpack.c.b16 %v5969, %v5968
        %5986 = vmatprep.subr.bf16.mxu0 0
        %5987 = vmatpush1.bf16.msra.mxu0 %v5970
        %5988 = vmatprep.subr.bf16.mxu0 0
        %5989 = vmatpush1.bf16.msra.mxu0 %v5971
        %5990 = vmatprep.subr.bf16.mxu0 0
        %5991 = vmatpush1.bf16.msra.mxu0 %v5972
        %5992 = vmatprep.subr.bf16.mxu0 0
        %5993 = vmatpush1.bf16.msra.mxu0 %v5973
        %5994 = vmatprep.subr.bf16.mxu0 0
        %5995 = vmatpush1.bf16.msra.mxu0 %v5974
        %5996 = vmatprep.subr.bf16.mxu0 0
        %5997 = vmatpush1.bf16.msra.mxu0 %v5975
        %5998 = vmatprep.subr.bf16.mxu0 0
        %5999 = vmatpush1.bf16.msra.mxu0 %v5976
        %6000 = vmatprep.subr.bf16.mxu0 0
        %6001 = vmatpush1.bf16.msra.mxu0 %v5977
        %6002 = vmatprep.subr.bf16.mxu0 0
        %6003 = vmatpush1.bf16.msra.mxu0 0
        %6004 = vmatprep.subr.bf16.mxu0 0
        %6005 = vmatpush1.bf16.msra.mxu0 0
        %6006 = vmatprep.subr.bf16.mxu0 0
        %6007 = vmatpush1.bf16.msra.mxu0 0
        %6008 = vmatprep.subr.bf16.mxu0 0
        %6009 = vmatpush1.bf16.msra.mxu0 0
        %6010 = vmatprep.subr.bf16.mxu0 0
        %6011 = vmatpush1.bf16.msra.mxu0 0
        %6012 = vmatprep.subr.bf16.mxu0 0
        %6013 = vmatpush1.bf16.msra.mxu0 0
        %6014 = vmatprep.subr.bf16.mxu0 0
        %6015 = vmatpush1.bf16.msra.mxu0 0
        %6016 = vmatprep.subr.bf16.mxu0 0
        %6017 = vmatpush1.bf16.msra.mxu0 0
        %6018 = vmatprep.mubr.bf16.mxu0 0
        %6019 = vmatmul.mubr.bf16.gmra.mrb[0].mxu0 %v5906
        %v6020 = vpop.f32.mrb[0].mxu0
        %v6021 = vadd.f32 0.0, %v6020
        %v6022 = vpop.f32.mrb[0].mxu0
        %v6023 = vpop.f32.mrb[0].mxu0
        %v6024 = vadd.f32 0.0, %v6023
        %v6025 = vpop.f32.mrb[0].mxu0
        %6026 = vmatprep.mubr.bf16.mxu0 0
        %6027 = vmatmul.mubr.bf16.gmra.mrb[0].mxu0 %v5907
        %v6028 = vpop.f32.mrb[0].mxu0
        %v6029 = vadd.f32 0.0, %v6028
        %v6030 = vpop.f32.mrb[0].mxu0
        %v6031 = vpop.f32.mrb[0].mxu0
        %v6032 = vadd.f32 0.0, %v6031
        %v6033 = vpop.f32.mrb[0].mxu0
        %6034 = vmatprep.mubr.bf16.mxu0 0
        %6035 = vmatmul.mubr.bf16.gmra.mrb[0].mxu0 %v5908
        %v6036 = vpop.f32.mrb[0].mxu0
        %v6037 = vadd.f32 0.0, %v6036
        %v6038 = vpop.f32.mrb[0].mxu0
        %v6039 = vpop.f32.mrb[0].mxu0
        %v6040 = vadd.f32 0.0, %v6039
        %v6041 = vpop.f32.mrb[0].mxu0
        %6042 = vmatprep.mubr.bf16.mxu0 0
        %6043 = vmatmul.mubr.bf16.gmra.mrb[0].mxu0 %v5909
        %v6044 = vpop.f32.mrb[0].mxu0
        %v6045 = vadd.f32 0.0, %v6044
        %v6046 = vpop.f32.mrb[0].mxu0
        %v6047 = vpop.f32.mrb[0].mxu0
        %v6048 = vadd.f32 0.0, %v6047
        %v6049 = vpop.f32.mrb[0].mxu0
        %6050 = vmatprep.mubr.bf16.mxu0 0
        %6051 = vmatmul.mubr.bf16.gmra.mrb[0].mxu0 %v5910
        %v6052 = vpop.f32.mrb[0].mxu0
        %v6053 = vadd.f32 0.0, %v6052
        %v6054 = vpop.f32.mrb[0].mxu0
        %v6055 = vpop.f32.mrb[0].mxu0
        %v6056 = vadd.f32 0.0, %v6055
        %v6057 = vpop.f32.mrb[0].mxu0
        %6058 = vmatprep.mubr.bf16.mxu0 0
        %6059 = vmatmul.mubr.bf16.gmra.mrb[0].mxu0 %v5911
        %v6060 = vpop.f32.mrb[0].mxu0
        %v6061 = vadd.f32 0.0, %v6060
        %v6062 = vpop.f32.mrb[0].mxu0
        %v6063 = vpop.f32.mrb[0].mxu0
        %v6064 = vadd.f32 0.0, %v6063
        %v6065 = vpop.f32.mrb[0].mxu0
        %6066 = vmatprep.mubr.bf16.mxu0 0
        %6067 = vmatmul.mubr.bf16.gmra.mrb[0].mxu0 %v5912
        %v6068 = vpop.f32.mrb[0].mxu0
        %v6069 = vadd.f32 0.0, %v6068
        %v6070 = vpop.f32.mrb[0].mxu0
        %v6071 = vpop.f32.mrb[0].mxu0
        %v6072 = vadd.f32 0.0, %v6071
        %v6073 = vpop.f32.mrb[0].mxu0
        %6074 = vmatprep.mubr.bf16.mxu0 0
        %6075 = vmatmul.mubr.bf16.gmra.mrb[0].mxu0 %v5913
        %v6076 = vpop.f32.mrb[0].mxu0
        %v6077 = vadd.f32 0.0, %v6076
        %v6078 = vpop.f32.mrb[0].mxu0
        %v6079 = vpop.f32.mrb[0].mxu0
        %v6080 = vadd.f32 0.0, %v6079
        %v6081 = vpop.f32.mrb[0].mxu0
        %6082 = vmatprep.mubr.bf16.mxu0 0
        %6083 = vmatmul.mubr.bf16.gmra.mrb[0].mxu0 %v5914
        %v6084 = vpop.f32.mrb[0].mxu0
        %v6085 = vadd.f32 0.0, %v6084
        %v6086 = vpop.f32.mrb[0].mxu0
        %v6087 = vpop.f32.mrb[0].mxu0
        %v6088 = vadd.f32 0.0, %v6087
        %v6089 = vpop.f32.mrb[0].mxu0
        %6090 = vmatprep.mubr.bf16.mxu0 0
        %6091 = vmatmul.mubr.bf16.gmra.mrb[0].mxu0 %v5915
        %v6092 = vpop.f32.mrb[0].mxu0
        %v6093 = vadd.f32 0.0, %v6092
        %v6094 = vpop.f32.mrb[0].mxu0
        %v6095 = vpop.f32.mrb[0].mxu0
        %v6096 = vadd.f32 0.0, %v6095
        %v6097 = vpop.f32.mrb[0].mxu0
        %6098 = vmatprep.mubr.bf16.mxu0 0
        %6099 = vmatmul.mubr.bf16.gmra.mrb[0].mxu0 %v5916
        %v6100 = vpop.f32.mrb[0].mxu0
        %v6101 = vadd.f32 0.0, %v6100
        %v6102 = vpop.f32.mrb[0].mxu0
        %v6103 = vpop.f32.mrb[0].mxu0
        %v6104 = vadd.f32 0.0, %v6103
        %v6105 = vpop.f32.mrb[0].mxu0
        %6106 = vmatprep.mubr.bf16.mxu0 0
        %6107 = vmatmul.mubr.bf16.gmra.mrb[0].mxu0 %v5917
        %v6108 = vpop.f32.mrb[0].mxu0
        %v6109 = vadd.f32 0.0, %v6108
        %v6110 = vpop.f32.mrb[0].mxu0
        %v6111 = vpop.f32.mrb[0].mxu0
        %v6112 = vadd.f32 0.0, %v6111
        %v6113 = vpop.f32.mrb[0].mxu0
        %6114 = vmatprep.mubr.bf16.mxu0 0
        %6115 = vmatmul.mubr.bf16.gmra.mrb[0].mxu0 %v5918
        %v6116 = vpop.f32.mrb[0].mxu0
        %v6117 = vadd.f32 0.0, %v6116
        %v6118 = vpop.f32.mrb[0].mxu0
        %v6119 = vpop.f32.mrb[0].mxu0
        %v6120 = vadd.f32 0.0, %v6119
        %v6121 = vpop.f32.mrb[0].mxu0
        %6122 = vmatprep.mubr.bf16.mxu0 0
        %6123 = vmatmul.mubr.bf16.gmra.mrb[0].mxu0 %v5919
        %v6124 = vpop.f32.mrb[0].mxu0
        %v6125 = vadd.f32 0.0, %v6124
        %v6126 = vpop.f32.mrb[0].mxu0
        %v6127 = vpop.f32.mrb[0].mxu0
        %v6128 = vadd.f32 0.0, %v6127
        %v6129 = vpop.f32.mrb[0].mxu0
        %6130 = vmatprep.mubr.bf16.mxu0 0
        %6131 = vmatmul.mubr.bf16.gmra.mrb[0].mxu0 %v5920
        %v6132 = vpop.f32.mrb[0].mxu0
        %v6133 = vadd.f32 0.0, %v6132
        %v6134 = vpop.f32.mrb[0].mxu0
        %v6135 = vpop.f32.mrb[0].mxu0
        %v6136 = vadd.f32 0.0, %v6135
        %v6137 = vpop.f32.mrb[0].mxu0
        %6138 = vmatprep.mubr.bf16.mxu0 0
        %6139 = vmatmul.mubr.bf16.gmra.mrb[0].mxu0 %v5921
        %v6140 = vpop.f32.mrb[0].mxu0
        %v6141 = vadd.f32 0.0, %v6140
        %v6142 = vpop.f32.mrb[0].mxu0
        %v6143 = vpop.f32.mrb[0].mxu0
        %v6144 = vadd.f32 0.0, %v6143
        %v6145 = vpop.f32.mrb[0].mxu0
        %6146 = vdwg.mxu0
        %v6147 = vadd.f32 %v5825, %v6021
        %v6148 = vadd.f32 %v5826, %v6024
        %v6149 = vadd.f32 %v5827, %v6029
        %v6150 = vadd.f32 %v5828, %v6032
        %v6151 = vadd.f32 %v5829, %v6037
        %v6152 = vadd.f32 %v5830, %v6040
        %v6153 = vadd.f32 %v5831, %v6045
        %v6154 = vadd.f32 %v5832, %v6048
        %v6155 = vadd.f32 %v5833, %v6053
        %v6156 = vadd.f32 %v5834, %v6056
        %v6157 = vadd.f32 %v5835, %v6061
        %v6158 = vadd.f32 %v5836, %v6064
        %v6159 = vadd.f32 %v5837, %v6069
        %v6160 = vadd.f32 %v5838, %v6072
        %v6161 = vadd.f32 %v5839, %v6077
        %v6162 = vadd.f32 %v5840, %v6080
        %v6163 = vadd.f32 %v5841, %v6085
        %v6164 = vadd.f32 %v5842, %v6088
        %v6165 = vadd.f32 %v5843, %v6093
        %v6166 = vadd.f32 %v5844, %v6096
        %v6167 = vadd.f32 %v5845, %v6101
        %v6168 = vadd.f32 %v5846, %v6104
        %v6169 = vadd.f32 %v5847, %v6109
        %v6170 = vadd.f32 %v5848, %v6112
        %v6171 = vadd.f32 %v5849, %v6117
        %v6172 = vadd.f32 %v5850, %v6120
        %v6173 = vadd.f32 %v5851, %v6125
        %v6174 = vadd.f32 %v5852, %v6128
        %v6175 = vadd.f32 %v5853, %v6133
        %v6176 = vadd.f32 %v5854, %v6136
        %v6177 = vadd.f32 %v5855, %v6141
        %v6178 = vadd.f32 %v5856, %v6144
        %6179 = vst [vmem:[#allocation3] sm:$0xff] %v6147
        %6180 = vst [vmem:[#allocation3 + $0x8] sm:$0xff] %v6148
        %6181 = vst [vmem:[#allocation3 + $0x10] sm:$0xff] %v6149
        %6182 = vst [vmem:[#allocation3 + $0x18] sm:$0xff] %v6150
        %6183 = vst [vmem:[#allocation3 + $0x20] sm:$0xff] %v6151
        %6184 = vst [vmem:[#allocation3 + $0x28] sm:$0xff] %v6152
        %6185 = vst [vmem:[#allocation3 + $0x30] sm:$0xff] %v6153
        %6186 = vst [vmem:[#allocation3 + $0x38] sm:$0xff] %v6154
        %6187 = vst [vmem:[#allocation3 + $0x40] sm:$0xff] %v6155
        %6188 = vst [vmem:[#allocation3 + $0x48] sm:$0xff] %v6156
        %6189 = vst [vmem:[#allocation3 + $0x50] sm:$0xff] %v6157
        %6190 = vst [vmem:[#allocation3 + $0x58] sm:$0xff] %v6158
        %6191 = vst [vmem:[#allocation3 + $0x60] sm:$0xff] %v6159
        %6192 = vst [vmem:[#allocation3 + $0x68] sm:$0xff] %v6160
        %6193 = vst [vmem:[#allocation3 + $0x70] sm:$0xff] %v6161
        %6194 = vst [vmem:[#allocation3 + $0x78] sm:$0xff] %v6162
        %6195 = vst [vmem:[#allocation3 + $0x80] sm:$0xff] %v6163
        %6196 = vst [vmem:[#allocation3 + $0x88] sm:$0xff] %v6164
        %6197 = vst [vmem:[#allocation3 + $0x90] sm:$0xff] %v6165
        %6198 = vst [vmem:[#allocation3 + $0x98] sm:$0xff] %v6166
        %6199 = vst [vmem:[#allocation3 + $0xa0] sm:$0xff] %v6167
        %6200 = vst [vmem:[#allocation3 + $0xa8] sm:$0xff] %v6168
        %6201 = vst [vmem:[#allocation3 + $0xb0] sm:$0xff] %v6169
        %6202 = vst [vmem:[#allocation3 + $0xb8] sm:$0xff] %v6170
        %6203 = vst [vmem:[#allocation3 + $0xc0] sm:$0xff] %v6171
        %6204 = vst [vmem:[#allocation3 + $0xc8] sm:$0xff] %v6172
        %6205 = vst [vmem:[#allocation3 + $0xd0] sm:$0xff] %v6173
        %6206 = vst [vmem:[#allocation3 + $0xd8] sm:$0xff] %v6174
        %6207 = vst [vmem:[#allocation3 + $0xe0] sm:$0xff] %v6175
        %6208 = vst [vmem:[#allocation3 + $0xe8] sm:$0xff] %v6176
        %6209 = vst [vmem:[#allocation3 + $0xf0] sm:$0xff] %v6177
        %6210 = vst [vmem:[#allocation3 + $0xf8] sm:$0xff] %v6178
        %v6211 = vld [vmem:[%s4942] sm:$0xe]
        %v6212 = vld [vmem:[%s4942 + $0x4] sm:$0xf]
        %v6213 = vld [vmem:[%s4942 + $0x8] sm:$0x1]
        %v6214 = vld [vmem:[%s4942 + $0xc] sm:$0xe]
        %v6215 = vld [vmem:[%s4942 + $0x10] sm:$0xf]
        %v6216 = vld [vmem:[%s4942 + $0x14] sm:$0x1]
        %v6217 = vld [vmem:[%s4942 + $0x18] sm:$0xe]
        %v6218 = vld [vmem:[%s4942 + $0x1c] sm:$0xf]
        %v6219 = vld [vmem:[%s4942 + $0x20] sm:$0x1]
        %v6220 = vld [vmem:[%s4942 + $0x24] sm:$0xe]
        %v6221 = vld [vmem:[%s4942 + $0x28] sm:$0xf]
        %v6222 = vld [vmem:[%s4942 + $0x2c] sm:$0x1]
        %v6223 = vld [vmem:[%s4942 + $0x30] sm:$0xe]
        %v6224 = vld [vmem:[%s4942 + $0x34] sm:$0xf]
        %v6225 = vld [vmem:[%s4942 + $0x38] sm:$0x1]
        %v6226 = vld [vmem:[%s4942 + $0x3c] sm:$0xe]
        %v6227 = vld [vmem:[%s4942 + $0x40] sm:$0xf]
        %v6228 = vld [vmem:[%s4942 + $0x44] sm:$0x1]
        %v6229 = vld [vmem:[%s4942 + $0x48] sm:$0xe]
        %v6230 = vld [vmem:[%s4942 + $0x4c] sm:$0xf]
        %v6231 = vld [vmem:[%s4942 + $0x50] sm:$0x1]
        %v6232 = vld [vmem:[%s4942 + $0x54] sm:$0xe]
        %v6233 = vld [vmem:[%s4942 + $0x58] sm:$0xf]
        %v6234 = vld [vmem:[%s4942 + $0x5c] sm:$0x1]
        %v6235 = vld [vmem:[%s4942 + $0x60] sm:$0xe]
        %v6236 = vld [vmem:[%s4942 + $0x64] sm:$0xf]
        %v6237 = vld [vmem:[%s4942 + $0x68] sm:$0x1]
        %v6238 = vld [vmem:[%s4942 + $0x6c] sm:$0xe]
        %v6239 = vld [vmem:[%s4942 + $0x70] sm:$0xf]
        %v6240 = vld [vmem:[%s4942 + $0x74] sm:$0x1]
        %v6241 = vld [vmem:[%s4942 + $0x78] sm:$0xe]
        %v6242 = vld [vmem:[%s4942 + $0x7c] sm:$0xf]
        %v6243 = vld [vmem:[%s4942 + $0x80] sm:$0x1]
        %v6244 = vld [vmem:[%s4942 + $0x84] sm:$0xe]
        %v6245 = vld [vmem:[%s4942 + $0x88] sm:$0xf]
        %v6246 = vld [vmem:[%s4942 + $0x8c] sm:$0x1]
        %v6247 = vld [vmem:[%s4942 + $0x90] sm:$0xe]
        %v6248 = vld [vmem:[%s4942 + $0x94] sm:$0xf]
        %v6249 = vld [vmem:[%s4942 + $0x98] sm:$0x1]
        %v6250 = vld [vmem:[%s4942 + $0x9c] sm:$0xe]
        %v6251 = vld [vmem:[%s4942 + $0xa0] sm:$0xf]
        %v6252 = vld [vmem:[%s4942 + $0xa4] sm:$0x1]
        %v6253 = vld [vmem:[%s4942 + $0xa8] sm:$0xe]
        %v6254 = vld [vmem:[%s4942 + $0xac] sm:$0xf]
        %v6255 = vld [vmem:[%s4942 + $0xb0] sm:$0x1]
        %v6256 = vld [vmem:[%s4942 + $0xb4] sm:$0xe]
        %v6257 = vld [vmem:[%s4942 + $0xb8] sm:$0xf]
        %v6258 = vld [vmem:[%s4942 + $0xbc] sm:$0x1]
        %v6307 = vrot.slane %v6211, 5
        %v6308 = vrot.slane %v6307, 4
        %v6309 = vrot.slane %v6212, 5
        %v6310 = vsel %vm2581, %v6308, %v6309
        %v6311 = vrot.slane %v6309, 4
        %v6312 = vrot.slane %v6213, 5
        %v6313 = vsel %vm2581, %v6311, %v6312
        %v6314 = vrot.slane %v6214, 5
        %v6315 = vrot.slane %v6314, 4
        %v6316 = vrot.slane %v6215, 5
        %v6317 = vsel %vm2581, %v6315, %v6316
        %v6318 = vrot.slane %v6316, 4
        %v6319 = vrot.slane %v6216, 5
        %v6320 = vsel %vm2581, %v6318, %v6319
        %v6321 = vrot.slane %v6217, 5
        %v6322 = vrot.slane %v6321, 4
        %v6323 = vrot.slane %v6218, 5
        %v6324 = vsel %vm2581, %v6322, %v6323
        %v6325 = vrot.slane %v6323, 4
        %v6326 = vrot.slane %v6219, 5
        %v6327 = vsel %vm2581, %v6325, %v6326
        %v6328 = vrot.slane %v6220, 5
        %v6329 = vrot.slane %v6328, 4
        %v6330 = vrot.slane %v6221, 5
        %v6331 = vsel %vm2581, %v6329, %v6330
        %v6332 = vrot.slane %v6330, 4
        %v6333 = vrot.slane %v6222, 5
        %v6334 = vsel %vm2581, %v6332, %v6333
        %v6335 = vrot.slane %v6223, 5
        %v6336 = vrot.slane %v6335, 4
        %v6337 = vrot.slane %v6224, 5
        %v6338 = vsel %vm2581, %v6336, %v6337
        %v6339 = vrot.slane %v6337, 4
        %v6340 = vrot.slane %v6225, 5
        %v6341 = vsel %vm2581, %v6339, %v6340
        %v6342 = vrot.slane %v6226, 5
        %v6343 = vrot.slane %v6342, 4
        %v6344 = vrot.slane %v6227, 5
        %v6345 = vsel %vm2581, %v6343, %v6344
        %v6346 = vrot.slane %v6344, 4
        %v6347 = vrot.slane %v6228, 5
        %v6348 = vsel %vm2581, %v6346, %v6347
        %v6349 = vrot.slane %v6229, 5
        %v6350 = vrot.slane %v6349, 4
        %v6351 = vrot.slane %v6230, 5
        %v6352 = vsel %vm2581, %v6350, %v6351
        %v6353 = vrot.slane %v6351, 4
        %v6354 = vrot.slane %v6231, 5
        %v6355 = vsel %vm2581, %v6353, %v6354
        %v6356 = vrot.slane %v6232, 5
        %v6357 = vrot.slane %v6356, 4
        %v6358 = vrot.slane %v6233, 5
        %v6359 = vsel %vm2581, %v6357, %v6358
        %v6360 = vrot.slane %v6358, 4
        %v6361 = vrot.slane %v6234, 5
        %v6362 = vsel %vm2581, %v6360, %v6361
        %v6363 = vrot.slane %v6235, 5
        %v6364 = vrot.slane %v6363, 4
        %v6365 = vrot.slane %v6236, 5
        %v6366 = vsel %vm2581, %v6364, %v6365
        %v6367 = vrot.slane %v6365, 4
        %v6368 = vrot.slane %v6237, 5
        %v6369 = vsel %vm2581, %v6367, %v6368
        %v6370 = vrot.slane %v6238, 5
        %v6371 = vrot.slane %v6370, 4
        %v6372 = vrot.slane %v6239, 5
        %v6373 = vsel %vm2581, %v6371, %v6372
        %v6374 = vrot.slane %v6372, 4
        %v6375 = vrot.slane %v6240, 5
        %v6376 = vsel %vm2581, %v6374, %v6375
        %v6377 = vrot.slane %v6241, 5
        %v6378 = vrot.slane %v6377, 4
        %v6379 = vrot.slane %v6242, 5
        %v6380 = vsel %vm2581, %v6378, %v6379
        %v6381 = vrot.slane %v6379, 4
        %v6382 = vrot.slane %v6243, 5
        %v6383 = vsel %vm2581, %v6381, %v6382
        %v6384 = vrot.slane %v6244, 5
        %v6385 = vrot.slane %v6384, 4
        %v6386 = vrot.slane %v6245, 5
        %v6387 = vsel %vm2581, %v6385, %v6386
        %v6388 = vrot.slane %v6386, 4
        %v6389 = vrot.slane %v6246, 5
        %v6390 = vsel %vm2581, %v6388, %v6389
        %v6391 = vrot.slane %v6247, 5
        %v6392 = vrot.slane %v6391, 4
        %v6393 = vrot.slane %v6248, 5
        %v6394 = vsel %vm2581, %v6392, %v6393
        %v6395 = vrot.slane %v6393, 4
        %v6396 = vrot.slane %v6249, 5
        %v6397 = vsel %vm2581, %v6395, %v6396
        %v6398 = vrot.slane %v6250, 5
        %v6399 = vrot.slane %v6398, 4
        %v6400 = vrot.slane %v6251, 5
        %v6401 = vsel %vm2581, %v6399, %v6400
        %v6402 = vrot.slane %v6400, 4
        %v6403 = vrot.slane %v6252, 5
        %v6404 = vsel %vm2581, %v6402, %v6403
        %v6405 = vrot.slane %v6253, 5
        %v6406 = vrot.slane %v6405, 4
        %v6407 = vrot.slane %v6254, 5
        %v6408 = vsel %vm2581, %v6406, %v6407
        %v6409 = vrot.slane %v6407, 4
        %v6410 = vrot.slane %v6255, 5
        %v6411 = vsel %vm2581, %v6409, %v6410
        %v6412 = vrot.slane %v6256, 5
        %v6413 = vrot.slane %v6412, 4
        %v6414 = vrot.slane %v6257, 5
        %v6415 = vsel %vm2581, %v6413, %v6414
        %v6416 = vrot.slane %v6414, 4
        %v6417 = vrot.slane %v6258, 5
        %v6418 = vsel %vm2581, %v6416, %v6417
        %v6419 = vld [vmem:[#allocation3] sm:$0xff]
        %v6420 = vld [vmem:[#allocation3 + $0x8] sm:$0xff]
        %v6421 = vld [vmem:[#allocation3 + $0x10] sm:$0xff]
        %v6422 = vld [vmem:[#allocation3 + $0x18] sm:$0xff]
        %v6423 = vld [vmem:[#allocation3 + $0x20] sm:$0xff]
        %v6424 = vld [vmem:[#allocation3 + $0x28] sm:$0xff]
        %v6425 = vld [vmem:[#allocation3 + $0x30] sm:$0xff]
        %v6426 = vld [vmem:[#allocation3 + $0x38] sm:$0xff]
        %v6427 = vld [vmem:[#allocation3 + $0x40] sm:$0xff]
        %v6428 = vld [vmem:[#allocation3 + $0x48] sm:$0xff]
        %v6429 = vld [vmem:[#allocation3 + $0x50] sm:$0xff]
        %v6430 = vld [vmem:[#allocation3 + $0x58] sm:$0xff]
        %v6431 = vld [vmem:[#allocation3 + $0x60] sm:$0xff]
        %v6432 = vld [vmem:[#allocation3 + $0x68] sm:$0xff]
        %v6433 = vld [vmem:[#allocation3 + $0x70] sm:$0xff]
        %v6434 = vld [vmem:[#allocation3 + $0x78] sm:$0xff]
        %v6435 = vld [vmem:[#allocation3 + $0x80] sm:$0xff]
        %v6436 = vld [vmem:[#allocation3 + $0x88] sm:$0xff]
        %v6437 = vld [vmem:[#allocation3 + $0x90] sm:$0xff]
        %v6438 = vld [vmem:[#allocation3 + $0x98] sm:$0xff]
        %v6439 = vld [vmem:[#allocation3 + $0xa0] sm:$0xff]
        %v6440 = vld [vmem:[#allocation3 + $0xa8] sm:$0xff]
        %v6441 = vld [vmem:[#allocation3 + $0xb0] sm:$0xff]
        %v6442 = vld [vmem:[#allocation3 + $0xb8] sm:$0xff]
        %v6443 = vld [vmem:[#allocation3 + $0xc0] sm:$0xff]
        %v6444 = vld [vmem:[#allocation3 + $0xc8] sm:$0xff]
        %v6445 = vld [vmem:[#allocation3 + $0xd0] sm:$0xff]
        %v6446 = vld [vmem:[#allocation3 + $0xd8] sm:$0xff]
        %v6447 = vld [vmem:[#allocation3 + $0xe0] sm:$0xff]
        %v6448 = vld [vmem:[#allocation3 + $0xe8] sm:$0xff]
        %v6449 = vld [vmem:[#allocation3 + $0xf0] sm:$0xff]
        %v6450 = vld [vmem:[#allocation3 + $0xf8] sm:$0xff]
        %s6451 = scalar_lea.vmem %s3, 512
        %v6452 = vld [vmem:[%s6451] sm:$0xf]
        %v6453 = vld [vmem:[%s6451 + $0x4] sm:$0xf]
        %v6454 = vld [vmem:[%s6451 + $0x8] sm:$0xf]
        %v6455 = vld [vmem:[%s6451 + $0xc] sm:$0xf]
        %v6456 = vld [vmem:[%s6451 + $0x10] sm:$0xf]
        %v6457 = vld [vmem:[%s6451 + $0x14] sm:$0xf]
        %v6458 = vld [vmem:[%s6451 + $0x18] sm:$0xf]
        %v6459 = vld [vmem:[%s6451 + $0x1c] sm:$0xf]
        %v6460 = vld [vmem:[%s6451 + $0x20] sm:$0xf]
        %v6461 = vld [vmem:[%s6451 + $0x24] sm:$0xf]
        %v6462 = vld [vmem:[%s6451 + $0x28] sm:$0xf]
        %v6463 = vld [vmem:[%s6451 + $0x2c] sm:$0xf]
        %v6464 = vld [vmem:[%s6451 + $0x30] sm:$0xf]
        %v6465 = vld [vmem:[%s6451 + $0x34] sm:$0xf]
        %v6466 = vld [vmem:[%s6451 + $0x38] sm:$0xf]
        %v6467 = vld [vmem:[%s6451 + $0x3c] sm:$0xf]
        %v6468 = vunpack.c.l.b16 %v6310
        %v6469 = vunpack.c.l.b16 %v6313
        %v6470 = vunpack.c.l.b16 %v6317
        %v6471 = vunpack.c.l.b16 %v6320
        %v6472 = vunpack.c.l.b16 %v6324
        %v6473 = vunpack.c.l.b16 %v6327
        %v6474 = vunpack.c.l.b16 %v6331
        %v6475 = vunpack.c.l.b16 %v6334
        %v6476 = vunpack.c.l.b16 %v6338
        %v6477 = vunpack.c.l.b16 %v6341
        %v6478 = vunpack.c.l.b16 %v6345
        %v6479 = vunpack.c.l.b16 %v6348
        %v6480 = vunpack.c.l.b16 %v6352
        %v6481 = vunpack.c.l.b16 %v6355
        %v6482 = vunpack.c.l.b16 %v6359
        %v6483 = vunpack.c.l.b16 %v6362
        %v6484 = vunpack.c.l.b16 %v6366
        %v6485 = vunpack.c.l.b16 %v6369
        %v6486 = vunpack.c.l.b16 %v6373
        %v6487 = vunpack.c.l.b16 %v6376
        %v6488 = vunpack.c.l.b16 %v6380
        %v6489 = vunpack.c.l.b16 %v6383
        %v6490 = vunpack.c.l.b16 %v6387
        %v6491 = vunpack.c.l.b16 %v6390
        %v6492 = vunpack.c.l.b16 %v6394
        %v6493 = vunpack.c.l.b16 %v6397
        %v6494 = vunpack.c.l.b16 %v6401
        %v6495 = vunpack.c.l.b16 %v6404
        %v6496 = vunpack.c.l.b16 %v6408
        %v6497 = vunpack.c.l.b16 %v6411
        %v6498 = vunpack.c.l.b16 %v6415
        %v6499 = vunpack.c.l.b16 %v6418
        %v6500 = vpack.c.b16 %v6469, %v6468
        %v6501 = vpack.c.b16 %v6471, %v6470
        %v6502 = vpack.c.b16 %v6473, %v6472
        %v6503 = vpack.c.b16 %v6475, %v6474
        %v6504 = vpack.c.b16 %v6477, %v6476
        %v6505 = vpack.c.b16 %v6479, %v6478
        %v6506 = vpack.c.b16 %v6481, %v6480
        %v6507 = vpack.c.b16 %v6483, %v6482
        %v6508 = vpack.c.b16 %v6485, %v6484
        %v6509 = vpack.c.b16 %v6487, %v6486
        %v6510 = vpack.c.b16 %v6489, %v6488
        %v6511 = vpack.c.b16 %v6491, %v6490
        %v6512 = vpack.c.b16 %v6493, %v6492
        %v6513 = vpack.c.b16 %v6495, %v6494
        %v6514 = vpack.c.b16 %v6497, %v6496
        %v6515 = vpack.c.b16 %v6499, %v6498
        %v6548 = vunpack.c.l.b16 %v6452
        %v6549 = vunpack.c.l.b16 %v6453
        %v6550 = vunpack.c.l.b16 %v6454
        %v6551 = vunpack.c.l.b16 %v6455
        %v6552 = vunpack.c.l.b16 %v6456
        %v6553 = vunpack.c.l.b16 %v6457
        %v6554 = vunpack.c.l.b16 %v6458
        %v6555 = vunpack.c.l.b16 %v6459
        %v6556 = vunpack.c.l.b16 %v6460
        %v6557 = vunpack.c.l.b16 %v6461
        %v6558 = vunpack.c.l.b16 %v6462
        %v6559 = vunpack.c.l.b16 %v6463
        %v6560 = vunpack.c.l.b16 %v6464
        %v6561 = vunpack.c.l.b16 %v6465
        %v6562 = vunpack.c.l.b16 %v6466
        %v6563 = vunpack.c.l.b16 %v6467
        %v6564 = vpack.c.b16 %v6549, %v6548
        %v6565 = vpack.c.b16 %v6551, %v6550
        %v6566 = vpack.c.b16 %v6553, %v6552
        %v6567 = vpack.c.b16 %v6555, %v6554
        %v6568 = vpack.c.b16 %v6557, %v6556
        %v6569 = vpack.c.b16 %v6559, %v6558
        %v6570 = vpack.c.b16 %v6561, %v6560
        %v6571 = vpack.c.b16 %v6563, %v6562
        %6580 = vmatprep.subr.bf16.mxu0 0
        %6581 = vmatpush1.bf16.msra.mxu0 %v6564
        %6582 = vmatprep.subr.bf16.mxu0 0
        %6583 = vmatpush1.bf16.msra.mxu0 %v6565
        %6584 = vmatprep.subr.bf16.mxu0 0
        %6585 = vmatpush1.bf16.msra.mxu0 %v6566
        %6586 = vmatprep.subr.bf16.mxu0 0
        %6587 = vmatpush1.bf16.msra.mxu0 %v6567
        %6588 = vmatprep.subr.bf16.mxu0 0
        %6589 = vmatpush1.bf16.msra.mxu0 %v6568
        %6590 = vmatprep.subr.bf16.mxu0 0
        %6591 = vmatpush1.bf16.msra.mxu0 %v6569
        %6592 = vmatprep.subr.bf16.mxu0 0
        %6593 = vmatpush1.bf16.msra.mxu0 %v6570
        %6594 = vmatprep.subr.bf16.mxu0 0
        %6595 = vmatpush1.bf16.msra.mxu0 %v6571
        %6596 = vmatprep.subr.bf16.mxu0 0
        %6597 = vmatpush1.bf16.msra.mxu0 0
        %6598 = vmatprep.subr.bf16.mxu0 0
        %6599 = vmatpush1.bf16.msra.mxu0 0
        %6600 = vmatprep.subr.bf16.mxu0 0
        %6601 = vmatpush1.bf16.msra.mxu0 0
        %6602 = vmatprep.subr.bf16.mxu0 0
        %6603 = vmatpush1.bf16.msra.mxu0 0
        %6604 = vmatprep.subr.bf16.mxu0 0
        %6605 = vmatpush1.bf16.msra.mxu0 0
        %6606 = vmatprep.subr.bf16.mxu0 0
        %6607 = vmatpush1.bf16.msra.mxu0 0
        %6608 = vmatprep.subr.bf16.mxu0 0
        %6609 = vmatpush1.bf16.msra.mxu0 0
        %6610 = vmatprep.subr.bf16.mxu0 0
        %6611 = vmatpush1.bf16.msra.mxu0 0
        %6612 = vmatprep.mubr.bf16.mxu0 0
        %6613 = vmatmul.mubr.bf16.gmra.mrb[0].mxu0 %v6500
        %v6614 = vpop.f32.mrb[0].mxu0
        %v6615 = vadd.f32 0.0, %v6614
        %v6616 = vpop.f32.mrb[0].mxu0
        %v6617 = vpop.f32.mrb[0].mxu0
        %v6618 = vadd.f32 0.0, %v6617
        %v6619 = vpop.f32.mrb[0].mxu0
        %6620 = vmatprep.mubr.bf16.mxu0 0
        %6621 = vmatmul.mubr.bf16.gmra.mrb[0].mxu0 %v6501
        %v6622 = vpop.f32.mrb[0].mxu0
        %v6623 = vadd.f32 0.0, %v6622
        %v6624 = vpop.f32.mrb[0].mxu0
        %v6625 = vpop.f32.mrb[0].mxu0
        %v6626 = vadd.f32 0.0, %v6625
        %v6627 = vpop.f32.mrb[0].mxu0
        %6628 = vmatprep.mubr.bf16.mxu0 0
        %6629 = vmatmul.mubr.bf16.gmra.mrb[0].mxu0 %v6502
        %v6630 = vpop.f32.mrb[0].mxu0
        %v6631 = vadd.f32 0.0, %v6630
        %v6632 = vpop.f32.mrb[0].mxu0
        %v6633 = vpop.f32.mrb[0].mxu0
        %v6634 = vadd.f32 0.0, %v6633
        %v6635 = vpop.f32.mrb[0].mxu0
        %6636 = vmatprep.mubr.bf16.mxu0 0
        %6637 = vmatmul.mubr.bf16.gmra.mrb[0].mxu0 %v6503
        %v6638 = vpop.f32.mrb[0].mxu0
        %v6639 = vadd.f32 0.0, %v6638
        %v6640 = vpop.f32.mrb[0].mxu0
        %v6641 = vpop.f32.mrb[0].mxu0
        %v6642 = vadd.f32 0.0, %v6641
        %v6643 = vpop.f32.mrb[0].mxu0
        %6644 = vmatprep.mubr.bf16.mxu0 0
        %6645 = vmatmul.mubr.bf16.gmra.mrb[0].mxu0 %v6504
        %v6646 = vpop.f32.mrb[0].mxu0
        %v6647 = vadd.f32 0.0, %v6646
        %v6648 = vpop.f32.mrb[0].mxu0
        %v6649 = vpop.f32.mrb[0].mxu0
        %v6650 = vadd.f32 0.0, %v6649
        %v6651 = vpop.f32.mrb[0].mxu0
        %6652 = vmatprep.mubr.bf16.mxu0 0
        %6653 = vmatmul.mubr.bf16.gmra.mrb[0].mxu0 %v6505
        %v6654 = vpop.f32.mrb[0].mxu0
        %v6655 = vadd.f32 0.0, %v6654
        %v6656 = vpop.f32.mrb[0].mxu0
        %v6657 = vpop.f32.mrb[0].mxu0
        %v6658 = vadd.f32 0.0, %v6657
        %v6659 = vpop.f32.mrb[0].mxu0
        %6660 = vmatprep.mubr.bf16.mxu0 0
        %6661 = vmatmul.mubr.bf16.gmra.mrb[0].mxu0 %v6506
        %v6662 = vpop.f32.mrb[0].mxu0
        %v6663 = vadd.f32 0.0, %v6662
        %v6664 = vpop.f32.mrb[0].mxu0
        %v6665 = vpop.f32.mrb[0].mxu0
        %v6666 = vadd.f32 0.0, %v6665
        %v6667 = vpop.f32.mrb[0].mxu0
        %6668 = vmatprep.mubr.bf16.mxu0 0
        %6669 = vmatmul.mubr.bf16.gmra.mrb[0].mxu0 %v6507
        %v6670 = vpop.f32.mrb[0].mxu0
        %v6671 = vadd.f32 0.0, %v6670
        %v6672 = vpop.f32.mrb[0].mxu0
        %v6673 = vpop.f32.mrb[0].mxu0
        %v6674 = vadd.f32 0.0, %v6673
        %v6675 = vpop.f32.mrb[0].mxu0
        %6676 = vmatprep.mubr.bf16.mxu0 0
        %6677 = vmatmul.mubr.bf16.gmra.mrb[0].mxu0 %v6508
        %v6678 = vpop.f32.mrb[0].mxu0
        %v6679 = vadd.f32 0.0, %v6678
        %v6680 = vpop.f32.mrb[0].mxu0
        %v6681 = vpop.f32.mrb[0].mxu0
        %v6682 = vadd.f32 0.0, %v6681
        %v6683 = vpop.f32.mrb[0].mxu0
        %6684 = vmatprep.mubr.bf16.mxu0 0
        %6685 = vmatmul.mubr.bf16.gmra.mrb[0].mxu0 %v6509
        %v6686 = vpop.f32.mrb[0].mxu0
        %v6687 = vadd.f32 0.0, %v6686
        %v6688 = vpop.f32.mrb[0].mxu0
        %v6689 = vpop.f32.mrb[0].mxu0
        %v6690 = vadd.f32 0.0, %v6689
        %v6691 = vpop.f32.mrb[0].mxu0
        %6692 = vmatprep.mubr.bf16.mxu0 0
        %6693 = vmatmul.mubr.bf16.gmra.mrb[0].mxu0 %v6510
        %v6694 = vpop.f32.mrb[0].mxu0
        %v6695 = vadd.f32 0.0, %v6694
        %v6696 = vpop.f32.mrb[0].mxu0
        %v6697 = vpop.f32.mrb[0].mxu0
        %v6698 = vadd.f32 0.0, %v6697
        %v6699 = vpop.f32.mrb[0].mxu0
        %6700 = vmatprep.mubr.bf16.mxu0 0
        %6701 = vmatmul.mubr.bf16.gmra.mrb[0].mxu0 %v6511
        %v6702 = vpop.f32.mrb[0].mxu0
        %v6703 = vadd.f32 0.0, %v6702
        %v6704 = vpop.f32.mrb[0].mxu0
        %v6705 = vpop.f32.mrb[0].mxu0
        %v6706 = vadd.f32 0.0, %v6705
        %v6707 = vpop.f32.mrb[0].mxu0
        %6708 = vmatprep.mubr.bf16.mxu0 0
        %6709 = vmatmul.mubr.bf16.gmra.mrb[0].mxu0 %v6512
        %v6710 = vpop.f32.mrb[0].mxu0
        %v6711 = vadd.f32 0.0, %v6710
        %v6712 = vpop.f32.mrb[0].mxu0
        %v6713 = vpop.f32.mrb[0].mxu0
        %v6714 = vadd.f32 0.0, %v6713
        %v6715 = vpop.f32.mrb[0].mxu0
        %6716 = vmatprep.mubr.bf16.mxu0 0
        %6717 = vmatmul.mubr.bf16.gmra.mrb[0].mxu0 %v6513
        %v6718 = vpop.f32.mrb[0].mxu0
        %v6719 = vadd.f32 0.0, %v6718
        %v6720 = vpop.f32.mrb[0].mxu0
        %v6721 = vpop.f32.mrb[0].mxu0
        %v6722 = vadd.f32 0.0, %v6721
        %v6723 = vpop.f32.mrb[0].mxu0
        %6724 = vmatprep.mubr.bf16.mxu0 0
        %6725 = vmatmul.mubr.bf16.gmra.mrb[0].mxu0 %v6514
        %v6726 = vpop.f32.mrb[0].mxu0
        %v6727 = vadd.f32 0.0, %v6726
        %v6728 = vpop.f32.mrb[0].mxu0
        %v6729 = vpop.f32.mrb[0].mxu0
        %v6730 = vadd.f32 0.0, %v6729
        %v6731 = vpop.f32.mrb[0].mxu0
        %6732 = vmatprep.mubr.bf16.mxu0 0
        %6733 = vmatmul.mubr.bf16.gmra.mrb[0].mxu0 %v6515
        %v6734 = vpop.f32.mrb[0].mxu0
        %v6735 = vadd.f32 0.0, %v6734
        %v6736 = vpop.f32.mrb[0].mxu0
        %v6737 = vpop.f32.mrb[0].mxu0
        %v6738 = vadd.f32 0.0, %v6737
        %v6739 = vpop.f32.mrb[0].mxu0
        %6740 = vdwg.mxu0
        %v6741 = vadd.f32 %v6419, %v6615
        %v6742 = vadd.f32 %v6420, %v6618
        %v6743 = vadd.f32 %v6421, %v6623
        %v6744 = vadd.f32 %v6422, %v6626
        %v6745 = vadd.f32 %v6423, %v6631
        %v6746 = vadd.f32 %v6424, %v6634
        %v6747 = vadd.f32 %v6425, %v6639
        %v6748 = vadd.f32 %v6426, %v6642
        %v6749 = vadd.f32 %v6427, %v6647
        %v6750 = vadd.f32 %v6428, %v6650
        %v6751 = vadd.f32 %v6429, %v6655
        %v6752 = vadd.f32 %v6430, %v6658
        %v6753 = vadd.f32 %v6431, %v6663
        %v6754 = vadd.f32 %v6432, %v6666
        %v6755 = vadd.f32 %v6433, %v6671
        %v6756 = vadd.f32 %v6434, %v6674
        %v6757 = vadd.f32 %v6435, %v6679
        %v6758 = vadd.f32 %v6436, %v6682
        %v6759 = vadd.f32 %v6437, %v6687
        %v6760 = vadd.f32 %v6438, %v6690
        %v6761 = vadd.f32 %v6439, %v6695
        %v6762 = vadd.f32 %v6440, %v6698
        %v6763 = vadd.f32 %v6441, %v6703
        %v6764 = vadd.f32 %v6442, %v6706
        %v6765 = vadd.f32 %v6443, %v6711
        %v6766 = vadd.f32 %v6444, %v6714
        %v6767 = vadd.f32 %v6445, %v6719
        %v6768 = vadd.f32 %v6446, %v6722
        %v6769 = vadd.f32 %v6447, %v6727
        %v6770 = vadd.f32 %v6448, %v6730
        %v6771 = vadd.f32 %v6449, %v6735
        %v6772 = vadd.f32 %v6450, %v6738
        %6773 = vst [vmem:[#allocation3] sm:$0xff] %v6741
        %6774 = vst [vmem:[#allocation3 + $0x8] sm:$0xff] %v6742
        %6775 = vst [vmem:[#allocation3 + $0x10] sm:$0xff] %v6743
        %6776 = vst [vmem:[#allocation3 + $0x18] sm:$0xff] %v6744
        %6777 = vst [vmem:[#allocation3 + $0x20] sm:$0xff] %v6745
        %6778 = vst [vmem:[#allocation3 + $0x28] sm:$0xff] %v6746
        %6779 = vst [vmem:[#allocation3 + $0x30] sm:$0xff] %v6747
        %6780 = vst [vmem:[#allocation3 + $0x38] sm:$0xff] %v6748
        %6781 = vst [vmem:[#allocation3 + $0x40] sm:$0xff] %v6749
        %6782 = vst [vmem:[#allocation3 + $0x48] sm:$0xff] %v6750
        %6783 = vst [vmem:[#allocation3 + $0x50] sm:$0xff] %v6751
        %6784 = vst [vmem:[#allocation3 + $0x58] sm:$0xff] %v6752
        %6785 = vst [vmem:[#allocation3 + $0x60] sm:$0xff] %v6753
        %6786 = vst [vmem:[#allocation3 + $0x68] sm:$0xff] %v6754
        %6787 = vst [vmem:[#allocation3 + $0x70] sm:$0xff] %v6755
        %6788 = vst [vmem:[#allocation3 + $0x78] sm:$0xff] %v6756
        %6789 = vst [vmem:[#allocation3 + $0x80] sm:$0xff] %v6757
        %6790 = vst [vmem:[#allocation3 + $0x88] sm:$0xff] %v6758
        %6791 = vst [vmem:[#allocation3 + $0x90] sm:$0xff] %v6759
        %6792 = vst [vmem:[#allocation3 + $0x98] sm:$0xff] %v6760
        %6793 = vst [vmem:[#allocation3 + $0xa0] sm:$0xff] %v6761
        %6794 = vst [vmem:[#allocation3 + $0xa8] sm:$0xff] %v6762
        %6795 = vst [vmem:[#allocation3 + $0xb0] sm:$0xff] %v6763
        %6796 = vst [vmem:[#allocation3 + $0xb8] sm:$0xff] %v6764
        %6797 = vst [vmem:[#allocation3 + $0xc0] sm:$0xff] %v6765
        %6798 = vst [vmem:[#allocation3 + $0xc8] sm:$0xff] %v6766
        %6799 = vst [vmem:[#allocation3 + $0xd0] sm:$0xff] %v6767
        %6800 = vst [vmem:[#allocation3 + $0xd8] sm:$0xff] %v6768
        %6801 = vst [vmem:[#allocation3 + $0xe0] sm:$0xff] %v6769
        %6802 = vst [vmem:[#allocation3 + $0xe8] sm:$0xff] %v6770
        %6803 = vst [vmem:[#allocation3 + $0xf0] sm:$0xff] %v6771
        %6804 = vst [vmem:[#allocation3 + $0xf8] sm:$0xff] %v6772
        %v6805 = vld [vmem:[#allocation3] sm:$0xff]
        %v6806 = vld [vmem:[#allocation3 + $0x8] sm:$0xff]
        %v6807 = vld [vmem:[#allocation3 + $0x10] sm:$0xff]
        %v6808 = vld [vmem:[#allocation3 + $0x18] sm:$0xff]
        %v6809 = vld [vmem:[#allocation3 + $0x20] sm:$0xff]
        %v6810 = vld [vmem:[#allocation3 + $0x28] sm:$0xff]
        %v6811 = vld [vmem:[#allocation3 + $0x30] sm:$0xff]
        %v6812 = vld [vmem:[#allocation3 + $0x38] sm:$0xff]
        %v6813 = vld [vmem:[#allocation3 + $0x40] sm:$0xff]
        %v6814 = vld [vmem:[#allocation3 + $0x48] sm:$0xff]
        %v6815 = vld [vmem:[#allocation3 + $0x50] sm:$0xff]
        %v6816 = vld [vmem:[#allocation3 + $0x58] sm:$0xff]
        %v6817 = vld [vmem:[#allocation3 + $0x60] sm:$0xff]
        %v6818 = vld [vmem:[#allocation3 + $0x68] sm:$0xff]
        %v6819 = vld [vmem:[#allocation3 + $0x70] sm:$0xff]
        %v6820 = vld [vmem:[#allocation3 + $0x78] sm:$0xff]
        %v6821 = vld [vmem:[#allocation3 + $0x80] sm:$0xff]
        %v6822 = vld [vmem:[#allocation3 + $0x88] sm:$0xff]
        %v6823 = vld [vmem:[#allocation3 + $0x90] sm:$0xff]
        %v6824 = vld [vmem:[#allocation3 + $0x98] sm:$0xff]
        %v6825 = vld [vmem:[#allocation3 + $0xa0] sm:$0xff]
        %v6826 = vld [vmem:[#allocation3 + $0xa8] sm:$0xff]
        %v6827 = vld [vmem:[#allocation3 + $0xb0] sm:$0xff]
        %v6828 = vld [vmem:[#allocation3 + $0xb8] sm:$0xff]
        %v6829 = vld [vmem:[#allocation3 + $0xc0] sm:$0xff]
        %v6830 = vld [vmem:[#allocation3 + $0xc8] sm:$0xff]
        %v6831 = vld [vmem:[#allocation3 + $0xd0] sm:$0xff]
        %v6832 = vld [vmem:[#allocation3 + $0xd8] sm:$0xff]
        %v6833 = vld [vmem:[#allocation3 + $0xe0] sm:$0xff]
        %v6834 = vld [vmem:[#allocation3 + $0xe8] sm:$0xff]
        %v6835 = vld [vmem:[#allocation3 + $0xf0] sm:$0xff]
        %v6836 = vld [vmem:[#allocation3 + $0xf8] sm:$0xff]
        %v6837 = vld [vmem:[%s4] sm:$0x1]
        %v6839 = vlaneseq
        %v6840 = vshrl.u32 %v6839, 7
        %v6841 = vsub.s32 0, %v6840
        %v6842 = vrot.slane %v6837, %v6841
        %v6844 = vadd.f32 %v6805, %v6842
        %v6845 = vadd.f32 %v6806, %v6842
        %v6846 = vadd.f32 %v6807, %v6842
        %v6847 = vadd.f32 %v6808, %v6842
        %v6848 = vadd.f32 %v6809, %v6842
        %v6849 = vadd.f32 %v6810, %v6842
        %v6850 = vadd.f32 %v6811, %v6842
        %v6851 = vadd.f32 %v6812, %v6842
        %v6852 = vadd.f32 %v6813, %v6842
        %v6853 = vadd.f32 %v6814, %v6842
        %v6854 = vadd.f32 %v6815, %v6842
        %v6855 = vadd.f32 %v6816, %v6842
        %v6856 = vadd.f32 %v6817, %v6842
        %v6857 = vadd.f32 %v6818, %v6842
        %v6858 = vadd.f32 %v6819, %v6842
        %v6859 = vadd.f32 %v6820, %v6842
        %v6860 = vadd.f32 %v6821, %v6842
        %v6861 = vadd.f32 %v6822, %v6842
        %v6862 = vadd.f32 %v6823, %v6842
        %v6863 = vadd.f32 %v6824, %v6842
        %v6864 = vadd.f32 %v6825, %v6842
        %v6865 = vadd.f32 %v6826, %v6842
        %v6866 = vadd.f32 %v6827, %v6842
        %v6867 = vadd.f32 %v6828, %v6842
        %v6868 = vadd.f32 %v6829, %v6842
        %v6869 = vadd.f32 %v6830, %v6842
        %v6870 = vadd.f32 %v6831, %v6842
        %v6871 = vadd.f32 %v6832, %v6842
        %v6872 = vadd.f32 %v6833, %v6842
        %v6873 = vadd.f32 %v6834, %v6842
        %v6874 = vadd.f32 %v6835, %v6842
        %v6875 = vadd.f32 %v6836, %v6842
        %v6876 = vmax.f32 %v6844, 0.0
        %v6877 = vmax.f32 %v6845, 0.0
        %v6878 = vmax.f32 %v6846, 0.0
        %v6879 = vmax.f32 %v6847, 0.0
        %v6880 = vmax.f32 %v6848, 0.0
        %v6881 = vmax.f32 %v6849, 0.0
        %v6882 = vmax.f32 %v6850, 0.0
        %v6883 = vmax.f32 %v6851, 0.0
        %v6884 = vmax.f32 %v6852, 0.0
        %v6885 = vmax.f32 %v6853, 0.0
        %v6886 = vmax.f32 %v6854, 0.0
        %v6887 = vmax.f32 %v6855, 0.0
        %v6888 = vmax.f32 %v6856, 0.0
        %v6889 = vmax.f32 %v6857, 0.0
        %v6890 = vmax.f32 %v6858, 0.0
        %v6891 = vmax.f32 %v6859, 0.0
        %v6892 = vmax.f32 %v6860, 0.0
        %v6893 = vmax.f32 %v6861, 0.0
        %v6894 = vmax.f32 %v6862, 0.0
        %v6895 = vmax.f32 %v6863, 0.0
        %v6896 = vmax.f32 %v6864, 0.0
        %v6897 = vmax.f32 %v6865, 0.0
        %v6898 = vmax.f32 %v6866, 0.0
        %v6899 = vmax.f32 %v6867, 0.0
        %v6900 = vmax.f32 %v6868, 0.0
        %v6901 = vmax.f32 %v6869, 0.0
        %v6902 = vmax.f32 %v6870, 0.0
        %v6903 = vmax.f32 %v6871, 0.0
        %v6904 = vmax.f32 %v6872, 0.0
        %v6905 = vmax.f32 %v6873, 0.0
        %v6906 = vmax.f32 %v6874, 0.0
        %v6907 = vmax.f32 %v6875, 0.0
        %v6908 = vpack.c.bf16 %v6877, %v6876
        %v6909 = vpack.c.bf16 %v6879, %v6878
        %v6910 = vpack.c.bf16 %v6881, %v6880
        %v6911 = vpack.c.bf16 %v6883, %v6882
        %v6912 = vpack.c.bf16 %v6885, %v6884
        %v6913 = vpack.c.bf16 %v6887, %v6886
        %v6914 = vpack.c.bf16 %v6889, %v6888
        %v6915 = vpack.c.bf16 %v6891, %v6890
        %v6916 = vpack.c.bf16 %v6893, %v6892
        %v6917 = vpack.c.bf16 %v6895, %v6894
        %v6918 = vpack.c.bf16 %v6897, %v6896
        %v6919 = vpack.c.bf16 %v6899, %v6898
        %v6920 = vpack.c.bf16 %v6901, %v6900
        %v6921 = vpack.c.bf16 %v6903, %v6902
        %v6922 = vpack.c.bf16 %v6905, %v6904
        %v6923 = vpack.c.bf16 %v6907, %v6906
        %v6924 = vld [vmem:[%s5] sm:$0xf]
        %v6925 = vld [vmem:[%s5 + $0x4] sm:$0xf]
        %v6926 = vld [vmem:[%s5 + $0x8] sm:$0xf]
        %v6927 = vld [vmem:[%s5 + $0xc] sm:$0xf]
        %v6928 = vld [vmem:[%s5 + $0x10] sm:$0xf]
        %v6929 = vld [vmem:[%s5 + $0x14] sm:$0xf]
        %v6930 = vld [vmem:[%s5 + $0x18] sm:$0xf]
        %v6931 = vld [vmem:[%s5 + $0x1c] sm:$0xf]
        %v6932 = vld [vmem:[%s5 + $0x20] sm:$0xf]
        %v6933 = vld [vmem:[%s5 + $0x24] sm:$0xf]
        %v6934 = vld [vmem:[%s5 + $0x28] sm:$0xf]
        %v6935 = vld [vmem:[%s5 + $0x2c] sm:$0xf]
        %v6936 = vld [vmem:[%s5 + $0x30] sm:$0xf]
        %v6937 = vld [vmem:[%s5 + $0x34] sm:$0xf]
        %v6938 = vld [vmem:[%s5 + $0x38] sm:$0xf]
        %v6939 = vld [vmem:[%s5 + $0x3c] sm:$0xf]
        %v6940 = vld [vmem:[%s6] sm:$0x1]
        %v6942 = vlaneseq
        %v6943 = vshrl.u32 %v6942, 7
        %v6944 = vsub.s32 0, %v6943
        %v6945 = vrot.slane %v6940, %v6944
        %v6963 = vunpack.c.l.b16 %v6924
        %v6964 = vunpack.c.l.b16 %v6925
        %v6965 = vunpack.c.l.b16 %v6926
        %v6966 = vunpack.c.l.b16 %v6927
        %v6967 = vunpack.c.l.b16 %v6928
        %v6968 = vunpack.c.l.b16 %v6929
        %v6969 = vunpack.c.l.b16 %v6930
        %v6970 = vunpack.c.l.b16 %v6931
        %v6971 = vunpack.c.l.b16 %v6932
        %v6972 = vunpack.c.l.b16 %v6933
        %v6973 = vunpack.c.l.b16 %v6934
        %v6974 = vunpack.c.l.b16 %v6935
        %v6975 = vunpack.c.l.b16 %v6936
        %v6976 = vunpack.c.l.b16 %v6937
        %v6977 = vunpack.c.l.b16 %v6938
        %v6978 = vunpack.c.l.b16 %v6939
        %v6979 = vpack.c.b16 %v6964, %v6963
        %v6980 = vpack.c.b16 %v6966, %v6965
        %v6981 = vpack.c.b16 %v6968, %v6967
        %v6982 = vpack.c.b16 %v6970, %v6969
        %v6983 = vpack.c.b16 %v6972, %v6971
        %v6984 = vpack.c.b16 %v6974, %v6973
        %v6985 = vpack.c.b16 %v6976, %v6975
        %v6986 = vpack.c.b16 %v6978, %v6977
        %6995 = vmatprep.subr.bf16.mxu0 0
        %6996 = vmatpush1.bf16.msra.mxu0 %v6979
        %6997 = vmatprep.subr.bf16.mxu0 0
        %6998 = vmatpush1.bf16.msra.mxu0 %v6980
        %6999 = vmatprep.subr.bf16.mxu0 0
        %7000 = vmatpush1.bf16.msra.mxu0 %v6981
        %7001 = vmatprep.subr.bf16.mxu0 0
        %7002 = vmatpush1.bf16.msra.mxu0 %v6982
        %7003 = vmatprep.subr.bf16.mxu0 0
        %7004 = vmatpush1.bf16.msra.mxu0 %v6983
        %7005 = vmatprep.subr.bf16.mxu0 0
        %7006 = vmatpush1.bf16.msra.mxu0 %v6984
        %7007 = vmatprep.subr.bf16.mxu0 0
        %7008 = vmatpush1.bf16.msra.mxu0 %v6985
        %7009 = vmatprep.subr.bf16.mxu0 0
        %7010 = vmatpush1.bf16.msra.mxu0 %v6986
        %7011 = vmatprep.subr.bf16.mxu0 0
        %7012 = vmatpush1.bf16.msra.mxu0 0
        %7013 = vmatprep.subr.bf16.mxu0 0
        %7014 = vmatpush1.bf16.msra.mxu0 0
        %7015 = vmatprep.subr.bf16.mxu0 0
        %7016 = vmatpush1.bf16.msra.mxu0 0
        %7017 = vmatprep.subr.bf16.mxu0 0
        %7018 = vmatpush1.bf16.msra.mxu0 0
        %7019 = vmatprep.subr.bf16.mxu0 0
        %7020 = vmatpush1.bf16.msra.mxu0 0
        %7021 = vmatprep.subr.bf16.mxu0 0
        %7022 = vmatpush1.bf16.msra.mxu0 0
        %7023 = vmatprep.subr.bf16.mxu0 0
        %7024 = vmatpush1.bf16.msra.mxu0 0
        %7025 = vmatprep.subr.bf16.mxu0 0
        %7026 = vmatpush1.bf16.msra.mxu0 0
        %7027 = vmatprep.mubr.bf16.mxu0 0
        %7028 = vmatmul.mubr.bf16.gmra.mrb[0].mxu0 %v6908
        %v7029 = vpop.f32.mrb[0].mxu0
        %v7030 = vadd.f32 %v6945, %v7029
        %v7031 = vpop.f32.mrb[0].mxu0
        %v7032 = vpop.f32.mrb[0].mxu0
        %v7033 = vadd.f32 %v6945, %v7032
        %v7034 = vpop.f32.mrb[0].mxu0
        %7035 = vmatprep.mubr.bf16.mxu0 0
        %7036 = vmatmul.mubr.bf16.gmra.mrb[0].mxu0 %v6909
        %v7037 = vpop.f32.mrb[0].mxu0
        %v7038 = vadd.f32 %v6945, %v7037
        %v7039 = vpop.f32.mrb[0].mxu0
        %v7040 = vpop.f32.mrb[0].mxu0
        %v7041 = vadd.f32 %v6945, %v7040
        %v7042 = vpop.f32.mrb[0].mxu0
        %7043 = vmatprep.mubr.bf16.mxu0 0
        %7044 = vmatmul.mubr.bf16.gmra.mrb[0].mxu0 %v6910
        %v7045 = vpop.f32.mrb[0].mxu0
        %v7046 = vadd.f32 %v6945, %v7045
        %v7047 = vpop.f32.mrb[0].mxu0
        %v7048 = vpop.f32.mrb[0].mxu0
        %v7049 = vadd.f32 %v6945, %v7048
        %v7050 = vpop.f32.mrb[0].mxu0
        %7051 = vmatprep.mubr.bf16.mxu0 0
        %7052 = vmatmul.mubr.bf16.gmra.mrb[0].mxu0 %v6911
        %v7053 = vpop.f32.mrb[0].mxu0
        %v7054 = vadd.f32 %v6945, %v7053
        %v7055 = vpop.f32.mrb[0].mxu0
        %v7056 = vpop.f32.mrb[0].mxu0
        %v7057 = vadd.f32 %v6945, %v7056
        %v7058 = vpop.f32.mrb[0].mxu0
        %7059 = vmatprep.mubr.bf16.mxu0 0
        %7060 = vmatmul.mubr.bf16.gmra.mrb[0].mxu0 %v6912
        %v7061 = vpop.f32.mrb[0].mxu0
        %v7062 = vadd.f32 %v6945, %v7061
        %v7063 = vpop.f32.mrb[0].mxu0
        %v7064 = vpop.f32.mrb[0].mxu0
        %v7065 = vadd.f32 %v6945, %v7064
        %v7066 = vpop.f32.mrb[0].mxu0
        %7067 = vmatprep.mubr.bf16.mxu0 0
        %7068 = vmatmul.mubr.bf16.gmra.mrb[0].mxu0 %v6913
        %v7069 = vpop.f32.mrb[0].mxu0
        %v7070 = vadd.f32 %v6945, %v7069
        %v7071 = vpop.f32.mrb[0].mxu0
        %v7072 = vpop.f32.mrb[0].mxu0
        %v7073 = vadd.f32 %v6945, %v7072
        %v7074 = vpop.f32.mrb[0].mxu0
        %7075 = vmatprep.mubr.bf16.mxu0 0
        %7076 = vmatmul.mubr.bf16.gmra.mrb[0].mxu0 %v6914
        %v7077 = vpop.f32.mrb[0].mxu0
        %v7078 = vadd.f32 %v6945, %v7077
        %v7079 = vpop.f32.mrb[0].mxu0
        %v7080 = vpop.f32.mrb[0].mxu0
        %v7081 = vadd.f32 %v6945, %v7080
        %v7082 = vpop.f32.mrb[0].mxu0
        %7083 = vmatprep.mubr.bf16.mxu0 0
        %7084 = vmatmul.mubr.bf16.gmra.mrb[0].mxu0 %v6915
        %v7085 = vpop.f32.mrb[0].mxu0
        %v7086 = vadd.f32 %v6945, %v7085
        %v7087 = vpop.f32.mrb[0].mxu0
        %v7088 = vpop.f32.mrb[0].mxu0
        %v7089 = vadd.f32 %v6945, %v7088
        %v7090 = vpop.f32.mrb[0].mxu0
        %7091 = vmatprep.mubr.bf16.mxu0 0
        %7092 = vmatmul.mubr.bf16.gmra.mrb[0].mxu0 %v6916
        %v7093 = vpop.f32.mrb[0].mxu0
        %v7094 = vadd.f32 %v6945, %v7093
        %v7095 = vpop.f32.mrb[0].mxu0
        %v7096 = vpop.f32.mrb[0].mxu0
        %v7097 = vadd.f32 %v6945, %v7096
        %v7098 = vpop.f32.mrb[0].mxu0
        %7099 = vmatprep.mubr.bf16.mxu0 0
        %7100 = vmatmul.mubr.bf16.gmra.mrb[0].mxu0 %v6917
        %v7101 = vpop.f32.mrb[0].mxu0
        %v7102 = vadd.f32 %v6945, %v7101
        %v7103 = vpop.f32.mrb[0].mxu0
        %v7104 = vpop.f32.mrb[0].mxu0
        %v7105 = vadd.f32 %v6945, %v7104
        %v7106 = vpop.f32.mrb[0].mxu0
        %7107 = vmatprep.mubr.bf16.mxu0 0
        %7108 = vmatmul.mubr.bf16.gmra.mrb[0].mxu0 %v6918
        %v7109 = vpop.f32.mrb[0].mxu0
        %v7110 = vadd.f32 %v6945, %v7109
        %v7111 = vpop.f32.mrb[0].mxu0
        %v7112 = vpop.f32.mrb[0].mxu0
        %v7113 = vadd.f32 %v6945, %v7112
        %v7114 = vpop.f32.mrb[0].mxu0
        %7115 = vmatprep.mubr.bf16.mxu0 0
        %7116 = vmatmul.mubr.bf16.gmra.mrb[0].mxu0 %v6919
        %v7117 = vpop.f32.mrb[0].mxu0
        %v7118 = vadd.f32 %v6945, %v7117
        %v7119 = vpop.f32.mrb[0].mxu0
        %v7120 = vpop.f32.mrb[0].mxu0
        %v7121 = vadd.f32 %v6945, %v7120
        %v7122 = vpop.f32.mrb[0].mxu0
        %7123 = vmatprep.mubr.bf16.mxu0 0
        %7124 = vmatmul.mubr.bf16.gmra.mrb[0].mxu0 %v6920
        %v7125 = vpop.f32.mrb[0].mxu0
        %v7126 = vadd.f32 %v6945, %v7125
        %v7127 = vpop.f32.mrb[0].mxu0
        %v7128 = vpop.f32.mrb[0].mxu0
        %v7129 = vadd.f32 %v6945, %v7128
        %v7130 = vpop.f32.mrb[0].mxu0
        %7131 = vmatprep.mubr.bf16.mxu0 0
        %7132 = vmatmul.mubr.bf16.gmra.mrb[0].mxu0 %v6921
        %v7133 = vpop.f32.mrb[0].mxu0
        %v7134 = vadd.f32 %v6945, %v7133
        %v7135 = vpop.f32.mrb[0].mxu0
        %v7136 = vpop.f32.mrb[0].mxu0
        %v7137 = vadd.f32 %v6945, %v7136
        %v7138 = vpop.f32.mrb[0].mxu0
        %7139 = vmatprep.mubr.bf16.mxu0 0
        %7140 = vmatmul.mubr.bf16.gmra.mrb[0].mxu0 %v6922
        %v7141 = vpop.f32.mrb[0].mxu0
        %v7142 = vadd.f32 %v6945, %v7141
        %v7143 = vpop.f32.mrb[0].mxu0
        %v7144 = vpop.f32.mrb[0].mxu0
        %v7145 = vadd.f32 %v6945, %v7144
        %v7146 = vpop.f32.mrb[0].mxu0
        %7147 = vmatprep.mubr.bf16.mxu0 0
        %7148 = vmatmul.mubr.bf16.gmra.mrb[0].mxu0 %v6923
        %v7149 = vpop.f32.mrb[0].mxu0
        %v7150 = vadd.f32 %v6945, %v7149
        %v7151 = vpop.f32.mrb[0].mxu0
        %v7152 = vpop.f32.mrb[0].mxu0
        %v7153 = vadd.f32 %v6945, %v7152
        %v7154 = vpop.f32.mrb[0].mxu0
        %7155 = vdwg.mxu0
        %v7156 = vadd.f32 %v7030, %v278
        %v7157 = vadd.f32 %v7033, %v279
        %v7158 = vadd.f32 %v7038, %v280
        %v7159 = vadd.f32 %v7041, %v281
        %v7160 = vadd.f32 %v7046, %v282
        %v7161 = vadd.f32 %v7049, %v283
        %v7162 = vadd.f32 %v7054, %v284
        %v7163 = vadd.f32 %v7057, %v285
        %v7164 = vadd.f32 %v7062, %v286
        %v7165 = vadd.f32 %v7065, %v287
        %v7166 = vadd.f32 %v7070, %v288
        %v7167 = vadd.f32 %v7073, %v289
        %v7168 = vadd.f32 %v7078, %v290
        %v7169 = vadd.f32 %v7081, %v291
        %v7170 = vadd.f32 %v7086, %v292
        %v7171 = vadd.f32 %v7089, %v293
        %v7172 = vadd.f32 %v7094, %v294
        %v7173 = vadd.f32 %v7097, %v295
        %v7174 = vadd.f32 %v7102, %v296
        %v7175 = vadd.f32 %v7105, %v297
        %v7176 = vadd.f32 %v7110, %v298
        %v7177 = vadd.f32 %v7113, %v299
        %v7178 = vadd.f32 %v7118, %v300
        %v7179 = vadd.f32 %v7121, %v301
        %v7180 = vadd.f32 %v7126, %v302
        %v7181 = vadd.f32 %v7129, %v303
        %v7182 = vadd.f32 %v7134, %v304
        %v7183 = vadd.f32 %v7137, %v305
        %v7184 = vadd.f32 %v7142, %v306
        %v7185 = vadd.f32 %v7145, %v307
        %v7186 = vadd.f32 %v7150, %v308
        %v7187 = vadd.f32 %v7153, %v309
        %v7188 = vmax.f32 %v7156, 0.0
        %v7189 = vmax.f32 %v7157, 0.0
        %v7190 = vmax.f32 %v7158, 0.0
        %v7191 = vmax.f32 %v7159, 0.0
        %v7192 = vmax.f32 %v7160, 0.0
        %v7193 = vmax.f32 %v7161, 0.0
        %v7194 = vmax.f32 %v7162, 0.0
        %v7195 = vmax.f32 %v7163, 0.0
        %v7196 = vmax.f32 %v7164, 0.0
        %v7197 = vmax.f32 %v7165, 0.0
        %v7198 = vmax.f32 %v7166, 0.0
        %v7199 = vmax.f32 %v7167, 0.0
        %v7200 = vmax.f32 %v7168, 0.0
        %v7201 = vmax.f32 %v7169, 0.0
        %v7202 = vmax.f32 %v7170, 0.0
        %v7203 = vmax.f32 %v7171, 0.0
        %v7204 = vmax.f32 %v7172, 0.0
        %v7205 = vmax.f32 %v7173, 0.0
        %v7206 = vmax.f32 %v7174, 0.0
        %v7207 = vmax.f32 %v7175, 0.0
        %v7208 = vmax.f32 %v7176, 0.0
        %v7209 = vmax.f32 %v7177, 0.0
        %v7210 = vmax.f32 %v7178, 0.0
        %v7211 = vmax.f32 %v7179, 0.0
        %v7212 = vmax.f32 %v7180, 0.0
        %v7213 = vmax.f32 %v7181, 0.0
        %v7214 = vmax.f32 %v7182, 0.0
        %v7215 = vmax.f32 %v7183, 0.0
        %v7216 = vmax.f32 %v7184, 0.0
        %v7217 = vmax.f32 %v7185, 0.0
        %v7218 = vmax.f32 %v7186, 0.0
        %v7219 = vmax.f32 %v7187, 0.0
        %7220 = vst [vmem:[%s271] sm:$0xff] %v7188
        %7221 = vst [vmem:[%s271 + $0x8] sm:$0xff] %v7189
        %7222 = vst [vmem:[%s271 + $0x10] sm:$0xff] %v7190
        %7223 = vst [vmem:[%s271 + $0x18] sm:$0xff] %v7191
        %7224 = vst [vmem:[%s271 + $0x20] sm:$0xff] %v7192
        %7225 = vst [vmem:[%s271 + $0x28] sm:$0xff] %v7193
        %7226 = vst [vmem:[%s271 + $0x30] sm:$0xff] %v7194
        %7227 = vst [vmem:[%s271 + $0x38] sm:$0xff] %v7195
        %7228 = vst [vmem:[%s271 + $0x40] sm:$0xff] %v7196
        %7229 = vst [vmem:[%s271 + $0x48] sm:$0xff] %v7197
        %7230 = vst [vmem:[%s271 + $0x50] sm:$0xff] %v7198
        %7231 = vst [vmem:[%s271 + $0x58] sm:$0xff] %v7199
        %7232 = vst [vmem:[%s271 + $0x60] sm:$0xff] %v7200
        %7233 = vst [vmem:[%s271 + $0x68] sm:$0xff] %v7201
        %7234 = vst [vmem:[%s271 + $0x70] sm:$0xff] %v7202
        %7235 = vst [vmem:[%s271 + $0x78] sm:$0xff] %v7203
        %7236 = vst [vmem:[%s271 + $0x80] sm:$0xff] %v7204
        %7237 = vst [vmem:[%s271 + $0x88] sm:$0xff] %v7205
        %7238 = vst [vmem:[%s271 + $0x90] sm:$0xff] %v7206
        %7239 = vst [vmem:[%s271 + $0x98] sm:$0xff] %v7207
        %7240 = vst [vmem:[%s271 + $0xa0] sm:$0xff] %v7208
        %7241 = vst [vmem:[%s271 + $0xa8] sm:$0xff] %v7209
        %7242 = vst [vmem:[%s271 + $0xb0] sm:$0xff] %v7210
        %7243 = vst [vmem:[%s271 + $0xb8] sm:$0xff] %v7211
        %7244 = vst [vmem:[%s271 + $0xc0] sm:$0xff] %v7212
        %7245 = vst [vmem:[%s271 + $0xc8] sm:$0xff] %v7213
        %7246 = vst [vmem:[%s271 + $0xd0] sm:$0xff] %v7214
        %7247 = vst [vmem:[%s271 + $0xd8] sm:$0xff] %v7215
        %7248 = vst [vmem:[%s271 + $0xe0] sm:$0xff] %v7216
        %7249 = vst [vmem:[%s271 + $0xe8] sm:$0xff] %v7217
        %7250 = vst [vmem:[%s271 + $0xf0] sm:$0xff] %v7218
        %7251 = vst [vmem:[%s271 + $0xf8] sm:$0xff] %v7219
        %s7252 = sand.u32 %s181, 1
        %s7253 = scalar_lea.sflag [#allocation5], %s7252
        %s7254 = sand.u32 %s181, 1
        %s7255 = smul.addr %s7254, 256
        %s7256 = scalar_lea.vmem [#allocation4], %s7255
        // Predicated region
        $region49: #{_lambda_.1} parent=47 // pred_check
          %p7257 = pneg %p191
        $region50: #{_lambda_.1} parent=47 // pred_check_branch
          %7259 = sbr.rel (%p7257) target = $region52
        $region51: #{_lambda_.1} parent=47 // pred_region
          %s7261 = ssub.s32 4096, 4096
          %7262 = vsyncadd %s7253, %s7261
          %s7263 = smul.addr %s21, 32
          %s7264 = smul.addr %s7263, 128
          %s7265 = scalar_lea.hbm %s7, %s7264
          %s7266 = sshll.u32 %s7256, 4
          %s7267 = int_to_ptr.vmem [resolvable:$true] %s7266
          %7272 = dma.vmem_to_hbm [thread:$0]  %s7267, 4096, %s7265, %s7253, 128, 128, 8
        $region52: #{_lambda_.1} parent=47 // pred_fallthru
          _
      $region48: #{_lambda_.1} parent=5 // pred_fallthru
        _
      %p7273 = scmp.le.s32.totalorder 2, %s16
      // Predicated region
      $region53: #{_lambda_.1} parent=5 // pred_check
        %p7274 = pneg %p7273
      $region54: #{_lambda_.1} parent=5 // pred_check_branch
        %7276 = sbr.rel (%p7274) target = $region56
      $region55: #{_lambda_.1} parent=5 // pred_region
        %s7277 = ssub.s32 %s16, 2
        // Predicated region
        $region57: #{_lambda_.1} parent=55 // pred_check
          %p7278 = pneg %p197
        $region58: #{_lambda_.1} parent=55 // pred_check_branch
          %7280 = sbr.rel (%p7278) target = $region60
        $region59: #{_lambda_.1} parent=55 // pred_region
          %s7281 = sand.u32 %s182, 1
          %s7282 = scalar_lea.sflag [#allocation5], %s7281
          %s7283 = sand.u32 %s182, 1
          %s7284 = smul.addr %s7283, 256
          %s7285 = scalar_lea.vmem [#allocation4], %s7284
          %7286 = dma.done %s7282, 4096
        $region60: #{_lambda_.1} parent=55 // pred_fallthru
          _
      $region56: #{_lambda_.1} parent=5 // pred_fallthru
        _
    $region6: #{_lambda_.1} parent=1 // loop_footer
      %s20 = sadd.s32 1, %s16
    $region7: #{_lambda_.1} parent=1 // loop_footer_branch
      %15 = sbr.rel target = $region3
    $region8: #{_lambda_.1} parent=1 // loop_exit
      _
    %7287 = vsyncpa [#allocation5], 1
    %s7288 = scalar_lea.sflag [#allocation5], 1
    %7289 = vsyncpa %s7288, 1

</llo_original>
